<compile_context>
chip_gen: v6e
topology: v6e:2x2x1
jax: 0.10.0
libtpu: 0.0.40
codegen_flags: <defaults>
</compile_context>

<pallas_src>
import jax
import jax.numpy as jnp
from jax.experimental import pallas as pl
from jax.experimental.pallas import tpu as pltpu


# ----------------------------------------------------------------------------
# Helpers
# ----------------------------------------------------------------------------
def _choose_tm(m, target):
    # If the array is small, use a single full-extent block (always a legal
    # block shape); otherwise use `target` (a multiple of 8) and let Pallas
    # handle the partial trailing block.
    return m if m <= target else target


# ----------------------------------------------------------------------------
# Kernel 1: fused  out = relu(A @ W + b)   (conv-as-matmul)
#   A, W in bf16 (MXU), accumulate f32, bias+ReLU in f32, cast at store.
# ----------------------------------------------------------------------------
def _conv_mm_kernel(a_ref, w_ref, b_ref, o_ref):
    acc = jnp.dot(a_ref[...], w_ref[...], preferred_element_type=jnp.float32)
    acc = jnp.maximum(acc + b_ref[...], 0.0)          # f32 epilogue (v5e-safe)
    o_ref[...] = acc.astype(o_ref.dtype)


def conv_matmul_relu(a, w, b, *, tm_target, out_dtype=jnp.bfloat16):
    """a: (M, K) bf16, w: (K, N) bf16, b: (1, N) f32  ->  relu(a@w+b): (M, N)."""
    M, K = a.shape
    _, N = w.shape
    tm = _choose_tm(M, tm_target)
    return pl.pallas_call(
        _conv_mm_kernel,
        out_shape=jax.ShapeDtypeStruct((M, N), out_dtype),
        grid=(pl.cdiv(M, tm),),
        in_specs=[
            pl.BlockSpec((tm, K), lambda i: (i, 0)),   # A rows tiled; K full
            pl.BlockSpec((K, N), lambda i: (0, 0)),    # full weight resident
            pl.BlockSpec((1, N), lambda i: (0, 0)),    # bias (f32, stored (1,N))
        ],
        out_specs=pl.BlockSpec((tm, N), lambda i: (i, 0)),
        compiler_params=pltpu.CompilerParams(
            dimension_semantics=("parallel",)),
    )(a, w, b)


# ----------------------------------------------------------------------------
# Kernel 2: fused FC tail  (fc1 + ReLU + fc2 + ReLU + 256->1 head)
#   Both FC weights resident in VMEM; the head runs on the VPU/XLU.
# ----------------------------------------------------------------------------
def _fc_tail_kernel(a_ref, w1_ref, b1_ref, w2_ref, b2_ref, w3_ref, b3_ref,
                    o_ref):
    # fc1: (tm,1600) @ (1600,512) on the MXU; f32 accumulate, f32 bias + ReLU.
    h = jnp.dot(a_ref[...], w1_ref[...], preferred_element_type=jnp.float32)
    h = jnp.maximum(h + b1_ref[...], 0.0)
    # fc2: (tm,512) @ (512,256); re-cast the activation to bf16 for the MXU.
    h = jnp.dot(h.astype(jnp.bfloat16), w2_ref[...],
                preferred_element_type=jnp.float32)
    h = jnp.maximum(h + b2_ref[...], 0.0)
    # Head (256 -> 1): N=1 would use 1 MXU column and a 1-lane masked store,
    # so compute it as a VPU multiply + lane reduction instead.
    v = jnp.sum(h * w3_ref[...], axis=-1, keepdims=True) + b3_ref[...]
    o_ref[...] = v.astype(o_ref.dtype)


def fc_tail(a, w1, b1, w2, b2, w3_row, b3, *, tm_target=128):
    """a: (M,1600) bf16 -> (M,1) f32, one pallas_call for the whole FC tail."""
    M, K = a.shape
    n1 = w1.shape[1]
    n2 = w2.shape[1]
    tm = _choose_tm(M, tm_target)
    return pl.pallas_call(
        _fc_tail_kernel,
        out_shape=jax.ShapeDtypeStruct((M, 1), jnp.float32),
        grid=(pl.cdiv(M, tm),),
        in_specs=[
            pl.BlockSpec((tm, K), lambda i: (i, 0)),    # activations, rows tiled
            pl.BlockSpec((K, n1), lambda i: (0, 0)),    # fc1 weight (bf16, ~1.6MB)
            pl.BlockSpec((1, n1), lambda i: (0, 0)),    # fc1 bias (f32)
            pl.BlockSpec((n1, n2), lambda i: (0, 0)),   # fc2 weight (bf16)
            pl.BlockSpec((1, n2), lambda i: (0, 0)),    # fc2 bias (f32)
            pl.BlockSpec((1, n2), lambda i: (0, 0)),    # head weight row (f32)
            pl.BlockSpec((1, 1), lambda i: (0, 0)),     # head bias (f32)
        ],
        out_specs=pl.BlockSpec((tm, 1), lambda i: (i, 0)),
        compiler_params=pltpu.CompilerParams(
            dimension_semantics=("parallel",)),
    )(a, w1, b1, w2, b2, w3_row, b3)


# ----------------------------------------------------------------------------
# Conv2d (valid padding, stride s) via im2col + Pallas fused matmul
# ----------------------------------------------------------------------------
def _im2col(x_nhwc, k, s):
    """x: (B,H,W,C) -> patches (B*Ho*Wo, k*k*C), column order (kh, kw, ci)."""
    B, H, W, C = x_nhwc.shape
    Ho = (H - k) // s + 1
    Wo = (W - k) // s + 1
    cols = []
    for kh in range(k):
        for kw in range(k):
            cols.append(x_nhwc[:, kh:kh + s * (Ho - 1) + 1:s,
                               kw:kw + s * (Wo - 1) + 1:s, :])
    patches = jnp.concatenate(cols, axis=-1)           # (B, Ho, Wo, k*k*C)
    return patches.reshape(B * Ho * Wo, k * k * C), (B, Ho, Wo)
    # TODO(synk): build patches in-kernel (manual DMA of the image tile) to
    # avoid materializing the blown-up im2col array in HBM at large batch.


def conv2d_relu(x_nhwc, w2d, b, *, k, stride, tm_target):
    """w2d: (k*k*Cin, Cout) bf16, b: (1, Cout) f32. Returns NHWC bf16 output."""
    patches, (B, Ho, Wo) = _im2col(x_nhwc, k, stride)
    cout = w2d.shape[1]
    y = conv_matmul_relu(patches, w2d, b, tm_target=tm_target)
    return y.reshape(B, Ho, Wo, cout)


# ----------------------------------------------------------------------------
# Parameters: synthetic init in PyTorch layout, converted once to kernel layout
# ----------------------------------------------------------------------------
def init_torch_params(key):
    """Synthetic parameters in PyTorch layout (Conv2d: OIHW, Linear: (out,in))."""
    ks = jax.random.split(key, 12)

    def nrm(k, shape, scale):
        return (scale * jax.random.normal(k, shape)).astype(jnp.float32)

    return {
        "conv1_w": nrm(ks[0], (32, 3, 5, 5), 0.05),   "conv1_b": nrm(ks[1], (32,), 0.01),
        "conv2_w": nrm(ks[2], (64, 32, 5, 5), 0.03),  "conv2_b": nrm(ks[3], (64,), 0.01),
        "conv3_w": nrm(ks[4], (64, 64, 5, 5), 0.03),  "conv3_b": nrm(ks[5], (64,), 0.01),
        "fc1_w": nrm(ks[6], (512, 64 * 5 * 5), 0.02), "fc1_b": nrm(ks[7], (512,), 0.01),
        "fc2_w": nrm(ks[8], (256, 512), 0.03),        "fc2_b": nrm(ks[9], (256,), 0.01),
        "fc3_w": nrm(ks[10], (1, 256), 0.05),         "fc3_b": nrm(ks[11], (1,), 0.01),
    }


def prepare_params(tp):
    """One-time conversion PyTorch layout -> kernel layout:
       - Conv OIHW -> (kh*kw*ci, co), matching the im2col (kh, kw, ci) order.
       - Linear (out, in) -> (in, out).
       - fc1 rows permuted from NCHW-flatten order to NHWC-flatten order so the
         conv3 output can be flattened directly (no runtime transpose).
       - MXU operands cast to bf16; biases kept f32 and pre-shaped to (1, N).
    """
    def conv_w(w_oihw):
        w = jnp.transpose(w_oihw, (2, 3, 1, 0))        # (kh, kw, ci, co)
        k, _, ci, co = w.shape
        return w.reshape(k * k * ci, co).astype(jnp.bfloat16)

    p = {}
    p["w1"] = conv_w(tp["conv1_w"]); p["b1"] = tp["conv1_b"].reshape(1, -1)
    p["w2"] = conv_w(tp["conv2_w"]); p["b2"] = tp["conv2_b"].reshape(1, -1)
    p["w3"] = conv_w(tp["conv3_w"]); p["b3"] = tp["conv3_b"].reshape(1, -1)

    # fc1: PyTorch rows are ordered by NCHW flatten (c*25 + h*5 + w).
    # Our activation flatten is NHWC (h*5*64 + w*64 + c); permute rows to match.
    wf1 = tp["fc1_w"].T                                 # (1600, 512), NCHW row order
    j = jnp.arange(64 * 5 * 5)
    c = j % 64
    hw = j // 64
    h_, w_ = hw // 5, hw % 5
    nchw_row = c * 25 + h_ * 5 + w_
    p["wf1"] = wf1[nchw_row].astype(jnp.bfloat16)       # rows now in NHWC order
    p["bf1"] = tp["fc1_b"].reshape(1, -1)

    p["wd1"] = tp["fc2_w"].T.astype(jnp.bfloat16)       # (512, 256)
    p["bd1"] = tp["fc2_b"].reshape(1, -1)
    p["wd2_row"] = tp["fc3_w"].astype(jnp.float32)      # (1, 256), f32 (VPU head)
    p["bd2"] = tp["fc3_b"].reshape(1, 1)
    return p


# ----------------------------------------------------------------------------
# Full forward pass (matches CoinRunCritic.forward)
# ----------------------------------------------------------------------------
def coinrun_critic_forward(params, x_nchw):
    # NCHW -> NHWC once at the input; bf16 activations through the conv stack.
    x = jnp.transpose(x_nchw, (0, 2, 3, 1)).astype(jnp.bfloat16)

    h = conv2d_relu(x, params["w1"], params["b1"], k=5, stride=2, tm_target=512)  # (B,30,30,32)
    h = conv2d_relu(h, params["w2"], params["b2"], k=5, stride=2, tm_target=256)  # (B,13,13,64)
    # Conv3 -> Flatten -> ReLU: ReLU is elementwise, so it is fused into the
    # conv3 matmul epilogue; the flatten below is a pure reshape (NHWC order,
    # fc1 rows were permuted at init to match).
    h = conv2d_relu(h, params["w3"], params["b3"], k=5, stride=2, tm_target=128)  # (B,5,5,64)

    B = h.shape[0]
    h = h.reshape(B, 5 * 5 * 64)                                                  # (B,1600) bf16

    # Fused FC tail: fc1 + ReLU + fc2 + ReLU + value head in a single kernel.
    return fc_tail(h, params["wf1"], params["bf1"],
                   params["wd1"], params["bd1"],
                   params["wd2_row"], params["bd2"])                              # (B,1) f32


if __name__ == "__main__":
    key = jax.random.PRNGKey(0)
    k_param, k_x = jax.random.split(key)
    params = prepare_params(init_torch_params(k_param))

    # CoinRun observations: 3x64x64 (64x64 is forced by the 64*5*5 Linear).
    batch = 2
    x = jax.random.uniform(k_x, (batch, 3, 64, 64), dtype=jnp.float32)

    fwd = jax.jit(coinrun_critic_forward)
    out = fwd(params, x)
    jax.block_until_ready(out)

    assert out.shape == (batch, 1), out.shape
    assert out.dtype == jnp.float32
    assert bool(jnp.all(jnp.isfinite(out)))
    print("KERNEL_OK")
</pallas_src>

<mosaic_0001>
module attributes {stable_mosaic.version = 11 : i64} {
  func.func @_conv_mm_kernel(%arg0: i32, %arg1: memref<512x75xbf16, #tpu.memory_space<vmem>>, %arg2: memref<75x32xbf16, #tpu.memory_space<vmem>>, %arg3: memref<1x32xf32, #tpu.memory_space<vmem>>, %arg4: memref<512x32xbf16, #tpu.memory_space<vmem>>) attributes {dimension_semantics = [#tpu.dimension_semantics<parallel>], iteration_bounds = array<i64: 4>, scalar_prefetch = 0 : i64, scratch_operands = 0 : i64, tpu.core_type = #tpu.core_type<tc>, window_params = [{transform_indices = @transform_0, window_bounds = array<i64: 512, 75>}, {pipeline_mode = #tpu.pipeline_mode<synchronous>, transform_indices = @transform_1, window_bounds = array<i64: 75, 32>}, {pipeline_mode = #tpu.pipeline_mode<synchronous>, transform_indices = @transform_2, window_bounds = array<i64: 1, 32>}, {transform_indices = @transform_3, window_bounds = array<i64: 512, 32>}]} {
    %c0 = arith.constant 0 : index
    %c0_0 = arith.constant 0 : index
    %0 = vector.load %arg1[%c0, %c0_0] : memref<512x75xbf16, #tpu.memory_space<vmem>>, vector<512x75xbf16>
    %c0_1 = arith.constant 0 : index
    %c0_2 = arith.constant 0 : index
    %1 = vector.load %arg2[%c0_1, %c0_2] : memref<75x32xbf16, #tpu.memory_space<vmem>>, vector<75x32xbf16>
    %cst = arith.constant dense<0.000000e+00> : vector<512x32xf32>
    %2 = tpu.matmul %0, %1, %cst {dimension_numbers = #tpu.dot_dimension_numbers<[1], [0], [0], [1], [0, 0, 1, 1], [], []>} : vector<512x75xbf16>, vector<75x32xbf16>, vector<512x32xf32> -> vector<512x32xf32>
    %c0_3 = arith.constant 0 : index
    %c0_4 = arith.constant 0 : index
    %3 = vector.load %arg3[%c0_3, %c0_4] : memref<1x32xf32, #tpu.memory_space<vmem>>, vector<1x32xf32>
    %4 = vector.broadcast %3 : vector<1x32xf32> to vector<512x32xf32>
    %5 = arith.addf %2, %4 : vector<512x32xf32>
    %cst_5 = arith.constant 0.000000e+00 : f32
    %6 = vector.broadcast %cst_5 : f32 to vector<512x32xf32>
    %7 = arith.maximumf %5, %6 : vector<512x32xf32>
    %8 = arith.truncf %7 : vector<512x32xf32> to vector<512x32xbf16>
    %c0_6 = arith.constant 0 : index
    %c0_7 = arith.constant 0 : index
    %9 = vector.load %arg4[%c0_6, %c0_7] : memref<512x32xbf16, #tpu.memory_space<vmem>>, vector<512x32xbf16>
    tpu.vector_store %arg4[%c0_6, %c0_7], %8 {strides = array<i32>} : memref<512x32xbf16, #tpu.memory_space<vmem>>, vector<512x32xbf16>,
    return
  }
  func.func @transform_0(%arg0: i32) -> (i32, i32) {
    %c0_i32 = arith.constant 0 : i32
    %c0_i32_0 = arith.constant 0 : i32
    return %arg0, %c0_i32 : i32, i32
  }
  func.func @transform_1(%arg0: i32) -> (i32, i32) {
    %c0_i32 = arith.constant 0 : i32
    %c0_i32_0 = arith.constant 0 : i32
    %c0_i32_1 = arith.constant 0 : i32
    return %c0_i32, %c0_i32_0 : i32, i32
  }
  func.func @transform_2(%arg0: i32) -> (i32, i32) {
    %c0_i32 = arith.constant 0 : i32
    %c0_i32_0 = arith.constant 0 : i32
    %c0_i32_1 = arith.constant 0 : i32
    return %c0_i32, %c0_i32_0 : i32, i32
  }
  func.func @transform_3(%arg0: i32) -> (i32, i32) {
    %c0_i32 = arith.constant 0 : i32
    %c0_i32_0 = arith.constant 0 : i32
    return %arg0, %c0_i32 : i32, i32
  }
}

module attributes {stable_mosaic.version = 11 : i64} {
  func.func @_conv_mm_kernel(%arg0: i32, %arg1: memref<256x800xbf16, #tpu.memory_space<vmem>>, %arg2: memref<800x64xbf16, #tpu.memory_space<vmem>>, %arg3: memref<1x64xf32, #tpu.memory_space<vmem>>, %arg4: memref<256x64xbf16, #tpu.memory_space<vmem>>) attributes {dimension_semantics = [#tpu.dimension_semantics<parallel>], iteration_bounds = array<i64: 2>, scalar_prefetch = 0 : i64, scratch_operands = 0 : i64, tpu.core_type = #tpu.core_type<tc>, window_params = [{transform_indices = @transform_0, window_bounds = array<i64: 256, 800>}, {pipeline_mode = #tpu.pipeline_mode<synchronous>, transform_indices = @transform_1, window_bounds = array<i64: 800, 64>}, {pipeline_mode = #tpu.pipeline_mode<synchronous>, transform_indices = @transform_2, window_bounds = array<i64: 1, 64>}, {transform_indices = @transform_3, window_bounds = array<i64: 256, 64>}]} {
    %c0 = arith.constant 0 : index
    %c0_0 = arith.constant 0 : index
    %0 = vector.load %arg1[%c0, %c0_0] : memref<256x800xbf16, #tpu.memory_space<vmem>>, vector<256x800xbf16>
    %c0_1 = arith.constant 0 : index
    %c0_2 = arith.constant 0 : index
    %1 = vector.load %arg2[%c0_1, %c0_2] : memref<800x64xbf16, #tpu.memory_space<vmem>>, vector<800x64xbf16>
    %cst = arith.constant dense<0.000000e+00> : vector<256x64xf32>
    %2 = tpu.matmul %0, %1, %cst {dimension_numbers = #tpu.dot_dimension_numbers<[1], [0], [0], [1], [0, 0, 1, 1], [], []>} : vector<256x800xbf16>, vector<800x64xbf16>, vector<256x64xf32> -> vector<256x64xf32>
    %c0_3 = arith.constant 0 : index
    %c0_4 = arith.constant 0 : index
    %3 = vector.load %arg3[%c0_3, %c0_4] : memref<1x64xf32, #tpu.memory_space<vmem>>, vector<1x64xf32>
    %4 = vector.broadcast %3 : vector<1x64xf32> to vector<256x64xf32>
    %5 = arith.addf %2, %4 : vector<256x64xf32>
    %cst_5 = arith.constant 0.000000e+00 : f32
    %6 = vector.broadcast %cst_5 : f32 to vector<256x64xf32>
    %7 = arith.maximumf %5, %6 : vector<256x64xf32>
    %8 = arith.truncf %7 : vector<256x64xf32> to vector<256x64xbf16>
    %c0_6 = arith.constant 0 : index
    %c0_7 = arith.constant 0 : index
    %9 = vector.load %arg4[%c0_6, %c0_7] : memref<256x64xbf16, #tpu.memory_space<vmem>>, vector<256x64xbf16>
    tpu.vector_store %arg4[%c0_6, %c0_7], %8 {strides = array<i32>} : memref<256x64xbf16, #tpu.memory_space<vmem>>, vector<256x64xbf16>,
    return
  }
  func.func @transform_0(%arg0: i32) -> (i32, i32) {
    %c0_i32 = arith.constant 0 : i32
    %c0_i32_0 = arith.constant 0 : i32
    return %arg0, %c0_i32 : i32, i32
  }
  func.func @transform_1(%arg0: i32) -> (i32, i32) {
    %c0_i32 = arith.constant 0 : i32
    %c0_i32_0 = arith.constant 0 : i32
    %c0_i32_1 = arith.constant 0 : i32
    return %c0_i32, %c0_i32_0 : i32, i32
  }
  func.func @transform_2(%arg0: i32) -> (i32, i32) {
    %c0_i32 = arith.constant 0 : i32
    %c0_i32_0 = arith.constant 0 : i32
    %c0_i32_1 = arith.constant 0 : i32
    return %c0_i32, %c0_i32_0 : i32, i32
  }
  func.func @transform_3(%arg0: i32) -> (i32, i32) {
    %c0_i32 = arith.constant 0 : i32
    %c0_i32_0 = arith.constant 0 : i32
    return %arg0, %c0_i32 : i32, i32
  }
}

module attributes {stable_mosaic.version = 11 : i64} {
  func.func @_conv_mm_kernel(%arg0: i32, %arg1: memref<50x1600xbf16, #tpu.memory_space<vmem>>, %arg2: memref<1600x64xbf16, #tpu.memory_space<vmem>>, %arg3: memref<1x64xf32, #tpu.memory_space<vmem>>, %arg4: memref<50x64xbf16, #tpu.memory_space<vmem>>) attributes {dimension_semantics = [#tpu.dimension_semantics<parallel>], iteration_bounds = array<i64: 1>, scalar_prefetch = 0 : i64, scratch_operands = 0 : i64, tpu.core_type = #tpu.core_type<tc>, window_params = [{transform_indices = @transform_0, window_bounds = array<i64: 50, 1600>}, {pipeline_mode = #tpu.pipeline_mode<synchronous>, transform_indices = @transform_1, window_bounds = array<i64: 1600, 64>}, {pipeline_mode = #tpu.pipeline_mode<synchronous>, transform_indices = @transform_2, window_bounds = array<i64: 1, 64>}, {transform_indices = @transform_3, window_bounds = array<i64: 50, 64>}]} {
    %c0 = arith.constant 0 : index
    %c0_0 = arith.constant 0 : index
    %0 = vector.load %arg1[%c0, %c0_0] : memref<50x1600xbf16, #tpu.memory_space<vmem>>, vector<50x1600xbf16>
    %c0_1 = arith.constant 0 : index
    %c0_2 = arith.constant 0 : index
    %1 = vector.load %arg2[%c0_1, %c0_2] : memref<1600x64xbf16, #tpu.memory_space<vmem>>, vector<1600x64xbf16>
    %cst = arith.constant dense<0.000000e+00> : vector<50x64xf32>
    %2 = tpu.matmul %0, %1, %cst {dimension_numbers = #tpu.dot_dimension_numbers<[1], [0], [0], [1], [0, 0, 1, 1], [], []>} : vector<50x1600xbf16>, vector<1600x64xbf16>, vector<50x64xf32> -> vector<50x64xf32>
    %c0_3 = arith.constant 0 : index
    %c0_4 = arith.constant 0 : index
    %3 = vector.load %arg3[%c0_3, %c0_4] : memref<1x64xf32, #tpu.memory_space<vmem>>, vector<1x64xf32>
    %4 = vector.broadcast %3 : vector<1x64xf32> to vector<50x64xf32>
    %5 = arith.addf %2, %4 : vector<50x64xf32>
    %cst_5 = arith.constant 0.000000e+00 : f32
    %6 = vector.broadcast %cst_5 : f32 to vector<50x64xf32>
    %7 = arith.maximumf %5, %6 : vector<50x64xf32>
    %8 = arith.truncf %7 : vector<50x64xf32> to vector<50x64xbf16>
    %c0_6 = arith.constant 0 : index
    %c0_7 = arith.constant 0 : index
    %9 = vector.load %arg4[%c0_6, %c0_7] : memref<50x64xbf16, #tpu.memory_space<vmem>>, vector<50x64xbf16>
    tpu.vector_store %arg4[%c0_6, %c0_7], %8 {strides = array<i32>} : memref<50x64xbf16, #tpu.memory_space<vmem>>, vector<50x64xbf16>,
    return
  }
  func.func @transform_0(%arg0: i32) -> (i32, i32) {
    %c0_i32 = arith.constant 0 : i32
    %c0_i32_0 = arith.constant 0 : i32
    return %arg0, %c0_i32 : i32, i32
  }
  func.func @transform_1(%arg0: i32) -> (i32, i32) {
    %c0_i32 = arith.constant 0 : i32
    %c0_i32_0 = arith.constant 0 : i32
    %c0_i32_1 = arith.constant 0 : i32
    return %c0_i32, %c0_i32_0 : i32, i32
  }
  func.func @transform_2(%arg0: i32) -> (i32, i32) {
    %c0_i32 = arith.constant 0 : i32
    %c0_i32_0 = arith.constant 0 : i32
    %c0_i32_1 = arith.constant 0 : i32
    return %c0_i32, %c0_i32_0 : i32, i32
  }
  func.func @transform_3(%arg0: i32) -> (i32, i32) {
    %c0_i32 = arith.constant 0 : i32
    %c0_i32_0 = arith.constant 0 : i32
    return %arg0, %c0_i32 : i32, i32
  }
}

module attributes {stable_mosaic.version = 11 : i64} {
  func.func @_fc_tail_kernel(%arg0: i32, %arg1: memref<2x1600xbf16, #tpu.memory_space<vmem>>, %arg2: memref<1600x512xbf16, #tpu.memory_space<vmem>>, %arg3: memref<1x512xf32, #tpu.memory_space<vmem>>, %arg4: memref<512x256xbf16, #tpu.memory_space<vmem>>, %arg5: memref<1x256xf32, #tpu.memory_space<vmem>>, %arg6: memref<1x256xf32, #tpu.memory_space<vmem>>, %arg7: memref<1x1xf32, #tpu.memory_space<vmem>>, %arg8: memref<2x1xf32, #tpu.memory_space<vmem>>) attributes {dimension_semantics = [#tpu.dimension_semantics<parallel>], iteration_bounds = array<i64: 1>, scalar_prefetch = 0 : i64, scratch_operands = 0 : i64, tpu.core_type = #tpu.core_type<tc>, window_params = [{transform_indices = @transform_0, window_bounds = array<i64: 2, 1600>}, {pipeline_mode = #tpu.pipeline_mode<synchronous>, transform_indices = @transform_1, window_bounds = array<i64: 1600, 512>}, {pipeline_mode = #tpu.pipeline_mode<synchronous>, transform_indices = @transform_2, window_bounds = array<i64: 1, 512>}, {pipeline_mode = #tpu.pipeline_mode<synchronous>, transform_indices = @transform_3, window_bounds = array<i64: 512, 256>}, {pipeline_mode = #tpu.pipeline_mode<synchronous>, transform_indices = @transform_4, window_bounds = array<i64: 1, 256>}, {pipeline_mode = #tpu.pipeline_mode<synchronous>, transform_indices = @transform_5, window_bounds = array<i64: 1, 256>}, {pipeline_mode = #tpu.pipeline_mode<synchronous>, transform_indices = @transform_6, window_bounds = array<i64: 1, 1>}, {transform_indices = @transform_7, window_bounds = array<i64: 2, 1>}]} {
    %c0 = arith.constant 0 : index
    %c0_0 = arith.constant 0 : index
    %0 = vector.load %arg1[%c0, %c0_0] : memref<2x1600xbf16, #tpu.memory_space<vmem>>, vector<2x1600xbf16>
    %c0_1 = arith.constant 0 : index
    %c0_2 = arith.constant 0 : index
    %1 = vector.load %arg2[%c0_1, %c0_2] : memref<1600x512xbf16, #tpu.memory_space<vmem>>, vector<1600x512xbf16>
    %cst = arith.constant dense<0.000000e+00> : vector<2x512xf32>
    %2 = tpu.matmul %0, %1, %cst {dimension_numbers = #tpu.dot_dimension_numbers<[1], [0], [0], [1], [0, 0, 1, 1], [], []>} : vector<2x1600xbf16>, vector<1600x512xbf16>, vector<2x512xf32> -> vector<2x512xf32>
    %c0_3 = arith.constant 0 : index
    %c0_4 = arith.constant 0 : index
    %3 = vector.load %arg3[%c0_3, %c0_4] : memref<1x512xf32, #tpu.memory_space<vmem>>, vector<1x512xf32>
    %4 = vector.broadcast %3 : vector<1x512xf32> to vector<2x512xf32>
    %5 = arith.addf %2, %4 : vector<2x512xf32>
    %cst_5 = arith.constant 0.000000e+00 : f32
    %6 = vector.broadcast %cst_5 : f32 to vector<2x512xf32>
    %7 = arith.maximumf %5, %6 : vector<2x512xf32>
    %8 = arith.truncf %7 : vector<2x512xf32> to vector<2x512xbf16>
    %c0_6 = arith.constant 0 : index
    %c0_7 = arith.constant 0 : index
    %9 = vector.load %arg4[%c0_6, %c0_7] : memref<512x256xbf16, #tpu.memory_space<vmem>>, vector<512x256xbf16>
    %cst_8 = arith.constant dense<0.000000e+00> : vector<2x256xf32>
    %10 = tpu.matmul %8, %9, %cst_8 {dimension_numbers = #tpu.dot_dimension_numbers<[1], [0], [0], [1], [0, 0, 1, 1], [], []>} : vector<2x512xbf16>, vector<512x256xbf16>, vector<2x256xf32> -> vector<2x256xf32>
    %c0_9 = arith.constant 0 : index
    %c0_10 = arith.constant 0 : index
    %11 = vector.load %arg5[%c0_9, %c0_10] : memref<1x256xf32, #tpu.memory_space<vmem>>, vector<1x256xf32>
    %12 = vector.broadcast %11 : vector<1x256xf32> to vector<2x256xf32>
    %13 = arith.addf %10, %12 : vector<2x256xf32>
    %cst_11 = arith.constant 0.000000e+00 : f32
    %14 = vector.broadcast %cst_11 : f32 to vector<2x256xf32>
    %15 = arith.maximumf %13, %14 : vector<2x256xf32>
    %c0_12 = arith.constant 0 : index
    %c0_13 = arith.constant 0 : index
    %16 = vector.load %arg6[%c0_12, %c0_13] : memref<1x256xf32, #tpu.memory_space<vmem>>, vector<1x256xf32>
    %17 = vector.broadcast %16 : vector<1x256xf32> to vector<2x256xf32>
    %18 = arith.mulf %15, %17 : vector<2x256xf32>
    %cst_14 = arith.constant dense<0.000000e+00> : vector<2xf32>
    %19 = vector.multi_reduction <add>, %18, %cst_14 [1] : vector<2x256xf32> to vector<2xf32>
    %20 = vector.shape_cast %19 : vector<2xf32> to vector<2x1xf32>
    %c0_15 = arith.constant 0 : index
    %c0_16 = arith.constant 0 : index
    %21 = vector.load %arg7[%c0_15, %c0_16] : memref<1x1xf32, #tpu.memory_space<vmem>>, vector<1x1xf32>
    %22 = vector.broadcast %21 : vector<1x1xf32> to vector<2x1xf32>
    %23 = arith.addf %20, %22 : vector<2x1xf32>
    %c0_17 = arith.constant 0 : index
    %c0_18 = arith.constant 0 : index
    %24 = vector.load %arg8[%c0_17, %c0_18] : memref<2x1xf32, #tpu.memory_space<vmem>>, vector<2x1xf32>
    tpu.vector_store %arg8[%c0_17, %c0_18], %23 {strides = array<i32>} : memref<2x1xf32, #tpu.memory_space<vmem>>, vector<2x1xf32>,
    return
  }
  func.func @transform_0(%arg0: i32) -> (i32, i32) {
    %c0_i32 = arith.constant 0 : i32
    %c0_i32_0 = arith.constant 0 : i32
    return %arg0, %c0_i32 : i32, i32
  }
  func.func @transform_1(%arg0: i32) -> (i32, i32) {
    %c0_i32 = arith.constant 0 : i32
    %c0_i32_0 = arith.constant 0 : i32
    %c0_i32_1 = arith.constant 0 : i32
    return %c0_i32, %c0_i32_0 : i32, i32
  }
  func.func @transform_2(%arg0: i32) -> (i32, i32) {
    %c0_i32 = arith.constant 0 : i32
    %c0_i32_0 = arith.constant 0 : i32
    %c0_i32_1 = arith.constant 0 : i32
    return %c0_i32, %c0_i32_0 : i32, i32
  }
  func.func @transform_3(%arg0: i32) -> (i32, i32) {
    %c0_i32 = arith.constant 0 : i32
    %c0_i32_0 = arith.constant 0 : i32
    %c0_i32_1 = arith.constant 0 : i32
    return %c0_i32, %c0_i32_0 : i32, i32
  }
  func.func @transform_4(%arg0: i32) -> (i32, i32) {
    %c0_i32 = arith.constant 0 : i32
    %c0_i32_0 = arith.constant 0 : i32
    %c0_i32_1 = arith.constant 0 : i32
    return %c0_i32, %c0_i32_0 : i32, i32
  }
  func.func @transform_5(%arg0: i32) -> (i32, i32) {
    %c0_i32 = arith.constant 0 : i32
    %c0_i32_0 = arith.constant 0 : i32
    %c0_i32_1 = arith.constant 0 : i32
    return %c0_i32, %c0_i32_0 : i32, i32
  }
  func.func @transform_6(%arg0: i32) -> (i32, i32) {
    %c0_i32 = arith.constant 0 : i32
    %c0_i32_0 = arith.constant 0 : i32
    %c0_i32_1 = arith.constant 0 : i32
    return %c0_i32, %c0_i32_0 : i32, i32
  }
  func.func @transform_7(%arg0: i32) -> (i32, i32) {
    %c0_i32 = arith.constant 0 : i32
    %c0_i32_0 = arith.constant 0 : i32
    return %arg0, %c0_i32 : i32, i32
  }
}

</mosaic_0001>

<llo_original>
// kernel: coinrun_critic_forward.4
$region0: #{coinrun_critic_forward.4}
  #allocation0 [shape = 'u32[]', space=smem, size = 0x4, offset = 0x4, fixed_abs, tag = 'smem constant byte address 0x4 - core index']
  #allocation1 [shape = 'u32[144,128]{1,0:T(1,128)}', space=vmem, size = 0x12000, scoped, tag = 'internal scratch']
  %s0 = inlined_call_operand.vmem [shape: bf16[1800,75], index: 0, kind: input, shape index: {}]
  %s1 = inlined_call_operand.vmem [shape: bf16[75,32], index: 1, kind: input, shape index: {}]
  %s2 = inlined_call_operand.vmem [shape: f32[1,32], index: 2, kind: input, shape index: {}]
  %s3 = inlined_call_operand.vmem [shape: bf16[1800,32], index: 3, kind: output, shape index: {}]
  %s4 = sld [smem:[#allocation0]]
  $region89: #{coinrun_critic_forward.4} parent=0
    _
  %s6 = ssub.s32 1, %s4
  %s7 = scalar_select 0, %s6, %s4
  $region1: #{coinrun_critic_forward.4} parent=0
    #allocation2 [shape = 'u8[262144]{0}', space=vmem, size = 0x40000, scoped, tag = 'output window, operand 0']
    loop: start=0, step=1, limit=6
    $region2: #{coinrun_critic_forward.4} parent=1 // loop_pre_header
      _
    $region3: #{coinrun_critic_forward.4} parent=1 // loop_header
      %s9 = sphi 0, %s13
      %p10 = scmp.ge.s32.totalorder %s9, 6
      %s19 = sphi 0, %s21
      %s22 = sphi 0, %s19
      %s23 = sphi 0, %s22
      %s39 = sphi 0, %s23
      %s43 = sphi 0, %s43
      %s45 = sphi 0, %s43
      %s46 = sphi 0, %s45
      %s60 = sphi 0, %s46
      %s64 = sphi 0, %s64
      %s66 = sphi 0, %s64
      %s67 = sphi 0, %s66
      %s81 = sphi 0, %s67
      %s87 = sphi 0, %s89
      %s90 = sphi 0, %s87
      %s91 = sphi 0, %s90
      %s107 = sphi 0, %s91
    $region4: #{coinrun_critic_forward.4} parent=1 // loop_header_branch
      %12 = sbr.rel (%p10) target = $region8
    $region5: #{coinrun_critic_forward.4} parent=1 // loop_body
      %s14 = ssub.s32 %s9, 1
      %s15 = ssub.s32 %s9, 2
      %s16 = sadd.s32 %s9, 1
      %s17 = ssub.s32 %s9, %s16
      %p18 = scmp.eq.s32.totalorder %s17, 0
      %s20 = sadd.s32 %s19, 1
      %s21 = scalar_select %p18, %s19, %s20
      %p24 = pneg %p18
      %p25 = scmp.eq.s32.totalorder %s9, 3
      %p26 = por %p24, %p25
      %p27 = scmp.ne.s32.totalorder %s19, %s22
      %p28 = scmp.eq.s32.totalorder %s9, 0
      %p29 = por %p27, %p28
      %p30 = scmp.ne.s32.totalorder %s19, %s22
      %p31 = scmp.eq.s32.totalorder %s14, 3
      %p32 = por %p30, %p31
      %p33 = scmp.ne.s32.totalorder %s22, %s23
      %p34 = scmp.eq.s32.totalorder %s14, 0
      %p35 = por %p33, %p34
      %p36 = scmp.ne.s32.totalorder %s22, %s23
      %p37 = scmp.eq.s32.totalorder %s15, 3
      %p38 = por %p36, %p37
      %p40 = scmp.ne.s32.totalorder %s23, %s39
      %p41 = scmp.eq.s32.totalorder %s15, 0
      %p42 = por %p40, %p41
      %s44 = sadd.s32 %s43, 1
      %p47 = scmp.eq.s32.totalorder %s9, 3
      %p48 = scmp.ne.s32.totalorder %s43, %s45
      %p49 = scmp.eq.s32.totalorder %s9, 0
      %p50 = por %p48, %p49
      %p51 = scmp.ne.s32.totalorder %s43, %s45
      %p52 = scmp.eq.s32.totalorder %s14, 3
      %p53 = por %p51, %p52
      %p54 = scmp.ne.s32.totalorder %s45, %s46
      %p55 = scmp.eq.s32.totalorder %s14, 0
      %p56 = por %p54, %p55
      %p57 = scmp.ne.s32.totalorder %s45, %s46
      %p58 = scmp.eq.s32.totalorder %s15, 3
      %p59 = por %p57, %p58
      %p61 = scmp.ne.s32.totalorder %s46, %s60
      %p62 = scmp.eq.s32.totalorder %s15, 0
      %p63 = por %p61, %p62
      %s65 = sadd.s32 %s64, 1
      %p68 = scmp.eq.s32.totalorder %s9, 3
      %p69 = scmp.ne.s32.totalorder %s64, %s66
      %p70 = scmp.eq.s32.totalorder %s9, 0
      %p71 = por %p69, %p70
      %p72 = scmp.ne.s32.totalorder %s64, %s66
      %p73 = scmp.eq.s32.totalorder %s14, 3
      %p74 = por %p72, %p73
      %p75 = scmp.ne.s32.totalorder %s66, %s67
      %p76 = scmp.eq.s32.totalorder %s14, 0
      %p77 = por %p75, %p76
      %p78 = scmp.ne.s32.totalorder %s66, %s67
      %p79 = scmp.eq.s32.totalorder %s15, 3
      %p80 = por %p78, %p79
      %p82 = scmp.ne.s32.totalorder %s67, %s81
      %p83 = scmp.eq.s32.totalorder %s15, 0
      %p84 = por %p82, %p83
      %s85 = ssub.s32 %s9, %s16
      %p86 = scmp.eq.s32.totalorder %s85, 0
      %s88 = sadd.s32 %s87, 1
      %s89 = scalar_select %p86, %s87, %s88
      %p92 = pneg %p86
      %p93 = scmp.eq.s32.totalorder %s9, 3
      %p94 = por %p92, %p93
      %p95 = scmp.ne.s32.totalorder %s87, %s90
      %p96 = scmp.eq.s32.totalorder %s9, 0
      %p97 = por %p95, %p96
      %p98 = scmp.ne.s32.totalorder %s87, %s90
      %p99 = scmp.eq.s32.totalorder %s14, 3
      %p100 = por %p98, %p99
      %p101 = scmp.ne.s32.totalorder %s90, %s91
      %p102 = scmp.eq.s32.totalorder %s14, 0
      %p103 = por %p101, %p102
      %p104 = scmp.ne.s32.totalorder %s90, %s91
      %p105 = scmp.eq.s32.totalorder %s15, 3
      %p106 = por %p104, %p105
      %p108 = scmp.ne.s32.totalorder %s91, %s107
      %p109 = scmp.eq.s32.totalorder %s15, 0
      %p110 = por %p108, %p109
      %p111 = scmp.le.s32.totalorder 1, %s9
      %p112 = scmp.lt.s32.totalorder %s9, 5
      %p113 = pnand %p111, %p112
      %p114 = pneg %p113
      // Predicated region
      $region9: #{coinrun_critic_forward.4} parent=5 // pred_check
        _
      $region10: #{coinrun_critic_forward.4} parent=5 // pred_check_branch
        %116 = sbr.rel (%p113) target = $region12
      $region11: #{coinrun_critic_forward.4} parent=5 // pred_region
        %s117 = ssub.s32 %s9, 1
        // Predicated region
        $region13: #{coinrun_critic_forward.4} parent=11 // pred_check
          %p118 = pneg %p56
        $region14: #{coinrun_critic_forward.4} parent=11 // pred_check_branch
          %120 = sbr.rel (%p118) target = $region16
        $region15: #{coinrun_critic_forward.4} parent=11 // pred_region
          _
        $region16: #{coinrun_critic_forward.4} parent=11 // pred_fallthru
          _
        // Predicated region
        $region17: #{coinrun_critic_forward.4} parent=11 // pred_check
          %p121 = pneg %p77
        $region18: #{coinrun_critic_forward.4} parent=11 // pred_check_branch
          %123 = sbr.rel (%p121) target = $region20
        $region19: #{coinrun_critic_forward.4} parent=11 // pred_region
          _
        $region20: #{coinrun_critic_forward.4} parent=11 // pred_fallthru
          _
      $region12: #{coinrun_critic_forward.4} parent=5 // pred_fallthru
        _
      %p124 = scmp.lt.s32.totalorder %s9, 4
      // Predicated region
      $region21: #{coinrun_critic_forward.4} parent=5 // pred_check
        %p125 = pneg %p124
      $region22: #{coinrun_critic_forward.4} parent=5 // pred_check_branch
        %127 = sbr.rel (%p125) target = $region24
      $region23: #{coinrun_critic_forward.4} parent=5 // pred_region
        // Predicated region
        $region25: #{coinrun_critic_forward.4} parent=23 // pred_check
          %p128 = pneg %p29
        $region26: #{coinrun_critic_forward.4} parent=23 // pred_check_branch
          %130 = sbr.rel (%p128) target = $region28
        $region27: #{coinrun_critic_forward.4} parent=23 // pred_region
          %s131 = smul.u32 64, %s9
          %s132 = ssub.s32 225, %s131
          %p133 = scmp.lt.s32.totalorder %s132, 64
          %s134 = scalar_select %p133, %s132, 64
          %s135 = smul.u32 64, %s134
          %p136 = scmp.lt.s32.totalorder %s131, 224
          %s137 = scalar_select %p136, %s131, 224
          %s138 = smul.addr %s137, 4
          %s139 = scalar_lea.vmem %s0, %s138
          %s140 = smul.u32 64, %s9
          %s141 = ssub.s32 225, %s140
          %p142 = scmp.lt.s32.totalorder %s141, 64
          %s143 = scalar_select %p142, %s141, 64
          %s144 = smul.u32 64, %s143
        $region28: #{coinrun_critic_forward.4} parent=23 // pred_fallthru
          _
      $region24: #{coinrun_critic_forward.4} parent=5 // pred_fallthru
        _
      %p145 = scmp.le.s32.totalorder 1, %s9
      %p146 = scmp.lt.s32.totalorder %s9, 5
      %p147 = pnand %p145, %p146
      %p148 = pneg %p147
      // Predicated region
      $region29: #{coinrun_critic_forward.4} parent=5 // pred_check
        _
      $region30: #{coinrun_critic_forward.4} parent=5 // pred_check_branch
        %150 = sbr.rel (%p147) target = $region32
      $region31: #{coinrun_critic_forward.4} parent=5 // pred_region
        %s151 = ssub.s32 %s9, 1
        %s152 = smul.u32 64, %s14
        %s153 = ssub.s32 225, %s152
        %p154 = scmp.lt.s32.totalorder %s153, 64
        %s155 = scalar_select %p154, %s153, 64
        %s156 = smul.u32 64, %s155
        %p157 = scmp.lt.s32.totalorder %s152, 224
        %s158 = scalar_select %p157, %s152, 224
        %s159 = smul.addr %s158, 4
        %s160 = scalar_lea.vmem %s0, %s159
        %p161 = pneg %p35
        %p162 = pneg %p32
        %p163 = pneg %p56
        %p164 = pneg %p53
        %p165 = pneg %p77
        %p166 = pneg %p74
        %p167 = pneg %p103
        %p168 = pneg %p100
        %s169 = sand.u32 %s90, 1
        %s170 = sand.u32 %s90, 1
        %s171 = smul.addr %s170, 256
        %s172 = scalar_lea.vmem [#allocation2], %s171
        %s173 = smul.u32 64, %s14
        %s174 = ssub.s32 225, %s173
        %p175 = scmp.lt.s32.totalorder %s174, 64
        %s176 = scalar_select %p175, %s174, 64
        %s177 = smul.u32 64, %s176
        %p178 = scmp.lt.s32.totalorder %s173, 224
        %s179 = scalar_select %p178, %s173, 224
        %s180 = smul.addr %s179, 4
        %s181 = scalar_lea.vmem %s0, %s180
        %s182 = smul.u32 64, %s14
        %s183 = ssub.s32 225, %s182
        %p184 = scmp.lt.s32.totalorder %s183, 64
        %s185 = scalar_select %p184, %s183, 64
        %s186 = smul.u32 64, %s185
        %s187 = smul.u32 64, %s14
        %s188 = ssub.s32 225, %s187
        %p189 = scmp.lt.s32.totalorder %s188, 64
        %s190 = scalar_select %p189, %s188, 64
        %s191 = smul.u32 64, %s190
        %v193 = vld [vmem:[%s181] sm:$0xf]
        %v194 = vld [vmem:[%s181 + $0x4] sm:$0xf]
        %v195 = vld [vmem:[%s181 + $0x8] sm:$0xf]
        %v196 = vld [vmem:[%s181 + $0xc] sm:$0xf]
        %v197 = vld [vmem:[%s181 + $0x10] sm:$0xf]
        %v198 = vld [vmem:[%s181 + $0x14] sm:$0xf]
        %v199 = vld [vmem:[%s181 + $0x18] sm:$0xf]
        %v200 = vld [vmem:[%s181 + $0x1c] sm:$0xf]
        %v201 = vld [vmem:[%s181 + $0x20] sm:$0xf]
        %v202 = vld [vmem:[%s181 + $0x24] sm:$0xf]
        %v203 = vld [vmem:[%s181 + $0x28] sm:$0xf]
        %v204 = vld [vmem:[%s181 + $0x2c] sm:$0xf]
        %v205 = vld [vmem:[%s181 + $0x30] sm:$0xf]
        %v206 = vld [vmem:[%s181 + $0x34] sm:$0xf]
        %v207 = vld [vmem:[%s181 + $0x38] sm:$0xf]
        %v208 = vld [vmem:[%s181 + $0x3c] sm:$0xf]
        %v209 = vld [vmem:[%s181 + $0x40] sm:$0xf]
        %v210 = vld [vmem:[%s181 + $0x44] sm:$0xf]
        %v211 = vld [vmem:[%s181 + $0x48] sm:$0xf]
        %v212 = vld [vmem:[%s181 + $0x4c] sm:$0xf]
        %v213 = vld [vmem:[%s181 + $0x50] sm:$0xf]
        %v214 = vld [vmem:[%s181 + $0x54] sm:$0xf]
        %v215 = vld [vmem:[%s181 + $0x58] sm:$0xf]
        %v216 = vld [vmem:[%s181 + $0x5c] sm:$0xf]
        %v217 = vld [vmem:[%s181 + $0x60] sm:$0xf]
        %v218 = vld [vmem:[%s181 + $0x64] sm:$0xf]
        %v219 = vld [vmem:[%s181 + $0x68] sm:$0xf]
        %v220 = vld [vmem:[%s181 + $0x6c] sm:$0xf]
        %v221 = vld [vmem:[%s181 + $0x70] sm:$0xf]
        %v222 = vld [vmem:[%s181 + $0x74] sm:$0xf]
        %v223 = vld [vmem:[%s181 + $0x78] sm:$0xf]
        %v224 = vld [vmem:[%s181 + $0x7c] sm:$0xf]
        %v225 = vld [vmem:[%s181 + $0x80] sm:$0xf]
        %v226 = vld [vmem:[%s181 + $0x84] sm:$0xf]
        %v227 = vld [vmem:[%s181 + $0x88] sm:$0xf]
        %v228 = vld [vmem:[%s181 + $0x8c] sm:$0xf]
        %v229 = vld [vmem:[%s181 + $0x90] sm:$0xf]
        %v230 = vld [vmem:[%s181 + $0x94] sm:$0xf]
        %v231 = vld [vmem:[%s181 + $0x98] sm:$0xf]
        %v232 = vld [vmem:[%s181 + $0x9c] sm:$0xf]
        %v233 = vld [vmem:[%s181 + $0xa0] sm:$0xf]
        %v234 = vld [vmem:[%s181 + $0xa4] sm:$0xf]
        %v235 = vld [vmem:[%s181 + $0xa8] sm:$0xf]
        %v236 = vld [vmem:[%s181 + $0xac] sm:$0xf]
        %v237 = vld [vmem:[%s181 + $0xb0] sm:$0xf]
        %v238 = vld [vmem:[%s181 + $0xb4] sm:$0xf]
        %v239 = vld [vmem:[%s181 + $0xb8] sm:$0xf]
        %v240 = vld [vmem:[%s181 + $0xbc] sm:$0xf]
        %v241 = vld [vmem:[%s181 + $0xc0] sm:$0xf]
        %v242 = vld [vmem:[%s181 + $0xc4] sm:$0xf]
        %v243 = vld [vmem:[%s181 + $0xc8] sm:$0xf]
        %v244 = vld [vmem:[%s181 + $0xcc] sm:$0xf]
        %v245 = vld [vmem:[%s181 + $0xd0] sm:$0xf]
        %v246 = vld [vmem:[%s181 + $0xd4] sm:$0xf]
        %v247 = vld [vmem:[%s181 + $0xd8] sm:$0xf]
        %v248 = vld [vmem:[%s181 + $0xdc] sm:$0xf]
        %v249 = vld [vmem:[%s181 + $0xe0] sm:$0xf]
        %v250 = vld [vmem:[%s181 + $0xe4] sm:$0xf]
        %v251 = vld [vmem:[%s181 + $0xe8] sm:$0xf]
        %v252 = vld [vmem:[%s181 + $0xec] sm:$0xf]
        %v253 = vld [vmem:[%s181 + $0xf0] sm:$0xf]
        %v254 = vld [vmem:[%s181 + $0xf4] sm:$0xf]
        %v255 = vld [vmem:[%s181 + $0xf8] sm:$0xf]
        %v256 = vld [vmem:[%s181 + $0xfc] sm:$0xf]
        %v257 = vld [vmem:[%s1] sm:$0xf]
        %v258 = vld [vmem:[%s1 + $0x4] sm:$0xf]
        %v259 = vld [vmem:[%s1 + $0x8] sm:$0xf]
        %v260 = vld [vmem:[%s1 + $0xc] sm:$0xf]
        %v261 = vld [vmem:[%s1 + $0x10] sm:$0xf]
        %v262 = vld [vmem:[%s1 + $0x14] sm:$0xf]
        %v263 = vld [vmem:[%s1 + $0x18] sm:$0xf]
        %v264 = vld [vmem:[%s1 + $0x1c] sm:$0xf]
        %v265 = vld [vmem:[%s1 + $0x20] sm:$0xf]
        %v266 = vld [vmem:[%s1 + $0x24] sm:$0x3]
        %v267 = vld [vmem:[%s2] sm:$0x1]
        %v269 = vlaneseq
        %v270 = vshrl.u32 %v269, 7
        %v271 = vsub.s32 0, %v270
        %v272 = vrot.slane %v267, %v271
        %v338 = vunpack.c.l.b16 %v193
        %v339 = vunpack.c.l.b16 %v194
        %v340 = vunpack.c.l.b16 %v195
        %v341 = vunpack.c.l.b16 %v196
        %v342 = vunpack.c.l.b16 %v197
        %v343 = vunpack.c.l.b16 %v198
        %v344 = vunpack.c.l.b16 %v199
        %v345 = vunpack.c.l.b16 %v200
        %v346 = vunpack.c.l.b16 %v201
        %v347 = vunpack.c.l.b16 %v202
        %v348 = vunpack.c.l.b16 %v203
        %v349 = vunpack.c.l.b16 %v204
        %v350 = vunpack.c.l.b16 %v205
        %v351 = vunpack.c.l.b16 %v206
        %v352 = vunpack.c.l.b16 %v207
        %v353 = vunpack.c.l.b16 %v208
        %v354 = vunpack.c.l.b16 %v209
        %v355 = vunpack.c.l.b16 %v210
        %v356 = vunpack.c.l.b16 %v211
        %v357 = vunpack.c.l.b16 %v212
        %v358 = vunpack.c.l.b16 %v213
        %v359 = vunpack.c.l.b16 %v214
        %v360 = vunpack.c.l.b16 %v215
        %v361 = vunpack.c.l.b16 %v216
        %v362 = vunpack.c.l.b16 %v217
        %v363 = vunpack.c.l.b16 %v218
        %v364 = vunpack.c.l.b16 %v219
        %v365 = vunpack.c.l.b16 %v220
        %v366 = vunpack.c.l.b16 %v221
        %v367 = vunpack.c.l.b16 %v222
        %v368 = vunpack.c.l.b16 %v223
        %v369 = vunpack.c.l.b16 %v224
        %v370 = vunpack.c.l.b16 %v225
        %v371 = vunpack.c.l.b16 %v226
        %v372 = vunpack.c.l.b16 %v227
        %v373 = vunpack.c.l.b16 %v228
        %v374 = vunpack.c.l.b16 %v229
        %v375 = vunpack.c.l.b16 %v230
        %v376 = vunpack.c.l.b16 %v231
        %v377 = vunpack.c.l.b16 %v232
        %v378 = vunpack.c.l.b16 %v233
        %v379 = vunpack.c.l.b16 %v234
        %v380 = vunpack.c.l.b16 %v235
        %v381 = vunpack.c.l.b16 %v236
        %v382 = vunpack.c.l.b16 %v237
        %v383 = vunpack.c.l.b16 %v238
        %v384 = vunpack.c.l.b16 %v239
        %v385 = vunpack.c.l.b16 %v240
        %v386 = vunpack.c.l.b16 %v241
        %v387 = vunpack.c.l.b16 %v242
        %v388 = vunpack.c.l.b16 %v243
        %v389 = vunpack.c.l.b16 %v244
        %v390 = vunpack.c.l.b16 %v245
        %v391 = vunpack.c.l.b16 %v246
        %v392 = vunpack.c.l.b16 %v247
        %v393 = vunpack.c.l.b16 %v248
        %v394 = vunpack.c.l.b16 %v249
        %v395 = vunpack.c.l.b16 %v250
        %v396 = vunpack.c.l.b16 %v251
        %v397 = vunpack.c.l.b16 %v252
        %v398 = vunpack.c.l.b16 %v253
        %v399 = vunpack.c.l.b16 %v254
        %v400 = vunpack.c.l.b16 %v255
        %v401 = vunpack.c.l.b16 %v256
        %v402 = vpack.c.b16 %v339, %v338
        %v403 = vpack.c.b16 %v341, %v340
        %v404 = vpack.c.b16 %v343, %v342
        %v405 = vpack.c.b16 %v345, %v344
        %v406 = vpack.c.b16 %v347, %v346
        %v407 = vpack.c.b16 %v349, %v348
        %v408 = vpack.c.b16 %v351, %v350
        %v409 = vpack.c.b16 %v353, %v352
        %v410 = vpack.c.b16 %v355, %v354
        %v411 = vpack.c.b16 %v357, %v356
        %v412 = vpack.c.b16 %v359, %v358
        %v413 = vpack.c.b16 %v361, %v360
        %v414 = vpack.c.b16 %v363, %v362
        %v415 = vpack.c.b16 %v365, %v364
        %v416 = vpack.c.b16 %v367, %v366
        %v417 = vpack.c.b16 %v369, %v368
        %v418 = vpack.c.b16 %v371, %v370
        %v419 = vpack.c.b16 %v373, %v372
        %v420 = vpack.c.b16 %v375, %v374
        %v421 = vpack.c.b16 %v377, %v376
        %v422 = vpack.c.b16 %v379, %v378
        %v423 = vpack.c.b16 %v381, %v380
        %v424 = vpack.c.b16 %v383, %v382
        %v425 = vpack.c.b16 %v385, %v384
        %v426 = vpack.c.b16 %v387, %v386
        %v427 = vpack.c.b16 %v389, %v388
        %v428 = vpack.c.b16 %v391, %v390
        %v429 = vpack.c.b16 %v393, %v392
        %v430 = vpack.c.b16 %v395, %v394
        %v431 = vpack.c.b16 %v397, %v396
        %v432 = vpack.c.b16 %v399, %v398
        %v433 = vpack.c.b16 %v401, %v400
        %v444 = vunpack.c.l.b16 %v257
        %v445 = vunpack.c.l.b16 %v258
        %v446 = vunpack.c.l.b16 %v259
        %v447 = vunpack.c.l.b16 %v260
        %v448 = vunpack.c.l.b16 %v261
        %v449 = vunpack.c.l.b16 %v262
        %v450 = vunpack.c.l.b16 %v263
        %v451 = vunpack.c.l.b16 %v264
        %v452 = vunpack.c.l.b16 %v265
        %v453 = vunpack.c.l.b16 %v266
        %v454 = vpack.c.b16 %v445, %v444
        %v455 = vpack.c.b16 %v447, %v446
        %v456 = vpack.c.b16 %v449, %v448
        %v457 = vpack.c.b16 %v451, %v450
        %v458 = vpack.c.b16 %v453, %v452
        %vm463 = vcmask 613376
        %v465 = vsel %vm463, %v402, 0
        %v468 = vsel %vm463, %v403, 0
        %v471 = vsel %vm463, %v404, 0
        %v474 = vsel %vm463, %v405, 0
        %v477 = vsel %vm463, %v406, 0
        %v480 = vsel %vm463, %v407, 0
        %v483 = vsel %vm463, %v408, 0
        %v486 = vsel %vm463, %v409, 0
        %v489 = vsel %vm463, %v410, 0
        %v492 = vsel %vm463, %v411, 0
        %v495 = vsel %vm463, %v412, 0
        %v498 = vsel %vm463, %v413, 0
        %v501 = vsel %vm463, %v414, 0
        %v504 = vsel %vm463, %v415, 0
        %v507 = vsel %vm463, %v416, 0
        %v510 = vsel %vm463, %v417, 0
        %v513 = vsel %vm463, %v418, 0
        %v516 = vsel %vm463, %v419, 0
        %v519 = vsel %vm463, %v420, 0
        %v522 = vsel %vm463, %v421, 0
        %v525 = vsel %vm463, %v422, 0
        %v528 = vsel %vm463, %v423, 0
        %v531 = vsel %vm463, %v424, 0
        %v534 = vsel %vm463, %v425, 0
        %v537 = vsel %vm463, %v426, 0
        %v540 = vsel %vm463, %v427, 0
        %v543 = vsel %vm463, %v428, 0
        %v546 = vsel %vm463, %v429, 0
        %v549 = vsel %vm463, %v430, 0
        %v552 = vsel %vm463, %v431, 0
        %v555 = vsel %vm463, %v432, 0
        %v558 = vsel %vm463, %v433, 0
        %vm560 = vcmask 1044480
        %vm561 = vcmask 1045504
        %v562 = vsel %vm560, 4294967295, 65535
        %v563 = vsel %vm561, %v562, 0
        %v565 = vand.u32 %v458, %v563
        %567 = vmatprep.subr.bf16.mxu0 0
        %568 = vmatpush1.bf16.msra.mxu0 0
        %569 = vmatprep.subr.bf16.mxu0 0
        %570 = vmatpush1.bf16.msra.mxu0 0
        %571 = vmatprep.subr.bf16.mxu0 0
        %572 = vmatpush1.bf16.msra.mxu0 0
        %573 = vmatprep.subr.bf16.mxu0 0
        %574 = vmatpush1.bf16.msra.mxu0 %v565
        %575 = vmatprep.subr.bf16.mxu0 0
        %576 = vmatpush1.bf16.msra.mxu0 %v457
        %577 = vmatprep.subr.bf16.mxu0 0
        %578 = vmatpush1.bf16.msra.mxu0 %v456
        %579 = vmatprep.subr.bf16.mxu0 0
        %580 = vmatpush1.bf16.msra.mxu0 %v455
        %581 = vmatprep.subr.bf16.mxu0 0
        %582 = vmatpush1.bf16.msra.mxu0 %v454
        %583 = vmatprep.subr.bf16.mxu0 0
        %584 = vmatpush2.bf16.msra.mxu0 0
        %585 = vmatprep.subr.bf16.mxu0 0
        %586 = vmatpush2.bf16.msra.mxu0 0
        %587 = vmatprep.subr.bf16.mxu0 0
        %588 = vmatpush2.bf16.msra.mxu0 0
        %589 = vmatprep.subr.bf16.mxu0 0
        %590 = vmatpush2.bf16.msra.mxu0 0
        %591 = vmatprep.subr.bf16.mxu0 0
        %592 = vmatpush2.bf16.msra.mxu0 0
        %593 = vmatprep.subr.bf16.mxu0 0
        %594 = vmatpush2.bf16.msra.mxu0 0
        %595 = vmatprep.subr.bf16.mxu0 0
        %596 = vmatpush2.bf16.msra.mxu0 0
        %597 = vmatprep.subr.bf16.mxu0 0
        %598 = vmatpush2.bf16.msra.mxu0 0
        %599 = vmatprep.mubr.bf16.mxu0 0
        %600 = vmatmul.mubr.bf16.gmra.mxu0 %v465
        %v601 = vpop.f32.mrf.mxu0
        %v602 = vadd.f32 %v272, %v601
        %v603 = vpop.f32.mrf.mxu0
        %v604 = vpop.f32.mrf.mxu0
        %v605 = vadd.f32 %v272, %v604
        %v606 = vpop.f32.mrf.mxu0
        %607 = vmatprep.mubr.bf16.mxu0 0
        %608 = vmatmul.mubr.bf16.gmra.mxu0 %v468
        %v609 = vpop.f32.mrf.mxu0
        %v610 = vadd.f32 %v272, %v609
        %v611 = vpop.f32.mrf.mxu0
        %v612 = vpop.f32.mrf.mxu0
        %v613 = vadd.f32 %v272, %v612
        %v614 = vpop.f32.mrf.mxu0
        %615 = vmatprep.mubr.bf16.mxu0 0
        %616 = vmatmul.mubr.bf16.gmra.mxu0 %v471
        %v617 = vpop.f32.mrf.mxu0
        %v618 = vadd.f32 %v272, %v617
        %v619 = vpop.f32.mrf.mxu0
        %v620 = vpop.f32.mrf.mxu0
        %v621 = vadd.f32 %v272, %v620
        %v622 = vpop.f32.mrf.mxu0
        %623 = vmatprep.mubr.bf16.mxu0 0
        %624 = vmatmul.mubr.bf16.gmra.mxu0 %v474
        %v625 = vpop.f32.mrf.mxu0
        %v626 = vadd.f32 %v272, %v625
        %v627 = vpop.f32.mrf.mxu0
        %v628 = vpop.f32.mrf.mxu0
        %v629 = vadd.f32 %v272, %v628
        %v630 = vpop.f32.mrf.mxu0
        %631 = vmatprep.mubr.bf16.mxu0 0
        %632 = vmatmul.mubr.bf16.gmra.mxu0 %v477
        %v633 = vpop.f32.mrf.mxu0
        %v634 = vadd.f32 %v272, %v633
        %v635 = vpop.f32.mrf.mxu0
        %v636 = vpop.f32.mrf.mxu0
        %v637 = vadd.f32 %v272, %v636
        %v638 = vpop.f32.mrf.mxu0
        %639 = vmatprep.mubr.bf16.mxu0 0
        %640 = vmatmul.mubr.bf16.gmra.mxu0 %v480
        %v641 = vpop.f32.mrf.mxu0
        %v642 = vadd.f32 %v272, %v641
        %v643 = vpop.f32.mrf.mxu0
        %v644 = vpop.f32.mrf.mxu0
        %v645 = vadd.f32 %v272, %v644
        %v646 = vpop.f32.mrf.mxu0
        %647 = vmatprep.mubr.bf16.mxu0 0
        %648 = vmatmul.mubr.bf16.gmra.mxu0 %v483
        %v649 = vpop.f32.mrf.mxu0
        %v650 = vadd.f32 %v272, %v649
        %v651 = vpop.f32.mrf.mxu0
        %v652 = vpop.f32.mrf.mxu0
        %v653 = vadd.f32 %v272, %v652
        %v654 = vpop.f32.mrf.mxu0
        %655 = vmatprep.mubr.bf16.mxu0 0
        %656 = vmatmul.mubr.bf16.gmra.mxu0 %v486
        %v657 = vpop.f32.mrf.mxu0
        %v658 = vadd.f32 %v272, %v657
        %v659 = vpop.f32.mrf.mxu0
        %v660 = vpop.f32.mrf.mxu0
        %v661 = vadd.f32 %v272, %v660
        %v662 = vpop.f32.mrf.mxu0
        %663 = vmatprep.mubr.bf16.mxu0 0
        %664 = vmatmul.mubr.bf16.gmra.mxu0 %v489
        %v665 = vpop.f32.mrf.mxu0
        %v666 = vadd.f32 %v272, %v665
        %v667 = vpop.f32.mrf.mxu0
        %v668 = vpop.f32.mrf.mxu0
        %v669 = vadd.f32 %v272, %v668
        %v670 = vpop.f32.mrf.mxu0
        %671 = vmatprep.mubr.bf16.mxu0 0
        %672 = vmatmul.mubr.bf16.gmra.mxu0 %v492
        %v673 = vpop.f32.mrf.mxu0
        %v674 = vadd.f32 %v272, %v673
        %v675 = vpop.f32.mrf.mxu0
        %v676 = vpop.f32.mrf.mxu0
        %v677 = vadd.f32 %v272, %v676
        %v678 = vpop.f32.mrf.mxu0
        %679 = vmatprep.mubr.bf16.mxu0 0
        %680 = vmatmul.mubr.bf16.gmra.mxu0 %v495
        %v681 = vpop.f32.mrf.mxu0
        %v682 = vadd.f32 %v272, %v681
        %v683 = vpop.f32.mrf.mxu0
        %v684 = vpop.f32.mrf.mxu0
        %v685 = vadd.f32 %v272, %v684
        %v686 = vpop.f32.mrf.mxu0
        %687 = vmatprep.mubr.bf16.mxu0 0
        %688 = vmatmul.mubr.bf16.gmra.mxu0 %v498
        %v689 = vpop.f32.mrf.mxu0
        %v690 = vadd.f32 %v272, %v689
        %v691 = vpop.f32.mrf.mxu0
        %v692 = vpop.f32.mrf.mxu0
        %v693 = vadd.f32 %v272, %v692
        %v694 = vpop.f32.mrf.mxu0
        %695 = vmatprep.mubr.bf16.mxu0 0
        %696 = vmatmul.mubr.bf16.gmra.mxu0 %v501
        %v697 = vpop.f32.mrf.mxu0
        %v698 = vadd.f32 %v272, %v697
        %v699 = vpop.f32.mrf.mxu0
        %v700 = vpop.f32.mrf.mxu0
        %v701 = vadd.f32 %v272, %v700
        %v702 = vpop.f32.mrf.mxu0
        %703 = vmatprep.mubr.bf16.mxu0 0
        %704 = vmatmul.mubr.bf16.gmra.mxu0 %v504
        %v705 = vpop.f32.mrf.mxu0
        %v706 = vadd.f32 %v272, %v705
        %v707 = vpop.f32.mrf.mxu0
        %v708 = vpop.f32.mrf.mxu0
        %v709 = vadd.f32 %v272, %v708
        %v710 = vpop.f32.mrf.mxu0
        %711 = vmatprep.mubr.bf16.mxu0 0
        %712 = vmatmul.mubr.bf16.gmra.mxu0 %v507
        %v713 = vpop.f32.mrf.mxu0
        %v714 = vadd.f32 %v272, %v713
        %v715 = vpop.f32.mrf.mxu0
        %v716 = vpop.f32.mrf.mxu0
        %v717 = vadd.f32 %v272, %v716
        %v718 = vpop.f32.mrf.mxu0
        %719 = vmatprep.mubr.bf16.mxu0 0
        %720 = vmatmul.mubr.bf16.gmra.mxu0 %v510
        %v721 = vpop.f32.mrf.mxu0
        %v722 = vadd.f32 %v272, %v721
        %v723 = vpop.f32.mrf.mxu0
        %v724 = vpop.f32.mrf.mxu0
        %v725 = vadd.f32 %v272, %v724
        %v726 = vpop.f32.mrf.mxu0
        %727 = vmatprep.mubr.bf16.mxu0 0
        %728 = vmatmul.mubr.bf16.gmra.mxu0 %v513
        %v729 = vpop.f32.mrf.mxu0
        %v730 = vadd.f32 %v272, %v729
        %v731 = vpop.f32.mrf.mxu0
        %v732 = vpop.f32.mrf.mxu0
        %v733 = vadd.f32 %v272, %v732
        %v734 = vpop.f32.mrf.mxu0
        %735 = vmatprep.mubr.bf16.mxu0 0
        %736 = vmatmul.mubr.bf16.gmra.mxu0 %v516
        %v737 = vpop.f32.mrf.mxu0
        %v738 = vadd.f32 %v272, %v737
        %v739 = vpop.f32.mrf.mxu0
        %v740 = vpop.f32.mrf.mxu0
        %v741 = vadd.f32 %v272, %v740
        %v742 = vpop.f32.mrf.mxu0
        %743 = vmatprep.mubr.bf16.mxu0 0
        %744 = vmatmul.mubr.bf16.gmra.mxu0 %v519
        %v745 = vpop.f32.mrf.mxu0
        %v746 = vadd.f32 %v272, %v745
        %v747 = vpop.f32.mrf.mxu0
        %v748 = vpop.f32.mrf.mxu0
        %v749 = vadd.f32 %v272, %v748
        %v750 = vpop.f32.mrf.mxu0
        %751 = vmatprep.mubr.bf16.mxu0 0
        %752 = vmatmul.mubr.bf16.gmra.mxu0 %v522
        %v753 = vpop.f32.mrf.mxu0
        %v754 = vadd.f32 %v272, %v753
        %v755 = vpop.f32.mrf.mxu0
        %v756 = vpop.f32.mrf.mxu0
        %v757 = vadd.f32 %v272, %v756
        %v758 = vpop.f32.mrf.mxu0
        %759 = vmatprep.mubr.bf16.mxu0 0
        %760 = vmatmul.mubr.bf16.gmra.mxu0 %v525
        %v761 = vpop.f32.mrf.mxu0
        %v762 = vadd.f32 %v272, %v761
        %v763 = vpop.f32.mrf.mxu0
        %v764 = vpop.f32.mrf.mxu0
        %v765 = vadd.f32 %v272, %v764
        %v766 = vpop.f32.mrf.mxu0
        %767 = vmatprep.mubr.bf16.mxu0 0
        %768 = vmatmul.mubr.bf16.gmra.mxu0 %v528
        %v769 = vpop.f32.mrf.mxu0
        %v770 = vadd.f32 %v272, %v769
        %v771 = vpop.f32.mrf.mxu0
        %v772 = vpop.f32.mrf.mxu0
        %v773 = vadd.f32 %v272, %v772
        %v774 = vpop.f32.mrf.mxu0
        %775 = vmatprep.mubr.bf16.mxu0 0
        %776 = vmatmul.mubr.bf16.gmra.mxu0 %v531
        %v777 = vpop.f32.mrf.mxu0
        %v778 = vadd.f32 %v272, %v777
        %v779 = vpop.f32.mrf.mxu0
        %v780 = vpop.f32.mrf.mxu0
        %v781 = vadd.f32 %v272, %v780
        %v782 = vpop.f32.mrf.mxu0
        %783 = vmatprep.mubr.bf16.mxu0 0
        %784 = vmatmul.mubr.bf16.gmra.mxu0 %v534
        %v785 = vpop.f32.mrf.mxu0
        %v786 = vadd.f32 %v272, %v785
        %v787 = vpop.f32.mrf.mxu0
        %v788 = vpop.f32.mrf.mxu0
        %v789 = vadd.f32 %v272, %v788
        %v790 = vpop.f32.mrf.mxu0
        %791 = vmatprep.mubr.bf16.mxu0 0
        %792 = vmatmul.mubr.bf16.gmra.mxu0 %v537
        %v793 = vpop.f32.mrf.mxu0
        %v794 = vadd.f32 %v272, %v793
        %v795 = vpop.f32.mrf.mxu0
        %v796 = vpop.f32.mrf.mxu0
        %v797 = vadd.f32 %v272, %v796
        %v798 = vpop.f32.mrf.mxu0
        %799 = vmatprep.mubr.bf16.mxu0 0
        %800 = vmatmul.mubr.bf16.gmra.mxu0 %v540
        %v801 = vpop.f32.mrf.mxu0
        %v802 = vadd.f32 %v272, %v801
        %v803 = vpop.f32.mrf.mxu0
        %v804 = vpop.f32.mrf.mxu0
        %v805 = vadd.f32 %v272, %v804
        %v806 = vpop.f32.mrf.mxu0
        %807 = vmatprep.mubr.bf16.mxu0 0
        %808 = vmatmul.mubr.bf16.gmra.mxu0 %v543
        %v809 = vpop.f32.mrf.mxu0
        %v810 = vadd.f32 %v272, %v809
        %v811 = vpop.f32.mrf.mxu0
        %v812 = vpop.f32.mrf.mxu0
        %v813 = vadd.f32 %v272, %v812
        %v814 = vpop.f32.mrf.mxu0
        %815 = vmatprep.mubr.bf16.mxu0 0
        %816 = vmatmul.mubr.bf16.gmra.mxu0 %v546
        %v817 = vpop.f32.mrf.mxu0
        %v818 = vadd.f32 %v272, %v817
        %v819 = vpop.f32.mrf.mxu0
        %v820 = vpop.f32.mrf.mxu0
        %v821 = vadd.f32 %v272, %v820
        %v822 = vpop.f32.mrf.mxu0
        %823 = vmatprep.mubr.bf16.mxu0 0
        %824 = vmatmul.mubr.bf16.gmra.mxu0 %v549
        %v825 = vpop.f32.mrf.mxu0
        %v826 = vadd.f32 %v272, %v825
        %v827 = vpop.f32.mrf.mxu0
        %v828 = vpop.f32.mrf.mxu0
        %v829 = vadd.f32 %v272, %v828
        %v830 = vpop.f32.mrf.mxu0
        %831 = vmatprep.mubr.bf16.mxu0 0
        %832 = vmatmul.mubr.bf16.gmra.mxu0 %v552
        %v833 = vpop.f32.mrf.mxu0
        %v834 = vadd.f32 %v272, %v833
        %v835 = vpop.f32.mrf.mxu0
        %v836 = vpop.f32.mrf.mxu0
        %v837 = vadd.f32 %v272, %v836
        %v838 = vpop.f32.mrf.mxu0
        %839 = vmatprep.mubr.bf16.mxu0 0
        %840 = vmatmul.mubr.bf16.gmra.mxu0 %v555
        %v841 = vpop.f32.mrf.mxu0
        %v842 = vadd.f32 %v272, %v841
        %v843 = vpop.f32.mrf.mxu0
        %v844 = vpop.f32.mrf.mxu0
        %v845 = vadd.f32 %v272, %v844
        %v846 = vpop.f32.mrf.mxu0
        %847 = vmatprep.mubr.bf16.mxu0 0
        %848 = vmatmul.mubr.bf16.gmra.mxu0 %v558
        %v849 = vpop.f32.mrf.mxu0
        %v850 = vadd.f32 %v272, %v849
        %v851 = vpop.f32.mrf.mxu0
        %v852 = vpop.f32.mrf.mxu0
        %v853 = vadd.f32 %v272, %v852
        %v854 = vpop.f32.mrf.mxu0
        %855 = vdwg.mxu0
        %v856 = vmax.f32 %v602, 0.0
        %v857 = vmax.f32 %v605, 0.0
        %v858 = vmax.f32 %v610, 0.0
        %v859 = vmax.f32 %v613, 0.0
        %v860 = vmax.f32 %v618, 0.0
        %v861 = vmax.f32 %v621, 0.0
        %v862 = vmax.f32 %v626, 0.0
        %v863 = vmax.f32 %v629, 0.0
        %v864 = vmax.f32 %v634, 0.0
        %v865 = vmax.f32 %v637, 0.0
        %v866 = vmax.f32 %v642, 0.0
        %v867 = vmax.f32 %v645, 0.0
        %v868 = vmax.f32 %v650, 0.0
        %v869 = vmax.f32 %v653, 0.0
        %v870 = vmax.f32 %v658, 0.0
        %v871 = vmax.f32 %v661, 0.0
        %v872 = vmax.f32 %v666, 0.0
        %v873 = vmax.f32 %v669, 0.0
        %v874 = vmax.f32 %v674, 0.0
        %v875 = vmax.f32 %v677, 0.0
        %v876 = vmax.f32 %v682, 0.0
        %v877 = vmax.f32 %v685, 0.0
        %v878 = vmax.f32 %v690, 0.0
        %v879 = vmax.f32 %v693, 0.0
        %v880 = vmax.f32 %v698, 0.0
        %v881 = vmax.f32 %v701, 0.0
        %v882 = vmax.f32 %v706, 0.0
        %v883 = vmax.f32 %v709, 0.0
        %v884 = vmax.f32 %v714, 0.0
        %v885 = vmax.f32 %v717, 0.0
        %v886 = vmax.f32 %v722, 0.0
        %v887 = vmax.f32 %v725, 0.0
        %v888 = vmax.f32 %v730, 0.0
        %v889 = vmax.f32 %v733, 0.0
        %v890 = vmax.f32 %v738, 0.0
        %v891 = vmax.f32 %v741, 0.0
        %v892 = vmax.f32 %v746, 0.0
        %v893 = vmax.f32 %v749, 0.0
        %v894 = vmax.f32 %v754, 0.0
        %v895 = vmax.f32 %v757, 0.0
        %v896 = vmax.f32 %v762, 0.0
        %v897 = vmax.f32 %v765, 0.0
        %v898 = vmax.f32 %v770, 0.0
        %v899 = vmax.f32 %v773, 0.0
        %v900 = vmax.f32 %v778, 0.0
        %v901 = vmax.f32 %v781, 0.0
        %v902 = vmax.f32 %v786, 0.0
        %v903 = vmax.f32 %v789, 0.0
        %v904 = vmax.f32 %v794, 0.0
        %v905 = vmax.f32 %v797, 0.0
        %v906 = vmax.f32 %v802, 0.0
        %v907 = vmax.f32 %v805, 0.0
        %v908 = vmax.f32 %v810, 0.0
        %v909 = vmax.f32 %v813, 0.0
        %v910 = vmax.f32 %v818, 0.0
        %v911 = vmax.f32 %v821, 0.0
        %v912 = vmax.f32 %v826, 0.0
        %v913 = vmax.f32 %v829, 0.0
        %v914 = vmax.f32 %v834, 0.0
        %v915 = vmax.f32 %v837, 0.0
        %v916 = vmax.f32 %v842, 0.0
        %v917 = vmax.f32 %v845, 0.0
        %v918 = vmax.f32 %v850, 0.0
        %v919 = vmax.f32 %v853, 0.0
        %v920 = vpack.c.bf16 %v857, %v856
        %v921 = vpack.c.bf16 %v859, %v858
        %v922 = vpack.c.bf16 %v861, %v860
        %v923 = vpack.c.bf16 %v863, %v862
        %v924 = vpack.c.bf16 %v865, %v864
        %v925 = vpack.c.bf16 %v867, %v866
        %v926 = vpack.c.bf16 %v869, %v868
        %v927 = vpack.c.bf16 %v871, %v870
        %v928 = vpack.c.bf16 %v873, %v872
        %v929 = vpack.c.bf16 %v875, %v874
        %v930 = vpack.c.bf16 %v877, %v876
        %v931 = vpack.c.bf16 %v879, %v878
        %v932 = vpack.c.bf16 %v881, %v880
        %v933 = vpack.c.bf16 %v883, %v882
        %v934 = vpack.c.bf16 %v885, %v884
        %v935 = vpack.c.bf16 %v887, %v886
        %v936 = vpack.c.bf16 %v889, %v888
        %v937 = vpack.c.bf16 %v891, %v890
        %v938 = vpack.c.bf16 %v893, %v892
        %v939 = vpack.c.bf16 %v895, %v894
        %v940 = vpack.c.bf16 %v897, %v896
        %v941 = vpack.c.bf16 %v899, %v898
        %v942 = vpack.c.bf16 %v901, %v900
        %v943 = vpack.c.bf16 %v903, %v902
        %v944 = vpack.c.bf16 %v905, %v904
        %v945 = vpack.c.bf16 %v907, %v906
        %v946 = vpack.c.bf16 %v909, %v908
        %v947 = vpack.c.bf16 %v911, %v910
        %v948 = vpack.c.bf16 %v913, %v912
        %v949 = vpack.c.bf16 %v915, %v914
        %v950 = vpack.c.bf16 %v917, %v916
        %v951 = vpack.c.bf16 %v919, %v918
        %v984 = vunpack.c.l.b16 %v920
        %v985 = vunpack.c.h.b16 %v920
        %v986 = vunpack.c.l.b16 %v921
        %v987 = vunpack.c.h.b16 %v921
        %v988 = vunpack.c.l.b16 %v922
        %v989 = vunpack.c.h.b16 %v922
        %v990 = vunpack.c.l.b16 %v923
        %v991 = vunpack.c.h.b16 %v923
        %v992 = vunpack.c.l.b16 %v924
        %v993 = vunpack.c.h.b16 %v924
        %v994 = vunpack.c.l.b16 %v925
        %v995 = vunpack.c.h.b16 %v925
        %v996 = vunpack.c.l.b16 %v926
        %v997 = vunpack.c.h.b16 %v926
        %v998 = vunpack.c.l.b16 %v927
        %v999 = vunpack.c.h.b16 %v927
        %v1000 = vunpack.c.l.b16 %v928
        %v1001 = vunpack.c.h.b16 %v928
        %v1002 = vunpack.c.l.b16 %v929
        %v1003 = vunpack.c.h.b16 %v929
        %v1004 = vunpack.c.l.b16 %v930
        %v1005 = vunpack.c.h.b16 %v930
        %v1006 = vunpack.c.l.b16 %v931
        %v1007 = vunpack.c.h.b16 %v931
        %v1008 = vunpack.c.l.b16 %v932
        %v1009 = vunpack.c.h.b16 %v932
        %v1010 = vunpack.c.l.b16 %v933
        %v1011 = vunpack.c.h.b16 %v933
        %v1012 = vunpack.c.l.b16 %v934
        %v1013 = vunpack.c.h.b16 %v934
        %v1014 = vunpack.c.l.b16 %v935
        %v1015 = vunpack.c.h.b16 %v935
        %v1016 = vunpack.c.l.b16 %v936
        %v1017 = vunpack.c.h.b16 %v936
        %v1018 = vunpack.c.l.b16 %v937
        %v1019 = vunpack.c.h.b16 %v937
        %v1020 = vunpack.c.l.b16 %v938
        %v1021 = vunpack.c.h.b16 %v938
        %v1022 = vunpack.c.l.b16 %v939
        %v1023 = vunpack.c.h.b16 %v939
        %v1024 = vunpack.c.l.b16 %v940
        %v1025 = vunpack.c.h.b16 %v940
        %v1026 = vunpack.c.l.b16 %v941
        %v1027 = vunpack.c.h.b16 %v941
        %v1028 = vunpack.c.l.b16 %v942
        %v1029 = vunpack.c.h.b16 %v942
        %v1030 = vunpack.c.l.b16 %v943
        %v1031 = vunpack.c.h.b16 %v943
        %v1032 = vunpack.c.l.b16 %v944
        %v1033 = vunpack.c.h.b16 %v944
        %v1034 = vunpack.c.l.b16 %v945
        %v1035 = vunpack.c.h.b16 %v945
        %v1036 = vunpack.c.l.b16 %v946
        %v1037 = vunpack.c.h.b16 %v946
        %v1038 = vunpack.c.l.b16 %v947
        %v1039 = vunpack.c.h.b16 %v947
        %v1040 = vunpack.c.l.b16 %v948
        %v1041 = vunpack.c.h.b16 %v948
        %v1042 = vunpack.c.l.b16 %v949
        %v1043 = vunpack.c.h.b16 %v949
        %v1044 = vunpack.c.l.b16 %v950
        %v1045 = vunpack.c.h.b16 %v950
        %v1046 = vunpack.c.l.b16 %v951
        %v1047 = vunpack.c.h.b16 %v951
        %v1048 = vpack.c.b16 %v984, %v984
        %v1049 = vpack.c.b16 %v985, %v985
        %v1050 = vpack.c.b16 %v986, %v986
        %v1051 = vpack.c.b16 %v987, %v987
        %v1052 = vpack.c.b16 %v988, %v988
        %v1053 = vpack.c.b16 %v989, %v989
        %v1054 = vpack.c.b16 %v990, %v990
        %v1055 = vpack.c.b16 %v991, %v991
        %v1056 = vpack.c.b16 %v992, %v992
        %v1057 = vpack.c.b16 %v993, %v993
        %v1058 = vpack.c.b16 %v994, %v994
        %v1059 = vpack.c.b16 %v995, %v995
        %v1060 = vpack.c.b16 %v996, %v996
        %v1061 = vpack.c.b16 %v997, %v997
        %v1062 = vpack.c.b16 %v998, %v998
        %v1063 = vpack.c.b16 %v999, %v999
        %v1064 = vpack.c.b16 %v1000, %v1000
        %v1065 = vpack.c.b16 %v1001, %v1001
        %v1066 = vpack.c.b16 %v1002, %v1002
        %v1067 = vpack.c.b16 %v1003, %v1003
        %v1068 = vpack.c.b16 %v1004, %v1004
        %v1069 = vpack.c.b16 %v1005, %v1005
        %v1070 = vpack.c.b16 %v1006, %v1006
        %v1071 = vpack.c.b16 %v1007, %v1007
        %v1072 = vpack.c.b16 %v1008, %v1008
        %v1073 = vpack.c.b16 %v1009, %v1009
        %v1074 = vpack.c.b16 %v1010, %v1010
        %v1075 = vpack.c.b16 %v1011, %v1011
        %v1076 = vpack.c.b16 %v1012, %v1012
        %v1077 = vpack.c.b16 %v1013, %v1013
        %v1078 = vpack.c.b16 %v1014, %v1014
        %v1079 = vpack.c.b16 %v1015, %v1015
        %v1080 = vpack.c.b16 %v1016, %v1016
        %v1081 = vpack.c.b16 %v1017, %v1017
        %v1082 = vpack.c.b16 %v1018, %v1018
        %v1083 = vpack.c.b16 %v1019, %v1019
        %v1084 = vpack.c.b16 %v1020, %v1020
        %v1085 = vpack.c.b16 %v1021, %v1021
        %v1086 = vpack.c.b16 %v1022, %v1022
        %v1087 = vpack.c.b16 %v1023, %v1023
        %v1088 = vpack.c.b16 %v1024, %v1024
        %v1089 = vpack.c.b16 %v1025, %v1025
        %v1090 = vpack.c.b16 %v1026, %v1026
        %v1091 = vpack.c.b16 %v1027, %v1027
        %v1092 = vpack.c.b16 %v1028, %v1028
        %v1093 = vpack.c.b16 %v1029, %v1029
        %v1094 = vpack.c.b16 %v1030, %v1030
        %v1095 = vpack.c.b16 %v1031, %v1031
        %v1096 = vpack.c.b16 %v1032, %v1032
        %v1097 = vpack.c.b16 %v1033, %v1033
        %v1098 = vpack.c.b16 %v1034, %v1034
        %v1099 = vpack.c.b16 %v1035, %v1035
        %v1100 = vpack.c.b16 %v1036, %v1036
        %v1101 = vpack.c.b16 %v1037, %v1037
        %v1102 = vpack.c.b16 %v1038, %v1038
        %v1103 = vpack.c.b16 %v1039, %v1039
        %v1104 = vpack.c.b16 %v1040, %v1040
        %v1105 = vpack.c.b16 %v1041, %v1041
        %v1106 = vpack.c.b16 %v1042, %v1042
        %v1107 = vpack.c.b16 %v1043, %v1043
        %v1108 = vpack.c.b16 %v1044, %v1044
        %v1109 = vpack.c.b16 %v1045, %v1045
        %v1110 = vpack.c.b16 %v1046, %v1046
        %v1111 = vpack.c.b16 %v1047, %v1047
        %vm1176 = vcmask 257024
        %1177 = vst.msk [vmem:[%s172] sm:$0xf] %vm1176, %v1048
        %1178 = vst.msk [vmem:[%s172 + $0x4] sm:$0xf] %vm1176, %v1049
        %1179 = vst.msk [vmem:[%s172 + $0x8] sm:$0xf] %vm1176, %v1050
        %1180 = vst.msk [vmem:[%s172 + $0xc] sm:$0xf] %vm1176, %v1051
        %1181 = vst.msk [vmem:[%s172 + $0x10] sm:$0xf] %vm1176, %v1052
        %1182 = vst.msk [vmem:[%s172 + $0x14] sm:$0xf] %vm1176, %v1053
        %1183 = vst.msk [vmem:[%s172 + $0x18] sm:$0xf] %vm1176, %v1054
        %1184 = vst.msk [vmem:[%s172 + $0x1c] sm:$0xf] %vm1176, %v1055
        %1185 = vst.msk [vmem:[%s172 + $0x20] sm:$0xf] %vm1176, %v1056
        %1186 = vst.msk [vmem:[%s172 + $0x24] sm:$0xf] %vm1176, %v1057
        %1187 = vst.msk [vmem:[%s172 + $0x28] sm:$0xf] %vm1176, %v1058
        %1188 = vst.msk [vmem:[%s172 + $0x2c] sm:$0xf] %vm1176, %v1059
        %1189 = vst.msk [vmem:[%s172 + $0x30] sm:$0xf] %vm1176, %v1060
        %1190 = vst.msk [vmem:[%s172 + $0x34] sm:$0xf] %vm1176, %v1061
        %1191 = vst.msk [vmem:[%s172 + $0x38] sm:$0xf] %vm1176, %v1062
        %1192 = vst.msk [vmem:[%s172 + $0x3c] sm:$0xf] %vm1176, %v1063
        %1193 = vst.msk [vmem:[%s172 + $0x40] sm:$0xf] %vm1176, %v1064
        %1194 = vst.msk [vmem:[%s172 + $0x44] sm:$0xf] %vm1176, %v1065
        %1195 = vst.msk [vmem:[%s172 + $0x48] sm:$0xf] %vm1176, %v1066
        %1196 = vst.msk [vmem:[%s172 + $0x4c] sm:$0xf] %vm1176, %v1067
        %1197 = vst.msk [vmem:[%s172 + $0x50] sm:$0xf] %vm1176, %v1068
        %1198 = vst.msk [vmem:[%s172 + $0x54] sm:$0xf] %vm1176, %v1069
        %1199 = vst.msk [vmem:[%s172 + $0x58] sm:$0xf] %vm1176, %v1070
        %1200 = vst.msk [vmem:[%s172 + $0x5c] sm:$0xf] %vm1176, %v1071
        %1201 = vst.msk [vmem:[%s172 + $0x60] sm:$0xf] %vm1176, %v1072
        %1202 = vst.msk [vmem:[%s172 + $0x64] sm:$0xf] %vm1176, %v1073
        %1203 = vst.msk [vmem:[%s172 + $0x68] sm:$0xf] %vm1176, %v1074
        %1204 = vst.msk [vmem:[%s172 + $0x6c] sm:$0xf] %vm1176, %v1075
        %1205 = vst.msk [vmem:[%s172 + $0x70] sm:$0xf] %vm1176, %v1076
        %1206 = vst.msk [vmem:[%s172 + $0x74] sm:$0xf] %vm1176, %v1077
        %1207 = vst.msk [vmem:[%s172 + $0x78] sm:$0xf] %vm1176, %v1078
        %1208 = vst.msk [vmem:[%s172 + $0x7c] sm:$0xf] %vm1176, %v1079
        %1209 = vst.msk [vmem:[%s172 + $0x80] sm:$0xf] %vm1176, %v1080
        %1210 = vst.msk [vmem:[%s172 + $0x84] sm:$0xf] %vm1176, %v1081
        %1211 = vst.msk [vmem:[%s172 + $0x88] sm:$0xf] %vm1176, %v1082
        %1212 = vst.msk [vmem:[%s172 + $0x8c] sm:$0xf] %vm1176, %v1083
        %1213 = vst.msk [vmem:[%s172 + $0x90] sm:$0xf] %vm1176, %v1084
        %1214 = vst.msk [vmem:[%s172 + $0x94] sm:$0xf] %vm1176, %v1085
        %1215 = vst.msk [vmem:[%s172 + $0x98] sm:$0xf] %vm1176, %v1086
        %1216 = vst.msk [vmem:[%s172 + $0x9c] sm:$0xf] %vm1176, %v1087
        %1217 = vst.msk [vmem:[%s172 + $0xa0] sm:$0xf] %vm1176, %v1088
        %1218 = vst.msk [vmem:[%s172 + $0xa4] sm:$0xf] %vm1176, %v1089
        %1219 = vst.msk [vmem:[%s172 + $0xa8] sm:$0xf] %vm1176, %v1090
        %1220 = vst.msk [vmem:[%s172 + $0xac] sm:$0xf] %vm1176, %v1091
        %1221 = vst.msk [vmem:[%s172 + $0xb0] sm:$0xf] %vm1176, %v1092
        %1222 = vst.msk [vmem:[%s172 + $0xb4] sm:$0xf] %vm1176, %v1093
        %1223 = vst.msk [vmem:[%s172 + $0xb8] sm:$0xf] %vm1176, %v1094
        %1224 = vst.msk [vmem:[%s172 + $0xbc] sm:$0xf] %vm1176, %v1095
        %1225 = vst.msk [vmem:[%s172 + $0xc0] sm:$0xf] %vm1176, %v1096
        %1226 = vst.msk [vmem:[%s172 + $0xc4] sm:$0xf] %vm1176, %v1097
        %1227 = vst.msk [vmem:[%s172 + $0xc8] sm:$0xf] %vm1176, %v1098
        %1228 = vst.msk [vmem:[%s172 + $0xcc] sm:$0xf] %vm1176, %v1099
        %1229 = vst.msk [vmem:[%s172 + $0xd0] sm:$0xf] %vm1176, %v1100
        %1230 = vst.msk [vmem:[%s172 + $0xd4] sm:$0xf] %vm1176, %v1101
        %1231 = vst.msk [vmem:[%s172 + $0xd8] sm:$0xf] %vm1176, %v1102
        %1232 = vst.msk [vmem:[%s172 + $0xdc] sm:$0xf] %vm1176, %v1103
        %1233 = vst.msk [vmem:[%s172 + $0xe0] sm:$0xf] %vm1176, %v1104
        %1234 = vst.msk [vmem:[%s172 + $0xe4] sm:$0xf] %vm1176, %v1105
        %1235 = vst.msk [vmem:[%s172 + $0xe8] sm:$0xf] %vm1176, %v1106
        %1236 = vst.msk [vmem:[%s172 + $0xec] sm:$0xf] %vm1176, %v1107
        %1237 = vst.msk [vmem:[%s172 + $0xf0] sm:$0xf] %vm1176, %v1108
        %1238 = vst.msk [vmem:[%s172 + $0xf4] sm:$0xf] %vm1176, %v1109
        %1239 = vst.msk [vmem:[%s172 + $0xf8] sm:$0xf] %vm1176, %v1110
        %1240 = vst.msk [vmem:[%s172 + $0xfc] sm:$0xf] %vm1176, %v1111
        %s1241 = sand.u32 %s90, 1
        %s1242 = sand.u32 %s90, 1
        %s1243 = smul.addr %s1242, 256
        %s1244 = scalar_lea.vmem [#allocation2], %s1243
        // Predicated region
        $region33: #{coinrun_critic_forward.4} parent=31 // pred_check
          %p1245 = pneg %p100
        $region34: #{coinrun_critic_forward.4} parent=31 // pred_check_branch
          %1247 = sbr.rel (%p1245) target = $region36
        $region35: #{coinrun_critic_forward.4} parent=31 // pred_region
          %s1248 = smul.u32 64, %s14
          %s1249 = ssub.s32 225, %s1248
          %p1250 = scmp.lt.s32.totalorder %s1249, 64
          %s1251 = scalar_select %p1250, %s1249, 64
          %s1252 = smul.u32 64, %s1251
          %p1253 = scmp.ne.s32.totalorder 0, %s1252
          %s1254 = smul.addr %s1248, 4
          %s1255 = scalar_lea.vmem %s3, %s1254
          // Predicated region
          $region37: #{coinrun_critic_forward.4} parent=35 // pred_check
            %p1256 = pneg %p1253
          $region38: #{coinrun_critic_forward.4} parent=35 // pred_check_branch
            %1258 = sbr.rel (%p1256) target = $region40
          $region39: #{coinrun_critic_forward.4} parent=35 // pred_region
            // Predicated region
            $region41: #{coinrun_critic_forward.4} parent=39 // pred_check
              _
            $region42: #{coinrun_critic_forward.4} parent=39 // pred_check_branch
              %1260 = sbr.rel target = $region44
            $region43: #{coinrun_critic_forward.4} parent=39 // pred_region
              // Predicated region
              $region63: #{coinrun_critic_forward.4} parent=43 // pred_check
                _
              $region64: #{coinrun_critic_forward.4} parent=43 // pred_check_branch
                %1436 = sbr.rel (0) target = $region66
              $region65: #{coinrun_critic_forward.4} parent=43 // pred_region
                %s1438 = ssub.s32 16, 1
                %s1439 = sshrl.u32 %s1251, 6
                // While loop
                $region67: #{coinrun_critic_forward.4} parent=65 // loop_pre_header
                  _
                $region68: #{coinrun_critic_forward.4} parent=65 // loop_header
                  %s1441 = sphi 0, %s1443
                  %p1442 = scmp.ge.s32.totalorder %s1441, %s1439
                  %s1446 = sphi 0, %s1579
                  %s1447 = sphi %s1244, %s1582
                  %s1448 = sphi %s1255, %s1583
                $region69: #{coinrun_critic_forward.4} parent=65 // loop_header_branch
                  %1445 = sbr.rel (%p1442) target = $region73
                $region70: #{coinrun_critic_forward.4} parent=65 // loop_body
                  %v1449 = vld [vmem:[%s1447] sm:%s1438]
                  %1450 = vst [vmem:[%s1448] sm:%s1438] %v1449
                  %v1451 = vld [vmem:[%s1447 + $0x4] sm:%s1438]
                  %1452 = vst [vmem:[%s1448 + $0x4] sm:%s1438] %v1451
                  %v1453 = vld [vmem:[%s1447 + $0x8] sm:%s1438]
                  %1454 = vst [vmem:[%s1448 + $0x8] sm:%s1438] %v1453
                  %v1455 = vld [vmem:[%s1447 + $0xc] sm:%s1438]
                  %1456 = vst [vmem:[%s1448 + $0xc] sm:%s1438] %v1455
                  %v1457 = vld [vmem:[%s1447 + $0x10] sm:%s1438]
                  %1458 = vst [vmem:[%s1448 + $0x10] sm:%s1438] %v1457
                  %v1459 = vld [vmem:[%s1447 + $0x14] sm:%s1438]
                  %1460 = vst [vmem:[%s1448 + $0x14] sm:%s1438] %v1459
                  %v1461 = vld [vmem:[%s1447 + $0x18] sm:%s1438]
                  %1462 = vst [vmem:[%s1448 + $0x18] sm:%s1438] %v1461
                  %v1463 = vld [vmem:[%s1447 + $0x1c] sm:%s1438]
                  %1464 = vst [vmem:[%s1448 + $0x1c] sm:%s1438] %v1463
                  %v1465 = vld [vmem:[%s1447 + $0x20] sm:%s1438]
                  %1466 = vst [vmem:[%s1448 + $0x20] sm:%s1438] %v1465
                  %v1467 = vld [vmem:[%s1447 + $0x24] sm:%s1438]
                  %1468 = vst [vmem:[%s1448 + $0x24] sm:%s1438] %v1467
                  %v1469 = vld [vmem:[%s1447 + $0x28] sm:%s1438]
                  %1470 = vst [vmem:[%s1448 + $0x28] sm:%s1438] %v1469
                  %v1471 = vld [vmem:[%s1447 + $0x2c] sm:%s1438]
                  %1472 = vst [vmem:[%s1448 + $0x2c] sm:%s1438] %v1471
                  %v1473 = vld [vmem:[%s1447 + $0x30] sm:%s1438]
                  %1474 = vst [vmem:[%s1448 + $0x30] sm:%s1438] %v1473
                  %v1475 = vld [vmem:[%s1447 + $0x34] sm:%s1438]
                  %1476 = vst [vmem:[%s1448 + $0x34] sm:%s1438] %v1475
                  %v1477 = vld [vmem:[%s1447 + $0x38] sm:%s1438]
                  %1478 = vst [vmem:[%s1448 + $0x38] sm:%s1438] %v1477
                  %v1479 = vld [vmem:[%s1447 + $0x3c] sm:%s1438]
                  %1480 = vst [vmem:[%s1448 + $0x3c] sm:%s1438] %v1479
                  %v1481 = vld [vmem:[%s1447 + $0x40] sm:%s1438]
                  %1482 = vst [vmem:[%s1448 + $0x40] sm:%s1438] %v1481
                  %v1483 = vld [vmem:[%s1447 + $0x44] sm:%s1438]
                  %1484 = vst [vmem:[%s1448 + $0x44] sm:%s1438] %v1483
                  %v1485 = vld [vmem:[%s1447 + $0x48] sm:%s1438]
                  %1486 = vst [vmem:[%s1448 + $0x48] sm:%s1438] %v1485
                  %v1487 = vld [vmem:[%s1447 + $0x4c] sm:%s1438]
                  %1488 = vst [vmem:[%s1448 + $0x4c] sm:%s1438] %v1487
                  %v1489 = vld [vmem:[%s1447 + $0x50] sm:%s1438]
                  %1490 = vst [vmem:[%s1448 + $0x50] sm:%s1438] %v1489
                  %v1491 = vld [vmem:[%s1447 + $0x54] sm:%s1438]
                  %1492 = vst [vmem:[%s1448 + $0x54] sm:%s1438] %v1491
                  %v1493 = vld [vmem:[%s1447 + $0x58] sm:%s1438]
                  %1494 = vst [vmem:[%s1448 + $0x58] sm:%s1438] %v1493
                  %v1495 = vld [vmem:[%s1447 + $0x5c] sm:%s1438]
                  %1496 = vst [vmem:[%s1448 + $0x5c] sm:%s1438] %v1495
                  %v1497 = vld [vmem:[%s1447 + $0x60] sm:%s1438]
                  %1498 = vst [vmem:[%s1448 + $0x60] sm:%s1438] %v1497
                  %v1499 = vld [vmem:[%s1447 + $0x64] sm:%s1438]
                  %1500 = vst [vmem:[%s1448 + $0x64] sm:%s1438] %v1499
                  %v1501 = vld [vmem:[%s1447 + $0x68] sm:%s1438]
                  %1502 = vst [vmem:[%s1448 + $0x68] sm:%s1438] %v1501
                  %v1503 = vld [vmem:[%s1447 + $0x6c] sm:%s1438]
                  %1504 = vst [vmem:[%s1448 + $0x6c] sm:%s1438] %v1503
                  %v1505 = vld [vmem:[%s1447 + $0x70] sm:%s1438]
                  %1506 = vst [vmem:[%s1448 + $0x70] sm:%s1438] %v1505
                  %v1507 = vld [vmem:[%s1447 + $0x74] sm:%s1438]
                  %1508 = vst [vmem:[%s1448 + $0x74] sm:%s1438] %v1507
                  %v1509 = vld [vmem:[%s1447 + $0x78] sm:%s1438]
                  %1510 = vst [vmem:[%s1448 + $0x78] sm:%s1438] %v1509
                  %v1511 = vld [vmem:[%s1447 + $0x7c] sm:%s1438]
                  %1512 = vst [vmem:[%s1448 + $0x7c] sm:%s1438] %v1511
                  %v1513 = vld [vmem:[%s1447 + $0x80] sm:%s1438]
                  %1514 = vst [vmem:[%s1448 + $0x80] sm:%s1438] %v1513
                  %v1515 = vld [vmem:[%s1447 + $0x84] sm:%s1438]
                  %1516 = vst [vmem:[%s1448 + $0x84] sm:%s1438] %v1515
                  %v1517 = vld [vmem:[%s1447 + $0x88] sm:%s1438]
                  %1518 = vst [vmem:[%s1448 + $0x88] sm:%s1438] %v1517
                  %v1519 = vld [vmem:[%s1447 + $0x8c] sm:%s1438]
                  %1520 = vst [vmem:[%s1448 + $0x8c] sm:%s1438] %v1519
                  %v1521 = vld [vmem:[%s1447 + $0x90] sm:%s1438]
                  %1522 = vst [vmem:[%s1448 + $0x90] sm:%s1438] %v1521
                  %v1523 = vld [vmem:[%s1447 + $0x94] sm:%s1438]
                  %1524 = vst [vmem:[%s1448 + $0x94] sm:%s1438] %v1523
                  %v1525 = vld [vmem:[%s1447 + $0x98] sm:%s1438]
                  %1526 = vst [vmem:[%s1448 + $0x98] sm:%s1438] %v1525
                  %v1527 = vld [vmem:[%s1447 + $0x9c] sm:%s1438]
                  %1528 = vst [vmem:[%s1448 + $0x9c] sm:%s1438] %v1527
                  %v1529 = vld [vmem:[%s1447 + $0xa0] sm:%s1438]
                  %1530 = vst [vmem:[%s1448 + $0xa0] sm:%s1438] %v1529
                  %v1531 = vld [vmem:[%s1447 + $0xa4] sm:%s1438]
                  %1532 = vst [vmem:[%s1448 + $0xa4] sm:%s1438] %v1531
                  %v1533 = vld [vmem:[%s1447 + $0xa8] sm:%s1438]
                  %1534 = vst [vmem:[%s1448 + $0xa8] sm:%s1438] %v1533
                  %v1535 = vld [vmem:[%s1447 + $0xac] sm:%s1438]
                  %1536 = vst [vmem:[%s1448 + $0xac] sm:%s1438] %v1535
                  %v1537 = vld [vmem:[%s1447 + $0xb0] sm:%s1438]
                  %1538 = vst [vmem:[%s1448 + $0xb0] sm:%s1438] %v1537
                  %v1539 = vld [vmem:[%s1447 + $0xb4] sm:%s1438]
                  %1540 = vst [vmem:[%s1448 + $0xb4] sm:%s1438] %v1539
                  %v1541 = vld [vmem:[%s1447 + $0xb8] sm:%s1438]
                  %1542 = vst [vmem:[%s1448 + $0xb8] sm:%s1438] %v1541
                  %v1543 = vld [vmem:[%s1447 + $0xbc] sm:%s1438]
                  %1544 = vst [vmem:[%s1448 + $0xbc] sm:%s1438] %v1543
                  %v1545 = vld [vmem:[%s1447 + $0xc0] sm:%s1438]
                  %1546 = vst [vmem:[%s1448 + $0xc0] sm:%s1438] %v1545
                  %v1547 = vld [vmem:[%s1447 + $0xc4] sm:%s1438]
                  %1548 = vst [vmem:[%s1448 + $0xc4] sm:%s1438] %v1547
                  %v1549 = vld [vmem:[%s1447 + $0xc8] sm:%s1438]
                  %1550 = vst [vmem:[%s1448 + $0xc8] sm:%s1438] %v1549
                  %v1551 = vld [vmem:[%s1447 + $0xcc] sm:%s1438]
                  %1552 = vst [vmem:[%s1448 + $0xcc] sm:%s1438] %v1551
                  %v1553 = vld [vmem:[%s1447 + $0xd0] sm:%s1438]
                  %1554 = vst [vmem:[%s1448 + $0xd0] sm:%s1438] %v1553
                  %v1555 = vld [vmem:[%s1447 + $0xd4] sm:%s1438]
                  %1556 = vst [vmem:[%s1448 + $0xd4] sm:%s1438] %v1555
                  %v1557 = vld [vmem:[%s1447 + $0xd8] sm:%s1438]
                  %1558 = vst [vmem:[%s1448 + $0xd8] sm:%s1438] %v1557
                  %v1559 = vld [vmem:[%s1447 + $0xdc] sm:%s1438]
                  %1560 = vst [vmem:[%s1448 + $0xdc] sm:%s1438] %v1559
                  %v1561 = vld [vmem:[%s1447 + $0xe0] sm:%s1438]
                  %1562 = vst [vmem:[%s1448 + $0xe0] sm:%s1438] %v1561
                  %v1563 = vld [vmem:[%s1447 + $0xe4] sm:%s1438]
                  %1564 = vst [vmem:[%s1448 + $0xe4] sm:%s1438] %v1563
                  %v1565 = vld [vmem:[%s1447 + $0xe8] sm:%s1438]
                  %1566 = vst [vmem:[%s1448 + $0xe8] sm:%s1438] %v1565
                  %v1567 = vld [vmem:[%s1447 + $0xec] sm:%s1438]
                  %1568 = vst [vmem:[%s1448 + $0xec] sm:%s1438] %v1567
                  %v1569 = vld [vmem:[%s1447 + $0xf0] sm:%s1438]
                  %1570 = vst [vmem:[%s1448 + $0xf0] sm:%s1438] %v1569
                  %v1571 = vld [vmem:[%s1447 + $0xf4] sm:%s1438]
                  %1572 = vst [vmem:[%s1448 + $0xf4] sm:%s1438] %v1571
                  %v1573 = vld [vmem:[%s1447 + $0xf8] sm:%s1438]
                  %1574 = vst [vmem:[%s1448 + $0xf8] sm:%s1438] %v1573
                  %v1575 = vld [vmem:[%s1447 + $0xfc] sm:%s1438]
                  %1576 = vst [vmem:[%s1448 + $0xfc] sm:%s1438] %v1575
                  %s1577 = sadd.s32 1, %s1446
                  %p1578 = scmp.ge.s32.totalorder %s1577, %s1439
                  %s1579 = scalar_select %p1578, 0, %s1577
                  %s1580 = smul.u32 %s1579, 256
                  %s1581 = smul.u32 %s1579, 256
                  %s1582 = scalar_lea.vmem %s1244, %s1580 [#allocation2]
                  %s1583 = scalar_lea.vmem %s1255, %s1581
                $region71: #{coinrun_critic_forward.4} parent=65 // loop_footer
                  %s1443 = sadd.s32 %s1441, 1
                $region72: #{coinrun_critic_forward.4} parent=65 // loop_footer_branch
                  %1440 = sbr.rel target = $region68
                $region73: #{coinrun_critic_forward.4} parent=65 // loop_exit
                  _
                %s1584 = sshrl.u32 %s1251, 6
                %s1585 = sand.u32 %s1251, 63
                %s1586 = smul.u32 %s1584, 64
                %s1587 = smul.u32 4, %s1586
                %s1588 = scalar_lea.vmem %s1244, %s1587 [#allocation2]
                %s1589 = smul.u32 4, %s1586
                %s1590 = scalar_lea.vmem %s1255, %s1589
                // While loop
                $region74: #{coinrun_critic_forward.4} parent=65 // loop_pre_header
                  _
                $region75: #{coinrun_critic_forward.4} parent=65 // loop_header
                  %s1592 = sphi 0, %s1594
                  %p1593 = scmp.ge.s32.totalorder %s1592, %s1585
                  %s1597 = sphi 0, %s1604
                  %s1598 = sphi %s1588, %s1607
                  %s1599 = sphi %s1590, %s1608
                $region76: #{coinrun_critic_forward.4} parent=65 // loop_header_branch
                  %1596 = sbr.rel (%p1593) target = $region80
                $region77: #{coinrun_critic_forward.4} parent=65 // loop_body
                  %v1600 = vld [vmem:[%s1598] sm:%s1438]
                  %1601 = vst [vmem:[%s1599] sm:%s1438] %v1600
                  %s1602 = sadd.s32 1, %s1597
                  %p1603 = scmp.ge.s32.totalorder %s1602, %s1585
                  %s1604 = scalar_select %p1603, 0, %s1602
                  %s1605 = smul.u32 %s1604, 4
                  %s1606 = smul.u32 %s1604, 4
                  %s1607 = scalar_lea.vmem %s1588, %s1605 [#allocation2]
                  %s1608 = scalar_lea.vmem %s1590, %s1606
                $region78: #{coinrun_critic_forward.4} parent=65 // loop_footer
                  %s1594 = sadd.s32 %s1592, 1
                $region79: #{coinrun_critic_forward.4} parent=65 // loop_footer_branch
                  %1591 = sbr.rel target = $region75
                $region80: #{coinrun_critic_forward.4} parent=65 // loop_exit
                  _
              $region66: #{coinrun_critic_forward.4} parent=43 // pred_fallthru
                _
            $region44: #{coinrun_critic_forward.4} parent=39 // pred_fallthru
              _
            // Predicated region
            $region45: #{coinrun_critic_forward.4} parent=39 // pred_check
              _
            $region46: #{coinrun_critic_forward.4} parent=39 // pred_check_branch
              %1262 = sbr.rel (0) target = $region48
            $region47: #{coinrun_critic_forward.4} parent=39 // pred_region
              %s1264 = ssub.s32 16, 1
              %s1265 = sshrl.u32 %s1251, 6
              // While loop
              $region49: #{coinrun_critic_forward.4} parent=47 // loop_pre_header
                _
              $region50: #{coinrun_critic_forward.4} parent=47 // loop_header
                %s1267 = sphi 0, %s1269
                %p1268 = scmp.ge.s32.totalorder %s1267, %s1265
                %s1272 = sphi 0, %s1405
                %s1273 = sphi %s1244, %s1408
                %s1274 = sphi %s1255, %s1409
              $region51: #{coinrun_critic_forward.4} parent=47 // loop_header_branch
                %1271 = sbr.rel (%p1268) target = $region55
              $region52: #{coinrun_critic_forward.4} parent=47 // loop_body
                %v1275 = vld [vmem:[%s1273] sm:%s1264]
                %1276 = vst [vmem:[%s1274] sm:%s1264] %v1275
                %v1277 = vld [vmem:[%s1273 + $0x4] sm:%s1264]
                %1278 = vst [vmem:[%s1274 + $0x4] sm:%s1264] %v1277
                %v1279 = vld [vmem:[%s1273 + $0x8] sm:%s1264]
                %1280 = vst [vmem:[%s1274 + $0x8] sm:%s1264] %v1279
                %v1281 = vld [vmem:[%s1273 + $0xc] sm:%s1264]
                %1282 = vst [vmem:[%s1274 + $0xc] sm:%s1264] %v1281
                %v1283 = vld [vmem:[%s1273 + $0x10] sm:%s1264]
                %1284 = vst [vmem:[%s1274 + $0x10] sm:%s1264] %v1283
                %v1285 = vld [vmem:[%s1273 + $0x14] sm:%s1264]
                %1286 = vst [vmem:[%s1274 + $0x14] sm:%s1264] %v1285
                %v1287 = vld [vmem:[%s1273 + $0x18] sm:%s1264]
                %1288 = vst [vmem:[%s1274 + $0x18] sm:%s1264] %v1287
                %v1289 = vld [vmem:[%s1273 + $0x1c] sm:%s1264]
                %1290 = vst [vmem:[%s1274 + $0x1c] sm:%s1264] %v1289
                %v1291 = vld [vmem:[%s1273 + $0x20] sm:%s1264]
                %1292 = vst [vmem:[%s1274 + $0x20] sm:%s1264] %v1291
                %v1293 = vld [vmem:[%s1273 + $0x24] sm:%s1264]
                %1294 = vst [vmem:[%s1274 + $0x24] sm:%s1264] %v1293
                %v1295 = vld [vmem:[%s1273 + $0x28] sm:%s1264]
                %1296 = vst [vmem:[%s1274 + $0x28] sm:%s1264] %v1295
                %v1297 = vld [vmem:[%s1273 + $0x2c] sm:%s1264]
                %1298 = vst [vmem:[%s1274 + $0x2c] sm:%s1264] %v1297
                %v1299 = vld [vmem:[%s1273 + $0x30] sm:%s1264]
                %1300 = vst [vmem:[%s1274 + $0x30] sm:%s1264] %v1299
                %v1301 = vld [vmem:[%s1273 + $0x34] sm:%s1264]
                %1302 = vst [vmem:[%s1274 + $0x34] sm:%s1264] %v1301
                %v1303 = vld [vmem:[%s1273 + $0x38] sm:%s1264]
                %1304 = vst [vmem:[%s1274 + $0x38] sm:%s1264] %v1303
                %v1305 = vld [vmem:[%s1273 + $0x3c] sm:%s1264]
                %1306 = vst [vmem:[%s1274 + $0x3c] sm:%s1264] %v1305
                %v1307 = vld [vmem:[%s1273 + $0x40] sm:%s1264]
                %1308 = vst [vmem:[%s1274 + $0x40] sm:%s1264] %v1307
                %v1309 = vld [vmem:[%s1273 + $0x44] sm:%s1264]
                %1310 = vst [vmem:[%s1274 + $0x44] sm:%s1264] %v1309
                %v1311 = vld [vmem:[%s1273 + $0x48] sm:%s1264]
                %1312 = vst [vmem:[%s1274 + $0x48] sm:%s1264] %v1311
                %v1313 = vld [vmem:[%s1273 + $0x4c] sm:%s1264]
                %1314 = vst [vmem:[%s1274 + $0x4c] sm:%s1264] %v1313
                %v1315 = vld [vmem:[%s1273 + $0x50] sm:%s1264]
                %1316 = vst [vmem:[%s1274 + $0x50] sm:%s1264] %v1315
                %v1317 = vld [vmem:[%s1273 + $0x54] sm:%s1264]
                %1318 = vst [vmem:[%s1274 + $0x54] sm:%s1264] %v1317
                %v1319 = vld [vmem:[%s1273 + $0x58] sm:%s1264]
                %1320 = vst [vmem:[%s1274 + $0x58] sm:%s1264] %v1319
                %v1321 = vld [vmem:[%s1273 + $0x5c] sm:%s1264]
                %1322 = vst [vmem:[%s1274 + $0x5c] sm:%s1264] %v1321
                %v1323 = vld [vmem:[%s1273 + $0x60] sm:%s1264]
                %1324 = vst [vmem:[%s1274 + $0x60] sm:%s1264] %v1323
                %v1325 = vld [vmem:[%s1273 + $0x64] sm:%s1264]
                %1326 = vst [vmem:[%s1274 + $0x64] sm:%s1264] %v1325
                %v1327 = vld [vmem:[%s1273 + $0x68] sm:%s1264]
                %1328 = vst [vmem:[%s1274 + $0x68] sm:%s1264] %v1327
                %v1329 = vld [vmem:[%s1273 + $0x6c] sm:%s1264]
                %1330 = vst [vmem:[%s1274 + $0x6c] sm:%s1264] %v1329
                %v1331 = vld [vmem:[%s1273 + $0x70] sm:%s1264]
                %1332 = vst [vmem:[%s1274 + $0x70] sm:%s1264] %v1331
                %v1333 = vld [vmem:[%s1273 + $0x74] sm:%s1264]
                %1334 = vst [vmem:[%s1274 + $0x74] sm:%s1264] %v1333
                %v1335 = vld [vmem:[%s1273 + $0x78] sm:%s1264]
                %1336 = vst [vmem:[%s1274 + $0x78] sm:%s1264] %v1335
                %v1337 = vld [vmem:[%s1273 + $0x7c] sm:%s1264]
                %1338 = vst [vmem:[%s1274 + $0x7c] sm:%s1264] %v1337
                %v1339 = vld [vmem:[%s1273 + $0x80] sm:%s1264]
                %1340 = vst [vmem:[%s1274 + $0x80] sm:%s1264] %v1339
                %v1341 = vld [vmem:[%s1273 + $0x84] sm:%s1264]
                %1342 = vst [vmem:[%s1274 + $0x84] sm:%s1264] %v1341
                %v1343 = vld [vmem:[%s1273 + $0x88] sm:%s1264]
                %1344 = vst [vmem:[%s1274 + $0x88] sm:%s1264] %v1343
                %v1345 = vld [vmem:[%s1273 + $0x8c] sm:%s1264]
                %1346 = vst [vmem:[%s1274 + $0x8c] sm:%s1264] %v1345
                %v1347 = vld [vmem:[%s1273 + $0x90] sm:%s1264]
                %1348 = vst [vmem:[%s1274 + $0x90] sm:%s1264] %v1347
                %v1349 = vld [vmem:[%s1273 + $0x94] sm:%s1264]
                %1350 = vst [vmem:[%s1274 + $0x94] sm:%s1264] %v1349
                %v1351 = vld [vmem:[%s1273 + $0x98] sm:%s1264]
                %1352 = vst [vmem:[%s1274 + $0x98] sm:%s1264] %v1351
                %v1353 = vld [vmem:[%s1273 + $0x9c] sm:%s1264]
                %1354 = vst [vmem:[%s1274 + $0x9c] sm:%s1264] %v1353
                %v1355 = vld [vmem:[%s1273 + $0xa0] sm:%s1264]
                %1356 = vst [vmem:[%s1274 + $0xa0] sm:%s1264] %v1355
                %v1357 = vld [vmem:[%s1273 + $0xa4] sm:%s1264]
                %1358 = vst [vmem:[%s1274 + $0xa4] sm:%s1264] %v1357
                %v1359 = vld [vmem:[%s1273 + $0xa8] sm:%s1264]
                %1360 = vst [vmem:[%s1274 + $0xa8] sm:%s1264] %v1359
                %v1361 = vld [vmem:[%s1273 + $0xac] sm:%s1264]
                %1362 = vst [vmem:[%s1274 + $0xac] sm:%s1264] %v1361
                %v1363 = vld [vmem:[%s1273 + $0xb0] sm:%s1264]
                %1364 = vst [vmem:[%s1274 + $0xb0] sm:%s1264] %v1363
                %v1365 = vld [vmem:[%s1273 + $0xb4] sm:%s1264]
                %1366 = vst [vmem:[%s1274 + $0xb4] sm:%s1264] %v1365
                %v1367 = vld [vmem:[%s1273 + $0xb8] sm:%s1264]
                %1368 = vst [vmem:[%s1274 + $0xb8] sm:%s1264] %v1367
                %v1369 = vld [vmem:[%s1273 + $0xbc] sm:%s1264]
                %1370 = vst [vmem:[%s1274 + $0xbc] sm:%s1264] %v1369
                %v1371 = vld [vmem:[%s1273 + $0xc0] sm:%s1264]
                %1372 = vst [vmem:[%s1274 + $0xc0] sm:%s1264] %v1371
                %v1373 = vld [vmem:[%s1273 + $0xc4] sm:%s1264]
                %1374 = vst [vmem:[%s1274 + $0xc4] sm:%s1264] %v1373
                %v1375 = vld [vmem:[%s1273 + $0xc8] sm:%s1264]
                %1376 = vst [vmem:[%s1274 + $0xc8] sm:%s1264] %v1375
                %v1377 = vld [vmem:[%s1273 + $0xcc] sm:%s1264]
                %1378 = vst [vmem:[%s1274 + $0xcc] sm:%s1264] %v1377
                %v1379 = vld [vmem:[%s1273 + $0xd0] sm:%s1264]
                %1380 = vst [vmem:[%s1274 + $0xd0] sm:%s1264] %v1379
                %v1381 = vld [vmem:[%s1273 + $0xd4] sm:%s1264]
                %1382 = vst [vmem:[%s1274 + $0xd4] sm:%s1264] %v1381
                %v1383 = vld [vmem:[%s1273 + $0xd8] sm:%s1264]
                %1384 = vst [vmem:[%s1274 + $0xd8] sm:%s1264] %v1383
                %v1385 = vld [vmem:[%s1273 + $0xdc] sm:%s1264]
                %1386 = vst [vmem:[%s1274 + $0xdc] sm:%s1264] %v1385
                %v1387 = vld [vmem:[%s1273 + $0xe0] sm:%s1264]
                %1388 = vst [vmem:[%s1274 + $0xe0] sm:%s1264] %v1387
                %v1389 = vld [vmem:[%s1273 + $0xe4] sm:%s1264]
                %1390 = vst [vmem:[%s1274 + $0xe4] sm:%s1264] %v1389
                %v1391 = vld [vmem:[%s1273 + $0xe8] sm:%s1264]
                %1392 = vst [vmem:[%s1274 + $0xe8] sm:%s1264] %v1391
                %v1393 = vld [vmem:[%s1273 + $0xec] sm:%s1264]
                %1394 = vst [vmem:[%s1274 + $0xec] sm:%s1264] %v1393
                %v1395 = vld [vmem:[%s1273 + $0xf0] sm:%s1264]
                %1396 = vst [vmem:[%s1274 + $0xf0] sm:%s1264] %v1395
                %v1397 = vld [vmem:[%s1273 + $0xf4] sm:%s1264]
                %1398 = vst [vmem:[%s1274 + $0xf4] sm:%s1264] %v1397
                %v1399 = vld [vmem:[%s1273 + $0xf8] sm:%s1264]
                %1400 = vst [vmem:[%s1274 + $0xf8] sm:%s1264] %v1399
                %v1401 = vld [vmem:[%s1273 + $0xfc] sm:%s1264]
                %1402 = vst [vmem:[%s1274 + $0xfc] sm:%s1264] %v1401
                %s1403 = sadd.s32 1, %s1272
                %p1404 = scmp.ge.s32.totalorder %s1403, %s1265
                %s1405 = scalar_select %p1404, 0, %s1403
                %s1406 = smul.u32 %s1405, 256
                %s1407 = smul.u32 %s1405, 256
                %s1408 = scalar_lea.vmem %s1244, %s1406 [#allocation2]
                %s1409 = scalar_lea.vmem %s1255, %s1407
              $region53: #{coinrun_critic_forward.4} parent=47 // loop_footer
                %s1269 = sadd.s32 %s1267, 1
              $region54: #{coinrun_critic_forward.4} parent=47 // loop_footer_branch
                %1266 = sbr.rel target = $region50
              $region55: #{coinrun_critic_forward.4} parent=47 // loop_exit
                _
              %s1410 = sshrl.u32 %s1251, 6
              %s1411 = sand.u32 %s1251, 63
              %s1412 = smul.u32 %s1410, 64
              %s1413 = smul.u32 4, %s1412
              %s1414 = scalar_lea.vmem %s1244, %s1413 [#allocation2]
              %s1415 = smul.u32 4, %s1412
              %s1416 = scalar_lea.vmem %s1255, %s1415
              // While loop
              $region56: #{coinrun_critic_forward.4} parent=47 // loop_pre_header
                _
              $region57: #{coinrun_critic_forward.4} parent=47 // loop_header
                %s1418 = sphi 0, %s1420
                %p1419 = scmp.ge.s32.totalorder %s1418, %s1411
                %s1423 = sphi 0, %s1430
                %s1424 = sphi %s1414, %s1433
                %s1425 = sphi %s1416, %s1434
              $region58: #{coinrun_critic_forward.4} parent=47 // loop_header_branch
                %1422 = sbr.rel (%p1419) target = $region62
              $region59: #{coinrun_critic_forward.4} parent=47 // loop_body
                %v1426 = vld [vmem:[%s1424] sm:%s1264]
                %1427 = vst [vmem:[%s1425] sm:%s1264] %v1426
                %s1428 = sadd.s32 1, %s1423
                %p1429 = scmp.ge.s32.totalorder %s1428, %s1411
                %s1430 = scalar_select %p1429, 0, %s1428
                %s1431 = smul.u32 %s1430, 4
                %s1432 = smul.u32 %s1430, 4
                %s1433 = scalar_lea.vmem %s1414, %s1431 [#allocation2]
                %s1434 = scalar_lea.vmem %s1416, %s1432
              $region60: #{coinrun_critic_forward.4} parent=47 // loop_footer
                %s1420 = sadd.s32 %s1418, 1
              $region61: #{coinrun_critic_forward.4} parent=47 // loop_footer_branch
                %1417 = sbr.rel target = $region57
              $region62: #{coinrun_critic_forward.4} parent=47 // loop_exit
                _
            $region48: #{coinrun_critic_forward.4} parent=39 // pred_fallthru
              _
          $region40: #{coinrun_critic_forward.4} parent=35 // pred_fallthru
            _
          %1609 = vnop
        $region36: #{coinrun_critic_forward.4} parent=31 // pred_fallthru
          _
      $region32: #{coinrun_critic_forward.4} parent=5 // pred_fallthru
        _
      %p1610 = scmp.le.s32.totalorder 2, %s9
      // Predicated region
      $region81: #{coinrun_critic_forward.4} parent=5 // pred_check
        %p1611 = pneg %p1610
      $region82: #{coinrun_critic_forward.4} parent=5 // pred_check_branch
        %1613 = sbr.rel (%p1611) target = $region84
      $region83: #{coinrun_critic_forward.4} parent=5 // pred_region
        %s1614 = ssub.s32 %s9, 2
        // Predicated region
        $region85: #{coinrun_critic_forward.4} parent=83 // pred_check
          %p1615 = pneg %p106
        $region86: #{coinrun_critic_forward.4} parent=83 // pred_check_branch
          %1617 = sbr.rel (%p1615) target = $region88
        $region87: #{coinrun_critic_forward.4} parent=83 // pred_region
          %s1618 = sand.u32 %s91, 1
          %s1619 = sand.u32 %s91, 1
          %s1620 = smul.addr %s1619, 256
          %s1621 = scalar_lea.vmem [#allocation2], %s1620
        $region88: #{coinrun_critic_forward.4} parent=83 // pred_fallthru
          _
      $region84: #{coinrun_critic_forward.4} parent=5 // pred_fallthru
        _
    $region6: #{coinrun_critic_forward.4} parent=1 // loop_footer
      %s13 = sadd.s32 1, %s9
    $region7: #{coinrun_critic_forward.4} parent=1 // loop_footer_branch
      %8 = sbr.rel target = $region3
    $region8: #{coinrun_critic_forward.4} parent=1 // loop_exit
      _

// kernel: coinrun_critic_forward.5
$region0: #{coinrun_critic_forward.5}
  #allocation0 [shape = 'u32[]', space=smem, size = 0x4, offset = 0x4, fixed_abs, tag = 'smem constant byte address 0x4 - core index']
  #allocation1 [shape = 'u32[144,128]{1,0:T(1,128)}', space=vmem, size = 0x12000, scoped, tag = 'internal scratch']
  %s0 = inlined_call_operand.vmem [shape: bf16[338,800], index: 0, kind: input, shape index: {}]
  %s1 = inlined_call_operand.vmem [shape: bf16[800,64], index: 1, kind: input, shape index: {}]
  %s2 = inlined_call_operand.vmem [shape: f32[1,64], index: 2, kind: input, shape index: {}]
  %s3 = inlined_call_operand.vmem [shape: bf16[338,64], index: 3, kind: output, shape index: {}]
  %s4 = sld [smem:[#allocation0]]
  $region89: #{coinrun_critic_forward.5} parent=0
    _
  %s6 = ssub.s32 1, %s4
  %s7 = scalar_select 0, %s6, %s4
  $region1: #{coinrun_critic_forward.5} parent=0
    #allocation2 [shape = 'u8[131072]{0}', space=vmem, size = 0x20000, scoped, tag = 'output window, operand 0']
    loop: start=0, step=1, limit=4
    $region2: #{coinrun_critic_forward.5} parent=1 // loop_pre_header
      _
    $region3: #{coinrun_critic_forward.5} parent=1 // loop_header
      %s9 = sphi 0, %s13
      %p10 = scmp.ge.s32.totalorder %s9, 4
      %s19 = sphi 0, %s21
      %s22 = sphi 0, %s19
      %s23 = sphi 0, %s22
      %s39 = sphi 0, %s23
      %s43 = sphi 0, %s43
      %s45 = sphi 0, %s43
      %s46 = sphi 0, %s45
      %s60 = sphi 0, %s46
      %s64 = sphi 0, %s64
      %s66 = sphi 0, %s64
      %s67 = sphi 0, %s66
      %s81 = sphi 0, %s67
      %s87 = sphi 0, %s89
      %s90 = sphi 0, %s87
      %s91 = sphi 0, %s90
      %s107 = sphi 0, %s91
    $region4: #{coinrun_critic_forward.5} parent=1 // loop_header_branch
      %12 = sbr.rel (%p10) target = $region8
    $region5: #{coinrun_critic_forward.5} parent=1 // loop_body
      %s14 = ssub.s32 %s9, 1
      %s15 = ssub.s32 %s9, 2
      %s16 = sadd.s32 %s9, 1
      %s17 = ssub.s32 %s9, %s16
      %p18 = scmp.eq.s32.totalorder %s17, 0
      %s20 = sadd.s32 %s19, 1
      %s21 = scalar_select %p18, %s19, %s20
      %p24 = pneg %p18
      %p25 = scmp.eq.s32.totalorder %s9, 1
      %p26 = por %p24, %p25
      %p27 = scmp.ne.s32.totalorder %s19, %s22
      %p28 = scmp.eq.s32.totalorder %s9, 0
      %p29 = por %p27, %p28
      %p30 = scmp.ne.s32.totalorder %s19, %s22
      %p31 = scmp.eq.s32.totalorder %s14, 1
      %p32 = por %p30, %p31
      %p33 = scmp.ne.s32.totalorder %s22, %s23
      %p34 = scmp.eq.s32.totalorder %s14, 0
      %p35 = por %p33, %p34
      %p36 = scmp.ne.s32.totalorder %s22, %s23
      %p37 = scmp.eq.s32.totalorder %s15, 1
      %p38 = por %p36, %p37
      %p40 = scmp.ne.s32.totalorder %s23, %s39
      %p41 = scmp.eq.s32.totalorder %s15, 0
      %p42 = por %p40, %p41
      %s44 = sadd.s32 %s43, 1
      %p47 = scmp.eq.s32.totalorder %s9, 1
      %p48 = scmp.ne.s32.totalorder %s43, %s45
      %p49 = scmp.eq.s32.totalorder %s9, 0
      %p50 = por %p48, %p49
      %p51 = scmp.ne.s32.totalorder %s43, %s45
      %p52 = scmp.eq.s32.totalorder %s14, 1
      %p53 = por %p51, %p52
      %p54 = scmp.ne.s32.totalorder %s45, %s46
      %p55 = scmp.eq.s32.totalorder %s14, 0
      %p56 = por %p54, %p55
      %p57 = scmp.ne.s32.totalorder %s45, %s46
      %p58 = scmp.eq.s32.totalorder %s15, 1
      %p59 = por %p57, %p58
      %p61 = scmp.ne.s32.totalorder %s46, %s60
      %p62 = scmp.eq.s32.totalorder %s15, 0
      %p63 = por %p61, %p62
      %s65 = sadd.s32 %s64, 1
      %p68 = scmp.eq.s32.totalorder %s9, 1
      %p69 = scmp.ne.s32.totalorder %s64, %s66
      %p70 = scmp.eq.s32.totalorder %s9, 0
      %p71 = por %p69, %p70
      %p72 = scmp.ne.s32.totalorder %s64, %s66
      %p73 = scmp.eq.s32.totalorder %s14, 1
      %p74 = por %p72, %p73
      %p75 = scmp.ne.s32.totalorder %s66, %s67
      %p76 = scmp.eq.s32.totalorder %s14, 0
      %p77 = por %p75, %p76
      %p78 = scmp.ne.s32.totalorder %s66, %s67
      %p79 = scmp.eq.s32.totalorder %s15, 1
      %p80 = por %p78, %p79
      %p82 = scmp.ne.s32.totalorder %s67, %s81
      %p83 = scmp.eq.s32.totalorder %s15, 0
      %p84 = por %p82, %p83
      %s85 = ssub.s32 %s9, %s16
      %p86 = scmp.eq.s32.totalorder %s85, 0
      %s88 = sadd.s32 %s87, 1
      %s89 = scalar_select %p86, %s87, %s88
      %p92 = pneg %p86
      %p93 = scmp.eq.s32.totalorder %s9, 1
      %p94 = por %p92, %p93
      %p95 = scmp.ne.s32.totalorder %s87, %s90
      %p96 = scmp.eq.s32.totalorder %s9, 0
      %p97 = por %p95, %p96
      %p98 = scmp.ne.s32.totalorder %s87, %s90
      %p99 = scmp.eq.s32.totalorder %s14, 1
      %p100 = por %p98, %p99
      %p101 = scmp.ne.s32.totalorder %s90, %s91
      %p102 = scmp.eq.s32.totalorder %s14, 0
      %p103 = por %p101, %p102
      %p104 = scmp.ne.s32.totalorder %s90, %s91
      %p105 = scmp.eq.s32.totalorder %s15, 1
      %p106 = por %p104, %p105
      %p108 = scmp.ne.s32.totalorder %s91, %s107
      %p109 = scmp.eq.s32.totalorder %s15, 0
      %p110 = por %p108, %p109
      %p111 = scmp.le.s32.totalorder 1, %s9
      %p112 = scmp.lt.s32.totalorder %s9, 3
      %p113 = pnand %p111, %p112
      %p114 = pneg %p113
      // Predicated region
      $region9: #{coinrun_critic_forward.5} parent=5 // pred_check
        _
      $region10: #{coinrun_critic_forward.5} parent=5 // pred_check_branch
        %116 = sbr.rel (%p113) target = $region12
      $region11: #{coinrun_critic_forward.5} parent=5 // pred_region
        %s117 = ssub.s32 %s9, 1
        // Predicated region
        $region13: #{coinrun_critic_forward.5} parent=11 // pred_check
          %p118 = pneg %p56
        $region14: #{coinrun_critic_forward.5} parent=11 // pred_check_branch
          %120 = sbr.rel (%p118) target = $region16
        $region15: #{coinrun_critic_forward.5} parent=11 // pred_region
          _
        $region16: #{coinrun_critic_forward.5} parent=11 // pred_fallthru
          _
        // Predicated region
        $region17: #{coinrun_critic_forward.5} parent=11 // pred_check
          %p121 = pneg %p77
        $region18: #{coinrun_critic_forward.5} parent=11 // pred_check_branch
          %123 = sbr.rel (%p121) target = $region20
        $region19: #{coinrun_critic_forward.5} parent=11 // pred_region
          _
        $region20: #{coinrun_critic_forward.5} parent=11 // pred_fallthru
          _
      $region12: #{coinrun_critic_forward.5} parent=5 // pred_fallthru
        _
      %p124 = scmp.lt.s32.totalorder %s9, 2
      // Predicated region
      $region21: #{coinrun_critic_forward.5} parent=5 // pred_check
        %p125 = pneg %p124
      $region22: #{coinrun_critic_forward.5} parent=5 // pred_check_branch
        %127 = sbr.rel (%p125) target = $region24
      $region23: #{coinrun_critic_forward.5} parent=5 // pred_region
        // Predicated region
        $region25: #{coinrun_critic_forward.5} parent=23 // pred_check
          %p128 = pneg %p29
        $region26: #{coinrun_critic_forward.5} parent=23 // pred_check_branch
          %130 = sbr.rel (%p128) target = $region28
        $region27: #{coinrun_critic_forward.5} parent=23 // pred_region
          %s131 = smul.u32 32, %s9
          %s132 = ssub.s32 43, %s131
          %p133 = scmp.lt.s32.totalorder %s132, 32
          %s134 = scalar_select %p133, %s132, 32
          %s135 = smul.u32 64, %s134
          %s136 = smul.u32 %s135, 7
          %p137 = scmp.lt.s32.totalorder %s131, 42
          %s138 = scalar_select %p137, %s131, 42
          %s139 = smul.addr %s138, 7
          %s140 = smul.addr %s139, 4
          %s141 = scalar_lea.vmem %s0, %s140
          %s142 = smul.u32 32, %s9
          %s143 = ssub.s32 43, %s142
          %p144 = scmp.lt.s32.totalorder %s143, 32
          %s145 = scalar_select %p144, %s143, 32
          %s146 = smul.u32 64, %s145
          %s147 = smul.u32 %s146, 7
        $region28: #{coinrun_critic_forward.5} parent=23 // pred_fallthru
          _
      $region24: #{coinrun_critic_forward.5} parent=5 // pred_fallthru
        _
      %p148 = scmp.le.s32.totalorder 1, %s9
      %p149 = scmp.lt.s32.totalorder %s9, 3
      %p150 = pnand %p148, %p149
      %p151 = pneg %p150
      // Predicated region
      $region29: #{coinrun_critic_forward.5} parent=5 // pred_check
        _
      $region30: #{coinrun_critic_forward.5} parent=5 // pred_check_branch
        %153 = sbr.rel (%p150) target = $region32
      $region31: #{coinrun_critic_forward.5} parent=5 // pred_region
        %s154 = ssub.s32 %s9, 1
        %s155 = smul.u32 32, %s14
        %s156 = ssub.s32 43, %s155
        %p157 = scmp.lt.s32.totalorder %s156, 32
        %s158 = scalar_select %p157, %s156, 32
        %s159 = smul.u32 64, %s158
        %s160 = smul.u32 %s159, 7
        %p161 = scmp.lt.s32.totalorder %s155, 42
        %s162 = scalar_select %p161, %s155, 42
        %s163 = smul.addr %s162, 7
        %s164 = smul.addr %s163, 4
        %s165 = scalar_lea.vmem %s0, %s164
        %p166 = pneg %p35
        %p167 = pneg %p32
        %p168 = pneg %p56
        %p169 = pneg %p53
        %p170 = pneg %p77
        %p171 = pneg %p74
        %p172 = pneg %p103
        %p173 = pneg %p100
        %s174 = sand.u32 %s90, 1
        %s175 = sand.u32 %s90, 1
        %s176 = smul.addr %s175, 128
        %s177 = scalar_lea.vmem [#allocation2], %s176
        %s178 = smul.u32 32, %s14
        %s179 = ssub.s32 43, %s178
        %p180 = scmp.lt.s32.totalorder %s179, 32
        %s181 = scalar_select %p180, %s179, 32
        %s182 = smul.u32 64, %s181
        %s183 = smul.u32 %s182, 7
        %p184 = scmp.lt.s32.totalorder %s178, 42
        %s185 = scalar_select %p184, %s178, 42
        %s186 = smul.addr %s185, 7
        %s187 = smul.addr %s186, 4
        %s188 = scalar_lea.vmem %s0, %s187
        %s189 = smul.u32 32, %s14
        %s190 = ssub.s32 43, %s189
        %p191 = scmp.lt.s32.totalorder %s190, 32
        %s192 = scalar_select %p191, %s190, 32
        %s193 = smul.u32 64, %s192
        %s194 = smul.u32 %s193, 7
        %s195 = smul.u32 32, %s14
        %s196 = ssub.s32 43, %s195
        %p197 = scmp.lt.s32.totalorder %s196, 32
        %s198 = scalar_select %p197, %s196, 32
        %s199 = smul.u32 64, %s198
        %v201 = vld [vmem:[%s188] sm:$0xff]
        %v202 = vld [vmem:[%s188 + $0x8] sm:$0xff]
        %v203 = vld [vmem:[%s188 + $0x10] sm:$0xff]
        %v204 = vld [vmem:[%s188 + $0x18] sm:$0xf]
        %v205 = vld [vmem:[%s188 + $0x1c] sm:$0xff]
        %v206 = vld [vmem:[%s188 + $0x24] sm:$0xff]
        %v207 = vld [vmem:[%s188 + $0x2c] sm:$0xff]
        %v208 = vld [vmem:[%s188 + $0x34] sm:$0xf]
        %v209 = vld [vmem:[%s188 + $0x38] sm:$0xff]
        %v210 = vld [vmem:[%s188 + $0x40] sm:$0xff]
        %v211 = vld [vmem:[%s188 + $0x48] sm:$0xff]
        %v212 = vld [vmem:[%s188 + $0x50] sm:$0xf]
        %v213 = vld [vmem:[%s188 + $0x54] sm:$0xff]
        %v214 = vld [vmem:[%s188 + $0x5c] sm:$0xff]
        %v215 = vld [vmem:[%s188 + $0x64] sm:$0xff]
        %v216 = vld [vmem:[%s188 + $0x6c] sm:$0xf]
        %v217 = vld [vmem:[%s188 + $0x70] sm:$0xff]
        %v218 = vld [vmem:[%s188 + $0x78] sm:$0xff]
        %v219 = vld [vmem:[%s188 + $0x80] sm:$0xff]
        %v220 = vld [vmem:[%s188 + $0x88] sm:$0xf]
        %v221 = vld [vmem:[%s188 + $0x8c] sm:$0xff]
        %v222 = vld [vmem:[%s188 + $0x94] sm:$0xff]
        %v223 = vld [vmem:[%s188 + $0x9c] sm:$0xff]
        %v224 = vld [vmem:[%s188 + $0xa4] sm:$0xf]
        %v225 = vld [vmem:[%s188 + $0xa8] sm:$0xff]
        %v226 = vld [vmem:[%s188 + $0xb0] sm:$0xff]
        %v227 = vld [vmem:[%s188 + $0xb8] sm:$0xff]
        %v228 = vld [vmem:[%s188 + $0xc0] sm:$0xf]
        %v229 = vld [vmem:[%s188 + $0xc4] sm:$0xff]
        %v230 = vld [vmem:[%s188 + $0xcc] sm:$0xff]
        %v231 = vld [vmem:[%s188 + $0xd4] sm:$0xff]
        %v232 = vld [vmem:[%s188 + $0xdc] sm:$0xf]
        %v233 = vld [vmem:[%s188 + $0xe0] sm:$0xff]
        %v234 = vld [vmem:[%s188 + $0xe8] sm:$0xff]
        %v235 = vld [vmem:[%s188 + $0xf0] sm:$0xff]
        %v236 = vld [vmem:[%s188 + $0xf8] sm:$0xf]
        %v237 = vld [vmem:[%s188 + $0xfc] sm:$0xff]
        %v238 = vld [vmem:[%s188 + $0x104] sm:$0xff]
        %v239 = vld [vmem:[%s188 + $0x10c] sm:$0xff]
        %v240 = vld [vmem:[%s188 + $0x114] sm:$0xf]
        %v241 = vld [vmem:[%s188 + $0x118] sm:$0xff]
        %v242 = vld [vmem:[%s188 + $0x120] sm:$0xff]
        %v243 = vld [vmem:[%s188 + $0x128] sm:$0xff]
        %v244 = vld [vmem:[%s188 + $0x130] sm:$0xf]
        %v245 = vld [vmem:[%s188 + $0x134] sm:$0xff]
        %v246 = vld [vmem:[%s188 + $0x13c] sm:$0xff]
        %v247 = vld [vmem:[%s188 + $0x144] sm:$0xff]
        %v248 = vld [vmem:[%s188 + $0x14c] sm:$0xf]
        %v249 = vld [vmem:[%s188 + $0x150] sm:$0xff]
        %v250 = vld [vmem:[%s188 + $0x158] sm:$0xff]
        %v251 = vld [vmem:[%s188 + $0x160] sm:$0xff]
        %v252 = vld [vmem:[%s188 + $0x168] sm:$0xf]
        %v253 = vld [vmem:[%s188 + $0x16c] sm:$0xff]
        %v254 = vld [vmem:[%s188 + $0x174] sm:$0xff]
        %v255 = vld [vmem:[%s188 + $0x17c] sm:$0xff]
        %v256 = vld [vmem:[%s188 + $0x184] sm:$0xf]
        %v257 = vld [vmem:[%s188 + $0x188] sm:$0xff]
        %v258 = vld [vmem:[%s188 + $0x190] sm:$0xff]
        %v259 = vld [vmem:[%s188 + $0x198] sm:$0xff]
        %v260 = vld [vmem:[%s188 + $0x1a0] sm:$0xf]
        %v261 = vld [vmem:[%s188 + $0x1a4] sm:$0xff]
        %v262 = vld [vmem:[%s188 + $0x1ac] sm:$0xff]
        %v263 = vld [vmem:[%s188 + $0x1b4] sm:$0xff]
        %v264 = vld [vmem:[%s188 + $0x1bc] sm:$0xf]
        %v265 = vld [vmem:[%s188 + $0x1c0] sm:$0xff]
        %v266 = vld [vmem:[%s188 + $0x1c8] sm:$0xff]
        %v267 = vld [vmem:[%s188 + $0x1d0] sm:$0xff]
        %v268 = vld [vmem:[%s188 + $0x1d8] sm:$0xf]
        %v269 = vld [vmem:[%s188 + $0x1dc] sm:$0xff]
        %v270 = vld [vmem:[%s188 + $0x1e4] sm:$0xff]
        %v271 = vld [vmem:[%s188 + $0x1ec] sm:$0xff]
        %v272 = vld [vmem:[%s188 + $0x1f4] sm:$0xf]
        %v273 = vld [vmem:[%s188 + $0x1f8] sm:$0xff]
        %v274 = vld [vmem:[%s188 + $0x200] sm:$0xff]
        %v275 = vld [vmem:[%s188 + $0x208] sm:$0xff]
        %v276 = vld [vmem:[%s188 + $0x210] sm:$0xf]
        %v277 = vld [vmem:[%s188 + $0x214] sm:$0xff]
        %v278 = vld [vmem:[%s188 + $0x21c] sm:$0xff]
        %v279 = vld [vmem:[%s188 + $0x224] sm:$0xff]
        %v280 = vld [vmem:[%s188 + $0x22c] sm:$0xf]
        %v281 = vld [vmem:[%s188 + $0x230] sm:$0xff]
        %v282 = vld [vmem:[%s188 + $0x238] sm:$0xff]
        %v283 = vld [vmem:[%s188 + $0x240] sm:$0xff]
        %v284 = vld [vmem:[%s188 + $0x248] sm:$0xf]
        %v285 = vld [vmem:[%s188 + $0x24c] sm:$0xff]
        %v286 = vld [vmem:[%s188 + $0x254] sm:$0xff]
        %v287 = vld [vmem:[%s188 + $0x25c] sm:$0xff]
        %v288 = vld [vmem:[%s188 + $0x264] sm:$0xf]
        %v289 = vld [vmem:[%s188 + $0x268] sm:$0xff]
        %v290 = vld [vmem:[%s188 + $0x270] sm:$0xff]
        %v291 = vld [vmem:[%s188 + $0x278] sm:$0xff]
        %v292 = vld [vmem:[%s188 + $0x280] sm:$0xf]
        %v293 = vld [vmem:[%s188 + $0x284] sm:$0xff]
        %v294 = vld [vmem:[%s188 + $0x28c] sm:$0xff]
        %v295 = vld [vmem:[%s188 + $0x294] sm:$0xff]
        %v296 = vld [vmem:[%s188 + $0x29c] sm:$0xf]
        %v297 = vld [vmem:[%s188 + $0x2a0] sm:$0xff]
        %v298 = vld [vmem:[%s188 + $0x2a8] sm:$0xff]
        %v299 = vld [vmem:[%s188 + $0x2b0] sm:$0xff]
        %v300 = vld [vmem:[%s188 + $0x2b8] sm:$0xf]
        %v301 = vld [vmem:[%s188 + $0x2bc] sm:$0xff]
        %v302 = vld [vmem:[%s188 + $0x2c4] sm:$0xff]
        %v303 = vld [vmem:[%s188 + $0x2cc] sm:$0xff]
        %v304 = vld [vmem:[%s188 + $0x2d4] sm:$0xf]
        %v305 = vld [vmem:[%s188 + $0x2d8] sm:$0xff]
        %v306 = vld [vmem:[%s188 + $0x2e0] sm:$0xff]
        %v307 = vld [vmem:[%s188 + $0x2e8] sm:$0xff]
        %v308 = vld [vmem:[%s188 + $0x2f0] sm:$0xf]
        %v309 = vld [vmem:[%s188 + $0x2f4] sm:$0xff]
        %v310 = vld [vmem:[%s188 + $0x2fc] sm:$0xff]
        %v311 = vld [vmem:[%s188 + $0x304] sm:$0xff]
        %v312 = vld [vmem:[%s188 + $0x30c] sm:$0xf]
        %v313 = vld [vmem:[%s188 + $0x310] sm:$0xff]
        %v314 = vld [vmem:[%s188 + $0x318] sm:$0xff]
        %v315 = vld [vmem:[%s188 + $0x320] sm:$0xff]
        %v316 = vld [vmem:[%s188 + $0x328] sm:$0xf]
        %v317 = vld [vmem:[%s188 + $0x32c] sm:$0xff]
        %v318 = vld [vmem:[%s188 + $0x334] sm:$0xff]
        %v319 = vld [vmem:[%s188 + $0x33c] sm:$0xff]
        %v320 = vld [vmem:[%s188 + $0x344] sm:$0xf]
        %v321 = vld [vmem:[%s188 + $0x348] sm:$0xff]
        %v322 = vld [vmem:[%s188 + $0x350] sm:$0xff]
        %v323 = vld [vmem:[%s188 + $0x358] sm:$0xff]
        %v324 = vld [vmem:[%s188 + $0x360] sm:$0xf]
        %v325 = vld [vmem:[%s188 + $0x364] sm:$0xff]
        %v326 = vld [vmem:[%s188 + $0x36c] sm:$0xff]
        %v327 = vld [vmem:[%s188 + $0x374] sm:$0xff]
        %v328 = vld [vmem:[%s188 + $0x37c] sm:$0xf]
        %v329 = vld [vmem:[%s1] sm:$0xf]
        %v330 = vld [vmem:[%s1 + $0x4] sm:$0xf]
        %v331 = vld [vmem:[%s1 + $0x8] sm:$0xf]
        %v332 = vld [vmem:[%s1 + $0xc] sm:$0xf]
        %v333 = vld [vmem:[%s1 + $0x10] sm:$0xf]
        %v334 = vld [vmem:[%s1 + $0x14] sm:$0xf]
        %v335 = vld [vmem:[%s1 + $0x18] sm:$0xf]
        %v336 = vld [vmem:[%s1 + $0x1c] sm:$0xf]
        %v337 = vld [vmem:[%s1 + $0x20] sm:$0xf]
        %v338 = vld [vmem:[%s1 + $0x24] sm:$0xf]
        %v339 = vld [vmem:[%s1 + $0x28] sm:$0xf]
        %v340 = vld [vmem:[%s1 + $0x2c] sm:$0xf]
        %v341 = vld [vmem:[%s1 + $0x30] sm:$0xf]
        %v342 = vld [vmem:[%s1 + $0x34] sm:$0xf]
        %v343 = vld [vmem:[%s1 + $0x38] sm:$0xf]
        %v344 = vld [vmem:[%s1 + $0x3c] sm:$0xf]
        %v345 = vld [vmem:[%s1 + $0x40] sm:$0xf]
        %v346 = vld [vmem:[%s1 + $0x44] sm:$0xf]
        %v347 = vld [vmem:[%s1 + $0x48] sm:$0xf]
        %v348 = vld [vmem:[%s1 + $0x4c] sm:$0xf]
        %v349 = vld [vmem:[%s1 + $0x50] sm:$0xf]
        %v350 = vld [vmem:[%s1 + $0x54] sm:$0xf]
        %v351 = vld [vmem:[%s1 + $0x58] sm:$0xf]
        %v352 = vld [vmem:[%s1 + $0x5c] sm:$0xf]
        %v353 = vld [vmem:[%s1 + $0x60] sm:$0xf]
        %v354 = vld [vmem:[%s1 + $0x64] sm:$0xf]
        %v355 = vld [vmem:[%s1 + $0x68] sm:$0xf]
        %v356 = vld [vmem:[%s1 + $0x6c] sm:$0xf]
        %v357 = vld [vmem:[%s1 + $0x70] sm:$0xf]
        %v358 = vld [vmem:[%s1 + $0x74] sm:$0xf]
        %v359 = vld [vmem:[%s1 + $0x78] sm:$0xf]
        %v360 = vld [vmem:[%s1 + $0x7c] sm:$0xf]
        %v361 = vld [vmem:[%s1 + $0x80] sm:$0xf]
        %v362 = vld [vmem:[%s1 + $0x84] sm:$0xf]
        %v363 = vld [vmem:[%s1 + $0x88] sm:$0xf]
        %v364 = vld [vmem:[%s1 + $0x8c] sm:$0xf]
        %v365 = vld [vmem:[%s1 + $0x90] sm:$0xf]
        %v366 = vld [vmem:[%s1 + $0x94] sm:$0xf]
        %v367 = vld [vmem:[%s1 + $0x98] sm:$0xf]
        %v368 = vld [vmem:[%s1 + $0x9c] sm:$0xf]
        %v369 = vld [vmem:[%s1 + $0xa0] sm:$0xf]
        %v370 = vld [vmem:[%s1 + $0xa4] sm:$0xf]
        %v371 = vld [vmem:[%s1 + $0xa8] sm:$0xf]
        %v372 = vld [vmem:[%s1 + $0xac] sm:$0xf]
        %v373 = vld [vmem:[%s1 + $0xb0] sm:$0xf]
        %v374 = vld [vmem:[%s1 + $0xb4] sm:$0xf]
        %v375 = vld [vmem:[%s1 + $0xb8] sm:$0xf]
        %v376 = vld [vmem:[%s1 + $0xbc] sm:$0xf]
        %v377 = vld [vmem:[%s1 + $0xc0] sm:$0xf]
        %v378 = vld [vmem:[%s1 + $0xc4] sm:$0xf]
        %v379 = vld [vmem:[%s1 + $0xc8] sm:$0xf]
        %v380 = vld [vmem:[%s1 + $0xcc] sm:$0xf]
        %v381 = vld [vmem:[%s1 + $0xd0] sm:$0xf]
        %v382 = vld [vmem:[%s1 + $0xd4] sm:$0xf]
        %v383 = vld [vmem:[%s1 + $0xd8] sm:$0xf]
        %v384 = vld [vmem:[%s1 + $0xdc] sm:$0xf]
        %v385 = vld [vmem:[%s1 + $0xe0] sm:$0xf]
        %v386 = vld [vmem:[%s1 + $0xe4] sm:$0xf]
        %v387 = vld [vmem:[%s1 + $0xe8] sm:$0xf]
        %v388 = vld [vmem:[%s1 + $0xec] sm:$0xf]
        %v389 = vld [vmem:[%s1 + $0xf0] sm:$0xf]
        %v390 = vld [vmem:[%s1 + $0xf4] sm:$0xf]
        %v391 = vld [vmem:[%s1 + $0xf8] sm:$0xf]
        %v392 = vld [vmem:[%s1 + $0xfc] sm:$0xf]
        %v393 = vld [vmem:[%s1 + $0x100] sm:$0xf]
        %v394 = vld [vmem:[%s1 + $0x104] sm:$0xf]
        %v395 = vld [vmem:[%s1 + $0x108] sm:$0xf]
        %v396 = vld [vmem:[%s1 + $0x10c] sm:$0xf]
        %v397 = vld [vmem:[%s1 + $0x110] sm:$0xf]
        %v398 = vld [vmem:[%s1 + $0x114] sm:$0xf]
        %v399 = vld [vmem:[%s1 + $0x118] sm:$0xf]
        %v400 = vld [vmem:[%s1 + $0x11c] sm:$0xf]
        %v401 = vld [vmem:[%s1 + $0x120] sm:$0xf]
        %v402 = vld [vmem:[%s1 + $0x124] sm:$0xf]
        %v403 = vld [vmem:[%s1 + $0x128] sm:$0xf]
        %v404 = vld [vmem:[%s1 + $0x12c] sm:$0xf]
        %v405 = vld [vmem:[%s1 + $0x130] sm:$0xf]
        %v406 = vld [vmem:[%s1 + $0x134] sm:$0xf]
        %v407 = vld [vmem:[%s1 + $0x138] sm:$0xf]
        %v408 = vld [vmem:[%s1 + $0x13c] sm:$0xf]
        %v409 = vld [vmem:[%s1 + $0x140] sm:$0xf]
        %v410 = vld [vmem:[%s1 + $0x144] sm:$0xf]
        %v411 = vld [vmem:[%s1 + $0x148] sm:$0xf]
        %v412 = vld [vmem:[%s1 + $0x14c] sm:$0xf]
        %v413 = vld [vmem:[%s1 + $0x150] sm:$0xf]
        %v414 = vld [vmem:[%s1 + $0x154] sm:$0xf]
        %v415 = vld [vmem:[%s1 + $0x158] sm:$0xf]
        %v416 = vld [vmem:[%s1 + $0x15c] sm:$0xf]
        %v417 = vld [vmem:[%s1 + $0x160] sm:$0xf]
        %v418 = vld [vmem:[%s1 + $0x164] sm:$0xf]
        %v419 = vld [vmem:[%s1 + $0x168] sm:$0xf]
        %v420 = vld [vmem:[%s1 + $0x16c] sm:$0xf]
        %v421 = vld [vmem:[%s1 + $0x170] sm:$0xf]
        %v422 = vld [vmem:[%s1 + $0x174] sm:$0xf]
        %v423 = vld [vmem:[%s1 + $0x178] sm:$0xf]
        %v424 = vld [vmem:[%s1 + $0x17c] sm:$0xf]
        %v425 = vld [vmem:[%s1 + $0x180] sm:$0xf]
        %v426 = vld [vmem:[%s1 + $0x184] sm:$0xf]
        %v427 = vld [vmem:[%s1 + $0x188] sm:$0xf]
        %v428 = vld [vmem:[%s1 + $0x18c] sm:$0xf]
        %v429 = vld [vmem:[%s2] sm:$0x1]
        %v431 = vlaneseq
        %v432 = vshrl.u32 %v431, 7
        %v433 = vsub.s32 0, %v432
        %v434 = vrot.slane %v429, %v433
        %v564 = vunpack.c.l.b16 %v201
        %v565 = vunpack.c.h.b16 %v201
        %v566 = vunpack.c.l.b16 %v202
        %v567 = vunpack.c.h.b16 %v202
        %v568 = vunpack.c.l.b16 %v203
        %v569 = vunpack.c.h.b16 %v203
        %v570 = vunpack.c.l.b16 %v204
        %v571 = vunpack.c.l.b16 %v205
        %v572 = vunpack.c.h.b16 %v205
        %v573 = vunpack.c.l.b16 %v206
        %v574 = vunpack.c.h.b16 %v206
        %v575 = vunpack.c.l.b16 %v207
        %v576 = vunpack.c.h.b16 %v207
        %v577 = vunpack.c.l.b16 %v208
        %v578 = vunpack.c.l.b16 %v209
        %v579 = vunpack.c.h.b16 %v209
        %v580 = vunpack.c.l.b16 %v210
        %v581 = vunpack.c.h.b16 %v210
        %v582 = vunpack.c.l.b16 %v211
        %v583 = vunpack.c.h.b16 %v211
        %v584 = vunpack.c.l.b16 %v212
        %v585 = vunpack.c.l.b16 %v213
        %v586 = vunpack.c.h.b16 %v213
        %v587 = vunpack.c.l.b16 %v214
        %v588 = vunpack.c.h.b16 %v214
        %v589 = vunpack.c.l.b16 %v215
        %v590 = vunpack.c.h.b16 %v215
        %v591 = vunpack.c.l.b16 %v216
        %v592 = vunpack.c.l.b16 %v217
        %v593 = vunpack.c.h.b16 %v217
        %v594 = vunpack.c.l.b16 %v218
        %v595 = vunpack.c.h.b16 %v218
        %v596 = vunpack.c.l.b16 %v219
        %v597 = vunpack.c.h.b16 %v219
        %v598 = vunpack.c.l.b16 %v220
        %v599 = vunpack.c.l.b16 %v221
        %v600 = vunpack.c.h.b16 %v221
        %v601 = vunpack.c.l.b16 %v222
        %v602 = vunpack.c.h.b16 %v222
        %v603 = vunpack.c.l.b16 %v223
        %v604 = vunpack.c.h.b16 %v223
        %v605 = vunpack.c.l.b16 %v224
        %v606 = vunpack.c.l.b16 %v225
        %v607 = vunpack.c.h.b16 %v225
        %v608 = vunpack.c.l.b16 %v226
        %v609 = vunpack.c.h.b16 %v226
        %v610 = vunpack.c.l.b16 %v227
        %v611 = vunpack.c.h.b16 %v227
        %v612 = vunpack.c.l.b16 %v228
        %v613 = vunpack.c.l.b16 %v229
        %v614 = vunpack.c.h.b16 %v229
        %v615 = vunpack.c.l.b16 %v230
        %v616 = vunpack.c.h.b16 %v230
        %v617 = vunpack.c.l.b16 %v231
        %v618 = vunpack.c.h.b16 %v231
        %v619 = vunpack.c.l.b16 %v232
        %v620 = vunpack.c.l.b16 %v233
        %v621 = vunpack.c.h.b16 %v233
        %v622 = vunpack.c.l.b16 %v234
        %v623 = vunpack.c.h.b16 %v234
        %v624 = vunpack.c.l.b16 %v235
        %v625 = vunpack.c.h.b16 %v235
        %v626 = vunpack.c.l.b16 %v236
        %v627 = vunpack.c.l.b16 %v237
        %v628 = vunpack.c.h.b16 %v237
        %v629 = vunpack.c.l.b16 %v238
        %v630 = vunpack.c.h.b16 %v238
        %v631 = vunpack.c.l.b16 %v239
        %v632 = vunpack.c.h.b16 %v239
        %v633 = vunpack.c.l.b16 %v240
        %v634 = vunpack.c.l.b16 %v241
        %v635 = vunpack.c.h.b16 %v241
        %v636 = vunpack.c.l.b16 %v242
        %v637 = vunpack.c.h.b16 %v242
        %v638 = vunpack.c.l.b16 %v243
        %v639 = vunpack.c.h.b16 %v243
        %v640 = vunpack.c.l.b16 %v244
        %v641 = vunpack.c.l.b16 %v245
        %v642 = vunpack.c.h.b16 %v245
        %v643 = vunpack.c.l.b16 %v246
        %v644 = vunpack.c.h.b16 %v246
        %v645 = vunpack.c.l.b16 %v247
        %v646 = vunpack.c.h.b16 %v247
        %v647 = vunpack.c.l.b16 %v248
        %v648 = vunpack.c.l.b16 %v249
        %v649 = vunpack.c.h.b16 %v249
        %v650 = vunpack.c.l.b16 %v250
        %v651 = vunpack.c.h.b16 %v250
        %v652 = vunpack.c.l.b16 %v251
        %v653 = vunpack.c.h.b16 %v251
        %v654 = vunpack.c.l.b16 %v252
        %v655 = vunpack.c.l.b16 %v253
        %v656 = vunpack.c.h.b16 %v253
        %v657 = vunpack.c.l.b16 %v254
        %v658 = vunpack.c.h.b16 %v254
        %v659 = vunpack.c.l.b16 %v255
        %v660 = vunpack.c.h.b16 %v255
        %v661 = vunpack.c.l.b16 %v256
        %v662 = vunpack.c.l.b16 %v257
        %v663 = vunpack.c.h.b16 %v257
        %v664 = vunpack.c.l.b16 %v258
        %v665 = vunpack.c.h.b16 %v258
        %v666 = vunpack.c.l.b16 %v259
        %v667 = vunpack.c.h.b16 %v259
        %v668 = vunpack.c.l.b16 %v260
        %v669 = vunpack.c.l.b16 %v261
        %v670 = vunpack.c.h.b16 %v261
        %v671 = vunpack.c.l.b16 %v262
        %v672 = vunpack.c.h.b16 %v262
        %v673 = vunpack.c.l.b16 %v263
        %v674 = vunpack.c.h.b16 %v263
        %v675 = vunpack.c.l.b16 %v264
        %v676 = vunpack.c.l.b16 %v265
        %v677 = vunpack.c.h.b16 %v265
        %v678 = vunpack.c.l.b16 %v266
        %v679 = vunpack.c.h.b16 %v266
        %v680 = vunpack.c.l.b16 %v267
        %v681 = vunpack.c.h.b16 %v267
        %v682 = vunpack.c.l.b16 %v268
        %v683 = vunpack.c.l.b16 %v269
        %v684 = vunpack.c.h.b16 %v269
        %v685 = vunpack.c.l.b16 %v270
        %v686 = vunpack.c.h.b16 %v270
        %v687 = vunpack.c.l.b16 %v271
        %v688 = vunpack.c.h.b16 %v271
        %v689 = vunpack.c.l.b16 %v272
        %v690 = vunpack.c.l.b16 %v273
        %v691 = vunpack.c.h.b16 %v273
        %v692 = vunpack.c.l.b16 %v274
        %v693 = vunpack.c.h.b16 %v274
        %v694 = vunpack.c.l.b16 %v275
        %v695 = vunpack.c.h.b16 %v275
        %v696 = vunpack.c.l.b16 %v276
        %v697 = vunpack.c.l.b16 %v277
        %v698 = vunpack.c.h.b16 %v277
        %v699 = vunpack.c.l.b16 %v278
        %v700 = vunpack.c.h.b16 %v278
        %v701 = vunpack.c.l.b16 %v279
        %v702 = vunpack.c.h.b16 %v279
        %v703 = vunpack.c.l.b16 %v280
        %v704 = vunpack.c.l.b16 %v281
        %v705 = vunpack.c.h.b16 %v281
        %v706 = vunpack.c.l.b16 %v282
        %v707 = vunpack.c.h.b16 %v282
        %v708 = vunpack.c.l.b16 %v283
        %v709 = vunpack.c.h.b16 %v283
        %v710 = vunpack.c.l.b16 %v284
        %v711 = vunpack.c.l.b16 %v285
        %v712 = vunpack.c.h.b16 %v285
        %v713 = vunpack.c.l.b16 %v286
        %v714 = vunpack.c.h.b16 %v286
        %v715 = vunpack.c.l.b16 %v287
        %v716 = vunpack.c.h.b16 %v287
        %v717 = vunpack.c.l.b16 %v288
        %v718 = vunpack.c.l.b16 %v289
        %v719 = vunpack.c.h.b16 %v289
        %v720 = vunpack.c.l.b16 %v290
        %v721 = vunpack.c.h.b16 %v290
        %v722 = vunpack.c.l.b16 %v291
        %v723 = vunpack.c.h.b16 %v291
        %v724 = vunpack.c.l.b16 %v292
        %v725 = vunpack.c.l.b16 %v293
        %v726 = vunpack.c.h.b16 %v293
        %v727 = vunpack.c.l.b16 %v294
        %v728 = vunpack.c.h.b16 %v294
        %v729 = vunpack.c.l.b16 %v295
        %v730 = vunpack.c.h.b16 %v295
        %v731 = vunpack.c.l.b16 %v296
        %v732 = vunpack.c.l.b16 %v297
        %v733 = vunpack.c.h.b16 %v297
        %v734 = vunpack.c.l.b16 %v298
        %v735 = vunpack.c.h.b16 %v298
        %v736 = vunpack.c.l.b16 %v299
        %v737 = vunpack.c.h.b16 %v299
        %v738 = vunpack.c.l.b16 %v300
        %v739 = vunpack.c.l.b16 %v301
        %v740 = vunpack.c.h.b16 %v301
        %v741 = vunpack.c.l.b16 %v302
        %v742 = vunpack.c.h.b16 %v302
        %v743 = vunpack.c.l.b16 %v303
        %v744 = vunpack.c.h.b16 %v303
        %v745 = vunpack.c.l.b16 %v304
        %v746 = vunpack.c.l.b16 %v305
        %v747 = vunpack.c.h.b16 %v305
        %v748 = vunpack.c.l.b16 %v306
        %v749 = vunpack.c.h.b16 %v306
        %v750 = vunpack.c.l.b16 %v307
        %v751 = vunpack.c.h.b16 %v307
        %v752 = vunpack.c.l.b16 %v308
        %v753 = vunpack.c.l.b16 %v309
        %v754 = vunpack.c.h.b16 %v309
        %v755 = vunpack.c.l.b16 %v310
        %v756 = vunpack.c.h.b16 %v310
        %v757 = vunpack.c.l.b16 %v311
        %v758 = vunpack.c.h.b16 %v311
        %v759 = vunpack.c.l.b16 %v312
        %v760 = vunpack.c.l.b16 %v313
        %v761 = vunpack.c.h.b16 %v313
        %v762 = vunpack.c.l.b16 %v314
        %v763 = vunpack.c.h.b16 %v314
        %v764 = vunpack.c.l.b16 %v315
        %v765 = vunpack.c.h.b16 %v315
        %v766 = vunpack.c.l.b16 %v316
        %v767 = vunpack.c.l.b16 %v317
        %v768 = vunpack.c.h.b16 %v317
        %v769 = vunpack.c.l.b16 %v318
        %v770 = vunpack.c.h.b16 %v318
        %v771 = vunpack.c.l.b16 %v319
        %v772 = vunpack.c.h.b16 %v319
        %v773 = vunpack.c.l.b16 %v320
        %v774 = vunpack.c.l.b16 %v321
        %v775 = vunpack.c.h.b16 %v321
        %v776 = vunpack.c.l.b16 %v322
        %v777 = vunpack.c.h.b16 %v322
        %v778 = vunpack.c.l.b16 %v323
        %v779 = vunpack.c.h.b16 %v323
        %v780 = vunpack.c.l.b16 %v324
        %v781 = vunpack.c.l.b16 %v325
        %v782 = vunpack.c.h.b16 %v325
        %v783 = vunpack.c.l.b16 %v326
        %v784 = vunpack.c.h.b16 %v326
        %v785 = vunpack.c.l.b16 %v327
        %v786 = vunpack.c.h.b16 %v327
        %v787 = vunpack.c.l.b16 %v328
        %v788 = vpack.c.b16 %v571, %v564
        %v789 = vpack.c.b16 %v572, %v565
        %v790 = vpack.c.b16 %v573, %v566
        %v791 = vpack.c.b16 %v574, %v567
        %v792 = vpack.c.b16 %v575, %v568
        %v793 = vpack.c.b16 %v576, %v569
        %v794 = vpack.c.b16 %v577, %v570
        %v795 = vpack.c.b16 %v585, %v578
        %v796 = vpack.c.b16 %v586, %v579
        %v797 = vpack.c.b16 %v587, %v580
        %v798 = vpack.c.b16 %v588, %v581
        %v799 = vpack.c.b16 %v589, %v582
        %v800 = vpack.c.b16 %v590, %v583
        %v801 = vpack.c.b16 %v591, %v584
        %v802 = vpack.c.b16 %v599, %v592
        %v803 = vpack.c.b16 %v600, %v593
        %v804 = vpack.c.b16 %v601, %v594
        %v805 = vpack.c.b16 %v602, %v595
        %v806 = vpack.c.b16 %v603, %v596
        %v807 = vpack.c.b16 %v604, %v597
        %v808 = vpack.c.b16 %v605, %v598
        %v809 = vpack.c.b16 %v613, %v606
        %v810 = vpack.c.b16 %v614, %v607
        %v811 = vpack.c.b16 %v615, %v608
        %v812 = vpack.c.b16 %v616, %v609
        %v813 = vpack.c.b16 %v617, %v610
        %v814 = vpack.c.b16 %v618, %v611
        %v815 = vpack.c.b16 %v619, %v612
        %v816 = vpack.c.b16 %v627, %v620
        %v817 = vpack.c.b16 %v628, %v621
        %v818 = vpack.c.b16 %v629, %v622
        %v819 = vpack.c.b16 %v630, %v623
        %v820 = vpack.c.b16 %v631, %v624
        %v821 = vpack.c.b16 %v632, %v625
        %v822 = vpack.c.b16 %v633, %v626
        %v823 = vpack.c.b16 %v641, %v634
        %v824 = vpack.c.b16 %v642, %v635
        %v825 = vpack.c.b16 %v643, %v636
        %v826 = vpack.c.b16 %v644, %v637
        %v827 = vpack.c.b16 %v645, %v638
        %v828 = vpack.c.b16 %v646, %v639
        %v829 = vpack.c.b16 %v647, %v640
        %v830 = vpack.c.b16 %v655, %v648
        %v831 = vpack.c.b16 %v656, %v649
        %v832 = vpack.c.b16 %v657, %v650
        %v833 = vpack.c.b16 %v658, %v651
        %v834 = vpack.c.b16 %v659, %v652
        %v835 = vpack.c.b16 %v660, %v653
        %v836 = vpack.c.b16 %v661, %v654
        %v837 = vpack.c.b16 %v669, %v662
        %v838 = vpack.c.b16 %v670, %v663
        %v839 = vpack.c.b16 %v671, %v664
        %v840 = vpack.c.b16 %v672, %v665
        %v841 = vpack.c.b16 %v673, %v666
        %v842 = vpack.c.b16 %v674, %v667
        %v843 = vpack.c.b16 %v675, %v668
        %v844 = vpack.c.b16 %v683, %v676
        %v845 = vpack.c.b16 %v684, %v677
        %v846 = vpack.c.b16 %v685, %v678
        %v847 = vpack.c.b16 %v686, %v679
        %v848 = vpack.c.b16 %v687, %v680
        %v849 = vpack.c.b16 %v688, %v681
        %v850 = vpack.c.b16 %v689, %v682
        %v851 = vpack.c.b16 %v697, %v690
        %v852 = vpack.c.b16 %v698, %v691
        %v853 = vpack.c.b16 %v699, %v692
        %v854 = vpack.c.b16 %v700, %v693
        %v855 = vpack.c.b16 %v701, %v694
        %v856 = vpack.c.b16 %v702, %v695
        %v857 = vpack.c.b16 %v703, %v696
        %v858 = vpack.c.b16 %v711, %v704
        %v859 = vpack.c.b16 %v712, %v705
        %v860 = vpack.c.b16 %v713, %v706
        %v861 = vpack.c.b16 %v714, %v707
        %v862 = vpack.c.b16 %v715, %v708
        %v863 = vpack.c.b16 %v716, %v709
        %v864 = vpack.c.b16 %v717, %v710
        %v865 = vpack.c.b16 %v725, %v718
        %v866 = vpack.c.b16 %v726, %v719
        %v867 = vpack.c.b16 %v727, %v720
        %v868 = vpack.c.b16 %v728, %v721
        %v869 = vpack.c.b16 %v729, %v722
        %v870 = vpack.c.b16 %v730, %v723
        %v871 = vpack.c.b16 %v731, %v724
        %v872 = vpack.c.b16 %v739, %v732
        %v873 = vpack.c.b16 %v740, %v733
        %v874 = vpack.c.b16 %v741, %v734
        %v875 = vpack.c.b16 %v742, %v735
        %v876 = vpack.c.b16 %v743, %v736
        %v877 = vpack.c.b16 %v744, %v737
        %v878 = vpack.c.b16 %v745, %v738
        %v879 = vpack.c.b16 %v753, %v746
        %v880 = vpack.c.b16 %v754, %v747
        %v881 = vpack.c.b16 %v755, %v748
        %v882 = vpack.c.b16 %v756, %v749
        %v883 = vpack.c.b16 %v757, %v750
        %v884 = vpack.c.b16 %v758, %v751
        %v885 = vpack.c.b16 %v759, %v752
        %v886 = vpack.c.b16 %v767, %v760
        %v887 = vpack.c.b16 %v768, %v761
        %v888 = vpack.c.b16 %v769, %v762
        %v889 = vpack.c.b16 %v770, %v763
        %v890 = vpack.c.b16 %v771, %v764
        %v891 = vpack.c.b16 %v772, %v765
        %v892 = vpack.c.b16 %v773, %v766
        %v893 = vpack.c.b16 %v781, %v774
        %v894 = vpack.c.b16 %v782, %v775
        %v895 = vpack.c.b16 %v783, %v776
        %v896 = vpack.c.b16 %v784, %v777
        %v897 = vpack.c.b16 %v785, %v778
        %v898 = vpack.c.b16 %v786, %v779
        %v899 = vpack.c.b16 %v787, %v780
        %v1096 = vunpack.c.l.b16 %v329
        %v1097 = vunpack.c.l.b16 %v330
        %v1098 = vunpack.c.l.b16 %v331
        %v1099 = vunpack.c.l.b16 %v332
        %v1100 = vunpack.c.l.b16 %v333
        %v1101 = vunpack.c.l.b16 %v334
        %v1102 = vunpack.c.l.b16 %v335
        %v1103 = vunpack.c.l.b16 %v336
        %v1104 = vunpack.c.l.b16 %v337
        %v1105 = vunpack.c.l.b16 %v338
        %v1106 = vunpack.c.l.b16 %v339
        %v1107 = vunpack.c.l.b16 %v340
        %v1108 = vunpack.c.l.b16 %v341
        %v1109 = vunpack.c.l.b16 %v342
        %v1110 = vunpack.c.l.b16 %v343
        %v1111 = vunpack.c.l.b16 %v344
        %v1112 = vunpack.c.l.b16 %v345
        %v1113 = vunpack.c.l.b16 %v346
        %v1114 = vunpack.c.l.b16 %v347
        %v1115 = vunpack.c.l.b16 %v348
        %v1116 = vunpack.c.l.b16 %v349
        %v1117 = vunpack.c.l.b16 %v350
        %v1118 = vunpack.c.l.b16 %v351
        %v1119 = vunpack.c.l.b16 %v352
        %v1120 = vunpack.c.l.b16 %v353
        %v1121 = vunpack.c.l.b16 %v354
        %v1122 = vunpack.c.l.b16 %v355
        %v1123 = vunpack.c.l.b16 %v356
        %v1124 = vunpack.c.l.b16 %v357
        %v1125 = vunpack.c.l.b16 %v358
        %v1126 = vunpack.c.l.b16 %v359
        %v1127 = vunpack.c.l.b16 %v360
        %v1128 = vunpack.c.l.b16 %v361
        %v1129 = vunpack.c.l.b16 %v362
        %v1130 = vunpack.c.l.b16 %v363
        %v1131 = vunpack.c.l.b16 %v364
        %v1132 = vunpack.c.l.b16 %v365
        %v1133 = vunpack.c.l.b16 %v366
        %v1134 = vunpack.c.l.b16 %v367
        %v1135 = vunpack.c.l.b16 %v368
        %v1136 = vunpack.c.l.b16 %v369
        %v1137 = vunpack.c.l.b16 %v370
        %v1138 = vunpack.c.l.b16 %v371
        %v1139 = vunpack.c.l.b16 %v372
        %v1140 = vunpack.c.l.b16 %v373
        %v1141 = vunpack.c.l.b16 %v374
        %v1142 = vunpack.c.l.b16 %v375
        %v1143 = vunpack.c.l.b16 %v376
        %v1144 = vunpack.c.l.b16 %v377
        %v1145 = vunpack.c.l.b16 %v378
        %v1146 = vunpack.c.l.b16 %v379
        %v1147 = vunpack.c.l.b16 %v380
        %v1148 = vunpack.c.l.b16 %v381
        %v1149 = vunpack.c.l.b16 %v382
        %v1150 = vunpack.c.l.b16 %v383
        %v1151 = vunpack.c.l.b16 %v384
        %v1152 = vunpack.c.l.b16 %v385
        %v1153 = vunpack.c.l.b16 %v386
        %v1154 = vunpack.c.l.b16 %v387
        %v1155 = vunpack.c.l.b16 %v388
        %v1156 = vunpack.c.l.b16 %v389
        %v1157 = vunpack.c.l.b16 %v390
        %v1158 = vunpack.c.l.b16 %v391
        %v1159 = vunpack.c.l.b16 %v392
        %v1160 = vunpack.c.l.b16 %v393
        %v1161 = vunpack.c.l.b16 %v394
        %v1162 = vunpack.c.l.b16 %v395
        %v1163 = vunpack.c.l.b16 %v396
        %v1164 = vunpack.c.l.b16 %v397
        %v1165 = vunpack.c.l.b16 %v398
        %v1166 = vunpack.c.l.b16 %v399
        %v1167 = vunpack.c.l.b16 %v400
        %v1168 = vunpack.c.l.b16 %v401
        %v1169 = vunpack.c.l.b16 %v402
        %v1170 = vunpack.c.l.b16 %v403
        %v1171 = vunpack.c.l.b16 %v404
        %v1172 = vunpack.c.l.b16 %v405
        %v1173 = vunpack.c.l.b16 %v406
        %v1174 = vunpack.c.l.b16 %v407
        %v1175 = vunpack.c.l.b16 %v408
        %v1176 = vunpack.c.l.b16 %v409
        %v1177 = vunpack.c.l.b16 %v410
        %v1178 = vunpack.c.l.b16 %v411
        %v1179 = vunpack.c.l.b16 %v412
        %v1180 = vunpack.c.l.b16 %v413
        %v1181 = vunpack.c.l.b16 %v414
        %v1182 = vunpack.c.l.b16 %v415
        %v1183 = vunpack.c.l.b16 %v416
        %v1184 = vunpack.c.l.b16 %v417
        %v1185 = vunpack.c.l.b16 %v418
        %v1186 = vunpack.c.l.b16 %v419
        %v1187 = vunpack.c.l.b16 %v420
        %v1188 = vunpack.c.l.b16 %v421
        %v1189 = vunpack.c.l.b16 %v422
        %v1190 = vunpack.c.l.b16 %v423
        %v1191 = vunpack.c.l.b16 %v424
        %v1192 = vunpack.c.l.b16 %v425
        %v1193 = vunpack.c.l.b16 %v426
        %v1194 = vunpack.c.l.b16 %v427
        %v1195 = vunpack.c.l.b16 %v428
        %v1196 = vpack.c.b16 %v1097, %v1096
        %v1197 = vpack.c.b16 %v1099, %v1098
        %v1198 = vpack.c.b16 %v1101, %v1100
        %v1199 = vpack.c.b16 %v1103, %v1102
        %v1200 = vpack.c.b16 %v1105, %v1104
        %v1201 = vpack.c.b16 %v1107, %v1106
        %v1202 = vpack.c.b16 %v1109, %v1108
        %v1203 = vpack.c.b16 %v1111, %v1110
        %v1204 = vpack.c.b16 %v1113, %v1112
        %v1205 = vpack.c.b16 %v1115, %v1114
        %v1206 = vpack.c.b16 %v1117, %v1116
        %v1207 = vpack.c.b16 %v1119, %v1118
        %v1208 = vpack.c.b16 %v1121, %v1120
        %v1209 = vpack.c.b16 %v1123, %v1122
        %v1210 = vpack.c.b16 %v1125, %v1124
        %v1211 = vpack.c.b16 %v1127, %v1126
        %v1212 = vpack.c.b16 %v1129, %v1128
        %v1213 = vpack.c.b16 %v1131, %v1130
        %v1214 = vpack.c.b16 %v1133, %v1132
        %v1215 = vpack.c.b16 %v1135, %v1134
        %v1216 = vpack.c.b16 %v1137, %v1136
        %v1217 = vpack.c.b16 %v1139, %v1138
        %v1218 = vpack.c.b16 %v1141, %v1140
        %v1219 = vpack.c.b16 %v1143, %v1142
        %v1220 = vpack.c.b16 %v1145, %v1144
        %v1221 = vpack.c.b16 %v1147, %v1146
        %v1222 = vpack.c.b16 %v1149, %v1148
        %v1223 = vpack.c.b16 %v1151, %v1150
        %v1224 = vpack.c.b16 %v1153, %v1152
        %v1225 = vpack.c.b16 %v1155, %v1154
        %v1226 = vpack.c.b16 %v1157, %v1156
        %v1227 = vpack.c.b16 %v1159, %v1158
        %v1228 = vpack.c.b16 %v1161, %v1160
        %v1229 = vpack.c.b16 %v1163, %v1162
        %v1230 = vpack.c.b16 %v1165, %v1164
        %v1231 = vpack.c.b16 %v1167, %v1166
        %v1232 = vpack.c.b16 %v1169, %v1168
        %v1233 = vpack.c.b16 %v1171, %v1170
        %v1234 = vpack.c.b16 %v1173, %v1172
        %v1235 = vpack.c.b16 %v1175, %v1174
        %v1236 = vpack.c.b16 %v1177, %v1176
        %v1237 = vpack.c.b16 %v1179, %v1178
        %v1238 = vpack.c.b16 %v1181, %v1180
        %v1239 = vpack.c.b16 %v1183, %v1182
        %v1240 = vpack.c.b16 %v1185, %v1184
        %v1241 = vpack.c.b16 %v1187, %v1186
        %v1242 = vpack.c.b16 %v1189, %v1188
        %v1243 = vpack.c.b16 %v1191, %v1190
        %v1244 = vpack.c.b16 %v1193, %v1192
        %v1245 = vpack.c.b16 %v1195, %v1194
        %vm1296 = vcmask 261120
        %v1298 = vsel %vm1296, %v794, 0
        %v1301 = vsel %vm1296, %v801, 0
        %v1304 = vsel %vm1296, %v808, 0
        %v1307 = vsel %vm1296, %v815, 0
        %v1310 = vsel %vm1296, %v822, 0
        %v1313 = vsel %vm1296, %v829, 0
        %v1316 = vsel %vm1296, %v836, 0
        %v1319 = vsel %vm1296, %v843, 0
        %v1322 = vsel %vm1296, %v850, 0
        %v1325 = vsel %vm1296, %v857, 0
        %v1328 = vsel %vm1296, %v864, 0
        %v1331 = vsel %vm1296, %v871, 0
        %v1334 = vsel %vm1296, %v878, 0
        %v1337 = vsel %vm1296, %v885, 0
        %v1340 = vsel %vm1296, %v892, 0
        %v1343 = vsel %vm1296, %v899, 0
        %1345 = vmatprep.subr.bf16.mxu0 0
        %1346 = vmatpush1.bf16.msra.mxu0 %v1203
        %1347 = vmatprep.subr.bf16.mxu0 0
        %1348 = vmatpush1.bf16.msra.mxu0 %v1202
        %1349 = vmatprep.subr.bf16.mxu0 0
        %1350 = vmatpush1.bf16.msra.mxu0 %v1201
        %1351 = vmatprep.subr.bf16.mxu0 0
        %1352 = vmatpush1.bf16.msra.mxu0 %v1200
        %1353 = vmatprep.subr.bf16.mxu0 0
        %1354 = vmatpush1.bf16.msra.mxu0 %v1199
        %1355 = vmatprep.subr.bf16.mxu0 0
        %1356 = vmatpush1.bf16.msra.mxu0 %v1198
        %1357 = vmatprep.subr.bf16.mxu0 0
        %1358 = vmatpush1.bf16.msra.mxu0 %v1197
        %1359 = vmatprep.subr.bf16.mxu0 0
        %1360 = vmatpush1.bf16.msra.mxu0 %v1196
        %1361 = vmatprep.subr.bf16.mxu0 0
        %1362 = vmatpush2.bf16.msra.mxu0 %v1211
        %1363 = vmatprep.subr.bf16.mxu0 0
        %1364 = vmatpush2.bf16.msra.mxu0 %v1210
        %1365 = vmatprep.subr.bf16.mxu0 0
        %1366 = vmatpush2.bf16.msra.mxu0 %v1209
        %1367 = vmatprep.subr.bf16.mxu0 0
        %1368 = vmatpush2.bf16.msra.mxu0 %v1208
        %1369 = vmatprep.subr.bf16.mxu0 0
        %1370 = vmatpush2.bf16.msra.mxu0 %v1207
        %1371 = vmatprep.subr.bf16.mxu0 0
        %1372 = vmatpush2.bf16.msra.mxu0 %v1206
        %1373 = vmatprep.subr.bf16.mxu0 0
        %1374 = vmatpush2.bf16.msra.mxu0 %v1205
        %1375 = vmatprep.subr.bf16.mxu0 0
        %1376 = vmatpush2.bf16.msra.mxu0 %v1204
        %1377 = vmatprep.mubr.bf16.mxu0 %v789
        %1378 = vmatmul.mubr.bf16.gmra.mxu0 %v788
        %v1379 = vpop.f32.mrf.mxu0
        %v1380 = vadd.f32 %v434, %v1379
        %v1381 = vpop.f32.mrf.mxu0
        %v1382 = vpop.f32.mrf.mxu0
        %v1383 = vadd.f32 %v434, %v1382
        %v1384 = vpop.f32.mrf.mxu0
        %1385 = vmatprep.mubr.bf16.mxu0 %v796
        %1386 = vmatmul.mubr.bf16.gmra.mxu0 %v795
        %v1387 = vpop.f32.mrf.mxu0
        %v1388 = vadd.f32 %v434, %v1387
        %v1389 = vpop.f32.mrf.mxu0
        %v1390 = vpop.f32.mrf.mxu0
        %v1391 = vadd.f32 %v434, %v1390
        %v1392 = vpop.f32.mrf.mxu0
        %1393 = vmatprep.mubr.bf16.mxu0 %v803
        %1394 = vmatmul.mubr.bf16.gmra.mxu0 %v802
        %v1395 = vpop.f32.mrf.mxu0
        %v1396 = vadd.f32 %v434, %v1395
        %v1397 = vpop.f32.mrf.mxu0
        %v1398 = vpop.f32.mrf.mxu0
        %v1399 = vadd.f32 %v434, %v1398
        %v1400 = vpop.f32.mrf.mxu0
        %1401 = vmatprep.mubr.bf16.mxu0 %v810
        %1402 = vmatmul.mubr.bf16.gmra.mxu0 %v809
        %v1403 = vpop.f32.mrf.mxu0
        %v1404 = vadd.f32 %v434, %v1403
        %v1405 = vpop.f32.mrf.mxu0
        %v1406 = vpop.f32.mrf.mxu0
        %v1407 = vadd.f32 %v434, %v1406
        %v1408 = vpop.f32.mrf.mxu0
        %1409 = vmatprep.mubr.bf16.mxu0 %v817
        %1410 = vmatmul.mubr.bf16.gmra.mxu0 %v816
        %v1411 = vpop.f32.mrf.mxu0
        %v1412 = vadd.f32 %v434, %v1411
        %v1413 = vpop.f32.mrf.mxu0
        %v1414 = vpop.f32.mrf.mxu0
        %v1415 = vadd.f32 %v434, %v1414
        %v1416 = vpop.f32.mrf.mxu0
        %1417 = vmatprep.mubr.bf16.mxu0 %v824
        %1418 = vmatmul.mubr.bf16.gmra.mxu0 %v823
        %v1419 = vpop.f32.mrf.mxu0
        %v1420 = vadd.f32 %v434, %v1419
        %v1421 = vpop.f32.mrf.mxu0
        %v1422 = vpop.f32.mrf.mxu0
        %v1423 = vadd.f32 %v434, %v1422
        %v1424 = vpop.f32.mrf.mxu0
        %1425 = vmatprep.mubr.bf16.mxu0 %v831
        %1426 = vmatmul.mubr.bf16.gmra.mxu0 %v830
        %v1427 = vpop.f32.mrf.mxu0
        %v1428 = vadd.f32 %v434, %v1427
        %v1429 = vpop.f32.mrf.mxu0
        %v1430 = vpop.f32.mrf.mxu0
        %v1431 = vadd.f32 %v434, %v1430
        %v1432 = vpop.f32.mrf.mxu0
        %1433 = vmatprep.mubr.bf16.mxu0 %v838
        %1434 = vmatmul.mubr.bf16.gmra.mxu0 %v837
        %v1435 = vpop.f32.mrf.mxu0
        %v1436 = vadd.f32 %v434, %v1435
        %v1437 = vpop.f32.mrf.mxu0
        %v1438 = vpop.f32.mrf.mxu0
        %v1439 = vadd.f32 %v434, %v1438
        %v1440 = vpop.f32.mrf.mxu0
        %1441 = vmatprep.mubr.bf16.mxu0 %v845
        %1442 = vmatmul.mubr.bf16.gmra.mxu0 %v844
        %v1443 = vpop.f32.mrf.mxu0
        %v1444 = vadd.f32 %v434, %v1443
        %v1445 = vpop.f32.mrf.mxu0
        %v1446 = vpop.f32.mrf.mxu0
        %v1447 = vadd.f32 %v434, %v1446
        %v1448 = vpop.f32.mrf.mxu0
        %1449 = vmatprep.mubr.bf16.mxu0 %v852
        %1450 = vmatmul.mubr.bf16.gmra.mxu0 %v851
        %v1451 = vpop.f32.mrf.mxu0
        %v1452 = vadd.f32 %v434, %v1451
        %v1453 = vpop.f32.mrf.mxu0
        %v1454 = vpop.f32.mrf.mxu0
        %v1455 = vadd.f32 %v434, %v1454
        %v1456 = vpop.f32.mrf.mxu0
        %1457 = vmatprep.mubr.bf16.mxu0 %v859
        %1458 = vmatmul.mubr.bf16.gmra.mxu0 %v858
        %v1459 = vpop.f32.mrf.mxu0
        %v1460 = vadd.f32 %v434, %v1459
        %v1461 = vpop.f32.mrf.mxu0
        %v1462 = vpop.f32.mrf.mxu0
        %v1463 = vadd.f32 %v434, %v1462
        %v1464 = vpop.f32.mrf.mxu0
        %1465 = vmatprep.mubr.bf16.mxu0 %v866
        %1466 = vmatmul.mubr.bf16.gmra.mxu0 %v865
        %v1467 = vpop.f32.mrf.mxu0
        %v1468 = vadd.f32 %v434, %v1467
        %v1469 = vpop.f32.mrf.mxu0
        %v1470 = vpop.f32.mrf.mxu0
        %v1471 = vadd.f32 %v434, %v1470
        %v1472 = vpop.f32.mrf.mxu0
        %1473 = vmatprep.mubr.bf16.mxu0 %v873
        %1474 = vmatmul.mubr.bf16.gmra.mxu0 %v872
        %v1475 = vpop.f32.mrf.mxu0
        %v1476 = vadd.f32 %v434, %v1475
        %v1477 = vpop.f32.mrf.mxu0
        %v1478 = vpop.f32.mrf.mxu0
        %v1479 = vadd.f32 %v434, %v1478
        %v1480 = vpop.f32.mrf.mxu0
        %1481 = vmatprep.mubr.bf16.mxu0 %v880
        %1482 = vmatmul.mubr.bf16.gmra.mxu0 %v879
        %v1483 = vpop.f32.mrf.mxu0
        %v1484 = vadd.f32 %v434, %v1483
        %v1485 = vpop.f32.mrf.mxu0
        %v1486 = vpop.f32.mrf.mxu0
        %v1487 = vadd.f32 %v434, %v1486
        %v1488 = vpop.f32.mrf.mxu0
        %1489 = vmatprep.mubr.bf16.mxu0 %v887
        %1490 = vmatmul.mubr.bf16.gmra.mxu0 %v886
        %v1491 = vpop.f32.mrf.mxu0
        %v1492 = vadd.f32 %v434, %v1491
        %v1493 = vpop.f32.mrf.mxu0
        %v1494 = vpop.f32.mrf.mxu0
        %v1495 = vadd.f32 %v434, %v1494
        %v1496 = vpop.f32.mrf.mxu0
        %1497 = vmatprep.mubr.bf16.mxu0 %v894
        %1498 = vmatmul.mubr.bf16.gmra.mxu0 %v893
        %v1499 = vpop.f32.mrf.mxu0
        %v1500 = vadd.f32 %v434, %v1499
        %v1501 = vpop.f32.mrf.mxu0
        %v1502 = vpop.f32.mrf.mxu0
        %v1503 = vadd.f32 %v434, %v1502
        %v1504 = vpop.f32.mrf.mxu0
        %1505 = vdwg.mxu0
        %1506 = vmatprep.subr.bf16.mxu0 0
        %1507 = vmatpush1.bf16.msra.mxu0 %v1219
        %1508 = vmatprep.subr.bf16.mxu0 0
        %1509 = vmatpush1.bf16.msra.mxu0 %v1218
        %1510 = vmatprep.subr.bf16.mxu0 0
        %1511 = vmatpush1.bf16.msra.mxu0 %v1217
        %1512 = vmatprep.subr.bf16.mxu0 0
        %1513 = vmatpush1.bf16.msra.mxu0 %v1216
        %1514 = vmatprep.subr.bf16.mxu0 0
        %1515 = vmatpush1.bf16.msra.mxu0 %v1215
        %1516 = vmatprep.subr.bf16.mxu0 0
        %1517 = vmatpush1.bf16.msra.mxu0 %v1214
        %1518 = vmatprep.subr.bf16.mxu0 0
        %1519 = vmatpush1.bf16.msra.mxu0 %v1213
        %1520 = vmatprep.subr.bf16.mxu0 0
        %1521 = vmatpush1.bf16.msra.mxu0 %v1212
        %1522 = vmatprep.subr.bf16.mxu0 0
        %1523 = vmatpush2.bf16.msra.mxu0 %v1227
        %1524 = vmatprep.subr.bf16.mxu0 0
        %1525 = vmatpush2.bf16.msra.mxu0 %v1226
        %1526 = vmatprep.subr.bf16.mxu0 0
        %1527 = vmatpush2.bf16.msra.mxu0 %v1225
        %1528 = vmatprep.subr.bf16.mxu0 0
        %1529 = vmatpush2.bf16.msra.mxu0 %v1224
        %1530 = vmatprep.subr.bf16.mxu0 0
        %1531 = vmatpush2.bf16.msra.mxu0 %v1223
        %1532 = vmatprep.subr.bf16.mxu0 0
        %1533 = vmatpush2.bf16.msra.mxu0 %v1222
        %1534 = vmatprep.subr.bf16.mxu0 0
        %1535 = vmatpush2.bf16.msra.mxu0 %v1221
        %1536 = vmatprep.subr.bf16.mxu0 0
        %1537 = vmatpush2.bf16.msra.mxu0 %v1220
        %1538 = vmatprep.mubr.bf16.mxu0 %v791
        %1539 = vmatmul.mubr.bf16.gmra.mxu0 %v790
        %v1540 = vpop.f32.mrf.mxu0
        %v1541 = vadd.f32 %v1380, %v1540
        %v1542 = vpop.f32.mrf.mxu0
        %v1543 = vpop.f32.mrf.mxu0
        %v1544 = vadd.f32 %v1383, %v1543
        %v1545 = vpop.f32.mrf.mxu0
        %1546 = vmatprep.mubr.bf16.mxu0 %v798
        %1547 = vmatmul.mubr.bf16.gmra.mxu0 %v797
        %v1548 = vpop.f32.mrf.mxu0
        %v1549 = vadd.f32 %v1388, %v1548
        %v1550 = vpop.f32.mrf.mxu0
        %v1551 = vpop.f32.mrf.mxu0
        %v1552 = vadd.f32 %v1391, %v1551
        %v1553 = vpop.f32.mrf.mxu0
        %1554 = vmatprep.mubr.bf16.mxu0 %v805
        %1555 = vmatmul.mubr.bf16.gmra.mxu0 %v804
        %v1556 = vpop.f32.mrf.mxu0
        %v1557 = vadd.f32 %v1396, %v1556
        %v1558 = vpop.f32.mrf.mxu0
        %v1559 = vpop.f32.mrf.mxu0
        %v1560 = vadd.f32 %v1399, %v1559
        %v1561 = vpop.f32.mrf.mxu0
        %1562 = vmatprep.mubr.bf16.mxu0 %v812
        %1563 = vmatmul.mubr.bf16.gmra.mxu0 %v811
        %v1564 = vpop.f32.mrf.mxu0
        %v1565 = vadd.f32 %v1404, %v1564
        %v1566 = vpop.f32.mrf.mxu0
        %v1567 = vpop.f32.mrf.mxu0
        %v1568 = vadd.f32 %v1407, %v1567
        %v1569 = vpop.f32.mrf.mxu0
        %1570 = vmatprep.mubr.bf16.mxu0 %v819
        %1571 = vmatmul.mubr.bf16.gmra.mxu0 %v818
        %v1572 = vpop.f32.mrf.mxu0
        %v1573 = vadd.f32 %v1412, %v1572
        %v1574 = vpop.f32.mrf.mxu0
        %v1575 = vpop.f32.mrf.mxu0
        %v1576 = vadd.f32 %v1415, %v1575
        %v1577 = vpop.f32.mrf.mxu0
        %1578 = vmatprep.mubr.bf16.mxu0 %v826
        %1579 = vmatmul.mubr.bf16.gmra.mxu0 %v825
        %v1580 = vpop.f32.mrf.mxu0
        %v1581 = vadd.f32 %v1420, %v1580
        %v1582 = vpop.f32.mrf.mxu0
        %v1583 = vpop.f32.mrf.mxu0
        %v1584 = vadd.f32 %v1423, %v1583
        %v1585 = vpop.f32.mrf.mxu0
        %1586 = vmatprep.mubr.bf16.mxu0 %v833
        %1587 = vmatmul.mubr.bf16.gmra.mxu0 %v832
        %v1588 = vpop.f32.mrf.mxu0
        %v1589 = vadd.f32 %v1428, %v1588
        %v1590 = vpop.f32.mrf.mxu0
        %v1591 = vpop.f32.mrf.mxu0
        %v1592 = vadd.f32 %v1431, %v1591
        %v1593 = vpop.f32.mrf.mxu0
        %1594 = vmatprep.mubr.bf16.mxu0 %v840
        %1595 = vmatmul.mubr.bf16.gmra.mxu0 %v839
        %v1596 = vpop.f32.mrf.mxu0
        %v1597 = vadd.f32 %v1436, %v1596
        %v1598 = vpop.f32.mrf.mxu0
        %v1599 = vpop.f32.mrf.mxu0
        %v1600 = vadd.f32 %v1439, %v1599
        %v1601 = vpop.f32.mrf.mxu0
        %1602 = vmatprep.mubr.bf16.mxu0 %v847
        %1603 = vmatmul.mubr.bf16.gmra.mxu0 %v846
        %v1604 = vpop.f32.mrf.mxu0
        %v1605 = vadd.f32 %v1444, %v1604
        %v1606 = vpop.f32.mrf.mxu0
        %v1607 = vpop.f32.mrf.mxu0
        %v1608 = vadd.f32 %v1447, %v1607
        %v1609 = vpop.f32.mrf.mxu0
        %1610 = vmatprep.mubr.bf16.mxu0 %v854
        %1611 = vmatmul.mubr.bf16.gmra.mxu0 %v853
        %v1612 = vpop.f32.mrf.mxu0
        %v1613 = vadd.f32 %v1452, %v1612
        %v1614 = vpop.f32.mrf.mxu0
        %v1615 = vpop.f32.mrf.mxu0
        %v1616 = vadd.f32 %v1455, %v1615
        %v1617 = vpop.f32.mrf.mxu0
        %1618 = vmatprep.mubr.bf16.mxu0 %v861
        %1619 = vmatmul.mubr.bf16.gmra.mxu0 %v860
        %v1620 = vpop.f32.mrf.mxu0
        %v1621 = vadd.f32 %v1460, %v1620
        %v1622 = vpop.f32.mrf.mxu0
        %v1623 = vpop.f32.mrf.mxu0
        %v1624 = vadd.f32 %v1463, %v1623
        %v1625 = vpop.f32.mrf.mxu0
        %1626 = vmatprep.mubr.bf16.mxu0 %v868
        %1627 = vmatmul.mubr.bf16.gmra.mxu0 %v867
        %v1628 = vpop.f32.mrf.mxu0
        %v1629 = vadd.f32 %v1468, %v1628
        %v1630 = vpop.f32.mrf.mxu0
        %v1631 = vpop.f32.mrf.mxu0
        %v1632 = vadd.f32 %v1471, %v1631
        %v1633 = vpop.f32.mrf.mxu0
        %1634 = vmatprep.mubr.bf16.mxu0 %v875
        %1635 = vmatmul.mubr.bf16.gmra.mxu0 %v874
        %v1636 = vpop.f32.mrf.mxu0
        %v1637 = vadd.f32 %v1476, %v1636
        %v1638 = vpop.f32.mrf.mxu0
        %v1639 = vpop.f32.mrf.mxu0
        %v1640 = vadd.f32 %v1479, %v1639
        %v1641 = vpop.f32.mrf.mxu0
        %1642 = vmatprep.mubr.bf16.mxu0 %v882
        %1643 = vmatmul.mubr.bf16.gmra.mxu0 %v881
        %v1644 = vpop.f32.mrf.mxu0
        %v1645 = vadd.f32 %v1484, %v1644
        %v1646 = vpop.f32.mrf.mxu0
        %v1647 = vpop.f32.mrf.mxu0
        %v1648 = vadd.f32 %v1487, %v1647
        %v1649 = vpop.f32.mrf.mxu0
        %1650 = vmatprep.mubr.bf16.mxu0 %v889
        %1651 = vmatmul.mubr.bf16.gmra.mxu0 %v888
        %v1652 = vpop.f32.mrf.mxu0
        %v1653 = vadd.f32 %v1492, %v1652
        %v1654 = vpop.f32.mrf.mxu0
        %v1655 = vpop.f32.mrf.mxu0
        %v1656 = vadd.f32 %v1495, %v1655
        %v1657 = vpop.f32.mrf.mxu0
        %1658 = vmatprep.mubr.bf16.mxu0 %v896
        %1659 = vmatmul.mubr.bf16.gmra.mxu0 %v895
        %v1660 = vpop.f32.mrf.mxu0
        %v1661 = vadd.f32 %v1500, %v1660
        %v1662 = vpop.f32.mrf.mxu0
        %v1663 = vpop.f32.mrf.mxu0
        %v1664 = vadd.f32 %v1503, %v1663
        %v1665 = vpop.f32.mrf.mxu0
        %1666 = vdwg.mxu0
        %1667 = vmatprep.subr.bf16.mxu0 0
        %1668 = vmatpush1.bf16.msra.mxu0 %v1235
        %1669 = vmatprep.subr.bf16.mxu0 0
        %1670 = vmatpush1.bf16.msra.mxu0 %v1234
        %1671 = vmatprep.subr.bf16.mxu0 0
        %1672 = vmatpush1.bf16.msra.mxu0 %v1233
        %1673 = vmatprep.subr.bf16.mxu0 0
        %1674 = vmatpush1.bf16.msra.mxu0 %v1232
        %1675 = vmatprep.subr.bf16.mxu0 0
        %1676 = vmatpush1.bf16.msra.mxu0 %v1231
        %1677 = vmatprep.subr.bf16.mxu0 0
        %1678 = vmatpush1.bf16.msra.mxu0 %v1230
        %1679 = vmatprep.subr.bf16.mxu0 0
        %1680 = vmatpush1.bf16.msra.mxu0 %v1229
        %1681 = vmatprep.subr.bf16.mxu0 0
        %1682 = vmatpush1.bf16.msra.mxu0 %v1228
        %1683 = vmatprep.subr.bf16.mxu0 0
        %1684 = vmatpush2.bf16.msra.mxu0 %v1243
        %1685 = vmatprep.subr.bf16.mxu0 0
        %1686 = vmatpush2.bf16.msra.mxu0 %v1242
        %1687 = vmatprep.subr.bf16.mxu0 0
        %1688 = vmatpush2.bf16.msra.mxu0 %v1241
        %1689 = vmatprep.subr.bf16.mxu0 0
        %1690 = vmatpush2.bf16.msra.mxu0 %v1240
        %1691 = vmatprep.subr.bf16.mxu0 0
        %1692 = vmatpush2.bf16.msra.mxu0 %v1239
        %1693 = vmatprep.subr.bf16.mxu0 0
        %1694 = vmatpush2.bf16.msra.mxu0 %v1238
        %1695 = vmatprep.subr.bf16.mxu0 0
        %1696 = vmatpush2.bf16.msra.mxu0 %v1237
        %1697 = vmatprep.subr.bf16.mxu0 0
        %1698 = vmatpush2.bf16.msra.mxu0 %v1236
        %1699 = vmatprep.mubr.bf16.mxu0 %v793
        %1700 = vmatmul.mubr.bf16.gmra.mxu0 %v792
        %v1701 = vpop.f32.mrf.mxu0
        %v1702 = vadd.f32 %v1541, %v1701
        %v1703 = vpop.f32.mrf.mxu0
        %v1704 = vpop.f32.mrf.mxu0
        %v1705 = vadd.f32 %v1544, %v1704
        %v1706 = vpop.f32.mrf.mxu0
        %1707 = vmatprep.mubr.bf16.mxu0 %v800
        %1708 = vmatmul.mubr.bf16.gmra.mxu0 %v799
        %v1709 = vpop.f32.mrf.mxu0
        %v1710 = vadd.f32 %v1549, %v1709
        %v1711 = vpop.f32.mrf.mxu0
        %v1712 = vpop.f32.mrf.mxu0
        %v1713 = vadd.f32 %v1552, %v1712
        %v1714 = vpop.f32.mrf.mxu0
        %1715 = vmatprep.mubr.bf16.mxu0 %v807
        %1716 = vmatmul.mubr.bf16.gmra.mxu0 %v806
        %v1717 = vpop.f32.mrf.mxu0
        %v1718 = vadd.f32 %v1557, %v1717
        %v1719 = vpop.f32.mrf.mxu0
        %v1720 = vpop.f32.mrf.mxu0
        %v1721 = vadd.f32 %v1560, %v1720
        %v1722 = vpop.f32.mrf.mxu0
        %1723 = vmatprep.mubr.bf16.mxu0 %v814
        %1724 = vmatmul.mubr.bf16.gmra.mxu0 %v813
        %v1725 = vpop.f32.mrf.mxu0
        %v1726 = vadd.f32 %v1565, %v1725
        %v1727 = vpop.f32.mrf.mxu0
        %v1728 = vpop.f32.mrf.mxu0
        %v1729 = vadd.f32 %v1568, %v1728
        %v1730 = vpop.f32.mrf.mxu0
        %1731 = vmatprep.mubr.bf16.mxu0 %v821
        %1732 = vmatmul.mubr.bf16.gmra.mxu0 %v820
        %v1733 = vpop.f32.mrf.mxu0
        %v1734 = vadd.f32 %v1573, %v1733
        %v1735 = vpop.f32.mrf.mxu0
        %v1736 = vpop.f32.mrf.mxu0
        %v1737 = vadd.f32 %v1576, %v1736
        %v1738 = vpop.f32.mrf.mxu0
        %1739 = vmatprep.mubr.bf16.mxu0 %v828
        %1740 = vmatmul.mubr.bf16.gmra.mxu0 %v827
        %v1741 = vpop.f32.mrf.mxu0
        %v1742 = vadd.f32 %v1581, %v1741
        %v1743 = vpop.f32.mrf.mxu0
        %v1744 = vpop.f32.mrf.mxu0
        %v1745 = vadd.f32 %v1584, %v1744
        %v1746 = vpop.f32.mrf.mxu0
        %1747 = vmatprep.mubr.bf16.mxu0 %v835
        %1748 = vmatmul.mubr.bf16.gmra.mxu0 %v834
        %v1749 = vpop.f32.mrf.mxu0
        %v1750 = vadd.f32 %v1589, %v1749
        %v1751 = vpop.f32.mrf.mxu0
        %v1752 = vpop.f32.mrf.mxu0
        %v1753 = vadd.f32 %v1592, %v1752
        %v1754 = vpop.f32.mrf.mxu0
        %1755 = vmatprep.mubr.bf16.mxu0 %v842
        %1756 = vmatmul.mubr.bf16.gmra.mxu0 %v841
        %v1757 = vpop.f32.mrf.mxu0
        %v1758 = vadd.f32 %v1597, %v1757
        %v1759 = vpop.f32.mrf.mxu0
        %v1760 = vpop.f32.mrf.mxu0
        %v1761 = vadd.f32 %v1600, %v1760
        %v1762 = vpop.f32.mrf.mxu0
        %1763 = vmatprep.mubr.bf16.mxu0 %v849
        %1764 = vmatmul.mubr.bf16.gmra.mxu0 %v848
        %v1765 = vpop.f32.mrf.mxu0
        %v1766 = vadd.f32 %v1605, %v1765
        %v1767 = vpop.f32.mrf.mxu0
        %v1768 = vpop.f32.mrf.mxu0
        %v1769 = vadd.f32 %v1608, %v1768
        %v1770 = vpop.f32.mrf.mxu0
        %1771 = vmatprep.mubr.bf16.mxu0 %v856
        %1772 = vmatmul.mubr.bf16.gmra.mxu0 %v855
        %v1773 = vpop.f32.mrf.mxu0
        %v1774 = vadd.f32 %v1613, %v1773
        %v1775 = vpop.f32.mrf.mxu0
        %v1776 = vpop.f32.mrf.mxu0
        %v1777 = vadd.f32 %v1616, %v1776
        %v1778 = vpop.f32.mrf.mxu0
        %1779 = vmatprep.mubr.bf16.mxu0 %v863
        %1780 = vmatmul.mubr.bf16.gmra.mxu0 %v862
        %v1781 = vpop.f32.mrf.mxu0
        %v1782 = vadd.f32 %v1621, %v1781
        %v1783 = vpop.f32.mrf.mxu0
        %v1784 = vpop.f32.mrf.mxu0
        %v1785 = vadd.f32 %v1624, %v1784
        %v1786 = vpop.f32.mrf.mxu0
        %1787 = vmatprep.mubr.bf16.mxu0 %v870
        %1788 = vmatmul.mubr.bf16.gmra.mxu0 %v869
        %v1789 = vpop.f32.mrf.mxu0
        %v1790 = vadd.f32 %v1629, %v1789
        %v1791 = vpop.f32.mrf.mxu0
        %v1792 = vpop.f32.mrf.mxu0
        %v1793 = vadd.f32 %v1632, %v1792
        %v1794 = vpop.f32.mrf.mxu0
        %1795 = vmatprep.mubr.bf16.mxu0 %v877
        %1796 = vmatmul.mubr.bf16.gmra.mxu0 %v876
        %v1797 = vpop.f32.mrf.mxu0
        %v1798 = vadd.f32 %v1637, %v1797
        %v1799 = vpop.f32.mrf.mxu0
        %v1800 = vpop.f32.mrf.mxu0
        %v1801 = vadd.f32 %v1640, %v1800
        %v1802 = vpop.f32.mrf.mxu0
        %1803 = vmatprep.mubr.bf16.mxu0 %v884
        %1804 = vmatmul.mubr.bf16.gmra.mxu0 %v883
        %v1805 = vpop.f32.mrf.mxu0
        %v1806 = vadd.f32 %v1645, %v1805
        %v1807 = vpop.f32.mrf.mxu0
        %v1808 = vpop.f32.mrf.mxu0
        %v1809 = vadd.f32 %v1648, %v1808
        %v1810 = vpop.f32.mrf.mxu0
        %1811 = vmatprep.mubr.bf16.mxu0 %v891
        %1812 = vmatmul.mubr.bf16.gmra.mxu0 %v890
        %v1813 = vpop.f32.mrf.mxu0
        %v1814 = vadd.f32 %v1653, %v1813
        %v1815 = vpop.f32.mrf.mxu0
        %v1816 = vpop.f32.mrf.mxu0
        %v1817 = vadd.f32 %v1656, %v1816
        %v1818 = vpop.f32.mrf.mxu0
        %1819 = vmatprep.mubr.bf16.mxu0 %v898
        %1820 = vmatmul.mubr.bf16.gmra.mxu0 %v897
        %v1821 = vpop.f32.mrf.mxu0
        %v1822 = vadd.f32 %v1661, %v1821
        %v1823 = vpop.f32.mrf.mxu0
        %v1824 = vpop.f32.mrf.mxu0
        %v1825 = vadd.f32 %v1664, %v1824
        %v1826 = vpop.f32.mrf.mxu0
        %1827 = vdwg.mxu0
        %1828 = vmatprep.subr.bf16.mxu0 0
        %1829 = vmatpush1.bf16.msra.mxu0 0
        %1830 = vmatprep.subr.bf16.mxu0 0
        %1831 = vmatpush1.bf16.msra.mxu0 0
        %1832 = vmatprep.subr.bf16.mxu0 0
        %1833 = vmatpush1.bf16.msra.mxu0 0
        %1834 = vmatprep.subr.bf16.mxu0 0
        %1835 = vmatpush1.bf16.msra.mxu0 0
        %1836 = vmatprep.subr.bf16.mxu0 0
        %1837 = vmatpush1.bf16.msra.mxu0 0
        %1838 = vmatprep.subr.bf16.mxu0 0
        %1839 = vmatpush1.bf16.msra.mxu0 0
        %1840 = vmatprep.subr.bf16.mxu0 0
        %1841 = vmatpush1.bf16.msra.mxu0 %v1245
        %1842 = vmatprep.subr.bf16.mxu0 0
        %1843 = vmatpush1.bf16.msra.mxu0 %v1244
        %1844 = vmatprep.subr.bf16.mxu0 0
        %1845 = vmatpush2.bf16.msra.mxu0 0
        %1846 = vmatprep.subr.bf16.mxu0 0
        %1847 = vmatpush2.bf16.msra.mxu0 0
        %1848 = vmatprep.subr.bf16.mxu0 0
        %1849 = vmatpush2.bf16.msra.mxu0 0
        %1850 = vmatprep.subr.bf16.mxu0 0
        %1851 = vmatpush2.bf16.msra.mxu0 0
        %1852 = vmatprep.subr.bf16.mxu0 0
        %1853 = vmatpush2.bf16.msra.mxu0 0
        %1854 = vmatprep.subr.bf16.mxu0 0
        %1855 = vmatpush2.bf16.msra.mxu0 0
        %1856 = vmatprep.subr.bf16.mxu0 0
        %1857 = vmatpush2.bf16.msra.mxu0 0
        %1858 = vmatprep.subr.bf16.mxu0 0
        %1859 = vmatpush2.bf16.msra.mxu0 0
        %1860 = vmatprep.mubr.bf16.mxu0 0
        %1861 = vmatmul.mubr.bf16.gmra.mxu0 %v1298
        %v1862 = vpop.f32.mrf.mxu0
        %v1863 = vadd.f32 %v1702, %v1862
        %v1864 = vpop.f32.mrf.mxu0
        %v1865 = vpop.f32.mrf.mxu0
        %v1866 = vadd.f32 %v1705, %v1865
        %v1867 = vpop.f32.mrf.mxu0
        %1868 = vmatprep.mubr.bf16.mxu0 0
        %1869 = vmatmul.mubr.bf16.gmra.mxu0 %v1301
        %v1870 = vpop.f32.mrf.mxu0
        %v1871 = vadd.f32 %v1710, %v1870
        %v1872 = vpop.f32.mrf.mxu0
        %v1873 = vpop.f32.mrf.mxu0
        %v1874 = vadd.f32 %v1713, %v1873
        %v1875 = vpop.f32.mrf.mxu0
        %1876 = vmatprep.mubr.bf16.mxu0 0
        %1877 = vmatmul.mubr.bf16.gmra.mxu0 %v1304
        %v1878 = vpop.f32.mrf.mxu0
        %v1879 = vadd.f32 %v1718, %v1878
        %v1880 = vpop.f32.mrf.mxu0
        %v1881 = vpop.f32.mrf.mxu0
        %v1882 = vadd.f32 %v1721, %v1881
        %v1883 = vpop.f32.mrf.mxu0
        %1884 = vmatprep.mubr.bf16.mxu0 0
        %1885 = vmatmul.mubr.bf16.gmra.mxu0 %v1307
        %v1886 = vpop.f32.mrf.mxu0
        %v1887 = vadd.f32 %v1726, %v1886
        %v1888 = vpop.f32.mrf.mxu0
        %v1889 = vpop.f32.mrf.mxu0
        %v1890 = vadd.f32 %v1729, %v1889
        %v1891 = vpop.f32.mrf.mxu0
        %1892 = vmatprep.mubr.bf16.mxu0 0
        %1893 = vmatmul.mubr.bf16.gmra.mxu0 %v1310
        %v1894 = vpop.f32.mrf.mxu0
        %v1895 = vadd.f32 %v1734, %v1894
        %v1896 = vpop.f32.mrf.mxu0
        %v1897 = vpop.f32.mrf.mxu0
        %v1898 = vadd.f32 %v1737, %v1897
        %v1899 = vpop.f32.mrf.mxu0
        %1900 = vmatprep.mubr.bf16.mxu0 0
        %1901 = vmatmul.mubr.bf16.gmra.mxu0 %v1313
        %v1902 = vpop.f32.mrf.mxu0
        %v1903 = vadd.f32 %v1742, %v1902
        %v1904 = vpop.f32.mrf.mxu0
        %v1905 = vpop.f32.mrf.mxu0
        %v1906 = vadd.f32 %v1745, %v1905
        %v1907 = vpop.f32.mrf.mxu0
        %1908 = vmatprep.mubr.bf16.mxu0 0
        %1909 = vmatmul.mubr.bf16.gmra.mxu0 %v1316
        %v1910 = vpop.f32.mrf.mxu0
        %v1911 = vadd.f32 %v1750, %v1910
        %v1912 = vpop.f32.mrf.mxu0
        %v1913 = vpop.f32.mrf.mxu0
        %v1914 = vadd.f32 %v1753, %v1913
        %v1915 = vpop.f32.mrf.mxu0
        %1916 = vmatprep.mubr.bf16.mxu0 0
        %1917 = vmatmul.mubr.bf16.gmra.mxu0 %v1319
        %v1918 = vpop.f32.mrf.mxu0
        %v1919 = vadd.f32 %v1758, %v1918
        %v1920 = vpop.f32.mrf.mxu0
        %v1921 = vpop.f32.mrf.mxu0
        %v1922 = vadd.f32 %v1761, %v1921
        %v1923 = vpop.f32.mrf.mxu0
        %1924 = vmatprep.mubr.bf16.mxu0 0
        %1925 = vmatmul.mubr.bf16.gmra.mxu0 %v1322
        %v1926 = vpop.f32.mrf.mxu0
        %v1927 = vadd.f32 %v1766, %v1926
        %v1928 = vpop.f32.mrf.mxu0
        %v1929 = vpop.f32.mrf.mxu0
        %v1930 = vadd.f32 %v1769, %v1929
        %v1931 = vpop.f32.mrf.mxu0
        %1932 = vmatprep.mubr.bf16.mxu0 0
        %1933 = vmatmul.mubr.bf16.gmra.mxu0 %v1325
        %v1934 = vpop.f32.mrf.mxu0
        %v1935 = vadd.f32 %v1774, %v1934
        %v1936 = vpop.f32.mrf.mxu0
        %v1937 = vpop.f32.mrf.mxu0
        %v1938 = vadd.f32 %v1777, %v1937
        %v1939 = vpop.f32.mrf.mxu0
        %1940 = vmatprep.mubr.bf16.mxu0 0
        %1941 = vmatmul.mubr.bf16.gmra.mxu0 %v1328
        %v1942 = vpop.f32.mrf.mxu0
        %v1943 = vadd.f32 %v1782, %v1942
        %v1944 = vpop.f32.mrf.mxu0
        %v1945 = vpop.f32.mrf.mxu0
        %v1946 = vadd.f32 %v1785, %v1945
        %v1947 = vpop.f32.mrf.mxu0
        %1948 = vmatprep.mubr.bf16.mxu0 0
        %1949 = vmatmul.mubr.bf16.gmra.mxu0 %v1331
        %v1950 = vpop.f32.mrf.mxu0
        %v1951 = vadd.f32 %v1790, %v1950
        %v1952 = vpop.f32.mrf.mxu0
        %v1953 = vpop.f32.mrf.mxu0
        %v1954 = vadd.f32 %v1793, %v1953
        %v1955 = vpop.f32.mrf.mxu0
        %1956 = vmatprep.mubr.bf16.mxu0 0
        %1957 = vmatmul.mubr.bf16.gmra.mxu0 %v1334
        %v1958 = vpop.f32.mrf.mxu0
        %v1959 = vadd.f32 %v1798, %v1958
        %v1960 = vpop.f32.mrf.mxu0
        %v1961 = vpop.f32.mrf.mxu0
        %v1962 = vadd.f32 %v1801, %v1961
        %v1963 = vpop.f32.mrf.mxu0
        %1964 = vmatprep.mubr.bf16.mxu0 0
        %1965 = vmatmul.mubr.bf16.gmra.mxu0 %v1337
        %v1966 = vpop.f32.mrf.mxu0
        %v1967 = vadd.f32 %v1806, %v1966
        %v1968 = vpop.f32.mrf.mxu0
        %v1969 = vpop.f32.mrf.mxu0
        %v1970 = vadd.f32 %v1809, %v1969
        %v1971 = vpop.f32.mrf.mxu0
        %1972 = vmatprep.mubr.bf16.mxu0 0
        %1973 = vmatmul.mubr.bf16.gmra.mxu0 %v1340
        %v1974 = vpop.f32.mrf.mxu0
        %v1975 = vadd.f32 %v1814, %v1974
        %v1976 = vpop.f32.mrf.mxu0
        %v1977 = vpop.f32.mrf.mxu0
        %v1978 = vadd.f32 %v1817, %v1977
        %v1979 = vpop.f32.mrf.mxu0
        %1980 = vmatprep.mubr.bf16.mxu0 0
        %1981 = vmatmul.mubr.bf16.gmra.mxu0 %v1343
        %v1982 = vpop.f32.mrf.mxu0
        %v1983 = vadd.f32 %v1822, %v1982
        %v1984 = vpop.f32.mrf.mxu0
        %v1985 = vpop.f32.mrf.mxu0
        %v1986 = vadd.f32 %v1825, %v1985
        %v1987 = vpop.f32.mrf.mxu0
        %1988 = vdwg.mxu0
        %v1989 = vmax.f32 %v1863, 0.0
        %v1990 = vmax.f32 %v1866, 0.0
        %v1991 = vmax.f32 %v1871, 0.0
        %v1992 = vmax.f32 %v1874, 0.0
        %v1993 = vmax.f32 %v1879, 0.0
        %v1994 = vmax.f32 %v1882, 0.0
        %v1995 = vmax.f32 %v1887, 0.0
        %v1996 = vmax.f32 %v1890, 0.0
        %v1997 = vmax.f32 %v1895, 0.0
        %v1998 = vmax.f32 %v1898, 0.0
        %v1999 = vmax.f32 %v1903, 0.0
        %v2000 = vmax.f32 %v1906, 0.0
        %v2001 = vmax.f32 %v1911, 0.0
        %v2002 = vmax.f32 %v1914, 0.0
        %v2003 = vmax.f32 %v1919, 0.0
        %v2004 = vmax.f32 %v1922, 0.0
        %v2005 = vmax.f32 %v1927, 0.0
        %v2006 = vmax.f32 %v1930, 0.0
        %v2007 = vmax.f32 %v1935, 0.0
        %v2008 = vmax.f32 %v1938, 0.0
        %v2009 = vmax.f32 %v1943, 0.0
        %v2010 = vmax.f32 %v1946, 0.0
        %v2011 = vmax.f32 %v1951, 0.0
        %v2012 = vmax.f32 %v1954, 0.0
        %v2013 = vmax.f32 %v1959, 0.0
        %v2014 = vmax.f32 %v1962, 0.0
        %v2015 = vmax.f32 %v1967, 0.0
        %v2016 = vmax.f32 %v1970, 0.0
        %v2017 = vmax.f32 %v1975, 0.0
        %v2018 = vmax.f32 %v1978, 0.0
        %v2019 = vmax.f32 %v1983, 0.0
        %v2020 = vmax.f32 %v1986, 0.0
        %v2021 = vpack.c.bf16 %v1990, %v1989
        %v2022 = vpack.c.bf16 %v1992, %v1991
        %v2023 = vpack.c.bf16 %v1994, %v1993
        %v2024 = vpack.c.bf16 %v1996, %v1995
        %v2025 = vpack.c.bf16 %v1998, %v1997
        %v2026 = vpack.c.bf16 %v2000, %v1999
        %v2027 = vpack.c.bf16 %v2002, %v2001
        %v2028 = vpack.c.bf16 %v2004, %v2003
        %v2029 = vpack.c.bf16 %v2006, %v2005
        %v2030 = vpack.c.bf16 %v2008, %v2007
        %v2031 = vpack.c.bf16 %v2010, %v2009
        %v2032 = vpack.c.bf16 %v2012, %v2011
        %v2033 = vpack.c.bf16 %v2014, %v2013
        %v2034 = vpack.c.bf16 %v2016, %v2015
        %v2035 = vpack.c.bf16 %v2018, %v2017
        %v2036 = vpack.c.bf16 %v2020, %v2019
        %v2053 = vunpack.c.l.b16 %v2021
        %v2054 = vunpack.c.h.b16 %v2021
        %v2055 = vunpack.c.l.b16 %v2022
        %v2056 = vunpack.c.h.b16 %v2022
        %v2057 = vunpack.c.l.b16 %v2023
        %v2058 = vunpack.c.h.b16 %v2023
        %v2059 = vunpack.c.l.b16 %v2024
        %v2060 = vunpack.c.h.b16 %v2024
        %v2061 = vunpack.c.l.b16 %v2025
        %v2062 = vunpack.c.h.b16 %v2025
        %v2063 = vunpack.c.l.b16 %v2026
        %v2064 = vunpack.c.h.b16 %v2026
        %v2065 = vunpack.c.l.b16 %v2027
        %v2066 = vunpack.c.h.b16 %v2027
        %v2067 = vunpack.c.l.b16 %v2028
        %v2068 = vunpack.c.h.b16 %v2028
        %v2069 = vunpack.c.l.b16 %v2029
        %v2070 = vunpack.c.h.b16 %v2029
        %v2071 = vunpack.c.l.b16 %v2030
        %v2072 = vunpack.c.h.b16 %v2030
        %v2073 = vunpack.c.l.b16 %v2031
        %v2074 = vunpack.c.h.b16 %v2031
        %v2075 = vunpack.c.l.b16 %v2032
        %v2076 = vunpack.c.h.b16 %v2032
        %v2077 = vunpack.c.l.b16 %v2033
        %v2078 = vunpack.c.h.b16 %v2033
        %v2079 = vunpack.c.l.b16 %v2034
        %v2080 = vunpack.c.h.b16 %v2034
        %v2081 = vunpack.c.l.b16 %v2035
        %v2082 = vunpack.c.h.b16 %v2035
        %v2083 = vunpack.c.l.b16 %v2036
        %v2084 = vunpack.c.h.b16 %v2036
        %v2085 = vpack.c.b16 %v2053, %v2053
        %v2086 = vpack.c.b16 %v2054, %v2054
        %v2087 = vpack.c.b16 %v2055, %v2055
        %v2088 = vpack.c.b16 %v2056, %v2056
        %v2089 = vpack.c.b16 %v2057, %v2057
        %v2090 = vpack.c.b16 %v2058, %v2058
        %v2091 = vpack.c.b16 %v2059, %v2059
        %v2092 = vpack.c.b16 %v2060, %v2060
        %v2093 = vpack.c.b16 %v2061, %v2061
        %v2094 = vpack.c.b16 %v2062, %v2062
        %v2095 = vpack.c.b16 %v2063, %v2063
        %v2096 = vpack.c.b16 %v2064, %v2064
        %v2097 = vpack.c.b16 %v2065, %v2065
        %v2098 = vpack.c.b16 %v2066, %v2066
        %v2099 = vpack.c.b16 %v2067, %v2067
        %v2100 = vpack.c.b16 %v2068, %v2068
        %v2101 = vpack.c.b16 %v2069, %v2069
        %v2102 = vpack.c.b16 %v2070, %v2070
        %v2103 = vpack.c.b16 %v2071, %v2071
        %v2104 = vpack.c.b16 %v2072, %v2072
        %v2105 = vpack.c.b16 %v2073, %v2073
        %v2106 = vpack.c.b16 %v2074, %v2074
        %v2107 = vpack.c.b16 %v2075, %v2075
        %v2108 = vpack.c.b16 %v2076, %v2076
        %v2109 = vpack.c.b16 %v2077, %v2077
        %v2110 = vpack.c.b16 %v2078, %v2078
        %v2111 = vpack.c.b16 %v2079, %v2079
        %v2112 = vpack.c.b16 %v2080, %v2080
        %v2113 = vpack.c.b16 %v2081, %v2081
        %v2114 = vpack.c.b16 %v2082, %v2082
        %v2115 = vpack.c.b16 %v2083, %v2083
        %v2116 = vpack.c.b16 %v2084, %v2084
        %vm2149 = vcmask 519168
        %2150 = vst.msk [vmem:[%s177] sm:$0xf] %vm2149, %v2085
        %2151 = vst.msk [vmem:[%s177 + $0x4] sm:$0xf] %vm2149, %v2086
        %2152 = vst.msk [vmem:[%s177 + $0x8] sm:$0xf] %vm2149, %v2087
        %2153 = vst.msk [vmem:[%s177 + $0xc] sm:$0xf] %vm2149, %v2088
        %2154 = vst.msk [vmem:[%s177 + $0x10] sm:$0xf] %vm2149, %v2089
        %2155 = vst.msk [vmem:[%s177 + $0x14] sm:$0xf] %vm2149, %v2090
        %2156 = vst.msk [vmem:[%s177 + $0x18] sm:$0xf] %vm2149, %v2091
        %2157 = vst.msk [vmem:[%s177 + $0x1c] sm:$0xf] %vm2149, %v2092
        %2158 = vst.msk [vmem:[%s177 + $0x20] sm:$0xf] %vm2149, %v2093
        %2159 = vst.msk [vmem:[%s177 + $0x24] sm:$0xf] %vm2149, %v2094
        %2160 = vst.msk [vmem:[%s177 + $0x28] sm:$0xf] %vm2149, %v2095
        %2161 = vst.msk [vmem:[%s177 + $0x2c] sm:$0xf] %vm2149, %v2096
        %2162 = vst.msk [vmem:[%s177 + $0x30] sm:$0xf] %vm2149, %v2097
        %2163 = vst.msk [vmem:[%s177 + $0x34] sm:$0xf] %vm2149, %v2098
        %2164 = vst.msk [vmem:[%s177 + $0x38] sm:$0xf] %vm2149, %v2099
        %2165 = vst.msk [vmem:[%s177 + $0x3c] sm:$0xf] %vm2149, %v2100
        %2166 = vst.msk [vmem:[%s177 + $0x40] sm:$0xf] %vm2149, %v2101
        %2167 = vst.msk [vmem:[%s177 + $0x44] sm:$0xf] %vm2149, %v2102
        %2168 = vst.msk [vmem:[%s177 + $0x48] sm:$0xf] %vm2149, %v2103
        %2169 = vst.msk [vmem:[%s177 + $0x4c] sm:$0xf] %vm2149, %v2104
        %2170 = vst.msk [vmem:[%s177 + $0x50] sm:$0xf] %vm2149, %v2105
        %2171 = vst.msk [vmem:[%s177 + $0x54] sm:$0xf] %vm2149, %v2106
        %2172 = vst.msk [vmem:[%s177 + $0x58] sm:$0xf] %vm2149, %v2107
        %2173 = vst.msk [vmem:[%s177 + $0x5c] sm:$0xf] %vm2149, %v2108
        %2174 = vst.msk [vmem:[%s177 + $0x60] sm:$0xf] %vm2149, %v2109
        %2175 = vst.msk [vmem:[%s177 + $0x64] sm:$0xf] %vm2149, %v2110
        %2176 = vst.msk [vmem:[%s177 + $0x68] sm:$0xf] %vm2149, %v2111
        %2177 = vst.msk [vmem:[%s177 + $0x6c] sm:$0xf] %vm2149, %v2112
        %2178 = vst.msk [vmem:[%s177 + $0x70] sm:$0xf] %vm2149, %v2113
        %2179 = vst.msk [vmem:[%s177 + $0x74] sm:$0xf] %vm2149, %v2114
        %2180 = vst.msk [vmem:[%s177 + $0x78] sm:$0xf] %vm2149, %v2115
        %2181 = vst.msk [vmem:[%s177 + $0x7c] sm:$0xf] %vm2149, %v2116
        %s2182 = sand.u32 %s90, 1
        %s2183 = sand.u32 %s90, 1
        %s2184 = smul.addr %s2183, 128
        %s2185 = scalar_lea.vmem [#allocation2], %s2184
        // Predicated region
        $region33: #{coinrun_critic_forward.5} parent=31 // pred_check
          %p2186 = pneg %p100
        $region34: #{coinrun_critic_forward.5} parent=31 // pred_check_branch
          %2188 = sbr.rel (%p2186) target = $region36
        $region35: #{coinrun_critic_forward.5} parent=31 // pred_region
          %s2189 = smul.u32 32, %s14
          %s2190 = ssub.s32 43, %s2189
          %p2191 = scmp.lt.s32.totalorder %s2190, 32
          %s2192 = scalar_select %p2191, %s2190, 32
          %s2193 = smul.u32 64, %s2192
          %p2194 = scmp.ne.s32.totalorder 0, %s2193
          %s2195 = smul.addr %s2189, 4
          %s2196 = scalar_lea.vmem %s3, %s2195
          // Predicated region
          $region37: #{coinrun_critic_forward.5} parent=35 // pred_check
            %p2197 = pneg %p2194
          $region38: #{coinrun_critic_forward.5} parent=35 // pred_check_branch
            %2199 = sbr.rel (%p2197) target = $region40
          $region39: #{coinrun_critic_forward.5} parent=35 // pred_region
            // Predicated region
            $region41: #{coinrun_critic_forward.5} parent=39 // pred_check
              _
            $region42: #{coinrun_critic_forward.5} parent=39 // pred_check_branch
              %2201 = sbr.rel target = $region44
            $region43: #{coinrun_critic_forward.5} parent=39 // pred_region
              // Predicated region
              $region63: #{coinrun_critic_forward.5} parent=43 // pred_check
                _
              $region64: #{coinrun_critic_forward.5} parent=43 // pred_check_branch
                %2313 = sbr.rel (0) target = $region66
              $region65: #{coinrun_critic_forward.5} parent=43 // pred_region
                %s2315 = ssub.s32 16, 1
                %s2316 = sshrl.u32 %s2192, 5
                // While loop
                $region67: #{coinrun_critic_forward.5} parent=65 // loop_pre_header
                  _
                $region68: #{coinrun_critic_forward.5} parent=65 // loop_header
                  %s2318 = sphi 0, %s2320
                  %p2319 = scmp.ge.s32.totalorder %s2318, %s2316
                  %s2323 = sphi 0, %s2392
                  %s2324 = sphi %s2185, %s2395
                  %s2325 = sphi %s2196, %s2396
                $region69: #{coinrun_critic_forward.5} parent=65 // loop_header_branch
                  %2322 = sbr.rel (%p2319) target = $region73
                $region70: #{coinrun_critic_forward.5} parent=65 // loop_body
                  %v2326 = vld [vmem:[%s2324] sm:%s2315]
                  %2327 = vst [vmem:[%s2325] sm:%s2315] %v2326
                  %v2328 = vld [vmem:[%s2324 + $0x4] sm:%s2315]
                  %2329 = vst [vmem:[%s2325 + $0x4] sm:%s2315] %v2328
                  %v2330 = vld [vmem:[%s2324 + $0x8] sm:%s2315]
                  %2331 = vst [vmem:[%s2325 + $0x8] sm:%s2315] %v2330
                  %v2332 = vld [vmem:[%s2324 + $0xc] sm:%s2315]
                  %2333 = vst [vmem:[%s2325 + $0xc] sm:%s2315] %v2332
                  %v2334 = vld [vmem:[%s2324 + $0x10] sm:%s2315]
                  %2335 = vst [vmem:[%s2325 + $0x10] sm:%s2315] %v2334
                  %v2336 = vld [vmem:[%s2324 + $0x14] sm:%s2315]
                  %2337 = vst [vmem:[%s2325 + $0x14] sm:%s2315] %v2336
                  %v2338 = vld [vmem:[%s2324 + $0x18] sm:%s2315]
                  %2339 = vst [vmem:[%s2325 + $0x18] sm:%s2315] %v2338
                  %v2340 = vld [vmem:[%s2324 + $0x1c] sm:%s2315]
                  %2341 = vst [vmem:[%s2325 + $0x1c] sm:%s2315] %v2340
                  %v2342 = vld [vmem:[%s2324 + $0x20] sm:%s2315]
                  %2343 = vst [vmem:[%s2325 + $0x20] sm:%s2315] %v2342
                  %v2344 = vld [vmem:[%s2324 + $0x24] sm:%s2315]
                  %2345 = vst [vmem:[%s2325 + $0x24] sm:%s2315] %v2344
                  %v2346 = vld [vmem:[%s2324 + $0x28] sm:%s2315]
                  %2347 = vst [vmem:[%s2325 + $0x28] sm:%s2315] %v2346
                  %v2348 = vld [vmem:[%s2324 + $0x2c] sm:%s2315]
                  %2349 = vst [vmem:[%s2325 + $0x2c] sm:%s2315] %v2348
                  %v2350 = vld [vmem:[%s2324 + $0x30] sm:%s2315]
                  %2351 = vst [vmem:[%s2325 + $0x30] sm:%s2315] %v2350
                  %v2352 = vld [vmem:[%s2324 + $0x34] sm:%s2315]
                  %2353 = vst [vmem:[%s2325 + $0x34] sm:%s2315] %v2352
                  %v2354 = vld [vmem:[%s2324 + $0x38] sm:%s2315]
                  %2355 = vst [vmem:[%s2325 + $0x38] sm:%s2315] %v2354
                  %v2356 = vld [vmem:[%s2324 + $0x3c] sm:%s2315]
                  %2357 = vst [vmem:[%s2325 + $0x3c] sm:%s2315] %v2356
                  %v2358 = vld [vmem:[%s2324 + $0x40] sm:%s2315]
                  %2359 = vst [vmem:[%s2325 + $0x40] sm:%s2315] %v2358
                  %v2360 = vld [vmem:[%s2324 + $0x44] sm:%s2315]
                  %2361 = vst [vmem:[%s2325 + $0x44] sm:%s2315] %v2360
                  %v2362 = vld [vmem:[%s2324 + $0x48] sm:%s2315]
                  %2363 = vst [vmem:[%s2325 + $0x48] sm:%s2315] %v2362
                  %v2364 = vld [vmem:[%s2324 + $0x4c] sm:%s2315]
                  %2365 = vst [vmem:[%s2325 + $0x4c] sm:%s2315] %v2364
                  %v2366 = vld [vmem:[%s2324 + $0x50] sm:%s2315]
                  %2367 = vst [vmem:[%s2325 + $0x50] sm:%s2315] %v2366
                  %v2368 = vld [vmem:[%s2324 + $0x54] sm:%s2315]
                  %2369 = vst [vmem:[%s2325 + $0x54] sm:%s2315] %v2368
                  %v2370 = vld [vmem:[%s2324 + $0x58] sm:%s2315]
                  %2371 = vst [vmem:[%s2325 + $0x58] sm:%s2315] %v2370
                  %v2372 = vld [vmem:[%s2324 + $0x5c] sm:%s2315]
                  %2373 = vst [vmem:[%s2325 + $0x5c] sm:%s2315] %v2372
                  %v2374 = vld [vmem:[%s2324 + $0x60] sm:%s2315]
                  %2375 = vst [vmem:[%s2325 + $0x60] sm:%s2315] %v2374
                  %v2376 = vld [vmem:[%s2324 + $0x64] sm:%s2315]
                  %2377 = vst [vmem:[%s2325 + $0x64] sm:%s2315] %v2376
                  %v2378 = vld [vmem:[%s2324 + $0x68] sm:%s2315]
                  %2379 = vst [vmem:[%s2325 + $0x68] sm:%s2315] %v2378
                  %v2380 = vld [vmem:[%s2324 + $0x6c] sm:%s2315]
                  %2381 = vst [vmem:[%s2325 + $0x6c] sm:%s2315] %v2380
                  %v2382 = vld [vmem:[%s2324 + $0x70] sm:%s2315]
                  %2383 = vst [vmem:[%s2325 + $0x70] sm:%s2315] %v2382
                  %v2384 = vld [vmem:[%s2324 + $0x74] sm:%s2315]
                  %2385 = vst [vmem:[%s2325 + $0x74] sm:%s2315] %v2384
                  %v2386 = vld [vmem:[%s2324 + $0x78] sm:%s2315]
                  %2387 = vst [vmem:[%s2325 + $0x78] sm:%s2315] %v2386
                  %v2388 = vld [vmem:[%s2324 + $0x7c] sm:%s2315]
                  %2389 = vst [vmem:[%s2325 + $0x7c] sm:%s2315] %v2388
                  %s2390 = sadd.s32 1, %s2323
                  %p2391 = scmp.ge.s32.totalorder %s2390, %s2316
                  %s2392 = scalar_select %p2391, 0, %s2390
                  %s2393 = smul.u32 %s2392, 128
                  %s2394 = smul.u32 %s2392, 128
                  %s2395 = scalar_lea.vmem %s2185, %s2393 [#allocation2]
                  %s2396 = scalar_lea.vmem %s2196, %s2394
                $region71: #{coinrun_critic_forward.5} parent=65 // loop_footer
                  %s2320 = sadd.s32 %s2318, 1
                $region72: #{coinrun_critic_forward.5} parent=65 // loop_footer_branch
                  %2317 = sbr.rel target = $region68
                $region73: #{coinrun_critic_forward.5} parent=65 // loop_exit
                  _
                %s2397 = sshrl.u32 %s2192, 5
                %s2398 = sand.u32 %s2192, 31
                %s2399 = smul.u32 %s2397, 32
                %s2400 = smul.u32 4, %s2399
                %s2401 = scalar_lea.vmem %s2185, %s2400 [#allocation2]
                %s2402 = smul.u32 4, %s2399
                %s2403 = scalar_lea.vmem %s2196, %s2402
                // While loop
                $region74: #{coinrun_critic_forward.5} parent=65 // loop_pre_header
                  _
                $region75: #{coinrun_critic_forward.5} parent=65 // loop_header
                  %s2405 = sphi 0, %s2407
                  %p2406 = scmp.ge.s32.totalorder %s2405, %s2398
                  %s2410 = sphi 0, %s2417
                  %s2411 = sphi %s2401, %s2420
                  %s2412 = sphi %s2403, %s2421
                $region76: #{coinrun_critic_forward.5} parent=65 // loop_header_branch
                  %2409 = sbr.rel (%p2406) target = $region80
                $region77: #{coinrun_critic_forward.5} parent=65 // loop_body
                  %v2413 = vld [vmem:[%s2411] sm:%s2315]
                  %2414 = vst [vmem:[%s2412] sm:%s2315] %v2413
                  %s2415 = sadd.s32 1, %s2410
                  %p2416 = scmp.ge.s32.totalorder %s2415, %s2398
                  %s2417 = scalar_select %p2416, 0, %s2415
                  %s2418 = smul.u32 %s2417, 4
                  %s2419 = smul.u32 %s2417, 4
                  %s2420 = scalar_lea.vmem %s2401, %s2418 [#allocation2]
                  %s2421 = scalar_lea.vmem %s2403, %s2419
                $region78: #{coinrun_critic_forward.5} parent=65 // loop_footer
                  %s2407 = sadd.s32 %s2405, 1
                $region79: #{coinrun_critic_forward.5} parent=65 // loop_footer_branch
                  %2404 = sbr.rel target = $region75
                $region80: #{coinrun_critic_forward.5} parent=65 // loop_exit
                  _
              $region66: #{coinrun_critic_forward.5} parent=43 // pred_fallthru
                _
            $region44: #{coinrun_critic_forward.5} parent=39 // pred_fallthru
              _
            // Predicated region
            $region45: #{coinrun_critic_forward.5} parent=39 // pred_check
              _
            $region46: #{coinrun_critic_forward.5} parent=39 // pred_check_branch
              %2203 = sbr.rel (0) target = $region48
            $region47: #{coinrun_critic_forward.5} parent=39 // pred_region
              %s2205 = ssub.s32 16, 1
              %s2206 = sshrl.u32 %s2192, 5
              // While loop
              $region49: #{coinrun_critic_forward.5} parent=47 // loop_pre_header
                _
              $region50: #{coinrun_critic_forward.5} parent=47 // loop_header
                %s2208 = sphi 0, %s2210
                %p2209 = scmp.ge.s32.totalorder %s2208, %s2206
                %s2213 = sphi 0, %s2282
                %s2214 = sphi %s2185, %s2285
                %s2215 = sphi %s2196, %s2286
              $region51: #{coinrun_critic_forward.5} parent=47 // loop_header_branch
                %2212 = sbr.rel (%p2209) target = $region55
              $region52: #{coinrun_critic_forward.5} parent=47 // loop_body
                %v2216 = vld [vmem:[%s2214] sm:%s2205]
                %2217 = vst [vmem:[%s2215] sm:%s2205] %v2216
                %v2218 = vld [vmem:[%s2214 + $0x4] sm:%s2205]
                %2219 = vst [vmem:[%s2215 + $0x4] sm:%s2205] %v2218
                %v2220 = vld [vmem:[%s2214 + $0x8] sm:%s2205]
                %2221 = vst [vmem:[%s2215 + $0x8] sm:%s2205] %v2220
                %v2222 = vld [vmem:[%s2214 + $0xc] sm:%s2205]
                %2223 = vst [vmem:[%s2215 + $0xc] sm:%s2205] %v2222
                %v2224 = vld [vmem:[%s2214 + $0x10] sm:%s2205]
                %2225 = vst [vmem:[%s2215 + $0x10] sm:%s2205] %v2224
                %v2226 = vld [vmem:[%s2214 + $0x14] sm:%s2205]
                %2227 = vst [vmem:[%s2215 + $0x14] sm:%s2205] %v2226
                %v2228 = vld [vmem:[%s2214 + $0x18] sm:%s2205]
                %2229 = vst [vmem:[%s2215 + $0x18] sm:%s2205] %v2228
                %v2230 = vld [vmem:[%s2214 + $0x1c] sm:%s2205]
                %2231 = vst [vmem:[%s2215 + $0x1c] sm:%s2205] %v2230
                %v2232 = vld [vmem:[%s2214 + $0x20] sm:%s2205]
                %2233 = vst [vmem:[%s2215 + $0x20] sm:%s2205] %v2232
                %v2234 = vld [vmem:[%s2214 + $0x24] sm:%s2205]
                %2235 = vst [vmem:[%s2215 + $0x24] sm:%s2205] %v2234
                %v2236 = vld [vmem:[%s2214 + $0x28] sm:%s2205]
                %2237 = vst [vmem:[%s2215 + $0x28] sm:%s2205] %v2236
                %v2238 = vld [vmem:[%s2214 + $0x2c] sm:%s2205]
                %2239 = vst [vmem:[%s2215 + $0x2c] sm:%s2205] %v2238
                %v2240 = vld [vmem:[%s2214 + $0x30] sm:%s2205]
                %2241 = vst [vmem:[%s2215 + $0x30] sm:%s2205] %v2240
                %v2242 = vld [vmem:[%s2214 + $0x34] sm:%s2205]
                %2243 = vst [vmem:[%s2215 + $0x34] sm:%s2205] %v2242
                %v2244 = vld [vmem:[%s2214 + $0x38] sm:%s2205]
                %2245 = vst [vmem:[%s2215 + $0x38] sm:%s2205] %v2244
                %v2246 = vld [vmem:[%s2214 + $0x3c] sm:%s2205]
                %2247 = vst [vmem:[%s2215 + $0x3c] sm:%s2205] %v2246
                %v2248 = vld [vmem:[%s2214 + $0x40] sm:%s2205]
                %2249 = vst [vmem:[%s2215 + $0x40] sm:%s2205] %v2248
                %v2250 = vld [vmem:[%s2214 + $0x44] sm:%s2205]
                %2251 = vst [vmem:[%s2215 + $0x44] sm:%s2205] %v2250
                %v2252 = vld [vmem:[%s2214 + $0x48] sm:%s2205]
                %2253 = vst [vmem:[%s2215 + $0x48] sm:%s2205] %v2252
                %v2254 = vld [vmem:[%s2214 + $0x4c] sm:%s2205]
                %2255 = vst [vmem:[%s2215 + $0x4c] sm:%s2205] %v2254
                %v2256 = vld [vmem:[%s2214 + $0x50] sm:%s2205]
                %2257 = vst [vmem:[%s2215 + $0x50] sm:%s2205] %v2256
                %v2258 = vld [vmem:[%s2214 + $0x54] sm:%s2205]
                %2259 = vst [vmem:[%s2215 + $0x54] sm:%s2205] %v2258
                %v2260 = vld [vmem:[%s2214 + $0x58] sm:%s2205]
                %2261 = vst [vmem:[%s2215 + $0x58] sm:%s2205] %v2260
                %v2262 = vld [vmem:[%s2214 + $0x5c] sm:%s2205]
                %2263 = vst [vmem:[%s2215 + $0x5c] sm:%s2205] %v2262
                %v2264 = vld [vmem:[%s2214 + $0x60] sm:%s2205]
                %2265 = vst [vmem:[%s2215 + $0x60] sm:%s2205] %v2264
                %v2266 = vld [vmem:[%s2214 + $0x64] sm:%s2205]
                %2267 = vst [vmem:[%s2215 + $0x64] sm:%s2205] %v2266
                %v2268 = vld [vmem:[%s2214 + $0x68] sm:%s2205]
                %2269 = vst [vmem:[%s2215 + $0x68] sm:%s2205] %v2268
                %v2270 = vld [vmem:[%s2214 + $0x6c] sm:%s2205]
                %2271 = vst [vmem:[%s2215 + $0x6c] sm:%s2205] %v2270
                %v2272 = vld [vmem:[%s2214 + $0x70] sm:%s2205]
                %2273 = vst [vmem:[%s2215 + $0x70] sm:%s2205] %v2272
                %v2274 = vld [vmem:[%s2214 + $0x74] sm:%s2205]
                %2275 = vst [vmem:[%s2215 + $0x74] sm:%s2205] %v2274
                %v2276 = vld [vmem:[%s2214 + $0x78] sm:%s2205]
                %2277 = vst [vmem:[%s2215 + $0x78] sm:%s2205] %v2276
                %v2278 = vld [vmem:[%s2214 + $0x7c] sm:%s2205]
                %2279 = vst [vmem:[%s2215 + $0x7c] sm:%s2205] %v2278
                %s2280 = sadd.s32 1, %s2213
                %p2281 = scmp.ge.s32.totalorder %s2280, %s2206
                %s2282 = scalar_select %p2281, 0, %s2280
                %s2283 = smul.u32 %s2282, 128
                %s2284 = smul.u32 %s2282, 128
                %s2285 = scalar_lea.vmem %s2185, %s2283 [#allocation2]
                %s2286 = scalar_lea.vmem %s2196, %s2284
              $region53: #{coinrun_critic_forward.5} parent=47 // loop_footer
                %s2210 = sadd.s32 %s2208, 1
              $region54: #{coinrun_critic_forward.5} parent=47 // loop_footer_branch
                %2207 = sbr.rel target = $region50
              $region55: #{coinrun_critic_forward.5} parent=47 // loop_exit
                _
              %s2287 = sshrl.u32 %s2192, 5
              %s2288 = sand.u32 %s2192, 31
              %s2289 = smul.u32 %s2287, 32
              %s2290 = smul.u32 4, %s2289
              %s2291 = scalar_lea.vmem %s2185, %s2290 [#allocation2]
              %s2292 = smul.u32 4, %s2289
              %s2293 = scalar_lea.vmem %s2196, %s2292
              // While loop
              $region56: #{coinrun_critic_forward.5} parent=47 // loop_pre_header
                _
              $region57: #{coinrun_critic_forward.5} parent=47 // loop_header
                %s2295 = sphi 0, %s2297
                %p2296 = scmp.ge.s32.totalorder %s2295, %s2288
                %s2300 = sphi 0, %s2307
                %s2301 = sphi %s2291, %s2310
                %s2302 = sphi %s2293, %s2311
              $region58: #{coinrun_critic_forward.5} parent=47 // loop_header_branch
                %2299 = sbr.rel (%p2296) target = $region62
              $region59: #{coinrun_critic_forward.5} parent=47 // loop_body
                %v2303 = vld [vmem:[%s2301] sm:%s2205]
                %2304 = vst [vmem:[%s2302] sm:%s2205] %v2303
                %s2305 = sadd.s32 1, %s2300
                %p2306 = scmp.ge.s32.totalorder %s2305, %s2288
                %s2307 = scalar_select %p2306, 0, %s2305
                %s2308 = smul.u32 %s2307, 4
                %s2309 = smul.u32 %s2307, 4
                %s2310 = scalar_lea.vmem %s2291, %s2308 [#allocation2]
                %s2311 = scalar_lea.vmem %s2293, %s2309
              $region60: #{coinrun_critic_forward.5} parent=47 // loop_footer
                %s2297 = sadd.s32 %s2295, 1
              $region61: #{coinrun_critic_forward.5} parent=47 // loop_footer_branch
                %2294 = sbr.rel target = $region57
              $region62: #{coinrun_critic_forward.5} parent=47 // loop_exit
                _
            $region48: #{coinrun_critic_forward.5} parent=39 // pred_fallthru
              _
          $region40: #{coinrun_critic_forward.5} parent=35 // pred_fallthru
            _
          %2422 = vnop
        $region36: #{coinrun_critic_forward.5} parent=31 // pred_fallthru
          _
      $region32: #{coinrun_critic_forward.5} parent=5 // pred_fallthru
        _
      %p2423 = scmp.le.s32.totalorder 2, %s9
      // Predicated region
      $region81: #{coinrun_critic_forward.5} parent=5 // pred_check
        %p2424 = pneg %p2423
      $region82: #{coinrun_critic_forward.5} parent=5 // pred_check_branch
        %2426 = sbr.rel (%p2424) target = $region84
      $region83: #{coinrun_critic_forward.5} parent=5 // pred_region
        %s2427 = ssub.s32 %s9, 2
        // Predicated region
        $region85: #{coinrun_critic_forward.5} parent=83 // pred_check
          %p2428 = pneg %p106
        $region86: #{coinrun_critic_forward.5} parent=83 // pred_check_branch
          %2430 = sbr.rel (%p2428) target = $region88
        $region87: #{coinrun_critic_forward.5} parent=83 // pred_region
          %s2431 = sand.u32 %s91, 1
          %s2432 = sand.u32 %s91, 1
          %s2433 = smul.addr %s2432, 128
          %s2434 = scalar_lea.vmem [#allocation2], %s2433
        $region88: #{coinrun_critic_forward.5} parent=83 // pred_fallthru
          _
      $region84: #{coinrun_critic_forward.5} parent=5 // pred_fallthru
        _
    $region6: #{coinrun_critic_forward.5} parent=1 // loop_footer
      %s13 = sadd.s32 1, %s9
    $region7: #{coinrun_critic_forward.5} parent=1 // loop_footer_branch
      %8 = sbr.rel target = $region3
    $region8: #{coinrun_critic_forward.5} parent=1 // loop_exit
      _

// kernel: coinrun_critic_forward.6
$region0: #{coinrun_critic_forward.6}
  #allocation0 [shape = 'u32[]', space=smem, size = 0x4, offset = 0x4, fixed_abs, tag = 'smem constant byte address 0x4 - core index']
  #allocation1 [shape = 'u32[144,128]{1,0:T(1,128)}', space=vmem, size = 0x12000, scoped, tag = 'internal scratch']
  %s0 = inlined_call_operand.vmem [shape: bf16[50,1600], index: 0, kind: input, shape index: {}]
  %s1 = inlined_call_operand.vmem [shape: bf16[1600,64], index: 1, kind: input, shape index: {}]
  %s2 = inlined_call_operand.vmem [shape: f32[1,64], index: 2, kind: input, shape index: {}]
  %s3 = inlined_call_operand.vmem [shape: bf16[50,64], index: 3, kind: output, shape index: {}]
  %s4 = sld [smem:[#allocation0]]
  $region22: #{coinrun_critic_forward.6} parent=0
    _
  %s6 = ssub.s32 1, %s4
  %s7 = scalar_select 0, %s6, %s4
  // Predicated region
  $region2: #{coinrun_critic_forward.6} parent=0 // pred_check
    _
  $region3: #{coinrun_critic_forward.6} parent=0 // pred_check_branch
    %9 = sbr.rel (0) target = $region5
  $region4: #{coinrun_critic_forward.6} parent=0 // pred_region
    _
  $region5: #{coinrun_critic_forward.6} parent=0 // pred_fallthru
    _
  // Predicated region
  $region6: #{coinrun_critic_forward.6} parent=0 // pred_check
    _
  $region7: #{coinrun_critic_forward.6} parent=0 // pred_check_branch
    %11 = sbr.rel (0) target = $region9
  $region8: #{coinrun_critic_forward.6} parent=0 // pred_region
    _
  $region9: #{coinrun_critic_forward.6} parent=0 // pred_fallthru
    _
  // Predicated region
  $region10: #{coinrun_critic_forward.6} parent=0 // pred_check
    _
  $region11: #{coinrun_critic_forward.6} parent=0 // pred_check_branch
    %13 = sbr.rel (0) target = $region13
  $region12: #{coinrun_critic_forward.6} parent=0 // pred_region
    _
  $region13: #{coinrun_critic_forward.6} parent=0 // pred_fallthru
    _
  %v15 = vld [vmem:[%s0] sm:$0xff]
  %v16 = vld [vmem:[%s0 + $0x8] sm:$0xff]
  %v17 = vld [vmem:[%s0 + $0x10] sm:$0xff]
  %v18 = vld [vmem:[%s0 + $0x18] sm:$0xff]
  %v19 = vld [vmem:[%s0 + $0x20] sm:$0xff]
  %v20 = vld [vmem:[%s0 + $0x28] sm:$0xff]
  %v21 = vld [vmem:[%s0 + $0x30] sm:$0xf]
  %v22 = vld [vmem:[%s0 + $0x34] sm:$0xff]
  %v23 = vld [vmem:[%s0 + $0x3c] sm:$0xff]
  %v24 = vld [vmem:[%s0 + $0x44] sm:$0xff]
  %v25 = vld [vmem:[%s0 + $0x4c] sm:$0xff]
  %v26 = vld [vmem:[%s0 + $0x54] sm:$0xff]
  %v27 = vld [vmem:[%s0 + $0x5c] sm:$0xff]
  %v28 = vld [vmem:[%s0 + $0x64] sm:$0xf]
  %v29 = vld [vmem:[%s0 + $0x68] sm:$0xff]
  %v30 = vld [vmem:[%s0 + $0x70] sm:$0xff]
  %v31 = vld [vmem:[%s0 + $0x78] sm:$0xff]
  %v32 = vld [vmem:[%s0 + $0x80] sm:$0xff]
  %v33 = vld [vmem:[%s0 + $0x88] sm:$0xff]
  %v34 = vld [vmem:[%s0 + $0x90] sm:$0xff]
  %v35 = vld [vmem:[%s0 + $0x98] sm:$0xf]
  %v36 = vld [vmem:[%s0 + $0x9c] sm:$0xff]
  %v37 = vld [vmem:[%s0 + $0xa4] sm:$0xff]
  %v38 = vld [vmem:[%s0 + $0xac] sm:$0xff]
  %v39 = vld [vmem:[%s0 + $0xb4] sm:$0xff]
  %v40 = vld [vmem:[%s0 + $0xbc] sm:$0xff]
  %v41 = vld [vmem:[%s0 + $0xc4] sm:$0xff]
  %v42 = vld [vmem:[%s0 + $0xcc] sm:$0xf]
  %v43 = vld [vmem:[%s0 + $0xd0] sm:$0xff]
  %v44 = vld [vmem:[%s0 + $0xd8] sm:$0xff]
  %v45 = vld [vmem:[%s0 + $0xe0] sm:$0xff]
  %v46 = vld [vmem:[%s0 + $0xe8] sm:$0xff]
  %v47 = vld [vmem:[%s0 + $0xf0] sm:$0xff]
  %v48 = vld [vmem:[%s0 + $0xf8] sm:$0xff]
  %v49 = vld [vmem:[%s0 + $0x100] sm:$0xf]
  %v50 = vld [vmem:[%s0 + $0x104] sm:$0xff]
  %v51 = vld [vmem:[%s0 + $0x10c] sm:$0xff]
  %v52 = vld [vmem:[%s0 + $0x114] sm:$0xff]
  %v53 = vld [vmem:[%s0 + $0x11c] sm:$0xff]
  %v54 = vld [vmem:[%s0 + $0x124] sm:$0xff]
  %v55 = vld [vmem:[%s0 + $0x12c] sm:$0xff]
  %v56 = vld [vmem:[%s0 + $0x134] sm:$0xf]
  %v57 = vld [vmem:[%s0 + $0x138] sm:$0x11]
  %v58 = vld [vmem:[%s0 + $0x140] sm:$0x11]
  %v59 = vld [vmem:[%s0 + $0x148] sm:$0x11]
  %v60 = vld [vmem:[%s0 + $0x150] sm:$0x11]
  %v61 = vld [vmem:[%s0 + $0x158] sm:$0x11]
  %v62 = vld [vmem:[%s0 + $0x160] sm:$0x11]
  %v63 = vld [vmem:[%s0 + $0x168] sm:$0x1]
  %v64 = vld [vmem:[%s1] sm:$0xf]
  %v65 = vld [vmem:[%s1 + $0x4] sm:$0xf]
  %v66 = vld [vmem:[%s1 + $0x8] sm:$0xf]
  %v67 = vld [vmem:[%s1 + $0xc] sm:$0xf]
  %v68 = vld [vmem:[%s1 + $0x10] sm:$0xf]
  %v69 = vld [vmem:[%s1 + $0x14] sm:$0xf]
  %v70 = vld [vmem:[%s1 + $0x18] sm:$0xf]
  %v71 = vld [vmem:[%s1 + $0x1c] sm:$0xf]
  %v72 = vld [vmem:[%s1 + $0x20] sm:$0xf]
  %v73 = vld [vmem:[%s1 + $0x24] sm:$0xf]
  %v74 = vld [vmem:[%s1 + $0x28] sm:$0xf]
  %v75 = vld [vmem:[%s1 + $0x2c] sm:$0xf]
  %v76 = vld [vmem:[%s1 + $0x30] sm:$0xf]
  %v77 = vld [vmem:[%s1 + $0x34] sm:$0xf]
  %v78 = vld [vmem:[%s1 + $0x38] sm:$0xf]
  %v79 = vld [vmem:[%s1 + $0x3c] sm:$0xf]
  %v80 = vld [vmem:[%s1 + $0x40] sm:$0xf]
  %v81 = vld [vmem:[%s1 + $0x44] sm:$0xf]
  %v82 = vld [vmem:[%s1 + $0x48] sm:$0xf]
  %v83 = vld [vmem:[%s1 + $0x4c] sm:$0xf]
  %v84 = vld [vmem:[%s1 + $0x50] sm:$0xf]
  %v85 = vld [vmem:[%s1 + $0x54] sm:$0xf]
  %v86 = vld [vmem:[%s1 + $0x58] sm:$0xf]
  %v87 = vld [vmem:[%s1 + $0x5c] sm:$0xf]
  %v88 = vld [vmem:[%s1 + $0x60] sm:$0xf]
  %v89 = vld [vmem:[%s1 + $0x64] sm:$0xf]
  %v90 = vld [vmem:[%s1 + $0x68] sm:$0xf]
  %v91 = vld [vmem:[%s1 + $0x6c] sm:$0xf]
  %v92 = vld [vmem:[%s1 + $0x70] sm:$0xf]
  %v93 = vld [vmem:[%s1 + $0x74] sm:$0xf]
  %v94 = vld [vmem:[%s1 + $0x78] sm:$0xf]
  %v95 = vld [vmem:[%s1 + $0x7c] sm:$0xf]
  %v96 = vld [vmem:[%s1 + $0x80] sm:$0xf]
  %v97 = vld [vmem:[%s1 + $0x84] sm:$0xf]
  %v98 = vld [vmem:[%s1 + $0x88] sm:$0xf]
  %v99 = vld [vmem:[%s1 + $0x8c] sm:$0xf]
  %v100 = vld [vmem:[%s1 + $0x90] sm:$0xf]
  %v101 = vld [vmem:[%s1 + $0x94] sm:$0xf]
  %v102 = vld [vmem:[%s1 + $0x98] sm:$0xf]
  %v103 = vld [vmem:[%s1 + $0x9c] sm:$0xf]
  %v104 = vld [vmem:[%s1 + $0xa0] sm:$0xf]
  %v105 = vld [vmem:[%s1 + $0xa4] sm:$0xf]
  %v106 = vld [vmem:[%s1 + $0xa8] sm:$0xf]
  %v107 = vld [vmem:[%s1 + $0xac] sm:$0xf]
  %v108 = vld [vmem:[%s1 + $0xb0] sm:$0xf]
  %v109 = vld [vmem:[%s1 + $0xb4] sm:$0xf]
  %v110 = vld [vmem:[%s1 + $0xb8] sm:$0xf]
  %v111 = vld [vmem:[%s1 + $0xbc] sm:$0xf]
  %v112 = vld [vmem:[%s1 + $0xc0] sm:$0xf]
  %v113 = vld [vmem:[%s1 + $0xc4] sm:$0xf]
  %v114 = vld [vmem:[%s1 + $0xc8] sm:$0xf]
  %v115 = vld [vmem:[%s1 + $0xcc] sm:$0xf]
  %v116 = vld [vmem:[%s1 + $0xd0] sm:$0xf]
  %v117 = vld [vmem:[%s1 + $0xd4] sm:$0xf]
  %v118 = vld [vmem:[%s1 + $0xd8] sm:$0xf]
  %v119 = vld [vmem:[%s1 + $0xdc] sm:$0xf]
  %v120 = vld [vmem:[%s1 + $0xe0] sm:$0xf]
  %v121 = vld [vmem:[%s1 + $0xe4] sm:$0xf]
  %v122 = vld [vmem:[%s1 + $0xe8] sm:$0xf]
  %v123 = vld [vmem:[%s1 + $0xec] sm:$0xf]
  %v124 = vld [vmem:[%s1 + $0xf0] sm:$0xf]
  %v125 = vld [vmem:[%s1 + $0xf4] sm:$0xf]
  %v126 = vld [vmem:[%s1 + $0xf8] sm:$0xf]
  %v127 = vld [vmem:[%s1 + $0xfc] sm:$0xf]
  %v128 = vld [vmem:[%s1 + $0x100] sm:$0xf]
  %v129 = vld [vmem:[%s1 + $0x104] sm:$0xf]
  %v130 = vld [vmem:[%s1 + $0x108] sm:$0xf]
  %v131 = vld [vmem:[%s1 + $0x10c] sm:$0xf]
  %v132 = vld [vmem:[%s1 + $0x110] sm:$0xf]
  %v133 = vld [vmem:[%s1 + $0x114] sm:$0xf]
  %v134 = vld [vmem:[%s1 + $0x118] sm:$0xf]
  %v135 = vld [vmem:[%s1 + $0x11c] sm:$0xf]
  %v136 = vld [vmem:[%s1 + $0x120] sm:$0xf]
  %v137 = vld [vmem:[%s1 + $0x124] sm:$0xf]
  %v138 = vld [vmem:[%s1 + $0x128] sm:$0xf]
  %v139 = vld [vmem:[%s1 + $0x12c] sm:$0xf]
  %v140 = vld [vmem:[%s1 + $0x130] sm:$0xf]
  %v141 = vld [vmem:[%s1 + $0x134] sm:$0xf]
  %v142 = vld [vmem:[%s1 + $0x138] sm:$0xf]
  %v143 = vld [vmem:[%s1 + $0x13c] sm:$0xf]
  %v144 = vld [vmem:[%s1 + $0x140] sm:$0xf]
  %v145 = vld [vmem:[%s1 + $0x144] sm:$0xf]
  %v146 = vld [vmem:[%s1 + $0x148] sm:$0xf]
  %v147 = vld [vmem:[%s1 + $0x14c] sm:$0xf]
  %v148 = vld [vmem:[%s1 + $0x150] sm:$0xf]
  %v149 = vld [vmem:[%s1 + $0x154] sm:$0xf]
  %v150 = vld [vmem:[%s1 + $0x158] sm:$0xf]
  %v151 = vld [vmem:[%s1 + $0x15c] sm:$0xf]
  %v152 = vld [vmem:[%s1 + $0x160] sm:$0xf]
  %v153 = vld [vmem:[%s1 + $0x164] sm:$0xf]
  %v154 = vld [vmem:[%s1 + $0x168] sm:$0xf]
  %v155 = vld [vmem:[%s1 + $0x16c] sm:$0xf]
  %v156 = vld [vmem:[%s1 + $0x170] sm:$0xf]
  %v157 = vld [vmem:[%s1 + $0x174] sm:$0xf]
  %v158 = vld [vmem:[%s1 + $0x178] sm:$0xf]
  %v159 = vld [vmem:[%s1 + $0x17c] sm:$0xf]
  %v160 = vld [vmem:[%s1 + $0x180] sm:$0xf]
  %v161 = vld [vmem:[%s1 + $0x184] sm:$0xf]
  %v162 = vld [vmem:[%s1 + $0x188] sm:$0xf]
  %v163 = vld [vmem:[%s1 + $0x18c] sm:$0xf]
  %v164 = vld [vmem:[%s1 + $0x190] sm:$0xf]
  %v165 = vld [vmem:[%s1 + $0x194] sm:$0xf]
  %v166 = vld [vmem:[%s1 + $0x198] sm:$0xf]
  %v167 = vld [vmem:[%s1 + $0x19c] sm:$0xf]
  %v168 = vld [vmem:[%s1 + $0x1a0] sm:$0xf]
  %v169 = vld [vmem:[%s1 + $0x1a4] sm:$0xf]
  %v170 = vld [vmem:[%s1 + $0x1a8] sm:$0xf]
  %v171 = vld [vmem:[%s1 + $0x1ac] sm:$0xf]
  %v172 = vld [vmem:[%s1 + $0x1b0] sm:$0xf]
  %v173 = vld [vmem:[%s1 + $0x1b4] sm:$0xf]
  %v174 = vld [vmem:[%s1 + $0x1b8] sm:$0xf]
  %v175 = vld [vmem:[%s1 + $0x1bc] sm:$0xf]
  %v176 = vld [vmem:[%s1 + $0x1c0] sm:$0xf]
  %v177 = vld [vmem:[%s1 + $0x1c4] sm:$0xf]
  %v178 = vld [vmem:[%s1 + $0x1c8] sm:$0xf]
  %v179 = vld [vmem:[%s1 + $0x1cc] sm:$0xf]
  %v180 = vld [vmem:[%s1 + $0x1d0] sm:$0xf]
  %v181 = vld [vmem:[%s1 + $0x1d4] sm:$0xf]
  %v182 = vld [vmem:[%s1 + $0x1d8] sm:$0xf]
  %v183 = vld [vmem:[%s1 + $0x1dc] sm:$0xf]
  %v184 = vld [vmem:[%s1 + $0x1e0] sm:$0xf]
  %v185 = vld [vmem:[%s1 + $0x1e4] sm:$0xf]
  %v186 = vld [vmem:[%s1 + $0x1e8] sm:$0xf]
  %v187 = vld [vmem:[%s1 + $0x1ec] sm:$0xf]
  %v188 = vld [vmem:[%s1 + $0x1f0] sm:$0xf]
  %v189 = vld [vmem:[%s1 + $0x1f4] sm:$0xf]
  %v190 = vld [vmem:[%s1 + $0x1f8] sm:$0xf]
  %v191 = vld [vmem:[%s1 + $0x1fc] sm:$0xf]
  %v192 = vld [vmem:[%s1 + $0x200] sm:$0xf]
  %v193 = vld [vmem:[%s1 + $0x204] sm:$0xf]
  %v194 = vld [vmem:[%s1 + $0x208] sm:$0xf]
  %v195 = vld [vmem:[%s1 + $0x20c] sm:$0xf]
  %v196 = vld [vmem:[%s1 + $0x210] sm:$0xf]
  %v197 = vld [vmem:[%s1 + $0x214] sm:$0xf]
  %v198 = vld [vmem:[%s1 + $0x218] sm:$0xf]
  %v199 = vld [vmem:[%s1 + $0x21c] sm:$0xf]
  %v200 = vld [vmem:[%s1 + $0x220] sm:$0xf]
  %v201 = vld [vmem:[%s1 + $0x224] sm:$0xf]
  %v202 = vld [vmem:[%s1 + $0x228] sm:$0xf]
  %v203 = vld [vmem:[%s1 + $0x22c] sm:$0xf]
  %v204 = vld [vmem:[%s1 + $0x230] sm:$0xf]
  %v205 = vld [vmem:[%s1 + $0x234] sm:$0xf]
  %v206 = vld [vmem:[%s1 + $0x238] sm:$0xf]
  %v207 = vld [vmem:[%s1 + $0x23c] sm:$0xf]
  %v208 = vld [vmem:[%s1 + $0x240] sm:$0xf]
  %v209 = vld [vmem:[%s1 + $0x244] sm:$0xf]
  %v210 = vld [vmem:[%s1 + $0x248] sm:$0xf]
  %v211 = vld [vmem:[%s1 + $0x24c] sm:$0xf]
  %v212 = vld [vmem:[%s1 + $0x250] sm:$0xf]
  %v213 = vld [vmem:[%s1 + $0x254] sm:$0xf]
  %v214 = vld [vmem:[%s1 + $0x258] sm:$0xf]
  %v215 = vld [vmem:[%s1 + $0x25c] sm:$0xf]
  %v216 = vld [vmem:[%s1 + $0x260] sm:$0xf]
  %v217 = vld [vmem:[%s1 + $0x264] sm:$0xf]
  %v218 = vld [vmem:[%s1 + $0x268] sm:$0xf]
  %v219 = vld [vmem:[%s1 + $0x26c] sm:$0xf]
  %v220 = vld [vmem:[%s1 + $0x270] sm:$0xf]
  %v221 = vld [vmem:[%s1 + $0x274] sm:$0xf]
  %v222 = vld [vmem:[%s1 + $0x278] sm:$0xf]
  %v223 = vld [vmem:[%s1 + $0x27c] sm:$0xf]
  %v224 = vld [vmem:[%s1 + $0x280] sm:$0xf]
  %v225 = vld [vmem:[%s1 + $0x284] sm:$0xf]
  %v226 = vld [vmem:[%s1 + $0x288] sm:$0xf]
  %v227 = vld [vmem:[%s1 + $0x28c] sm:$0xf]
  %v228 = vld [vmem:[%s1 + $0x290] sm:$0xf]
  %v229 = vld [vmem:[%s1 + $0x294] sm:$0xf]
  %v230 = vld [vmem:[%s1 + $0x298] sm:$0xf]
  %v231 = vld [vmem:[%s1 + $0x29c] sm:$0xf]
  %v232 = vld [vmem:[%s1 + $0x2a0] sm:$0xf]
  %v233 = vld [vmem:[%s1 + $0x2a4] sm:$0xf]
  %v234 = vld [vmem:[%s1 + $0x2a8] sm:$0xf]
  %v235 = vld [vmem:[%s1 + $0x2ac] sm:$0xf]
  %v236 = vld [vmem:[%s1 + $0x2b0] sm:$0xf]
  %v237 = vld [vmem:[%s1 + $0x2b4] sm:$0xf]
  %v238 = vld [vmem:[%s1 + $0x2b8] sm:$0xf]
  %v239 = vld [vmem:[%s1 + $0x2bc] sm:$0xf]
  %v240 = vld [vmem:[%s1 + $0x2c0] sm:$0xf]
  %v241 = vld [vmem:[%s1 + $0x2c4] sm:$0xf]
  %v242 = vld [vmem:[%s1 + $0x2c8] sm:$0xf]
  %v243 = vld [vmem:[%s1 + $0x2cc] sm:$0xf]
  %v244 = vld [vmem:[%s1 + $0x2d0] sm:$0xf]
  %v245 = vld [vmem:[%s1 + $0x2d4] sm:$0xf]
  %v246 = vld [vmem:[%s1 + $0x2d8] sm:$0xf]
  %v247 = vld [vmem:[%s1 + $0x2dc] sm:$0xf]
  %v248 = vld [vmem:[%s1 + $0x2e0] sm:$0xf]
  %v249 = vld [vmem:[%s1 + $0x2e4] sm:$0xf]
  %v250 = vld [vmem:[%s1 + $0x2e8] sm:$0xf]
  %v251 = vld [vmem:[%s1 + $0x2ec] sm:$0xf]
  %v252 = vld [vmem:[%s1 + $0x2f0] sm:$0xf]
  %v253 = vld [vmem:[%s1 + $0x2f4] sm:$0xf]
  %v254 = vld [vmem:[%s1 + $0x2f8] sm:$0xf]
  %v255 = vld [vmem:[%s1 + $0x2fc] sm:$0xf]
  %v256 = vld [vmem:[%s1 + $0x300] sm:$0xf]
  %v257 = vld [vmem:[%s1 + $0x304] sm:$0xf]
  %v258 = vld [vmem:[%s1 + $0x308] sm:$0xf]
  %v259 = vld [vmem:[%s1 + $0x30c] sm:$0xf]
  %v260 = vld [vmem:[%s1 + $0x310] sm:$0xf]
  %v261 = vld [vmem:[%s1 + $0x314] sm:$0xf]
  %v262 = vld [vmem:[%s1 + $0x318] sm:$0xf]
  %v263 = vld [vmem:[%s1 + $0x31c] sm:$0xf]
  %v264 = vld [vmem:[%s2] sm:$0x1]
  %v266 = vlaneseq
  %v267 = vshrl.u32 %v266, 7
  %v268 = vsub.s32 0, %v267
  %v269 = vrot.slane %v264, %v268
  %v320 = vunpack.c.l.b16 %v15
  %v321 = vunpack.c.h.b16 %v15
  %v322 = vunpack.c.l.b16 %v16
  %v323 = vunpack.c.h.b16 %v16
  %v324 = vunpack.c.l.b16 %v17
  %v325 = vunpack.c.h.b16 %v17
  %v326 = vunpack.c.l.b16 %v18
  %v327 = vunpack.c.h.b16 %v18
  %v328 = vunpack.c.l.b16 %v19
  %v329 = vunpack.c.h.b16 %v19
  %v330 = vunpack.c.l.b16 %v20
  %v331 = vunpack.c.h.b16 %v20
  %v332 = vunpack.c.l.b16 %v21
  %v333 = vunpack.c.l.b16 %v22
  %v334 = vunpack.c.h.b16 %v22
  %v335 = vunpack.c.l.b16 %v23
  %v336 = vunpack.c.h.b16 %v23
  %v337 = vunpack.c.l.b16 %v24
  %v338 = vunpack.c.h.b16 %v24
  %v339 = vunpack.c.l.b16 %v25
  %v340 = vunpack.c.h.b16 %v25
  %v341 = vunpack.c.l.b16 %v26
  %v342 = vunpack.c.h.b16 %v26
  %v343 = vunpack.c.l.b16 %v27
  %v344 = vunpack.c.h.b16 %v27
  %v345 = vunpack.c.l.b16 %v28
  %v346 = vunpack.c.l.b16 %v29
  %v347 = vunpack.c.h.b16 %v29
  %v348 = vunpack.c.l.b16 %v30
  %v349 = vunpack.c.h.b16 %v30
  %v350 = vunpack.c.l.b16 %v31
  %v351 = vunpack.c.h.b16 %v31
  %v352 = vunpack.c.l.b16 %v32
  %v353 = vunpack.c.h.b16 %v32
  %v354 = vunpack.c.l.b16 %v33
  %v355 = vunpack.c.h.b16 %v33
  %v356 = vunpack.c.l.b16 %v34
  %v357 = vunpack.c.h.b16 %v34
  %v358 = vunpack.c.l.b16 %v35
  %v359 = vunpack.c.l.b16 %v36
  %v360 = vunpack.c.h.b16 %v36
  %v361 = vunpack.c.l.b16 %v37
  %v362 = vunpack.c.h.b16 %v37
  %v363 = vunpack.c.l.b16 %v38
  %v364 = vunpack.c.h.b16 %v38
  %v365 = vunpack.c.l.b16 %v39
  %v366 = vunpack.c.h.b16 %v39
  %v367 = vunpack.c.l.b16 %v40
  %v368 = vunpack.c.h.b16 %v40
  %v369 = vunpack.c.l.b16 %v41
  %v370 = vunpack.c.h.b16 %v41
  %v371 = vunpack.c.l.b16 %v42
  %v372 = vunpack.c.l.b16 %v43
  %v373 = vunpack.c.h.b16 %v43
  %v374 = vunpack.c.l.b16 %v44
  %v375 = vunpack.c.h.b16 %v44
  %v376 = vunpack.c.l.b16 %v45
  %v377 = vunpack.c.h.b16 %v45
  %v378 = vunpack.c.l.b16 %v46
  %v379 = vunpack.c.h.b16 %v46
  %v380 = vunpack.c.l.b16 %v47
  %v381 = vunpack.c.h.b16 %v47
  %v382 = vunpack.c.l.b16 %v48
  %v383 = vunpack.c.h.b16 %v48
  %v384 = vunpack.c.l.b16 %v49
  %v385 = vunpack.c.l.b16 %v50
  %v386 = vunpack.c.h.b16 %v50
  %v387 = vunpack.c.l.b16 %v51
  %v388 = vunpack.c.h.b16 %v51
  %v389 = vunpack.c.l.b16 %v52
  %v390 = vunpack.c.h.b16 %v52
  %v391 = vunpack.c.l.b16 %v53
  %v392 = vunpack.c.h.b16 %v53
  %v393 = vunpack.c.l.b16 %v54
  %v394 = vunpack.c.h.b16 %v54
  %v395 = vunpack.c.l.b16 %v55
  %v396 = vunpack.c.h.b16 %v55
  %v397 = vunpack.c.l.b16 %v56
  %v398 = vunpack.c.l.b16 %v57
  %v399 = vunpack.c.h.b16 %v57
  %v400 = vunpack.c.l.b16 %v58
  %v401 = vunpack.c.h.b16 %v58
  %v402 = vunpack.c.l.b16 %v59
  %v403 = vunpack.c.h.b16 %v59
  %v404 = vunpack.c.l.b16 %v60
  %v405 = vunpack.c.h.b16 %v60
  %v406 = vunpack.c.l.b16 %v61
  %v407 = vunpack.c.h.b16 %v61
  %v408 = vunpack.c.l.b16 %v62
  %v409 = vunpack.c.h.b16 %v62
  %v410 = vunpack.c.l.b16 %v63
  %v411 = vpack.c.b16 %v333, %v320
  %v412 = vpack.c.b16 %v334, %v321
  %v413 = vpack.c.b16 %v335, %v322
  %v414 = vpack.c.b16 %v336, %v323
  %v415 = vpack.c.b16 %v337, %v324
  %v416 = vpack.c.b16 %v338, %v325
  %v417 = vpack.c.b16 %v339, %v326
  %v418 = vpack.c.b16 %v340, %v327
  %v419 = vpack.c.b16 %v341, %v328
  %v420 = vpack.c.b16 %v342, %v329
  %v421 = vpack.c.b16 %v343, %v330
  %v422 = vpack.c.b16 %v344, %v331
  %v423 = vpack.c.b16 %v345, %v332
  %v424 = vpack.c.b16 %v359, %v346
  %v425 = vpack.c.b16 %v360, %v347
  %v426 = vpack.c.b16 %v361, %v348
  %v427 = vpack.c.b16 %v362, %v349
  %v428 = vpack.c.b16 %v363, %v350
  %v429 = vpack.c.b16 %v364, %v351
  %v430 = vpack.c.b16 %v365, %v352
  %v431 = vpack.c.b16 %v366, %v353
  %v432 = vpack.c.b16 %v367, %v354
  %v433 = vpack.c.b16 %v368, %v355
  %v434 = vpack.c.b16 %v369, %v356
  %v435 = vpack.c.b16 %v370, %v357
  %v436 = vpack.c.b16 %v371, %v358
  %v437 = vpack.c.b16 %v385, %v372
  %v438 = vpack.c.b16 %v386, %v373
  %v439 = vpack.c.b16 %v387, %v374
  %v440 = vpack.c.b16 %v388, %v375
  %v441 = vpack.c.b16 %v389, %v376
  %v442 = vpack.c.b16 %v390, %v377
  %v443 = vpack.c.b16 %v391, %v378
  %v444 = vpack.c.b16 %v392, %v379
  %v445 = vpack.c.b16 %v393, %v380
  %v446 = vpack.c.b16 %v394, %v381
  %v447 = vpack.c.b16 %v395, %v382
  %v448 = vpack.c.b16 %v396, %v383
  %v449 = vpack.c.b16 %v397, %v384
  %v450 = vpack.c.b16 %v398, %v398
  %v451 = vpack.c.b16 %v399, %v399
  %v452 = vpack.c.b16 %v400, %v400
  %v453 = vpack.c.b16 %v401, %v401
  %v454 = vpack.c.b16 %v402, %v402
  %v455 = vpack.c.b16 %v403, %v403
  %v456 = vpack.c.b16 %v404, %v404
  %v457 = vpack.c.b16 %v405, %v405
  %v458 = vpack.c.b16 %v406, %v406
  %v459 = vpack.c.b16 %v407, %v407
  %v460 = vpack.c.b16 %v408, %v408
  %v461 = vpack.c.b16 %v409, %v409
  %v462 = vpack.c.b16 %v410, %v410
  %v711 = vunpack.c.l.b16 %v64
  %v712 = vunpack.c.l.b16 %v65
  %v713 = vunpack.c.l.b16 %v66
  %v714 = vunpack.c.l.b16 %v67
  %v715 = vunpack.c.l.b16 %v68
  %v716 = vunpack.c.l.b16 %v69
  %v717 = vunpack.c.l.b16 %v70
  %v718 = vunpack.c.l.b16 %v71
  %v719 = vunpack.c.l.b16 %v72
  %v720 = vunpack.c.l.b16 %v73
  %v721 = vunpack.c.l.b16 %v74
  %v722 = vunpack.c.l.b16 %v75
  %v723 = vunpack.c.l.b16 %v76
  %v724 = vunpack.c.l.b16 %v77
  %v725 = vunpack.c.l.b16 %v78
  %v726 = vunpack.c.l.b16 %v79
  %v727 = vunpack.c.l.b16 %v80
  %v728 = vunpack.c.l.b16 %v81
  %v729 = vunpack.c.l.b16 %v82
  %v730 = vunpack.c.l.b16 %v83
  %v731 = vunpack.c.l.b16 %v84
  %v732 = vunpack.c.l.b16 %v85
  %v733 = vunpack.c.l.b16 %v86
  %v734 = vunpack.c.l.b16 %v87
  %v735 = vunpack.c.l.b16 %v88
  %v736 = vunpack.c.l.b16 %v89
  %v737 = vunpack.c.l.b16 %v90
  %v738 = vunpack.c.l.b16 %v91
  %v739 = vunpack.c.l.b16 %v92
  %v740 = vunpack.c.l.b16 %v93
  %v741 = vunpack.c.l.b16 %v94
  %v742 = vunpack.c.l.b16 %v95
  %v743 = vunpack.c.l.b16 %v96
  %v744 = vunpack.c.l.b16 %v97
  %v745 = vunpack.c.l.b16 %v98
  %v746 = vunpack.c.l.b16 %v99
  %v747 = vunpack.c.l.b16 %v100
  %v748 = vunpack.c.l.b16 %v101
  %v749 = vunpack.c.l.b16 %v102
  %v750 = vunpack.c.l.b16 %v103
  %v751 = vunpack.c.l.b16 %v104
  %v752 = vunpack.c.l.b16 %v105
  %v753 = vunpack.c.l.b16 %v106
  %v754 = vunpack.c.l.b16 %v107
  %v755 = vunpack.c.l.b16 %v108
  %v756 = vunpack.c.l.b16 %v109
  %v757 = vunpack.c.l.b16 %v110
  %v758 = vunpack.c.l.b16 %v111
  %v759 = vunpack.c.l.b16 %v112
  %v760 = vunpack.c.l.b16 %v113
  %v761 = vunpack.c.l.b16 %v114
  %v762 = vunpack.c.l.b16 %v115
  %v763 = vunpack.c.l.b16 %v116
  %v764 = vunpack.c.l.b16 %v117
  %v765 = vunpack.c.l.b16 %v118
  %v766 = vunpack.c.l.b16 %v119
  %v767 = vunpack.c.l.b16 %v120
  %v768 = vunpack.c.l.b16 %v121
  %v769 = vunpack.c.l.b16 %v122
  %v770 = vunpack.c.l.b16 %v123
  %v771 = vunpack.c.l.b16 %v124
  %v772 = vunpack.c.l.b16 %v125
  %v773 = vunpack.c.l.b16 %v126
  %v774 = vunpack.c.l.b16 %v127
  %v775 = vunpack.c.l.b16 %v128
  %v776 = vunpack.c.l.b16 %v129
  %v777 = vunpack.c.l.b16 %v130
  %v778 = vunpack.c.l.b16 %v131
  %v779 = vunpack.c.l.b16 %v132
  %v780 = vunpack.c.l.b16 %v133
  %v781 = vunpack.c.l.b16 %v134
  %v782 = vunpack.c.l.b16 %v135
  %v783 = vunpack.c.l.b16 %v136
  %v784 = vunpack.c.l.b16 %v137
  %v785 = vunpack.c.l.b16 %v138
  %v786 = vunpack.c.l.b16 %v139
  %v787 = vunpack.c.l.b16 %v140
  %v788 = vunpack.c.l.b16 %v141
  %v789 = vunpack.c.l.b16 %v142
  %v790 = vunpack.c.l.b16 %v143
  %v791 = vunpack.c.l.b16 %v144
  %v792 = vunpack.c.l.b16 %v145
  %v793 = vunpack.c.l.b16 %v146
  %v794 = vunpack.c.l.b16 %v147
  %v795 = vunpack.c.l.b16 %v148
  %v796 = vunpack.c.l.b16 %v149
  %v797 = vunpack.c.l.b16 %v150
  %v798 = vunpack.c.l.b16 %v151
  %v799 = vunpack.c.l.b16 %v152
  %v800 = vunpack.c.l.b16 %v153
  %v801 = vunpack.c.l.b16 %v154
  %v802 = vunpack.c.l.b16 %v155
  %v803 = vunpack.c.l.b16 %v156
  %v804 = vunpack.c.l.b16 %v157
  %v805 = vunpack.c.l.b16 %v158
  %v806 = vunpack.c.l.b16 %v159
  %v807 = vunpack.c.l.b16 %v160
  %v808 = vunpack.c.l.b16 %v161
  %v809 = vunpack.c.l.b16 %v162
  %v810 = vunpack.c.l.b16 %v163
  %v811 = vunpack.c.l.b16 %v164
  %v812 = vunpack.c.l.b16 %v165
  %v813 = vunpack.c.l.b16 %v166
  %v814 = vunpack.c.l.b16 %v167
  %v815 = vunpack.c.l.b16 %v168
  %v816 = vunpack.c.l.b16 %v169
  %v817 = vunpack.c.l.b16 %v170
  %v818 = vunpack.c.l.b16 %v171
  %v819 = vunpack.c.l.b16 %v172
  %v820 = vunpack.c.l.b16 %v173
  %v821 = vunpack.c.l.b16 %v174
  %v822 = vunpack.c.l.b16 %v175
  %v823 = vunpack.c.l.b16 %v176
  %v824 = vunpack.c.l.b16 %v177
  %v825 = vunpack.c.l.b16 %v178
  %v826 = vunpack.c.l.b16 %v179
  %v827 = vunpack.c.l.b16 %v180
  %v828 = vunpack.c.l.b16 %v181
  %v829 = vunpack.c.l.b16 %v182
  %v830 = vunpack.c.l.b16 %v183
  %v831 = vunpack.c.l.b16 %v184
  %v832 = vunpack.c.l.b16 %v185
  %v833 = vunpack.c.l.b16 %v186
  %v834 = vunpack.c.l.b16 %v187
  %v835 = vunpack.c.l.b16 %v188
  %v836 = vunpack.c.l.b16 %v189
  %v837 = vunpack.c.l.b16 %v190
  %v838 = vunpack.c.l.b16 %v191
  %v839 = vunpack.c.l.b16 %v192
  %v840 = vunpack.c.l.b16 %v193
  %v841 = vunpack.c.l.b16 %v194
  %v842 = vunpack.c.l.b16 %v195
  %v843 = vunpack.c.l.b16 %v196
  %v844 = vunpack.c.l.b16 %v197
  %v845 = vunpack.c.l.b16 %v198
  %v846 = vunpack.c.l.b16 %v199
  %v847 = vunpack.c.l.b16 %v200
  %v848 = vunpack.c.l.b16 %v201
  %v849 = vunpack.c.l.b16 %v202
  %v850 = vunpack.c.l.b16 %v203
  %v851 = vunpack.c.l.b16 %v204
  %v852 = vunpack.c.l.b16 %v205
  %v853 = vunpack.c.l.b16 %v206
  %v854 = vunpack.c.l.b16 %v207
  %v855 = vunpack.c.l.b16 %v208
  %v856 = vunpack.c.l.b16 %v209
  %v857 = vunpack.c.l.b16 %v210
  %v858 = vunpack.c.l.b16 %v211
  %v859 = vunpack.c.l.b16 %v212
  %v860 = vunpack.c.l.b16 %v213
  %v861 = vunpack.c.l.b16 %v214
  %v862 = vunpack.c.l.b16 %v215
  %v863 = vunpack.c.l.b16 %v216
  %v864 = vunpack.c.l.b16 %v217
  %v865 = vunpack.c.l.b16 %v218
  %v866 = vunpack.c.l.b16 %v219
  %v867 = vunpack.c.l.b16 %v220
  %v868 = vunpack.c.l.b16 %v221
  %v869 = vunpack.c.l.b16 %v222
  %v870 = vunpack.c.l.b16 %v223
  %v871 = vunpack.c.l.b16 %v224
  %v872 = vunpack.c.l.b16 %v225
  %v873 = vunpack.c.l.b16 %v226
  %v874 = vunpack.c.l.b16 %v227
  %v875 = vunpack.c.l.b16 %v228
  %v876 = vunpack.c.l.b16 %v229
  %v877 = vunpack.c.l.b16 %v230
  %v878 = vunpack.c.l.b16 %v231
  %v879 = vunpack.c.l.b16 %v232
  %v880 = vunpack.c.l.b16 %v233
  %v881 = vunpack.c.l.b16 %v234
  %v882 = vunpack.c.l.b16 %v235
  %v883 = vunpack.c.l.b16 %v236
  %v884 = vunpack.c.l.b16 %v237
  %v885 = vunpack.c.l.b16 %v238
  %v886 = vunpack.c.l.b16 %v239
  %v887 = vunpack.c.l.b16 %v240
  %v888 = vunpack.c.l.b16 %v241
  %v889 = vunpack.c.l.b16 %v242
  %v890 = vunpack.c.l.b16 %v243
  %v891 = vunpack.c.l.b16 %v244
  %v892 = vunpack.c.l.b16 %v245
  %v893 = vunpack.c.l.b16 %v246
  %v894 = vunpack.c.l.b16 %v247
  %v895 = vunpack.c.l.b16 %v248
  %v896 = vunpack.c.l.b16 %v249
  %v897 = vunpack.c.l.b16 %v250
  %v898 = vunpack.c.l.b16 %v251
  %v899 = vunpack.c.l.b16 %v252
  %v900 = vunpack.c.l.b16 %v253
  %v901 = vunpack.c.l.b16 %v254
  %v902 = vunpack.c.l.b16 %v255
  %v903 = vunpack.c.l.b16 %v256
  %v904 = vunpack.c.l.b16 %v257
  %v905 = vunpack.c.l.b16 %v258
  %v906 = vunpack.c.l.b16 %v259
  %v907 = vunpack.c.l.b16 %v260
  %v908 = vunpack.c.l.b16 %v261
  %v909 = vunpack.c.l.b16 %v262
  %v910 = vunpack.c.l.b16 %v263
  %v911 = vpack.c.b16 %v712, %v711
  %v912 = vpack.c.b16 %v714, %v713
  %v913 = vpack.c.b16 %v716, %v715
  %v914 = vpack.c.b16 %v718, %v717
  %v915 = vpack.c.b16 %v720, %v719
  %v916 = vpack.c.b16 %v722, %v721
  %v917 = vpack.c.b16 %v724, %v723
  %v918 = vpack.c.b16 %v726, %v725
  %v919 = vpack.c.b16 %v728, %v727
  %v920 = vpack.c.b16 %v730, %v729
  %v921 = vpack.c.b16 %v732, %v731
  %v922 = vpack.c.b16 %v734, %v733
  %v923 = vpack.c.b16 %v736, %v735
  %v924 = vpack.c.b16 %v738, %v737
  %v925 = vpack.c.b16 %v740, %v739
  %v926 = vpack.c.b16 %v742, %v741
  %v927 = vpack.c.b16 %v744, %v743
  %v928 = vpack.c.b16 %v746, %v745
  %v929 = vpack.c.b16 %v748, %v747
  %v930 = vpack.c.b16 %v750, %v749
  %v931 = vpack.c.b16 %v752, %v751
  %v932 = vpack.c.b16 %v754, %v753
  %v933 = vpack.c.b16 %v756, %v755
  %v934 = vpack.c.b16 %v758, %v757
  %v935 = vpack.c.b16 %v760, %v759
  %v936 = vpack.c.b16 %v762, %v761
  %v937 = vpack.c.b16 %v764, %v763
  %v938 = vpack.c.b16 %v766, %v765
  %v939 = vpack.c.b16 %v768, %v767
  %v940 = vpack.c.b16 %v770, %v769
  %v941 = vpack.c.b16 %v772, %v771
  %v942 = vpack.c.b16 %v774, %v773
  %v943 = vpack.c.b16 %v776, %v775
  %v944 = vpack.c.b16 %v778, %v777
  %v945 = vpack.c.b16 %v780, %v779
  %v946 = vpack.c.b16 %v782, %v781
  %v947 = vpack.c.b16 %v784, %v783
  %v948 = vpack.c.b16 %v786, %v785
  %v949 = vpack.c.b16 %v788, %v787
  %v950 = vpack.c.b16 %v790, %v789
  %v951 = vpack.c.b16 %v792, %v791
  %v952 = vpack.c.b16 %v794, %v793
  %v953 = vpack.c.b16 %v796, %v795
  %v954 = vpack.c.b16 %v798, %v797
  %v955 = vpack.c.b16 %v800, %v799
  %v956 = vpack.c.b16 %v802, %v801
  %v957 = vpack.c.b16 %v804, %v803
  %v958 = vpack.c.b16 %v806, %v805
  %v959 = vpack.c.b16 %v808, %v807
  %v960 = vpack.c.b16 %v810, %v809
  %v961 = vpack.c.b16 %v812, %v811
  %v962 = vpack.c.b16 %v814, %v813
  %v963 = vpack.c.b16 %v816, %v815
  %v964 = vpack.c.b16 %v818, %v817
  %v965 = vpack.c.b16 %v820, %v819
  %v966 = vpack.c.b16 %v822, %v821
  %v967 = vpack.c.b16 %v824, %v823
  %v968 = vpack.c.b16 %v826, %v825
  %v969 = vpack.c.b16 %v828, %v827
  %v970 = vpack.c.b16 %v830, %v829
  %v971 = vpack.c.b16 %v832, %v831
  %v972 = vpack.c.b16 %v834, %v833
  %v973 = vpack.c.b16 %v836, %v835
  %v974 = vpack.c.b16 %v838, %v837
  %v975 = vpack.c.b16 %v840, %v839
  %v976 = vpack.c.b16 %v842, %v841
  %v977 = vpack.c.b16 %v844, %v843
  %v978 = vpack.c.b16 %v846, %v845
  %v979 = vpack.c.b16 %v848, %v847
  %v980 = vpack.c.b16 %v850, %v849
  %v981 = vpack.c.b16 %v852, %v851
  %v982 = vpack.c.b16 %v854, %v853
  %v983 = vpack.c.b16 %v856, %v855
  %v984 = vpack.c.b16 %v858, %v857
  %v985 = vpack.c.b16 %v860, %v859
  %v986 = vpack.c.b16 %v862, %v861
  %v987 = vpack.c.b16 %v864, %v863
  %v988 = vpack.c.b16 %v866, %v865
  %v989 = vpack.c.b16 %v868, %v867
  %v990 = vpack.c.b16 %v870, %v869
  %v991 = vpack.c.b16 %v872, %v871
  %v992 = vpack.c.b16 %v874, %v873
  %v993 = vpack.c.b16 %v876, %v875
  %v994 = vpack.c.b16 %v878, %v877
  %v995 = vpack.c.b16 %v880, %v879
  %v996 = vpack.c.b16 %v882, %v881
  %v997 = vpack.c.b16 %v884, %v883
  %v998 = vpack.c.b16 %v886, %v885
  %v999 = vpack.c.b16 %v888, %v887
  %v1000 = vpack.c.b16 %v890, %v889
  %v1001 = vpack.c.b16 %v892, %v891
  %v1002 = vpack.c.b16 %v894, %v893
  %v1003 = vpack.c.b16 %v896, %v895
  %v1004 = vpack.c.b16 %v898, %v897
  %v1005 = vpack.c.b16 %v900, %v899
  %v1006 = vpack.c.b16 %v902, %v901
  %v1007 = vpack.c.b16 %v904, %v903
  %v1008 = vpack.c.b16 %v906, %v905
  %v1009 = vpack.c.b16 %v908, %v907
  %v1010 = vpack.c.b16 %v910, %v909
  %vm1111 = vcmask 523264
  %v1113 = vsel %vm1111, %v423, 0
  %v1116 = vsel %vm1111, %v436, 0
  %v1119 = vsel %vm1111, %v449, 0
  %v1122 = vsel %vm1111, %v462, 0
  %1124 = vmatprep.subr.bf16.mxu0 0
  %1125 = vmatpush1.bf16.msra.mxu0 %v918
  %1126 = vmatprep.subr.bf16.mxu0 0
  %1127 = vmatpush1.bf16.msra.mxu0 %v917
  %1128 = vmatprep.subr.bf16.mxu0 0
  %1129 = vmatpush1.bf16.msra.mxu0 %v916
  %1130 = vmatprep.subr.bf16.mxu0 0
  %1131 = vmatpush1.bf16.msra.mxu0 %v915
  %1132 = vmatprep.subr.bf16.mxu0 0
  %1133 = vmatpush1.bf16.msra.mxu0 %v914
  %1134 = vmatprep.subr.bf16.mxu0 0
  %1135 = vmatpush1.bf16.msra.mxu0 %v913
  %1136 = vmatprep.subr.bf16.mxu0 0
  %1137 = vmatpush1.bf16.msra.mxu0 %v912
  %1138 = vmatprep.subr.bf16.mxu0 0
  %1139 = vmatpush1.bf16.msra.mxu0 %v911
  %1140 = vmatprep.subr.bf16.mxu0 0
  %1141 = vmatpush2.bf16.msra.mxu0 %v926
  %1142 = vmatprep.subr.bf16.mxu0 0
  %1143 = vmatpush2.bf16.msra.mxu0 %v925
  %1144 = vmatprep.subr.bf16.mxu0 0
  %1145 = vmatpush2.bf16.msra.mxu0 %v924
  %1146 = vmatprep.subr.bf16.mxu0 0
  %1147 = vmatpush2.bf16.msra.mxu0 %v923
  %1148 = vmatprep.subr.bf16.mxu0 0
  %1149 = vmatpush2.bf16.msra.mxu0 %v922
  %1150 = vmatprep.subr.bf16.mxu0 0
  %1151 = vmatpush2.bf16.msra.mxu0 %v921
  %1152 = vmatprep.subr.bf16.mxu0 0
  %1153 = vmatpush2.bf16.msra.mxu0 %v920
  %1154 = vmatprep.subr.bf16.mxu0 0
  %1155 = vmatpush2.bf16.msra.mxu0 %v919
  %1156 = vmatprep.mubr.bf16.mxu0 %v412
  %1157 = vmatmul.mubr.bf16.gmra.mxu0 %v411
  %v1158 = vpop.f32.mrf.mxu0
  %v1159 = vadd.f32 %v269, %v1158
  %v1160 = vpop.f32.mrf.mxu0
  %v1161 = vpop.f32.mrf.mxu0
  %v1162 = vadd.f32 %v269, %v1161
  %v1163 = vpop.f32.mrf.mxu0
  %1164 = vmatprep.mubr.bf16.mxu0 %v425
  %1165 = vmatmul.mubr.bf16.gmra.mxu0 %v424
  %v1166 = vpop.f32.mrf.mxu0
  %v1167 = vadd.f32 %v269, %v1166
  %v1168 = vpop.f32.mrf.mxu0
  %v1169 = vpop.f32.mrf.mxu0
  %v1170 = vadd.f32 %v269, %v1169
  %v1171 = vpop.f32.mrf.mxu0
  %1172 = vmatprep.mubr.bf16.mxu0 %v438
  %1173 = vmatmul.mubr.bf16.gmra.mxu0 %v437
  %v1174 = vpop.f32.mrf.mxu0
  %v1175 = vadd.f32 %v269, %v1174
  %v1176 = vpop.f32.mrf.mxu0
  %v1177 = vpop.f32.mrf.mxu0
  %v1178 = vadd.f32 %v269, %v1177
  %v1179 = vpop.f32.mrf.mxu0
  %1180 = vmatprep.mubr.bf16.mxu0 %v451
  %1181 = vmatmul.mubr.bf16.gmra.mxu0 %v450
  %v1182 = vpop.f32.mrf.mxu0
  %v1183 = vadd.f32 %v269, %v1182
  %v1184 = vpop.f32.mrf.mxu0
  %v1185 = vpop.f32.mrf.mxu0
  %v1186 = vpop.f32.mrf.mxu0
  %1187 = vdwg.mxu0
  %1188 = vmatprep.subr.bf16.mxu0 0
  %1189 = vmatpush1.bf16.msra.mxu0 %v934
  %1190 = vmatprep.subr.bf16.mxu0 0
  %1191 = vmatpush1.bf16.msra.mxu0 %v933
  %1192 = vmatprep.subr.bf16.mxu0 0
  %1193 = vmatpush1.bf16.msra.mxu0 %v932
  %1194 = vmatprep.subr.bf16.mxu0 0
  %1195 = vmatpush1.bf16.msra.mxu0 %v931
  %1196 = vmatprep.subr.bf16.mxu0 0
  %1197 = vmatpush1.bf16.msra.mxu0 %v930
  %1198 = vmatprep.subr.bf16.mxu0 0
  %1199 = vmatpush1.bf16.msra.mxu0 %v929
  %1200 = vmatprep.subr.bf16.mxu0 0
  %1201 = vmatpush1.bf16.msra.mxu0 %v928
  %1202 = vmatprep.subr.bf16.mxu0 0
  %1203 = vmatpush1.bf16.msra.mxu0 %v927
  %1204 = vmatprep.subr.bf16.mxu0 0
  %1205 = vmatpush2.bf16.msra.mxu0 %v942
  %1206 = vmatprep.subr.bf16.mxu0 0
  %1207 = vmatpush2.bf16.msra.mxu0 %v941
  %1208 = vmatprep.subr.bf16.mxu0 0
  %1209 = vmatpush2.bf16.msra.mxu0 %v940
  %1210 = vmatprep.subr.bf16.mxu0 0
  %1211 = vmatpush2.bf16.msra.mxu0 %v939
  %1212 = vmatprep.subr.bf16.mxu0 0
  %1213 = vmatpush2.bf16.msra.mxu0 %v938
  %1214 = vmatprep.subr.bf16.mxu0 0
  %1215 = vmatpush2.bf16.msra.mxu0 %v937
  %1216 = vmatprep.subr.bf16.mxu0 0
  %1217 = vmatpush2.bf16.msra.mxu0 %v936
  %1218 = vmatprep.subr.bf16.mxu0 0
  %1219 = vmatpush2.bf16.msra.mxu0 %v935
  %1220 = vmatprep.mubr.bf16.mxu0 %v414
  %1221 = vmatmul.mubr.bf16.gmra.mxu0 %v413
  %v1222 = vpop.f32.mrf.mxu0
  %v1223 = vadd.f32 %v1159, %v1222
  %v1224 = vpop.f32.mrf.mxu0
  %v1225 = vpop.f32.mrf.mxu0
  %v1226 = vadd.f32 %v1162, %v1225
  %v1227 = vpop.f32.mrf.mxu0
  %1228 = vmatprep.mubr.bf16.mxu0 %v427
  %1229 = vmatmul.mubr.bf16.gmra.mxu0 %v426
  %v1230 = vpop.f32.mrf.mxu0
  %v1231 = vadd.f32 %v1167, %v1230
  %v1232 = vpop.f32.mrf.mxu0
  %v1233 = vpop.f32.mrf.mxu0
  %v1234 = vadd.f32 %v1170, %v1233
  %v1235 = vpop.f32.mrf.mxu0
  %1236 = vmatprep.mubr.bf16.mxu0 %v440
  %1237 = vmatmul.mubr.bf16.gmra.mxu0 %v439
  %v1238 = vpop.f32.mrf.mxu0
  %v1239 = vadd.f32 %v1175, %v1238
  %v1240 = vpop.f32.mrf.mxu0
  %v1241 = vpop.f32.mrf.mxu0
  %v1242 = vadd.f32 %v1178, %v1241
  %v1243 = vpop.f32.mrf.mxu0
  %1244 = vmatprep.mubr.bf16.mxu0 %v453
  %1245 = vmatmul.mubr.bf16.gmra.mxu0 %v452
  %v1246 = vpop.f32.mrf.mxu0
  %v1247 = vadd.f32 %v1183, %v1246
  %v1248 = vpop.f32.mrf.mxu0
  %v1249 = vpop.f32.mrf.mxu0
  %v1250 = vpop.f32.mrf.mxu0
  %1251 = vdwg.mxu0
  %1252 = vmatprep.subr.bf16.mxu0 0
  %1253 = vmatpush1.bf16.msra.mxu0 %v950
  %1254 = vmatprep.subr.bf16.mxu0 0
  %1255 = vmatpush1.bf16.msra.mxu0 %v949
  %1256 = vmatprep.subr.bf16.mxu0 0
  %1257 = vmatpush1.bf16.msra.mxu0 %v948
  %1258 = vmatprep.subr.bf16.mxu0 0
  %1259 = vmatpush1.bf16.msra.mxu0 %v947
  %1260 = vmatprep.subr.bf16.mxu0 0
  %1261 = vmatpush1.bf16.msra.mxu0 %v946
  %1262 = vmatprep.subr.bf16.mxu0 0
  %1263 = vmatpush1.bf16.msra.mxu0 %v945
  %1264 = vmatprep.subr.bf16.mxu0 0
  %1265 = vmatpush1.bf16.msra.mxu0 %v944
  %1266 = vmatprep.subr.bf16.mxu0 0
  %1267 = vmatpush1.bf16.msra.mxu0 %v943
  %1268 = vmatprep.subr.bf16.mxu0 0
  %1269 = vmatpush2.bf16.msra.mxu0 %v958
  %1270 = vmatprep.subr.bf16.mxu0 0
  %1271 = vmatpush2.bf16.msra.mxu0 %v957
  %1272 = vmatprep.subr.bf16.mxu0 0
  %1273 = vmatpush2.bf16.msra.mxu0 %v956
  %1274 = vmatprep.subr.bf16.mxu0 0
  %1275 = vmatpush2.bf16.msra.mxu0 %v955
  %1276 = vmatprep.subr.bf16.mxu0 0
  %1277 = vmatpush2.bf16.msra.mxu0 %v954
  %1278 = vmatprep.subr.bf16.mxu0 0
  %1279 = vmatpush2.bf16.msra.mxu0 %v953
  %1280 = vmatprep.subr.bf16.mxu0 0
  %1281 = vmatpush2.bf16.msra.mxu0 %v952
  %1282 = vmatprep.subr.bf16.mxu0 0
  %1283 = vmatpush2.bf16.msra.mxu0 %v951
  %1284 = vmatprep.mubr.bf16.mxu0 %v416
  %1285 = vmatmul.mubr.bf16.gmra.mxu0 %v415
  %v1286 = vpop.f32.mrf.mxu0
  %v1287 = vadd.f32 %v1223, %v1286
  %v1288 = vpop.f32.mrf.mxu0
  %v1289 = vpop.f32.mrf.mxu0
  %v1290 = vadd.f32 %v1226, %v1289
  %v1291 = vpop.f32.mrf.mxu0
  %1292 = vmatprep.mubr.bf16.mxu0 %v429
  %1293 = vmatmul.mubr.bf16.gmra.mxu0 %v428
  %v1294 = vpop.f32.mrf.mxu0
  %v1295 = vadd.f32 %v1231, %v1294
  %v1296 = vpop.f32.mrf.mxu0
  %v1297 = vpop.f32.mrf.mxu0
  %v1298 = vadd.f32 %v1234, %v1297
  %v1299 = vpop.f32.mrf.mxu0
  %1300 = vmatprep.mubr.bf16.mxu0 %v442
  %1301 = vmatmul.mubr.bf16.gmra.mxu0 %v441
  %v1302 = vpop.f32.mrf.mxu0
  %v1303 = vadd.f32 %v1239, %v1302
  %v1304 = vpop.f32.mrf.mxu0
  %v1305 = vpop.f32.mrf.mxu0
  %v1306 = vadd.f32 %v1242, %v1305
  %v1307 = vpop.f32.mrf.mxu0
  %1308 = vmatprep.mubr.bf16.mxu0 %v455
  %1309 = vmatmul.mubr.bf16.gmra.mxu0 %v454
  %v1310 = vpop.f32.mrf.mxu0
  %v1311 = vadd.f32 %v1247, %v1310
  %v1312 = vpop.f32.mrf.mxu0
  %v1313 = vpop.f32.mrf.mxu0
  %v1314 = vpop.f32.mrf.mxu0
  %1315 = vdwg.mxu0
  %1316 = vmatprep.subr.bf16.mxu0 0
  %1317 = vmatpush1.bf16.msra.mxu0 %v966
  %1318 = vmatprep.subr.bf16.mxu0 0
  %1319 = vmatpush1.bf16.msra.mxu0 %v965
  %1320 = vmatprep.subr.bf16.mxu0 0
  %1321 = vmatpush1.bf16.msra.mxu0 %v964
  %1322 = vmatprep.subr.bf16.mxu0 0
  %1323 = vmatpush1.bf16.msra.mxu0 %v963
  %1324 = vmatprep.subr.bf16.mxu0 0
  %1325 = vmatpush1.bf16.msra.mxu0 %v962
  %1326 = vmatprep.subr.bf16.mxu0 0
  %1327 = vmatpush1.bf16.msra.mxu0 %v961
  %1328 = vmatprep.subr.bf16.mxu0 0
  %1329 = vmatpush1.bf16.msra.mxu0 %v960
  %1330 = vmatprep.subr.bf16.mxu0 0
  %1331 = vmatpush1.bf16.msra.mxu0 %v959
  %1332 = vmatprep.subr.bf16.mxu0 0
  %1333 = vmatpush2.bf16.msra.mxu0 %v974
  %1334 = vmatprep.subr.bf16.mxu0 0
  %1335 = vmatpush2.bf16.msra.mxu0 %v973
  %1336 = vmatprep.subr.bf16.mxu0 0
  %1337 = vmatpush2.bf16.msra.mxu0 %v972
  %1338 = vmatprep.subr.bf16.mxu0 0
  %1339 = vmatpush2.bf16.msra.mxu0 %v971
  %1340 = vmatprep.subr.bf16.mxu0 0
  %1341 = vmatpush2.bf16.msra.mxu0 %v970
  %1342 = vmatprep.subr.bf16.mxu0 0
  %1343 = vmatpush2.bf16.msra.mxu0 %v969
  %1344 = vmatprep.subr.bf16.mxu0 0
  %1345 = vmatpush2.bf16.msra.mxu0 %v968
  %1346 = vmatprep.subr.bf16.mxu0 0
  %1347 = vmatpush2.bf16.msra.mxu0 %v967
  %1348 = vmatprep.mubr.bf16.mxu0 %v418
  %1349 = vmatmul.mubr.bf16.gmra.mxu0 %v417
  %v1350 = vpop.f32.mrf.mxu0
  %v1351 = vadd.f32 %v1287, %v1350
  %v1352 = vpop.f32.mrf.mxu0
  %v1353 = vpop.f32.mrf.mxu0
  %v1354 = vadd.f32 %v1290, %v1353
  %v1355 = vpop.f32.mrf.mxu0
  %1356 = vmatprep.mubr.bf16.mxu0 %v431
  %1357 = vmatmul.mubr.bf16.gmra.mxu0 %v430
  %v1358 = vpop.f32.mrf.mxu0
  %v1359 = vadd.f32 %v1295, %v1358
  %v1360 = vpop.f32.mrf.mxu0
  %v1361 = vpop.f32.mrf.mxu0
  %v1362 = vadd.f32 %v1298, %v1361
  %v1363 = vpop.f32.mrf.mxu0
  %1364 = vmatprep.mubr.bf16.mxu0 %v444
  %1365 = vmatmul.mubr.bf16.gmra.mxu0 %v443
  %v1366 = vpop.f32.mrf.mxu0
  %v1367 = vadd.f32 %v1303, %v1366
  %v1368 = vpop.f32.mrf.mxu0
  %v1369 = vpop.f32.mrf.mxu0
  %v1370 = vadd.f32 %v1306, %v1369
  %v1371 = vpop.f32.mrf.mxu0
  %1372 = vmatprep.mubr.bf16.mxu0 %v457
  %1373 = vmatmul.mubr.bf16.gmra.mxu0 %v456
  %v1374 = vpop.f32.mrf.mxu0
  %v1375 = vadd.f32 %v1311, %v1374
  %v1376 = vpop.f32.mrf.mxu0
  %v1377 = vpop.f32.mrf.mxu0
  %v1378 = vpop.f32.mrf.mxu0
  %1379 = vdwg.mxu0
  %1380 = vmatprep.subr.bf16.mxu0 0
  %1381 = vmatpush1.bf16.msra.mxu0 %v982
  %1382 = vmatprep.subr.bf16.mxu0 0
  %1383 = vmatpush1.bf16.msra.mxu0 %v981
  %1384 = vmatprep.subr.bf16.mxu0 0
  %1385 = vmatpush1.bf16.msra.mxu0 %v980
  %1386 = vmatprep.subr.bf16.mxu0 0
  %1387 = vmatpush1.bf16.msra.mxu0 %v979
  %1388 = vmatprep.subr.bf16.mxu0 0
  %1389 = vmatpush1.bf16.msra.mxu0 %v978
  %1390 = vmatprep.subr.bf16.mxu0 0
  %1391 = vmatpush1.bf16.msra.mxu0 %v977
  %1392 = vmatprep.subr.bf16.mxu0 0
  %1393 = vmatpush1.bf16.msra.mxu0 %v976
  %1394 = vmatprep.subr.bf16.mxu0 0
  %1395 = vmatpush1.bf16.msra.mxu0 %v975
  %1396 = vmatprep.subr.bf16.mxu0 0
  %1397 = vmatpush2.bf16.msra.mxu0 %v990
  %1398 = vmatprep.subr.bf16.mxu0 0
  %1399 = vmatpush2.bf16.msra.mxu0 %v989
  %1400 = vmatprep.subr.bf16.mxu0 0
  %1401 = vmatpush2.bf16.msra.mxu0 %v988
  %1402 = vmatprep.subr.bf16.mxu0 0
  %1403 = vmatpush2.bf16.msra.mxu0 %v987
  %1404 = vmatprep.subr.bf16.mxu0 0
  %1405 = vmatpush2.bf16.msra.mxu0 %v986
  %1406 = vmatprep.subr.bf16.mxu0 0
  %1407 = vmatpush2.bf16.msra.mxu0 %v985
  %1408 = vmatprep.subr.bf16.mxu0 0
  %1409 = vmatpush2.bf16.msra.mxu0 %v984
  %1410 = vmatprep.subr.bf16.mxu0 0
  %1411 = vmatpush2.bf16.msra.mxu0 %v983
  %1412 = vmatprep.mubr.bf16.mxu0 %v420
  %1413 = vmatmul.mubr.bf16.gmra.mxu0 %v419
  %v1414 = vpop.f32.mrf.mxu0
  %v1415 = vadd.f32 %v1351, %v1414
  %v1416 = vpop.f32.mrf.mxu0
  %v1417 = vpop.f32.mrf.mxu0
  %v1418 = vadd.f32 %v1354, %v1417
  %v1419 = vpop.f32.mrf.mxu0
  %1420 = vmatprep.mubr.bf16.mxu0 %v433
  %1421 = vmatmul.mubr.bf16.gmra.mxu0 %v432
  %v1422 = vpop.f32.mrf.mxu0
  %v1423 = vadd.f32 %v1359, %v1422
  %v1424 = vpop.f32.mrf.mxu0
  %v1425 = vpop.f32.mrf.mxu0
  %v1426 = vadd.f32 %v1362, %v1425
  %v1427 = vpop.f32.mrf.mxu0
  %1428 = vmatprep.mubr.bf16.mxu0 %v446
  %1429 = vmatmul.mubr.bf16.gmra.mxu0 %v445
  %v1430 = vpop.f32.mrf.mxu0
  %v1431 = vadd.f32 %v1367, %v1430
  %v1432 = vpop.f32.mrf.mxu0
  %v1433 = vpop.f32.mrf.mxu0
  %v1434 = vadd.f32 %v1370, %v1433
  %v1435 = vpop.f32.mrf.mxu0
  %1436 = vmatprep.mubr.bf16.mxu0 %v459
  %1437 = vmatmul.mubr.bf16.gmra.mxu0 %v458
  %v1438 = vpop.f32.mrf.mxu0
  %v1439 = vadd.f32 %v1375, %v1438
  %v1440 = vpop.f32.mrf.mxu0
  %v1441 = vpop.f32.mrf.mxu0
  %v1442 = vpop.f32.mrf.mxu0
  %1443 = vdwg.mxu0
  %1444 = vmatprep.subr.bf16.mxu0 0
  %1445 = vmatpush1.bf16.msra.mxu0 %v998
  %1446 = vmatprep.subr.bf16.mxu0 0
  %1447 = vmatpush1.bf16.msra.mxu0 %v997
  %1448 = vmatprep.subr.bf16.mxu0 0
  %1449 = vmatpush1.bf16.msra.mxu0 %v996
  %1450 = vmatprep.subr.bf16.mxu0 0
  %1451 = vmatpush1.bf16.msra.mxu0 %v995
  %1452 = vmatprep.subr.bf16.mxu0 0
  %1453 = vmatpush1.bf16.msra.mxu0 %v994
  %1454 = vmatprep.subr.bf16.mxu0 0
  %1455 = vmatpush1.bf16.msra.mxu0 %v993
  %1456 = vmatprep.subr.bf16.mxu0 0
  %1457 = vmatpush1.bf16.msra.mxu0 %v992
  %1458 = vmatprep.subr.bf16.mxu0 0
  %1459 = vmatpush1.bf16.msra.mxu0 %v991
  %1460 = vmatprep.subr.bf16.mxu0 0
  %1461 = vmatpush2.bf16.msra.mxu0 %v1006
  %1462 = vmatprep.subr.bf16.mxu0 0
  %1463 = vmatpush2.bf16.msra.mxu0 %v1005
  %1464 = vmatprep.subr.bf16.mxu0 0
  %1465 = vmatpush2.bf16.msra.mxu0 %v1004
  %1466 = vmatprep.subr.bf16.mxu0 0
  %1467 = vmatpush2.bf16.msra.mxu0 %v1003
  %1468 = vmatprep.subr.bf16.mxu0 0
  %1469 = vmatpush2.bf16.msra.mxu0 %v1002
  %1470 = vmatprep.subr.bf16.mxu0 0
  %1471 = vmatpush2.bf16.msra.mxu0 %v1001
  %1472 = vmatprep.subr.bf16.mxu0 0
  %1473 = vmatpush2.bf16.msra.mxu0 %v1000
  %1474 = vmatprep.subr.bf16.mxu0 0
  %1475 = vmatpush2.bf16.msra.mxu0 %v999
  %1476 = vmatprep.mubr.bf16.mxu0 %v422
  %1477 = vmatmul.mubr.bf16.gmra.mxu0 %v421
  %v1478 = vpop.f32.mrf.mxu0
  %v1479 = vadd.f32 %v1415, %v1478
  %v1480 = vpop.f32.mrf.mxu0
  %v1481 = vpop.f32.mrf.mxu0
  %v1482 = vadd.f32 %v1418, %v1481
  %v1483 = vpop.f32.mrf.mxu0
  %1484 = vmatprep.mubr.bf16.mxu0 %v435
  %1485 = vmatmul.mubr.bf16.gmra.mxu0 %v434
  %v1486 = vpop.f32.mrf.mxu0
  %v1487 = vadd.f32 %v1423, %v1486
  %v1488 = vpop.f32.mrf.mxu0
  %v1489 = vpop.f32.mrf.mxu0
  %v1490 = vadd.f32 %v1426, %v1489
  %v1491 = vpop.f32.mrf.mxu0
  %1492 = vmatprep.mubr.bf16.mxu0 %v448
  %1493 = vmatmul.mubr.bf16.gmra.mxu0 %v447
  %v1494 = vpop.f32.mrf.mxu0
  %v1495 = vadd.f32 %v1431, %v1494
  %v1496 = vpop.f32.mrf.mxu0
  %v1497 = vpop.f32.mrf.mxu0
  %v1498 = vadd.f32 %v1434, %v1497
  %v1499 = vpop.f32.mrf.mxu0
  %1500 = vmatprep.mubr.bf16.mxu0 %v461
  %1501 = vmatmul.mubr.bf16.gmra.mxu0 %v460
  %v1502 = vpop.f32.mrf.mxu0
  %v1503 = vadd.f32 %v1439, %v1502
  %v1504 = vpop.f32.mrf.mxu0
  %v1505 = vpop.f32.mrf.mxu0
  %v1506 = vpop.f32.mrf.mxu0
  %1507 = vdwg.mxu0
  %1508 = vmatprep.subr.bf16.mxu0 0
  %1509 = vmatpush1.bf16.msra.mxu0 0
  %1510 = vmatprep.subr.bf16.mxu0 0
  %1511 = vmatpush1.bf16.msra.mxu0 0
  %1512 = vmatprep.subr.bf16.mxu0 0
  %1513 = vmatpush1.bf16.msra.mxu0 0
  %1514 = vmatprep.subr.bf16.mxu0 0
  %1515 = vmatpush1.bf16.msra.mxu0 0
  %1516 = vmatprep.subr.bf16.mxu0 0
  %1517 = vmatpush1.bf16.msra.mxu0 %v1010
  %1518 = vmatprep.subr.bf16.mxu0 0
  %1519 = vmatpush1.bf16.msra.mxu0 %v1009
  %1520 = vmatprep.subr.bf16.mxu0 0
  %1521 = vmatpush1.bf16.msra.mxu0 %v1008
  %1522 = vmatprep.subr.bf16.mxu0 0
  %1523 = vmatpush1.bf16.msra.mxu0 %v1007
  %1524 = vmatprep.subr.bf16.mxu0 0
  %1525 = vmatpush2.bf16.msra.mxu0 0
  %1526 = vmatprep.subr.bf16.mxu0 0
  %1527 = vmatpush2.bf16.msra.mxu0 0
  %1528 = vmatprep.subr.bf16.mxu0 0
  %1529 = vmatpush2.bf16.msra.mxu0 0
  %1530 = vmatprep.subr.bf16.mxu0 0
  %1531 = vmatpush2.bf16.msra.mxu0 0
  %1532 = vmatprep.subr.bf16.mxu0 0
  %1533 = vmatpush2.bf16.msra.mxu0 0
  %1534 = vmatprep.subr.bf16.mxu0 0
  %1535 = vmatpush2.bf16.msra.mxu0 0
  %1536 = vmatprep.subr.bf16.mxu0 0
  %1537 = vmatpush2.bf16.msra.mxu0 0
  %1538 = vmatprep.subr.bf16.mxu0 0
  %1539 = vmatpush2.bf16.msra.mxu0 0
  %1540 = vmatprep.mubr.bf16.mxu0 0
  %1541 = vmatmul.mubr.bf16.gmra.mxu0 %v1113
  %v1542 = vpop.f32.mrf.mxu0
  %v1543 = vadd.f32 %v1479, %v1542
  %v1544 = vpop.f32.mrf.mxu0
  %v1545 = vpop.f32.mrf.mxu0
  %v1546 = vadd.f32 %v1482, %v1545
  %v1547 = vpop.f32.mrf.mxu0
  %1548 = vmatprep.mubr.bf16.mxu0 0
  %1549 = vmatmul.mubr.bf16.gmra.mxu0 %v1116
  %v1550 = vpop.f32.mrf.mxu0
  %v1551 = vadd.f32 %v1487, %v1550
  %v1552 = vpop.f32.mrf.mxu0
  %v1553 = vpop.f32.mrf.mxu0
  %v1554 = vadd.f32 %v1490, %v1553
  %v1555 = vpop.f32.mrf.mxu0
  %1556 = vmatprep.mubr.bf16.mxu0 0
  %1557 = vmatmul.mubr.bf16.gmra.mxu0 %v1119
  %v1558 = vpop.f32.mrf.mxu0
  %v1559 = vadd.f32 %v1495, %v1558
  %v1560 = vpop.f32.mrf.mxu0
  %v1561 = vpop.f32.mrf.mxu0
  %v1562 = vadd.f32 %v1498, %v1561
  %v1563 = vpop.f32.mrf.mxu0
  %1564 = vmatprep.mubr.bf16.mxu0 0
  %1565 = vmatmul.mubr.bf16.gmra.mxu0 %v1122
  %v1566 = vpop.f32.mrf.mxu0
  %v1567 = vadd.f32 %v1503, %v1566
  %v1568 = vpop.f32.mrf.mxu0
  %v1569 = vpop.f32.mrf.mxu0
  %v1570 = vpop.f32.mrf.mxu0
  %1571 = vdwg.mxu0
  %v1572 = vmax.f32 %v1543, 0.0
  %v1573 = vmax.f32 %v1546, 0.0
  %v1574 = vmax.f32 %v1551, 0.0
  %v1575 = vmax.f32 %v1554, 0.0
  %v1576 = vmax.f32 %v1559, 0.0
  %v1577 = vmax.f32 %v1562, 0.0
  %v1578 = vmax.f32 %v1567, 0.0
  %v1579 = vpack.c.bf16 %v1573, %v1572
  %v1580 = vpack.c.bf16 %v1575, %v1574
  %v1581 = vpack.c.bf16 %v1577, %v1576
  %v1582 = vpack.c.bf16 %v1578, %v1578
  %v1587 = vunpack.c.l.b16 %v1579
  %v1588 = vunpack.c.h.b16 %v1579
  %v1589 = vunpack.c.l.b16 %v1580
  %v1590 = vunpack.c.h.b16 %v1580
  %v1591 = vunpack.c.l.b16 %v1581
  %v1592 = vunpack.c.h.b16 %v1581
  %v1593 = vunpack.c.l.b16 %v1582
  %v1594 = vpack.c.b16 %v1587, %v1587
  %v1595 = vpack.c.b16 %v1588, %v1588
  %v1596 = vpack.c.b16 %v1589, %v1589
  %v1597 = vpack.c.b16 %v1590, %v1590
  %v1598 = vpack.c.b16 %v1591, %v1591
  %v1599 = vpack.c.b16 %v1592, %v1592
  %v1600 = vpack.c.b16 %v1593, %v1593
  %vm1608 = vcmask 519168
  %1609 = vst.msk [vmem:[%s3] sm:$0xf] %vm1608, %v1594
  %1610 = vst.msk [vmem:[%s3 + $0x4] sm:$0xf] %vm1608, %v1595
  %1611 = vst.msk [vmem:[%s3 + $0x8] sm:$0xf] %vm1608, %v1596
  %1612 = vst.msk [vmem:[%s3 + $0xc] sm:$0xf] %vm1608, %v1597
  %1613 = vst.msk [vmem:[%s3 + $0x10] sm:$0xf] %vm1608, %v1598
  %1614 = vst.msk [vmem:[%s3 + $0x14] sm:$0xf] %vm1608, %v1599
  %vm1615 = vcmask 516096
  %1616 = vst.msk [vmem:[%s3 + $0x18] sm:$0x1] %vm1615, %v1600
  // Predicated region
  $region14: #{coinrun_critic_forward.6} parent=0 // pred_check
    _
  $region15: #{coinrun_critic_forward.6} parent=0 // pred_check_branch
    %1618 = sbr.rel (0) target = $region17
  $region16: #{coinrun_critic_forward.6} parent=0 // pred_region
    _
  $region17: #{coinrun_critic_forward.6} parent=0 // pred_fallthru
    _
  // Predicated region
  $region18: #{coinrun_critic_forward.6} parent=0 // pred_check
    _
  $region19: #{coinrun_critic_forward.6} parent=0 // pred_check_branch
    %1620 = sbr.rel (0) target = $region21
  $region20: #{coinrun_critic_forward.6} parent=0 // pred_region
    _
  $region21: #{coinrun_critic_forward.6} parent=0 // pred_fallthru
    _

// kernel: coinrun_critic_forward.7
$region0: #{coinrun_critic_forward.7}
  #allocation0 [shape = 'u32[]', space=smem, size = 0x4, offset = 0x4, fixed_abs, tag = 'smem constant byte address 0x4 - core index']
  #allocation1 [shape = 'u32[144,128]{1,0:T(1,128)}', space=vmem, size = 0x12000, scoped, tag = 'internal scratch']
  #allocation2 [shape = 'f32[1,1]{1,0:T(1,128)S(1)}', space=vmem, size = 0x200, scoped, tag = 'scoped memory for coinrun_critic_forward.7']
  %s0 = inlined_call_operand.vmem [shape: bf16[2,1600], index: 0, kind: input, shape index: {}]
  %s1 = inlined_call_operand.vmem [shape: bf16[1600,512], index: 1, kind: input, shape index: {}]
  %s2 = inlined_call_operand.vmem [shape: f32[1,512], index: 2, kind: input, shape index: {}]
  %s3 = inlined_call_operand.vmem [shape: bf16[512,256], index: 3, kind: input, shape index: {}]
  %s4 = inlined_call_operand.vmem [shape: f32[1,256], index: 4, kind: input, shape index: {}]
  %s5 = inlined_call_operand.vmem [shape: f32[1,256], index: 5, kind: input, shape index: {}]
  %s6 = inlined_call_operand.<no memory space> [shape: f32[1,1], index: 6, kind: input, shape index: {}]
  %s7 = inlined_call_operand.vmem [shape: f32[2,1], index: 7, kind: output, shape index: {}]
  %s8 = sld [smem:[#allocation0]]
  $region38: #{coinrun_critic_forward.7} parent=0
    _
  %s10 = ssub.s32 1, %s8
  %s11 = scalar_select 0, %s10, %s8
  %v12 = vstv %s6
  %13 = vst [vmem:[#allocation2] sm:$0x1] %v12
  // Predicated region
  $region2: #{coinrun_critic_forward.7} parent=0 // pred_check
    _
  $region3: #{coinrun_critic_forward.7} parent=0 // pred_check_branch
    %15 = sbr.rel (0) target = $region5
  $region4: #{coinrun_critic_forward.7} parent=0 // pred_region
    _
  $region5: #{coinrun_critic_forward.7} parent=0 // pred_fallthru
    _
  // Predicated region
  $region6: #{coinrun_critic_forward.7} parent=0 // pred_check
    _
  $region7: #{coinrun_critic_forward.7} parent=0 // pred_check_branch
    %17 = sbr.rel (0) target = $region9
  $region8: #{coinrun_critic_forward.7} parent=0 // pred_region
    _
  $region9: #{coinrun_critic_forward.7} parent=0 // pred_fallthru
    _
  // Predicated region
  $region10: #{coinrun_critic_forward.7} parent=0 // pred_check
    _
  $region11: #{coinrun_critic_forward.7} parent=0 // pred_check_branch
    %19 = sbr.rel (0) target = $region13
  $region12: #{coinrun_critic_forward.7} parent=0 // pred_region
    _
  $region13: #{coinrun_critic_forward.7} parent=0 // pred_fallthru
    _
  // Predicated region
  $region14: #{coinrun_critic_forward.7} parent=0 // pred_check
    _
  $region15: #{coinrun_critic_forward.7} parent=0 // pred_check_branch
    %21 = sbr.rel (0) target = $region17
  $region16: #{coinrun_critic_forward.7} parent=0 // pred_region
    _
  $region17: #{coinrun_critic_forward.7} parent=0 // pred_fallthru
    _
  // Predicated region
  $region18: #{coinrun_critic_forward.7} parent=0 // pred_check
    _
  $region19: #{coinrun_critic_forward.7} parent=0 // pred_check_branch
    %23 = sbr.rel (0) target = $region21
  $region20: #{coinrun_critic_forward.7} parent=0 // pred_region
    _
  $region21: #{coinrun_critic_forward.7} parent=0 // pred_fallthru
    _
  // Predicated region
  $region22: #{coinrun_critic_forward.7} parent=0 // pred_check
    _
  $region23: #{coinrun_critic_forward.7} parent=0 // pred_check_branch
    %25 = sbr.rel (0) target = $region25
  $region24: #{coinrun_critic_forward.7} parent=0 // pred_region
    _
  $region25: #{coinrun_critic_forward.7} parent=0 // pred_fallthru
    _
  // Predicated region
  $region26: #{coinrun_critic_forward.7} parent=0 // pred_check
    _
  $region27: #{coinrun_critic_forward.7} parent=0 // pred_check_branch
    %27 = sbr.rel (0) target = $region29
  $region28: #{coinrun_critic_forward.7} parent=0 // pred_region
    _
  $region29: #{coinrun_critic_forward.7} parent=0 // pred_fallthru
    _
  %v29 = vld [vmem:[%s0] sm:$0xff]
  %v30 = vld [vmem:[%s0 + $0x8] sm:$0x1f]
  %v31 = vld [vmem:[%s1] sm:$0xff]
  %v32 = vld [vmem:[%s1 + $0x8] sm:$0xff]
  %v33 = vld [vmem:[%s1 + $0x10] sm:$0xff]
  %v34 = vld [vmem:[%s1 + $0x18] sm:$0xff]
  %v35 = vld [vmem:[%s1 + $0x20] sm:$0xff]
  %v36 = vld [vmem:[%s1 + $0x28] sm:$0xff]
  %v37 = vld [vmem:[%s1 + $0x30] sm:$0xff]
  %v38 = vld [vmem:[%s1 + $0x38] sm:$0xff]
  %v39 = vld [vmem:[%s1 + $0x40] sm:$0xff]
  %v40 = vld [vmem:[%s1 + $0x48] sm:$0xff]
  %v41 = vld [vmem:[%s1 + $0x50] sm:$0xff]
  %v42 = vld [vmem:[%s1 + $0x58] sm:$0xff]
  %v43 = vld [vmem:[%s1 + $0x60] sm:$0xff]
  %v44 = vld [vmem:[%s1 + $0x68] sm:$0xff]
  %v45 = vld [vmem:[%s1 + $0x70] sm:$0xff]
  %v46 = vld [vmem:[%s1 + $0x78] sm:$0xff]
  %v47 = vld [vmem:[%s1 + $0x80] sm:$0xff]
  %v48 = vld [vmem:[%s1 + $0x88] sm:$0xff]
  %v49 = vld [vmem:[%s1 + $0x90] sm:$0xff]
  %v50 = vld [vmem:[%s1 + $0x98] sm:$0xff]
  %v51 = vld [vmem:[%s1 + $0xa0] sm:$0xff]
  %v52 = vld [vmem:[%s1 + $0xa8] sm:$0xff]
  %v53 = vld [vmem:[%s1 + $0xb0] sm:$0xff]
  %v54 = vld [vmem:[%s1 + $0xb8] sm:$0xff]
  %v55 = vld [vmem:[%s1 + $0xc0] sm:$0xff]
  %v56 = vld [vmem:[%s1 + $0xc8] sm:$0xff]
  %v57 = vld [vmem:[%s1 + $0xd0] sm:$0xff]
  %v58 = vld [vmem:[%s1 + $0xd8] sm:$0xff]
  %v59 = vld [vmem:[%s1 + $0xe0] sm:$0xff]
  %v60 = vld [vmem:[%s1 + $0xe8] sm:$0xff]
  %v61 = vld [vmem:[%s1 + $0xf0] sm:$0xff]
  %v62 = vld [vmem:[%s1 + $0xf8] sm:$0xff]
  %v63 = vld [vmem:[%s1 + $0x100] sm:$0xff]
  %v64 = vld [vmem:[%s1 + $0x108] sm:$0xff]
  %v65 = vld [vmem:[%s1 + $0x110] sm:$0xff]
  %v66 = vld [vmem:[%s1 + $0x118] sm:$0xff]
  %v67 = vld [vmem:[%s1 + $0x120] sm:$0xff]
  %v68 = vld [vmem:[%s1 + $0x128] sm:$0xff]
  %v69 = vld [vmem:[%s1 + $0x130] sm:$0xff]
  %v70 = vld [vmem:[%s1 + $0x138] sm:$0xff]
  %v71 = vld [vmem:[%s1 + $0x140] sm:$0xff]
  %v72 = vld [vmem:[%s1 + $0x148] sm:$0xff]
  %v73 = vld [vmem:[%s1 + $0x150] sm:$0xff]
  %v74 = vld [vmem:[%s1 + $0x158] sm:$0xff]
  %v75 = vld [vmem:[%s1 + $0x160] sm:$0xff]
  %v76 = vld [vmem:[%s1 + $0x168] sm:$0xff]
  %v77 = vld [vmem:[%s1 + $0x170] sm:$0xff]
  %v78 = vld [vmem:[%s1 + $0x178] sm:$0xff]
  %v79 = vld [vmem:[%s1 + $0x180] sm:$0xff]
  %v80 = vld [vmem:[%s1 + $0x188] sm:$0xff]
  %v81 = vld [vmem:[%s1 + $0x190] sm:$0xff]
  %v82 = vld [vmem:[%s1 + $0x198] sm:$0xff]
  %v83 = vld [vmem:[%s1 + $0x1a0] sm:$0xff]
  %v84 = vld [vmem:[%s1 + $0x1a8] sm:$0xff]
  %v85 = vld [vmem:[%s1 + $0x1b0] sm:$0xff]
  %v86 = vld [vmem:[%s1 + $0x1b8] sm:$0xff]
  %v87 = vld [vmem:[%s1 + $0x1c0] sm:$0xff]
  %v88 = vld [vmem:[%s1 + $0x1c8] sm:$0xff]
  %v89 = vld [vmem:[%s1 + $0x1d0] sm:$0xff]
  %v90 = vld [vmem:[%s1 + $0x1d8] sm:$0xff]
  %v91 = vld [vmem:[%s1 + $0x1e0] sm:$0xff]
  %v92 = vld [vmem:[%s1 + $0x1e8] sm:$0xff]
  %v93 = vld [vmem:[%s1 + $0x1f0] sm:$0xff]
  %v94 = vld [vmem:[%s1 + $0x1f8] sm:$0xff]
  %v95 = vld [vmem:[%s1 + $0x200] sm:$0xff]
  %v96 = vld [vmem:[%s1 + $0x208] sm:$0xff]
  %v97 = vld [vmem:[%s1 + $0x210] sm:$0xff]
  %v98 = vld [vmem:[%s1 + $0x218] sm:$0xff]
  %v99 = vld [vmem:[%s1 + $0x220] sm:$0xff]
  %v100 = vld [vmem:[%s1 + $0x228] sm:$0xff]
  %v101 = vld [vmem:[%s1 + $0x230] sm:$0xff]
  %v102 = vld [vmem:[%s1 + $0x238] sm:$0xff]
  %v103 = vld [vmem:[%s1 + $0x240] sm:$0xff]
  %v104 = vld [vmem:[%s1 + $0x248] sm:$0xff]
  %v105 = vld [vmem:[%s1 + $0x250] sm:$0xff]
  %v106 = vld [vmem:[%s1 + $0x258] sm:$0xff]
  %v107 = vld [vmem:[%s1 + $0x260] sm:$0xff]
  %v108 = vld [vmem:[%s1 + $0x268] sm:$0xff]
  %v109 = vld [vmem:[%s1 + $0x270] sm:$0xff]
  %v110 = vld [vmem:[%s1 + $0x278] sm:$0xff]
  %v111 = vld [vmem:[%s1 + $0x280] sm:$0xff]
  %v112 = vld [vmem:[%s1 + $0x288] sm:$0xff]
  %v113 = vld [vmem:[%s1 + $0x290] sm:$0xff]
  %v114 = vld [vmem:[%s1 + $0x298] sm:$0xff]
  %v115 = vld [vmem:[%s1 + $0x2a0] sm:$0xff]
  %v116 = vld [vmem:[%s1 + $0x2a8] sm:$0xff]
  %v117 = vld [vmem:[%s1 + $0x2b0] sm:$0xff]
  %v118 = vld [vmem:[%s1 + $0x2b8] sm:$0xff]
  %v119 = vld [vmem:[%s1 + $0x2c0] sm:$0xff]
  %v120 = vld [vmem:[%s1 + $0x2c8] sm:$0xff]
  %v121 = vld [vmem:[%s1 + $0x2d0] sm:$0xff]
  %v122 = vld [vmem:[%s1 + $0x2d8] sm:$0xff]
  %v123 = vld [vmem:[%s1 + $0x2e0] sm:$0xff]
  %v124 = vld [vmem:[%s1 + $0x2e8] sm:$0xff]
  %v125 = vld [vmem:[%s1 + $0x2f0] sm:$0xff]
  %v126 = vld [vmem:[%s1 + $0x2f8] sm:$0xff]
  %v127 = vld [vmem:[%s1 + $0x300] sm:$0xff]
  %v128 = vld [vmem:[%s1 + $0x308] sm:$0xff]
  %v129 = vld [vmem:[%s1 + $0x310] sm:$0xff]
  %v130 = vld [vmem:[%s1 + $0x318] sm:$0xff]
  %v131 = vld [vmem:[%s1 + $0x320] sm:$0xff]
  %v132 = vld [vmem:[%s1 + $0x328] sm:$0xff]
  %v133 = vld [vmem:[%s1 + $0x330] sm:$0xff]
  %v134 = vld [vmem:[%s1 + $0x338] sm:$0xff]
  %v135 = vld [vmem:[%s1 + $0x340] sm:$0xff]
  %v136 = vld [vmem:[%s1 + $0x348] sm:$0xff]
  %v137 = vld [vmem:[%s1 + $0x350] sm:$0xff]
  %v138 = vld [vmem:[%s1 + $0x358] sm:$0xff]
  %v139 = vld [vmem:[%s1 + $0x360] sm:$0xff]
  %v140 = vld [vmem:[%s1 + $0x368] sm:$0xff]
  %v141 = vld [vmem:[%s1 + $0x370] sm:$0xff]
  %v142 = vld [vmem:[%s1 + $0x378] sm:$0xff]
  %v143 = vld [vmem:[%s1 + $0x380] sm:$0xff]
  %v144 = vld [vmem:[%s1 + $0x388] sm:$0xff]
  %v145 = vld [vmem:[%s1 + $0x390] sm:$0xff]
  %v146 = vld [vmem:[%s1 + $0x398] sm:$0xff]
  %v147 = vld [vmem:[%s1 + $0x3a0] sm:$0xff]
  %v148 = vld [vmem:[%s1 + $0x3a8] sm:$0xff]
  %v149 = vld [vmem:[%s1 + $0x3b0] sm:$0xff]
  %v150 = vld [vmem:[%s1 + $0x3b8] sm:$0xff]
  %v151 = vld [vmem:[%s1 + $0x3c0] sm:$0xff]
  %v152 = vld [vmem:[%s1 + $0x3c8] sm:$0xff]
  %v153 = vld [vmem:[%s1 + $0x3d0] sm:$0xff]
  %v154 = vld [vmem:[%s1 + $0x3d8] sm:$0xff]
  %v155 = vld [vmem:[%s1 + $0x3e0] sm:$0xff]
  %v156 = vld [vmem:[%s1 + $0x3e8] sm:$0xff]
  %v157 = vld [vmem:[%s1 + $0x3f0] sm:$0xff]
  %v158 = vld [vmem:[%s1 + $0x3f8] sm:$0xff]
  %v159 = vld [vmem:[%s1 + $0x400] sm:$0xff]
  %v160 = vld [vmem:[%s1 + $0x408] sm:$0xff]
  %v161 = vld [vmem:[%s1 + $0x410] sm:$0xff]
  %v162 = vld [vmem:[%s1 + $0x418] sm:$0xff]
  %v163 = vld [vmem:[%s1 + $0x420] sm:$0xff]
  %v164 = vld [vmem:[%s1 + $0x428] sm:$0xff]
  %v165 = vld [vmem:[%s1 + $0x430] sm:$0xff]
  %v166 = vld [vmem:[%s1 + $0x438] sm:$0xff]
  %v167 = vld [vmem:[%s1 + $0x440] sm:$0xff]
  %v168 = vld [vmem:[%s1 + $0x448] sm:$0xff]
  %v169 = vld [vmem:[%s1 + $0x450] sm:$0xff]
  %v170 = vld [vmem:[%s1 + $0x458] sm:$0xff]
  %v171 = vld [vmem:[%s1 + $0x460] sm:$0xff]
  %v172 = vld [vmem:[%s1 + $0x468] sm:$0xff]
  %v173 = vld [vmem:[%s1 + $0x470] sm:$0xff]
  %v174 = vld [vmem:[%s1 + $0x478] sm:$0xff]
  %v175 = vld [vmem:[%s1 + $0x480] sm:$0xff]
  %v176 = vld [vmem:[%s1 + $0x488] sm:$0xff]
  %v177 = vld [vmem:[%s1 + $0x490] sm:$0xff]
  %v178 = vld [vmem:[%s1 + $0x498] sm:$0xff]
  %v179 = vld [vmem:[%s1 + $0x4a0] sm:$0xff]
  %v180 = vld [vmem:[%s1 + $0x4a8] sm:$0xff]
  %v181 = vld [vmem:[%s1 + $0x4b0] sm:$0xff]
  %v182 = vld [vmem:[%s1 + $0x4b8] sm:$0xff]
  %v183 = vld [vmem:[%s1 + $0x4c0] sm:$0xff]
  %v184 = vld [vmem:[%s1 + $0x4c8] sm:$0xff]
  %v185 = vld [vmem:[%s1 + $0x4d0] sm:$0xff]
  %v186 = vld [vmem:[%s1 + $0x4d8] sm:$0xff]
  %v187 = vld [vmem:[%s1 + $0x4e0] sm:$0xff]
  %v188 = vld [vmem:[%s1 + $0x4e8] sm:$0xff]
  %v189 = vld [vmem:[%s1 + $0x4f0] sm:$0xff]
  %v190 = vld [vmem:[%s1 + $0x4f8] sm:$0xff]
  %v191 = vld [vmem:[%s1 + $0x500] sm:$0xff]
  %v192 = vld [vmem:[%s1 + $0x508] sm:$0xff]
  %v193 = vld [vmem:[%s1 + $0x510] sm:$0xff]
  %v194 = vld [vmem:[%s1 + $0x518] sm:$0xff]
  %v195 = vld [vmem:[%s1 + $0x520] sm:$0xff]
  %v196 = vld [vmem:[%s1 + $0x528] sm:$0xff]
  %v197 = vld [vmem:[%s1 + $0x530] sm:$0xff]
  %v198 = vld [vmem:[%s1 + $0x538] sm:$0xff]
  %v199 = vld [vmem:[%s1 + $0x540] sm:$0xff]
  %v200 = vld [vmem:[%s1 + $0x548] sm:$0xff]
  %v201 = vld [vmem:[%s1 + $0x550] sm:$0xff]
  %v202 = vld [vmem:[%s1 + $0x558] sm:$0xff]
  %v203 = vld [vmem:[%s1 + $0x560] sm:$0xff]
  %v204 = vld [vmem:[%s1 + $0x568] sm:$0xff]
  %v205 = vld [vmem:[%s1 + $0x570] sm:$0xff]
  %v206 = vld [vmem:[%s1 + $0x578] sm:$0xff]
  %v207 = vld [vmem:[%s1 + $0x580] sm:$0xff]
  %v208 = vld [vmem:[%s1 + $0x588] sm:$0xff]
  %v209 = vld [vmem:[%s1 + $0x590] sm:$0xff]
  %v210 = vld [vmem:[%s1 + $0x598] sm:$0xff]
  %v211 = vld [vmem:[%s1 + $0x5a0] sm:$0xff]
  %v212 = vld [vmem:[%s1 + $0x5a8] sm:$0xff]
  %v213 = vld [vmem:[%s1 + $0x5b0] sm:$0xff]
  %v214 = vld [vmem:[%s1 + $0x5b8] sm:$0xff]
  %v215 = vld [vmem:[%s1 + $0x5c0] sm:$0xff]
  %v216 = vld [vmem:[%s1 + $0x5c8] sm:$0xff]
  %v217 = vld [vmem:[%s1 + $0x5d0] sm:$0xff]
  %v218 = vld [vmem:[%s1 + $0x5d8] sm:$0xff]
  %v219 = vld [vmem:[%s1 + $0x5e0] sm:$0xff]
  %v220 = vld [vmem:[%s1 + $0x5e8] sm:$0xff]
  %v221 = vld [vmem:[%s1 + $0x5f0] sm:$0xff]
  %v222 = vld [vmem:[%s1 + $0x5f8] sm:$0xff]
  %v223 = vld [vmem:[%s1 + $0x600] sm:$0xff]
  %v224 = vld [vmem:[%s1 + $0x608] sm:$0xff]
  %v225 = vld [vmem:[%s1 + $0x610] sm:$0xff]
  %v226 = vld [vmem:[%s1 + $0x618] sm:$0xff]
  %v227 = vld [vmem:[%s1 + $0x620] sm:$0xff]
  %v228 = vld [vmem:[%s1 + $0x628] sm:$0xff]
  %v229 = vld [vmem:[%s1 + $0x630] sm:$0xff]
  %v230 = vld [vmem:[%s1 + $0x638] sm:$0xff]
  %v231 = vld [vmem:[%s1 + $0x640] sm:$0xff]
  %v232 = vld [vmem:[%s1 + $0x648] sm:$0xff]
  %v233 = vld [vmem:[%s1 + $0x650] sm:$0xff]
  %v234 = vld [vmem:[%s1 + $0x658] sm:$0xff]
  %v235 = vld [vmem:[%s1 + $0x660] sm:$0xff]
  %v236 = vld [vmem:[%s1 + $0x668] sm:$0xff]
  %v237 = vld [vmem:[%s1 + $0x670] sm:$0xff]
  %v238 = vld [vmem:[%s1 + $0x678] sm:$0xff]
  %v239 = vld [vmem:[%s1 + $0x680] sm:$0xff]
  %v240 = vld [vmem:[%s1 + $0x688] sm:$0xff]
  %v241 = vld [vmem:[%s1 + $0x690] sm:$0xff]
  %v242 = vld [vmem:[%s1 + $0x698] sm:$0xff]
  %v243 = vld [vmem:[%s1 + $0x6a0] sm:$0xff]
  %v244 = vld [vmem:[%s1 + $0x6a8] sm:$0xff]
  %v245 = vld [vmem:[%s1 + $0x6b0] sm:$0xff]
  %v246 = vld [vmem:[%s1 + $0x6b8] sm:$0xff]
  %v247 = vld [vmem:[%s1 + $0x6c0] sm:$0xff]
  %v248 = vld [vmem:[%s1 + $0x6c8] sm:$0xff]
  %v249 = vld [vmem:[%s1 + $0x6d0] sm:$0xff]
  %v250 = vld [vmem:[%s1 + $0x6d8] sm:$0xff]
  %v251 = vld [vmem:[%s1 + $0x6e0] sm:$0xff]
  %v252 = vld [vmem:[%s1 + $0x6e8] sm:$0xff]
  %v253 = vld [vmem:[%s1 + $0x6f0] sm:$0xff]
  %v254 = vld [vmem:[%s1 + $0x6f8] sm:$0xff]
  %v255 = vld [vmem:[%s1 + $0x700] sm:$0xff]
  %v256 = vld [vmem:[%s1 + $0x708] sm:$0xff]
  %v257 = vld [vmem:[%s1 + $0x710] sm:$0xff]
  %v258 = vld [vmem:[%s1 + $0x718] sm:$0xff]
  %v259 = vld [vmem:[%s1 + $0x720] sm:$0xff]
  %v260 = vld [vmem:[%s1 + $0x728] sm:$0xff]
  %v261 = vld [vmem:[%s1 + $0x730] sm:$0xff]
  %v262 = vld [vmem:[%s1 + $0x738] sm:$0xff]
  %v263 = vld [vmem:[%s1 + $0x740] sm:$0xff]
  %v264 = vld [vmem:[%s1 + $0x748] sm:$0xff]
  %v265 = vld [vmem:[%s1 + $0x750] sm:$0xff]
  %v266 = vld [vmem:[%s1 + $0x758] sm:$0xff]
  %v267 = vld [vmem:[%s1 + $0x760] sm:$0xff]
  %v268 = vld [vmem:[%s1 + $0x768] sm:$0xff]
  %v269 = vld [vmem:[%s1 + $0x770] sm:$0xff]
  %v270 = vld [vmem:[%s1 + $0x778] sm:$0xff]
  %v271 = vld [vmem:[%s1 + $0x780] sm:$0xff]
  %v272 = vld [vmem:[%s1 + $0x788] sm:$0xff]
  %v273 = vld [vmem:[%s1 + $0x790] sm:$0xff]
  %v274 = vld [vmem:[%s1 + $0x798] sm:$0xff]
  %v275 = vld [vmem:[%s1 + $0x7a0] sm:$0xff]
  %v276 = vld [vmem:[%s1 + $0x7a8] sm:$0xff]
  %v277 = vld [vmem:[%s1 + $0x7b0] sm:$0xff]
  %v278 = vld [vmem:[%s1 + $0x7b8] sm:$0xff]
  %v279 = vld [vmem:[%s1 + $0x7c0] sm:$0xff]
  %v280 = vld [vmem:[%s1 + $0x7c8] sm:$0xff]
  %v281 = vld [vmem:[%s1 + $0x7d0] sm:$0xff]
  %v282 = vld [vmem:[%s1 + $0x7d8] sm:$0xff]
  %v283 = vld [vmem:[%s1 + $0x7e0] sm:$0xff]
  %v284 = vld [vmem:[%s1 + $0x7e8] sm:$0xff]
  %v285 = vld [vmem:[%s1 + $0x7f0] sm:$0xff]
  %v286 = vld [vmem:[%s1 + $0x7f8] sm:$0xff]
  %v287 = vld [vmem:[%s1 + $0x800] sm:$0xff]
  %v288 = vld [vmem:[%s1 + $0x808] sm:$0xff]
  %v289 = vld [vmem:[%s1 + $0x810] sm:$0xff]
  %v290 = vld [vmem:[%s1 + $0x818] sm:$0xff]
  %v291 = vld [vmem:[%s1 + $0x820] sm:$0xff]
  %v292 = vld [vmem:[%s1 + $0x828] sm:$0xff]
  %v293 = vld [vmem:[%s1 + $0x830] sm:$0xff]
  %v294 = vld [vmem:[%s1 + $0x838] sm:$0xff]
  %v295 = vld [vmem:[%s1 + $0x840] sm:$0xff]
  %v296 = vld [vmem:[%s1 + $0x848] sm:$0xff]
  %v297 = vld [vmem:[%s1 + $0x850] sm:$0xff]
  %v298 = vld [vmem:[%s1 + $0x858] sm:$0xff]
  %v299 = vld [vmem:[%s1 + $0x860] sm:$0xff]
  %v300 = vld [vmem:[%s1 + $0x868] sm:$0xff]
  %v301 = vld [vmem:[%s1 + $0x870] sm:$0xff]
  %v302 = vld [vmem:[%s1 + $0x878] sm:$0xff]
  %v303 = vld [vmem:[%s1 + $0x880] sm:$0xff]
  %v304 = vld [vmem:[%s1 + $0x888] sm:$0xff]
  %v305 = vld [vmem:[%s1 + $0x890] sm:$0xff]
  %v306 = vld [vmem:[%s1 + $0x898] sm:$0xff]
  %v307 = vld [vmem:[%s1 + $0x8a0] sm:$0xff]
  %v308 = vld [vmem:[%s1 + $0x8a8] sm:$0xff]
  %v309 = vld [vmem:[%s1 + $0x8b0] sm:$0xff]
  %v310 = vld [vmem:[%s1 + $0x8b8] sm:$0xff]
  %v311 = vld [vmem:[%s1 + $0x8c0] sm:$0xff]
  %v312 = vld [vmem:[%s1 + $0x8c8] sm:$0xff]
  %v313 = vld [vmem:[%s1 + $0x8d0] sm:$0xff]
  %v314 = vld [vmem:[%s1 + $0x8d8] sm:$0xff]
  %v315 = vld [vmem:[%s1 + $0x8e0] sm:$0xff]
  %v316 = vld [vmem:[%s1 + $0x8e8] sm:$0xff]
  %v317 = vld [vmem:[%s1 + $0x8f0] sm:$0xff]
  %v318 = vld [vmem:[%s1 + $0x8f8] sm:$0xff]
  %v319 = vld [vmem:[%s1 + $0x900] sm:$0xff]
  %v320 = vld [vmem:[%s1 + $0x908] sm:$0xff]
  %v321 = vld [vmem:[%s1 + $0x910] sm:$0xff]
  %v322 = vld [vmem:[%s1 + $0x918] sm:$0xff]
  %v323 = vld [vmem:[%s1 + $0x920] sm:$0xff]
  %v324 = vld [vmem:[%s1 + $0x928] sm:$0xff]
  %v325 = vld [vmem:[%s1 + $0x930] sm:$0xff]
  %v326 = vld [vmem:[%s1 + $0x938] sm:$0xff]
  %v327 = vld [vmem:[%s1 + $0x940] sm:$0xff]
  %v328 = vld [vmem:[%s1 + $0x948] sm:$0xff]
  %v329 = vld [vmem:[%s1 + $0x950] sm:$0xff]
  %v330 = vld [vmem:[%s1 + $0x958] sm:$0xff]
  %v331 = vld [vmem:[%s1 + $0x960] sm:$0xff]
  %v332 = vld [vmem:[%s1 + $0x968] sm:$0xff]
  %v333 = vld [vmem:[%s1 + $0x970] sm:$0xff]
  %v334 = vld [vmem:[%s1 + $0x978] sm:$0xff]
  %v335 = vld [vmem:[%s1 + $0x980] sm:$0xff]
  %v336 = vld [vmem:[%s1 + $0x988] sm:$0xff]
  %v337 = vld [vmem:[%s1 + $0x990] sm:$0xff]
  %v338 = vld [vmem:[%s1 + $0x998] sm:$0xff]
  %v339 = vld [vmem:[%s1 + $0x9a0] sm:$0xff]
  %v340 = vld [vmem:[%s1 + $0x9a8] sm:$0xff]
  %v341 = vld [vmem:[%s1 + $0x9b0] sm:$0xff]
  %v342 = vld [vmem:[%s1 + $0x9b8] sm:$0xff]
  %v343 = vld [vmem:[%s1 + $0x9c0] sm:$0xff]
  %v344 = vld [vmem:[%s1 + $0x9c8] sm:$0xff]
  %v345 = vld [vmem:[%s1 + $0x9d0] sm:$0xff]
  %v346 = vld [vmem:[%s1 + $0x9d8] sm:$0xff]
  %v347 = vld [vmem:[%s1 + $0x9e0] sm:$0xff]
  %v348 = vld [vmem:[%s1 + $0x9e8] sm:$0xff]
  %v349 = vld [vmem:[%s1 + $0x9f0] sm:$0xff]
  %v350 = vld [vmem:[%s1 + $0x9f8] sm:$0xff]
  %v351 = vld [vmem:[%s1 + $0xa00] sm:$0xff]
  %v352 = vld [vmem:[%s1 + $0xa08] sm:$0xff]
  %v353 = vld [vmem:[%s1 + $0xa10] sm:$0xff]
  %v354 = vld [vmem:[%s1 + $0xa18] sm:$0xff]
  %v355 = vld [vmem:[%s1 + $0xa20] sm:$0xff]
  %v356 = vld [vmem:[%s1 + $0xa28] sm:$0xff]
  %v357 = vld [vmem:[%s1 + $0xa30] sm:$0xff]
  %v358 = vld [vmem:[%s1 + $0xa38] sm:$0xff]
  %v359 = vld [vmem:[%s1 + $0xa40] sm:$0xff]
  %v360 = vld [vmem:[%s1 + $0xa48] sm:$0xff]
  %v361 = vld [vmem:[%s1 + $0xa50] sm:$0xff]
  %v362 = vld [vmem:[%s1 + $0xa58] sm:$0xff]
  %v363 = vld [vmem:[%s1 + $0xa60] sm:$0xff]
  %v364 = vld [vmem:[%s1 + $0xa68] sm:$0xff]
  %v365 = vld [vmem:[%s1 + $0xa70] sm:$0xff]
  %v366 = vld [vmem:[%s1 + $0xa78] sm:$0xff]
  %v367 = vld [vmem:[%s1 + $0xa80] sm:$0xff]
  %v368 = vld [vmem:[%s1 + $0xa88] sm:$0xff]
  %v369 = vld [vmem:[%s1 + $0xa90] sm:$0xff]
  %v370 = vld [vmem:[%s1 + $0xa98] sm:$0xff]
  %v371 = vld [vmem:[%s1 + $0xaa0] sm:$0xff]
  %v372 = vld [vmem:[%s1 + $0xaa8] sm:$0xff]
  %v373 = vld [vmem:[%s1 + $0xab0] sm:$0xff]
  %v374 = vld [vmem:[%s1 + $0xab8] sm:$0xff]
  %v375 = vld [vmem:[%s1 + $0xac0] sm:$0xff]
  %v376 = vld [vmem:[%s1 + $0xac8] sm:$0xff]
  %v377 = vld [vmem:[%s1 + $0xad0] sm:$0xff]
  %v378 = vld [vmem:[%s1 + $0xad8] sm:$0xff]
  %v379 = vld [vmem:[%s1 + $0xae0] sm:$0xff]
  %v380 = vld [vmem:[%s1 + $0xae8] sm:$0xff]
  %v381 = vld [vmem:[%s1 + $0xaf0] sm:$0xff]
  %v382 = vld [vmem:[%s1 + $0xaf8] sm:$0xff]
  %v383 = vld [vmem:[%s1 + $0xb00] sm:$0xff]
  %v384 = vld [vmem:[%s1 + $0xb08] sm:$0xff]
  %v385 = vld [vmem:[%s1 + $0xb10] sm:$0xff]
  %v386 = vld [vmem:[%s1 + $0xb18] sm:$0xff]
  %v387 = vld [vmem:[%s1 + $0xb20] sm:$0xff]
  %v388 = vld [vmem:[%s1 + $0xb28] sm:$0xff]
  %v389 = vld [vmem:[%s1 + $0xb30] sm:$0xff]
  %v390 = vld [vmem:[%s1 + $0xb38] sm:$0xff]
  %v391 = vld [vmem:[%s1 + $0xb40] sm:$0xff]
  %v392 = vld [vmem:[%s1 + $0xb48] sm:$0xff]
  %v393 = vld [vmem:[%s1 + $0xb50] sm:$0xff]
  %v394 = vld [vmem:[%s1 + $0xb58] sm:$0xff]
  %v395 = vld [vmem:[%s1 + $0xb60] sm:$0xff]
  %v396 = vld [vmem:[%s1 + $0xb68] sm:$0xff]
  %v397 = vld [vmem:[%s1 + $0xb70] sm:$0xff]
  %v398 = vld [vmem:[%s1 + $0xb78] sm:$0xff]
  %v399 = vld [vmem:[%s1 + $0xb80] sm:$0xff]
  %v400 = vld [vmem:[%s1 + $0xb88] sm:$0xff]
  %v401 = vld [vmem:[%s1 + $0xb90] sm:$0xff]
  %v402 = vld [vmem:[%s1 + $0xb98] sm:$0xff]
  %v403 = vld [vmem:[%s1 + $0xba0] sm:$0xff]
  %v404 = vld [vmem:[%s1 + $0xba8] sm:$0xff]
  %v405 = vld [vmem:[%s1 + $0xbb0] sm:$0xff]
  %v406 = vld [vmem:[%s1 + $0xbb8] sm:$0xff]
  %v407 = vld [vmem:[%s1 + $0xbc0] sm:$0xff]
  %v408 = vld [vmem:[%s1 + $0xbc8] sm:$0xff]
  %v409 = vld [vmem:[%s1 + $0xbd0] sm:$0xff]
  %v410 = vld [vmem:[%s1 + $0xbd8] sm:$0xff]
  %v411 = vld [vmem:[%s1 + $0xbe0] sm:$0xff]
  %v412 = vld [vmem:[%s1 + $0xbe8] sm:$0xff]
  %v413 = vld [vmem:[%s1 + $0xbf0] sm:$0xff]
  %v414 = vld [vmem:[%s1 + $0xbf8] sm:$0xff]
  %v415 = vld [vmem:[%s1 + $0xc00] sm:$0xff]
  %v416 = vld [vmem:[%s1 + $0xc08] sm:$0xff]
  %v417 = vld [vmem:[%s1 + $0xc10] sm:$0xff]
  %v418 = vld [vmem:[%s1 + $0xc18] sm:$0xff]
  %v419 = vld [vmem:[%s1 + $0xc20] sm:$0xff]
  %v420 = vld [vmem:[%s1 + $0xc28] sm:$0xff]
  %v421 = vld [vmem:[%s1 + $0xc30] sm:$0xff]
  %v422 = vld [vmem:[%s1 + $0xc38] sm:$0xff]
  %v423 = vld [vmem:[%s1 + $0xc40] sm:$0xff]
  %v424 = vld [vmem:[%s1 + $0xc48] sm:$0xff]
  %v425 = vld [vmem:[%s1 + $0xc50] sm:$0xff]
  %v426 = vld [vmem:[%s1 + $0xc58] sm:$0xff]
  %v427 = vld [vmem:[%s1 + $0xc60] sm:$0xff]
  %v428 = vld [vmem:[%s1 + $0xc68] sm:$0xff]
  %v429 = vld [vmem:[%s1 + $0xc70] sm:$0xff]
  %v430 = vld [vmem:[%s1 + $0xc78] sm:$0xff]
  %v431 = vld [vmem:[%s2] sm:$0xf]
  %v433 = vlaneseq
  %v434 = vshrl.u32 %v433, 7
  %v435 = vsub.s32 0, %v434
  %v436 = vrot.slane %v431, %v435
  %v437 = vlaneseq
  %v438 = vshrl.u32 %v437, 7
  %v439 = vsub.s32 1, %v438
  %v440 = vrot.slane %v431, %v439
  %v441 = vlaneseq
  %v442 = vshrl.u32 %v441, 7
  %v443 = vsub.s32 2, %v442
  %v444 = vrot.slane %v431, %v443
  %v445 = vlaneseq
  %v446 = vshrl.u32 %v445, 7
  %v447 = vsub.s32 3, %v446
  %v448 = vrot.slane %v431, %v447
  %v455 = vcombine.high %v29, %v29
  %v457 = vunpack.c.l.s4 1966171168
  %v458 = vunpack.c.0.s8 %v457
  %v459 = vlaneseq
  %v460 = vshrl.u32 %v459, 7
  %v461 = vsub.s32 %v458, %v460
  %v462 = vrot.slane %v29, %v461
  %v464 = vunpack.c.l.s4 1966171168
  %v465 = vunpack.c.0.s8 %v464
  %v466 = vlaneseq
  %v467 = vshrl.u32 %v466, 7
  %v468 = vsub.s32 %v465, %v467
  %v469 = vrot.slane %v455, %v468
  %v470 = vcombine.high %v462, %v462
  %v471 = vcombine.high %v469, %v469
  %v473 = vunpack.c.l.s4 1966171168
  %v474 = vunpack.c.0.s8 %v473
  %v475 = vlaneseq
  %v476 = vshrl.u32 %v475, 7
  %v477 = vsub.s32 %v474, %v476
  %v478 = vrot.slane %v462, %v477
  %v480 = vunpack.c.l.s4 1966171168
  %v481 = vunpack.c.0.s8 %v480
  %v482 = vlaneseq
  %v483 = vshrl.u32 %v482, 7
  %v484 = vsub.s32 %v481, %v483
  %v485 = vrot.slane %v469, %v484
  %v487 = vunpack.c.l.s4 1966171168
  %v488 = vunpack.c.0.s8 %v487
  %v489 = vlaneseq
  %v490 = vshrl.u32 %v489, 7
  %v491 = vsub.s32 %v488, %v490
  %v492 = vrot.slane %v470, %v491
  %v494 = vunpack.c.l.s4 1966171168
  %v495 = vunpack.c.0.s8 %v494
  %v496 = vlaneseq
  %v497 = vshrl.u32 %v496, 7
  %v498 = vsub.s32 %v495, %v497
  %v499 = vrot.slane %v471, %v498
  %v500 = vcombine.high %v478, %v478
  %v501 = vcombine.high %v485, %v485
  %v502 = vcombine.high %v492, %v492
  %v503 = vcombine.high %v499, %v499
  %v504 = vcombine.high %v30, %v30
  %v506 = vunpack.c.l.s4 1966171168
  %v507 = vunpack.c.0.s8 %v506
  %v508 = vlaneseq
  %v509 = vshrl.u32 %v508, 7
  %v510 = vsub.s32 %v507, %v509
  %v511 = vrot.slane %v30, %v510
  %v513 = vunpack.c.l.s4 1966171168
  %v514 = vunpack.c.0.s8 %v513
  %v515 = vlaneseq
  %v516 = vshrl.u32 %v515, 7
  %v517 = vsub.s32 %v514, %v516
  %v518 = vrot.slane %v504, %v517
  %v519 = vcombine.high %v511, %v511
  %v521 = vunpack.c.l.s4 1966171168
  %v522 = vunpack.c.0.s8 %v521
  %v523 = vlaneseq
  %v524 = vshrl.u32 %v523, 7
  %v525 = vsub.s32 %v522, %v524
  %v526 = vrot.slane %v511, %v525
  %v528 = vunpack.c.l.s4 1966171168
  %v529 = vunpack.c.0.s8 %v528
  %v530 = vlaneseq
  %v531 = vshrl.u32 %v530, 7
  %v532 = vsub.s32 %v529, %v531
  %v533 = vrot.slane %v518, %v532
  %v535 = vunpack.c.l.s4 1966171168
  %v536 = vunpack.c.0.s8 %v535
  %v537 = vlaneseq
  %v538 = vshrl.u32 %v537, 7
  %v539 = vsub.s32 %v536, %v538
  %v540 = vrot.slane %v519, %v539
  %v541 = vcombine.high %v526, %v526
  %v542 = vcombine.high %v540, %v540
  %v955 = vunpack.c.l.b16 %v31
  %v956 = vunpack.c.h.b16 %v31
  %v957 = vunpack.c.l.b16 %v32
  %v958 = vunpack.c.h.b16 %v32
  %v959 = vunpack.c.l.b16 %v33
  %v960 = vunpack.c.h.b16 %v33
  %v961 = vunpack.c.l.b16 %v34
  %v962 = vunpack.c.h.b16 %v34
  %v963 = vunpack.c.l.b16 %v35
  %v964 = vunpack.c.h.b16 %v35
  %v965 = vunpack.c.l.b16 %v36
  %v966 = vunpack.c.h.b16 %v36
  %v967 = vunpack.c.l.b16 %v37
  %v968 = vunpack.c.h.b16 %v37
  %v969 = vunpack.c.l.b16 %v38
  %v970 = vunpack.c.h.b16 %v38
  %v971 = vunpack.c.l.b16 %v39
  %v972 = vunpack.c.h.b16 %v39
  %v973 = vunpack.c.l.b16 %v40
  %v974 = vunpack.c.h.b16 %v40
  %v975 = vunpack.c.l.b16 %v41
  %v976 = vunpack.c.h.b16 %v41
  %v977 = vunpack.c.l.b16 %v42
  %v978 = vunpack.c.h.b16 %v42
  %v979 = vunpack.c.l.b16 %v43
  %v980 = vunpack.c.h.b16 %v43
  %v981 = vunpack.c.l.b16 %v44
  %v982 = vunpack.c.h.b16 %v44
  %v983 = vunpack.c.l.b16 %v45
  %v984 = vunpack.c.h.b16 %v45
  %v985 = vunpack.c.l.b16 %v46
  %v986 = vunpack.c.h.b16 %v46
  %v987 = vunpack.c.l.b16 %v47
  %v988 = vunpack.c.h.b16 %v47
  %v989 = vunpack.c.l.b16 %v48
  %v990 = vunpack.c.h.b16 %v48
  %v991 = vunpack.c.l.b16 %v49
  %v992 = vunpack.c.h.b16 %v49
  %v993 = vunpack.c.l.b16 %v50
  %v994 = vunpack.c.h.b16 %v50
  %v995 = vunpack.c.l.b16 %v51
  %v996 = vunpack.c.h.b16 %v51
  %v997 = vunpack.c.l.b16 %v52
  %v998 = vunpack.c.h.b16 %v52
  %v999 = vunpack.c.l.b16 %v53
  %v1000 = vunpack.c.h.b16 %v53
  %v1001 = vunpack.c.l.b16 %v54
  %v1002 = vunpack.c.h.b16 %v54
  %v1003 = vunpack.c.l.b16 %v55
  %v1004 = vunpack.c.h.b16 %v55
  %v1005 = vunpack.c.l.b16 %v56
  %v1006 = vunpack.c.h.b16 %v56
  %v1007 = vunpack.c.l.b16 %v57
  %v1008 = vunpack.c.h.b16 %v57
  %v1009 = vunpack.c.l.b16 %v58
  %v1010 = vunpack.c.h.b16 %v58
  %v1011 = vunpack.c.l.b16 %v59
  %v1012 = vunpack.c.h.b16 %v59
  %v1013 = vunpack.c.l.b16 %v60
  %v1014 = vunpack.c.h.b16 %v60
  %v1015 = vunpack.c.l.b16 %v61
  %v1016 = vunpack.c.h.b16 %v61
  %v1017 = vunpack.c.l.b16 %v62
  %v1018 = vunpack.c.h.b16 %v62
  %v1019 = vunpack.c.l.b16 %v63
  %v1020 = vunpack.c.h.b16 %v63
  %v1021 = vunpack.c.l.b16 %v64
  %v1022 = vunpack.c.h.b16 %v64
  %v1023 = vunpack.c.l.b16 %v65
  %v1024 = vunpack.c.h.b16 %v65
  %v1025 = vunpack.c.l.b16 %v66
  %v1026 = vunpack.c.h.b16 %v66
  %v1027 = vunpack.c.l.b16 %v67
  %v1028 = vunpack.c.h.b16 %v67
  %v1029 = vunpack.c.l.b16 %v68
  %v1030 = vunpack.c.h.b16 %v68
  %v1031 = vunpack.c.l.b16 %v69
  %v1032 = vunpack.c.h.b16 %v69
  %v1033 = vunpack.c.l.b16 %v70
  %v1034 = vunpack.c.h.b16 %v70
  %v1035 = vunpack.c.l.b16 %v71
  %v1036 = vunpack.c.h.b16 %v71
  %v1037 = vunpack.c.l.b16 %v72
  %v1038 = vunpack.c.h.b16 %v72
  %v1039 = vunpack.c.l.b16 %v73
  %v1040 = vunpack.c.h.b16 %v73
  %v1041 = vunpack.c.l.b16 %v74
  %v1042 = vunpack.c.h.b16 %v74
  %v1043 = vunpack.c.l.b16 %v75
  %v1044 = vunpack.c.h.b16 %v75
  %v1045 = vunpack.c.l.b16 %v76
  %v1046 = vunpack.c.h.b16 %v76
  %v1047 = vunpack.c.l.b16 %v77
  %v1048 = vunpack.c.h.b16 %v77
  %v1049 = vunpack.c.l.b16 %v78
  %v1050 = vunpack.c.h.b16 %v78
  %v1051 = vunpack.c.l.b16 %v79
  %v1052 = vunpack.c.h.b16 %v79
  %v1053 = vunpack.c.l.b16 %v80
  %v1054 = vunpack.c.h.b16 %v80
  %v1055 = vunpack.c.l.b16 %v81
  %v1056 = vunpack.c.h.b16 %v81
  %v1057 = vunpack.c.l.b16 %v82
  %v1058 = vunpack.c.h.b16 %v82
  %v1059 = vunpack.c.l.b16 %v83
  %v1060 = vunpack.c.h.b16 %v83
  %v1061 = vunpack.c.l.b16 %v84
  %v1062 = vunpack.c.h.b16 %v84
  %v1063 = vunpack.c.l.b16 %v85
  %v1064 = vunpack.c.h.b16 %v85
  %v1065 = vunpack.c.l.b16 %v86
  %v1066 = vunpack.c.h.b16 %v86
  %v1067 = vunpack.c.l.b16 %v87
  %v1068 = vunpack.c.h.b16 %v87
  %v1069 = vunpack.c.l.b16 %v88
  %v1070 = vunpack.c.h.b16 %v88
  %v1071 = vunpack.c.l.b16 %v89
  %v1072 = vunpack.c.h.b16 %v89
  %v1073 = vunpack.c.l.b16 %v90
  %v1074 = vunpack.c.h.b16 %v90
  %v1075 = vunpack.c.l.b16 %v91
  %v1076 = vunpack.c.h.b16 %v91
  %v1077 = vunpack.c.l.b16 %v92
  %v1078 = vunpack.c.h.b16 %v92
  %v1079 = vunpack.c.l.b16 %v93
  %v1080 = vunpack.c.h.b16 %v93
  %v1081 = vunpack.c.l.b16 %v94
  %v1082 = vunpack.c.h.b16 %v94
  %v1083 = vunpack.c.l.b16 %v95
  %v1084 = vunpack.c.h.b16 %v95
  %v1085 = vunpack.c.l.b16 %v96
  %v1086 = vunpack.c.h.b16 %v96
  %v1087 = vunpack.c.l.b16 %v97
  %v1088 = vunpack.c.h.b16 %v97
  %v1089 = vunpack.c.l.b16 %v98
  %v1090 = vunpack.c.h.b16 %v98
  %v1091 = vunpack.c.l.b16 %v99
  %v1092 = vunpack.c.h.b16 %v99
  %v1093 = vunpack.c.l.b16 %v100
  %v1094 = vunpack.c.h.b16 %v100
  %v1095 = vunpack.c.l.b16 %v101
  %v1096 = vunpack.c.h.b16 %v101
  %v1097 = vunpack.c.l.b16 %v102
  %v1098 = vunpack.c.h.b16 %v102
  %v1099 = vunpack.c.l.b16 %v103
  %v1100 = vunpack.c.h.b16 %v103
  %v1101 = vunpack.c.l.b16 %v104
  %v1102 = vunpack.c.h.b16 %v104
  %v1103 = vunpack.c.l.b16 %v105
  %v1104 = vunpack.c.h.b16 %v105
  %v1105 = vunpack.c.l.b16 %v106
  %v1106 = vunpack.c.h.b16 %v106
  %v1107 = vunpack.c.l.b16 %v107
  %v1108 = vunpack.c.h.b16 %v107
  %v1109 = vunpack.c.l.b16 %v108
  %v1110 = vunpack.c.h.b16 %v108
  %v1111 = vunpack.c.l.b16 %v109
  %v1112 = vunpack.c.h.b16 %v109
  %v1113 = vunpack.c.l.b16 %v110
  %v1114 = vunpack.c.h.b16 %v110
  %v1115 = vunpack.c.l.b16 %v111
  %v1116 = vunpack.c.h.b16 %v111
  %v1117 = vunpack.c.l.b16 %v112
  %v1118 = vunpack.c.h.b16 %v112
  %v1119 = vunpack.c.l.b16 %v113
  %v1120 = vunpack.c.h.b16 %v113
  %v1121 = vunpack.c.l.b16 %v114
  %v1122 = vunpack.c.h.b16 %v114
  %v1123 = vunpack.c.l.b16 %v115
  %v1124 = vunpack.c.h.b16 %v115
  %v1125 = vunpack.c.l.b16 %v116
  %v1126 = vunpack.c.h.b16 %v116
  %v1127 = vunpack.c.l.b16 %v117
  %v1128 = vunpack.c.h.b16 %v117
  %v1129 = vunpack.c.l.b16 %v118
  %v1130 = vunpack.c.h.b16 %v118
  %v1131 = vunpack.c.l.b16 %v119
  %v1132 = vunpack.c.h.b16 %v119
  %v1133 = vunpack.c.l.b16 %v120
  %v1134 = vunpack.c.h.b16 %v120
  %v1135 = vunpack.c.l.b16 %v121
  %v1136 = vunpack.c.h.b16 %v121
  %v1137 = vunpack.c.l.b16 %v122
  %v1138 = vunpack.c.h.b16 %v122
  %v1139 = vunpack.c.l.b16 %v123
  %v1140 = vunpack.c.h.b16 %v123
  %v1141 = vunpack.c.l.b16 %v124
  %v1142 = vunpack.c.h.b16 %v124
  %v1143 = vunpack.c.l.b16 %v125
  %v1144 = vunpack.c.h.b16 %v125
  %v1145 = vunpack.c.l.b16 %v126
  %v1146 = vunpack.c.h.b16 %v126
  %v1147 = vunpack.c.l.b16 %v127
  %v1148 = vunpack.c.h.b16 %v127
  %v1149 = vunpack.c.l.b16 %v128
  %v1150 = vunpack.c.h.b16 %v128
  %v1151 = vunpack.c.l.b16 %v129
  %v1152 = vunpack.c.h.b16 %v129
  %v1153 = vunpack.c.l.b16 %v130
  %v1154 = vunpack.c.h.b16 %v130
  %v1155 = vunpack.c.l.b16 %v131
  %v1156 = vunpack.c.h.b16 %v131
  %v1157 = vunpack.c.l.b16 %v132
  %v1158 = vunpack.c.h.b16 %v132
  %v1159 = vunpack.c.l.b16 %v133
  %v1160 = vunpack.c.h.b16 %v133
  %v1161 = vunpack.c.l.b16 %v134
  %v1162 = vunpack.c.h.b16 %v134
  %v1163 = vunpack.c.l.b16 %v135
  %v1164 = vunpack.c.h.b16 %v135
  %v1165 = vunpack.c.l.b16 %v136
  %v1166 = vunpack.c.h.b16 %v136
  %v1167 = vunpack.c.l.b16 %v137
  %v1168 = vunpack.c.h.b16 %v137
  %v1169 = vunpack.c.l.b16 %v138
  %v1170 = vunpack.c.h.b16 %v138
  %v1171 = vunpack.c.l.b16 %v139
  %v1172 = vunpack.c.h.b16 %v139
  %v1173 = vunpack.c.l.b16 %v140
  %v1174 = vunpack.c.h.b16 %v140
  %v1175 = vunpack.c.l.b16 %v141
  %v1176 = vunpack.c.h.b16 %v141
  %v1177 = vunpack.c.l.b16 %v142
  %v1178 = vunpack.c.h.b16 %v142
  %v1179 = vunpack.c.l.b16 %v143
  %v1180 = vunpack.c.h.b16 %v143
  %v1181 = vunpack.c.l.b16 %v144
  %v1182 = vunpack.c.h.b16 %v144
  %v1183 = vunpack.c.l.b16 %v145
  %v1184 = vunpack.c.h.b16 %v145
  %v1185 = vunpack.c.l.b16 %v146
  %v1186 = vunpack.c.h.b16 %v146
  %v1187 = vunpack.c.l.b16 %v147
  %v1188 = vunpack.c.h.b16 %v147
  %v1189 = vunpack.c.l.b16 %v148
  %v1190 = vunpack.c.h.b16 %v148
  %v1191 = vunpack.c.l.b16 %v149
  %v1192 = vunpack.c.h.b16 %v149
  %v1193 = vunpack.c.l.b16 %v150
  %v1194 = vunpack.c.h.b16 %v150
  %v1195 = vunpack.c.l.b16 %v151
  %v1196 = vunpack.c.h.b16 %v151
  %v1197 = vunpack.c.l.b16 %v152
  %v1198 = vunpack.c.h.b16 %v152
  %v1199 = vunpack.c.l.b16 %v153
  %v1200 = vunpack.c.h.b16 %v153
  %v1201 = vunpack.c.l.b16 %v154
  %v1202 = vunpack.c.h.b16 %v154
  %v1203 = vunpack.c.l.b16 %v155
  %v1204 = vunpack.c.h.b16 %v155
  %v1205 = vunpack.c.l.b16 %v156
  %v1206 = vunpack.c.h.b16 %v156
  %v1207 = vunpack.c.l.b16 %v157
  %v1208 = vunpack.c.h.b16 %v157
  %v1209 = vunpack.c.l.b16 %v158
  %v1210 = vunpack.c.h.b16 %v158
  %v1211 = vunpack.c.l.b16 %v159
  %v1212 = vunpack.c.h.b16 %v159
  %v1213 = vunpack.c.l.b16 %v160
  %v1214 = vunpack.c.h.b16 %v160
  %v1215 = vunpack.c.l.b16 %v161
  %v1216 = vunpack.c.h.b16 %v161
  %v1217 = vunpack.c.l.b16 %v162
  %v1218 = vunpack.c.h.b16 %v162
  %v1219 = vunpack.c.l.b16 %v163
  %v1220 = vunpack.c.h.b16 %v163
  %v1221 = vunpack.c.l.b16 %v164
  %v1222 = vunpack.c.h.b16 %v164
  %v1223 = vunpack.c.l.b16 %v165
  %v1224 = vunpack.c.h.b16 %v165
  %v1225 = vunpack.c.l.b16 %v166
  %v1226 = vunpack.c.h.b16 %v166
  %v1227 = vunpack.c.l.b16 %v167
  %v1228 = vunpack.c.h.b16 %v167
  %v1229 = vunpack.c.l.b16 %v168
  %v1230 = vunpack.c.h.b16 %v168
  %v1231 = vunpack.c.l.b16 %v169
  %v1232 = vunpack.c.h.b16 %v169
  %v1233 = vunpack.c.l.b16 %v170
  %v1234 = vunpack.c.h.b16 %v170
  %v1235 = vunpack.c.l.b16 %v171
  %v1236 = vunpack.c.h.b16 %v171
  %v1237 = vunpack.c.l.b16 %v172
  %v1238 = vunpack.c.h.b16 %v172
  %v1239 = vunpack.c.l.b16 %v173
  %v1240 = vunpack.c.h.b16 %v173
  %v1241 = vunpack.c.l.b16 %v174
  %v1242 = vunpack.c.h.b16 %v174
  %v1243 = vunpack.c.l.b16 %v175
  %v1244 = vunpack.c.h.b16 %v175
  %v1245 = vunpack.c.l.b16 %v176
  %v1246 = vunpack.c.h.b16 %v176
  %v1247 = vunpack.c.l.b16 %v177
  %v1248 = vunpack.c.h.b16 %v177
  %v1249 = vunpack.c.l.b16 %v178
  %v1250 = vunpack.c.h.b16 %v178
  %v1251 = vunpack.c.l.b16 %v179
  %v1252 = vunpack.c.h.b16 %v179
  %v1253 = vunpack.c.l.b16 %v180
  %v1254 = vunpack.c.h.b16 %v180
  %v1255 = vunpack.c.l.b16 %v181
  %v1256 = vunpack.c.h.b16 %v181
  %v1257 = vunpack.c.l.b16 %v182
  %v1258 = vunpack.c.h.b16 %v182
  %v1259 = vunpack.c.l.b16 %v183
  %v1260 = vunpack.c.h.b16 %v183
  %v1261 = vunpack.c.l.b16 %v184
  %v1262 = vunpack.c.h.b16 %v184
  %v1263 = vunpack.c.l.b16 %v185
  %v1264 = vunpack.c.h.b16 %v185
  %v1265 = vunpack.c.l.b16 %v186
  %v1266 = vunpack.c.h.b16 %v186
  %v1267 = vunpack.c.l.b16 %v187
  %v1268 = vunpack.c.h.b16 %v187
  %v1269 = vunpack.c.l.b16 %v188
  %v1270 = vunpack.c.h.b16 %v188
  %v1271 = vunpack.c.l.b16 %v189
  %v1272 = vunpack.c.h.b16 %v189
  %v1273 = vunpack.c.l.b16 %v190
  %v1274 = vunpack.c.h.b16 %v190
  %v1275 = vunpack.c.l.b16 %v191
  %v1276 = vunpack.c.h.b16 %v191
  %v1277 = vunpack.c.l.b16 %v192
  %v1278 = vunpack.c.h.b16 %v192
  %v1279 = vunpack.c.l.b16 %v193
  %v1280 = vunpack.c.h.b16 %v193
  %v1281 = vunpack.c.l.b16 %v194
  %v1282 = vunpack.c.h.b16 %v194
  %v1283 = vunpack.c.l.b16 %v195
  %v1284 = vunpack.c.h.b16 %v195
  %v1285 = vunpack.c.l.b16 %v196
  %v1286 = vunpack.c.h.b16 %v196
  %v1287 = vunpack.c.l.b16 %v197
  %v1288 = vunpack.c.h.b16 %v197
  %v1289 = vunpack.c.l.b16 %v198
  %v1290 = vunpack.c.h.b16 %v198
  %v1291 = vunpack.c.l.b16 %v199
  %v1292 = vunpack.c.h.b16 %v199
  %v1293 = vunpack.c.l.b16 %v200
  %v1294 = vunpack.c.h.b16 %v200
  %v1295 = vunpack.c.l.b16 %v201
  %v1296 = vunpack.c.h.b16 %v201
  %v1297 = vunpack.c.l.b16 %v202
  %v1298 = vunpack.c.h.b16 %v202
  %v1299 = vunpack.c.l.b16 %v203
  %v1300 = vunpack.c.h.b16 %v203
  %v1301 = vunpack.c.l.b16 %v204
  %v1302 = vunpack.c.h.b16 %v204
  %v1303 = vunpack.c.l.b16 %v205
  %v1304 = vunpack.c.h.b16 %v205
  %v1305 = vunpack.c.l.b16 %v206
  %v1306 = vunpack.c.h.b16 %v206
  %v1307 = vunpack.c.l.b16 %v207
  %v1308 = vunpack.c.h.b16 %v207
  %v1309 = vunpack.c.l.b16 %v208
  %v1310 = vunpack.c.h.b16 %v208
  %v1311 = vunpack.c.l.b16 %v209
  %v1312 = vunpack.c.h.b16 %v209
  %v1313 = vunpack.c.l.b16 %v210
  %v1314 = vunpack.c.h.b16 %v210
  %v1315 = vunpack.c.l.b16 %v211
  %v1316 = vunpack.c.h.b16 %v211
  %v1317 = vunpack.c.l.b16 %v212
  %v1318 = vunpack.c.h.b16 %v212
  %v1319 = vunpack.c.l.b16 %v213
  %v1320 = vunpack.c.h.b16 %v213
  %v1321 = vunpack.c.l.b16 %v214
  %v1322 = vunpack.c.h.b16 %v214
  %v1323 = vunpack.c.l.b16 %v215
  %v1324 = vunpack.c.h.b16 %v215
  %v1325 = vunpack.c.l.b16 %v216
  %v1326 = vunpack.c.h.b16 %v216
  %v1327 = vunpack.c.l.b16 %v217
  %v1328 = vunpack.c.h.b16 %v217
  %v1329 = vunpack.c.l.b16 %v218
  %v1330 = vunpack.c.h.b16 %v218
  %v1331 = vunpack.c.l.b16 %v219
  %v1332 = vunpack.c.h.b16 %v219
  %v1333 = vunpack.c.l.b16 %v220
  %v1334 = vunpack.c.h.b16 %v220
  %v1335 = vunpack.c.l.b16 %v221
  %v1336 = vunpack.c.h.b16 %v221
  %v1337 = vunpack.c.l.b16 %v222
  %v1338 = vunpack.c.h.b16 %v222
  %v1339 = vunpack.c.l.b16 %v223
  %v1340 = vunpack.c.h.b16 %v223
  %v1341 = vunpack.c.l.b16 %v224
  %v1342 = vunpack.c.h.b16 %v224
  %v1343 = vunpack.c.l.b16 %v225
  %v1344 = vunpack.c.h.b16 %v225
  %v1345 = vunpack.c.l.b16 %v226
  %v1346 = vunpack.c.h.b16 %v226
  %v1347 = vunpack.c.l.b16 %v227
  %v1348 = vunpack.c.h.b16 %v227
  %v1349 = vunpack.c.l.b16 %v228
  %v1350 = vunpack.c.h.b16 %v228
  %v1351 = vunpack.c.l.b16 %v229
  %v1352 = vunpack.c.h.b16 %v229
  %v1353 = vunpack.c.l.b16 %v230
  %v1354 = vunpack.c.h.b16 %v230
  %v1355 = vunpack.c.l.b16 %v231
  %v1356 = vunpack.c.h.b16 %v231
  %v1357 = vunpack.c.l.b16 %v232
  %v1358 = vunpack.c.h.b16 %v232
  %v1359 = vunpack.c.l.b16 %v233
  %v1360 = vunpack.c.h.b16 %v233
  %v1361 = vunpack.c.l.b16 %v234
  %v1362 = vunpack.c.h.b16 %v234
  %v1363 = vunpack.c.l.b16 %v235
  %v1364 = vunpack.c.h.b16 %v235
  %v1365 = vunpack.c.l.b16 %v236
  %v1366 = vunpack.c.h.b16 %v236
  %v1367 = vunpack.c.l.b16 %v237
  %v1368 = vunpack.c.h.b16 %v237
  %v1369 = vunpack.c.l.b16 %v238
  %v1370 = vunpack.c.h.b16 %v238
  %v1371 = vunpack.c.l.b16 %v239
  %v1372 = vunpack.c.h.b16 %v239
  %v1373 = vunpack.c.l.b16 %v240
  %v1374 = vunpack.c.h.b16 %v240
  %v1375 = vunpack.c.l.b16 %v241
  %v1376 = vunpack.c.h.b16 %v241
  %v1377 = vunpack.c.l.b16 %v242
  %v1378 = vunpack.c.h.b16 %v242
  %v1379 = vunpack.c.l.b16 %v243
  %v1380 = vunpack.c.h.b16 %v243
  %v1381 = vunpack.c.l.b16 %v244
  %v1382 = vunpack.c.h.b16 %v244
  %v1383 = vunpack.c.l.b16 %v245
  %v1384 = vunpack.c.h.b16 %v245
  %v1385 = vunpack.c.l.b16 %v246
  %v1386 = vunpack.c.h.b16 %v246
  %v1387 = vunpack.c.l.b16 %v247
  %v1388 = vunpack.c.h.b16 %v247
  %v1389 = vunpack.c.l.b16 %v248
  %v1390 = vunpack.c.h.b16 %v248
  %v1391 = vunpack.c.l.b16 %v249
  %v1392 = vunpack.c.h.b16 %v249
  %v1393 = vunpack.c.l.b16 %v250
  %v1394 = vunpack.c.h.b16 %v250
  %v1395 = vunpack.c.l.b16 %v251
  %v1396 = vunpack.c.h.b16 %v251
  %v1397 = vunpack.c.l.b16 %v252
  %v1398 = vunpack.c.h.b16 %v252
  %v1399 = vunpack.c.l.b16 %v253
  %v1400 = vunpack.c.h.b16 %v253
  %v1401 = vunpack.c.l.b16 %v254
  %v1402 = vunpack.c.h.b16 %v254
  %v1403 = vunpack.c.l.b16 %v255
  %v1404 = vunpack.c.h.b16 %v255
  %v1405 = vunpack.c.l.b16 %v256
  %v1406 = vunpack.c.h.b16 %v256
  %v1407 = vunpack.c.l.b16 %v257
  %v1408 = vunpack.c.h.b16 %v257
  %v1409 = vunpack.c.l.b16 %v258
  %v1410 = vunpack.c.h.b16 %v258
  %v1411 = vunpack.c.l.b16 %v259
  %v1412 = vunpack.c.h.b16 %v259
  %v1413 = vunpack.c.l.b16 %v260
  %v1414 = vunpack.c.h.b16 %v260
  %v1415 = vunpack.c.l.b16 %v261
  %v1416 = vunpack.c.h.b16 %v261
  %v1417 = vunpack.c.l.b16 %v262
  %v1418 = vunpack.c.h.b16 %v262
  %v1419 = vunpack.c.l.b16 %v263
  %v1420 = vunpack.c.h.b16 %v263
  %v1421 = vunpack.c.l.b16 %v264
  %v1422 = vunpack.c.h.b16 %v264
  %v1423 = vunpack.c.l.b16 %v265
  %v1424 = vunpack.c.h.b16 %v265
  %v1425 = vunpack.c.l.b16 %v266
  %v1426 = vunpack.c.h.b16 %v266
  %v1427 = vunpack.c.l.b16 %v267
  %v1428 = vunpack.c.h.b16 %v267
  %v1429 = vunpack.c.l.b16 %v268
  %v1430 = vunpack.c.h.b16 %v268
  %v1431 = vunpack.c.l.b16 %v269
  %v1432 = vunpack.c.h.b16 %v269
  %v1433 = vunpack.c.l.b16 %v270
  %v1434 = vunpack.c.h.b16 %v270
  %v1435 = vunpack.c.l.b16 %v271
  %v1436 = vunpack.c.h.b16 %v271
  %v1437 = vunpack.c.l.b16 %v272
  %v1438 = vunpack.c.h.b16 %v272
  %v1439 = vunpack.c.l.b16 %v273
  %v1440 = vunpack.c.h.b16 %v273
  %v1441 = vunpack.c.l.b16 %v274
  %v1442 = vunpack.c.h.b16 %v274
  %v1443 = vunpack.c.l.b16 %v275
  %v1444 = vunpack.c.h.b16 %v275
  %v1445 = vunpack.c.l.b16 %v276
  %v1446 = vunpack.c.h.b16 %v276
  %v1447 = vunpack.c.l.b16 %v277
  %v1448 = vunpack.c.h.b16 %v277
  %v1449 = vunpack.c.l.b16 %v278
  %v1450 = vunpack.c.h.b16 %v278
  %v1451 = vunpack.c.l.b16 %v279
  %v1452 = vunpack.c.h.b16 %v279
  %v1453 = vunpack.c.l.b16 %v280
  %v1454 = vunpack.c.h.b16 %v280
  %v1455 = vunpack.c.l.b16 %v281
  %v1456 = vunpack.c.h.b16 %v281
  %v1457 = vunpack.c.l.b16 %v282
  %v1458 = vunpack.c.h.b16 %v282
  %v1459 = vunpack.c.l.b16 %v283
  %v1460 = vunpack.c.h.b16 %v283
  %v1461 = vunpack.c.l.b16 %v284
  %v1462 = vunpack.c.h.b16 %v284
  %v1463 = vunpack.c.l.b16 %v285
  %v1464 = vunpack.c.h.b16 %v285
  %v1465 = vunpack.c.l.b16 %v286
  %v1466 = vunpack.c.h.b16 %v286
  %v1467 = vunpack.c.l.b16 %v287
  %v1468 = vunpack.c.h.b16 %v287
  %v1469 = vunpack.c.l.b16 %v288
  %v1470 = vunpack.c.h.b16 %v288
  %v1471 = vunpack.c.l.b16 %v289
  %v1472 = vunpack.c.h.b16 %v289
  %v1473 = vunpack.c.l.b16 %v290
  %v1474 = vunpack.c.h.b16 %v290
  %v1475 = vunpack.c.l.b16 %v291
  %v1476 = vunpack.c.h.b16 %v291
  %v1477 = vunpack.c.l.b16 %v292
  %v1478 = vunpack.c.h.b16 %v292
  %v1479 = vunpack.c.l.b16 %v293
  %v1480 = vunpack.c.h.b16 %v293
  %v1481 = vunpack.c.l.b16 %v294
  %v1482 = vunpack.c.h.b16 %v294
  %v1483 = vunpack.c.l.b16 %v295
  %v1484 = vunpack.c.h.b16 %v295
  %v1485 = vunpack.c.l.b16 %v296
  %v1486 = vunpack.c.h.b16 %v296
  %v1487 = vunpack.c.l.b16 %v297
  %v1488 = vunpack.c.h.b16 %v297
  %v1489 = vunpack.c.l.b16 %v298
  %v1490 = vunpack.c.h.b16 %v298
  %v1491 = vunpack.c.l.b16 %v299
  %v1492 = vunpack.c.h.b16 %v299
  %v1493 = vunpack.c.l.b16 %v300
  %v1494 = vunpack.c.h.b16 %v300
  %v1495 = vunpack.c.l.b16 %v301
  %v1496 = vunpack.c.h.b16 %v301
  %v1497 = vunpack.c.l.b16 %v302
  %v1498 = vunpack.c.h.b16 %v302
  %v1499 = vunpack.c.l.b16 %v303
  %v1500 = vunpack.c.h.b16 %v303
  %v1501 = vunpack.c.l.b16 %v304
  %v1502 = vunpack.c.h.b16 %v304
  %v1503 = vunpack.c.l.b16 %v305
  %v1504 = vunpack.c.h.b16 %v305
  %v1505 = vunpack.c.l.b16 %v306
  %v1506 = vunpack.c.h.b16 %v306
  %v1507 = vunpack.c.l.b16 %v307
  %v1508 = vunpack.c.h.b16 %v307
  %v1509 = vunpack.c.l.b16 %v308
  %v1510 = vunpack.c.h.b16 %v308
  %v1511 = vunpack.c.l.b16 %v309
  %v1512 = vunpack.c.h.b16 %v309
  %v1513 = vunpack.c.l.b16 %v310
  %v1514 = vunpack.c.h.b16 %v310
  %v1515 = vunpack.c.l.b16 %v311
  %v1516 = vunpack.c.h.b16 %v311
  %v1517 = vunpack.c.l.b16 %v312
  %v1518 = vunpack.c.h.b16 %v312
  %v1519 = vunpack.c.l.b16 %v313
  %v1520 = vunpack.c.h.b16 %v313
  %v1521 = vunpack.c.l.b16 %v314
  %v1522 = vunpack.c.h.b16 %v314
  %v1523 = vunpack.c.l.b16 %v315
  %v1524 = vunpack.c.h.b16 %v315
  %v1525 = vunpack.c.l.b16 %v316
  %v1526 = vunpack.c.h.b16 %v316
  %v1527 = vunpack.c.l.b16 %v317
  %v1528 = vunpack.c.h.b16 %v317
  %v1529 = vunpack.c.l.b16 %v318
  %v1530 = vunpack.c.h.b16 %v318
  %v1531 = vunpack.c.l.b16 %v319
  %v1532 = vunpack.c.h.b16 %v319
  %v1533 = vunpack.c.l.b16 %v320
  %v1534 = vunpack.c.h.b16 %v320
  %v1535 = vunpack.c.l.b16 %v321
  %v1536 = vunpack.c.h.b16 %v321
  %v1537 = vunpack.c.l.b16 %v322
  %v1538 = vunpack.c.h.b16 %v322
  %v1539 = vunpack.c.l.b16 %v323
  %v1540 = vunpack.c.h.b16 %v323
  %v1541 = vunpack.c.l.b16 %v324
  %v1542 = vunpack.c.h.b16 %v324
  %v1543 = vunpack.c.l.b16 %v325
  %v1544 = vunpack.c.h.b16 %v325
  %v1545 = vunpack.c.l.b16 %v326
  %v1546 = vunpack.c.h.b16 %v326
  %v1547 = vunpack.c.l.b16 %v327
  %v1548 = vunpack.c.h.b16 %v327
  %v1549 = vunpack.c.l.b16 %v328
  %v1550 = vunpack.c.h.b16 %v328
  %v1551 = vunpack.c.l.b16 %v329
  %v1552 = vunpack.c.h.b16 %v329
  %v1553 = vunpack.c.l.b16 %v330
  %v1554 = vunpack.c.h.b16 %v330
  %v1555 = vunpack.c.l.b16 %v331
  %v1556 = vunpack.c.h.b16 %v331
  %v1557 = vunpack.c.l.b16 %v332
  %v1558 = vunpack.c.h.b16 %v332
  %v1559 = vunpack.c.l.b16 %v333
  %v1560 = vunpack.c.h.b16 %v333
  %v1561 = vunpack.c.l.b16 %v334
  %v1562 = vunpack.c.h.b16 %v334
  %v1563 = vunpack.c.l.b16 %v335
  %v1564 = vunpack.c.h.b16 %v335
  %v1565 = vunpack.c.l.b16 %v336
  %v1566 = vunpack.c.h.b16 %v336
  %v1567 = vunpack.c.l.b16 %v337
  %v1568 = vunpack.c.h.b16 %v337
  %v1569 = vunpack.c.l.b16 %v338
  %v1570 = vunpack.c.h.b16 %v338
  %v1571 = vunpack.c.l.b16 %v339
  %v1572 = vunpack.c.h.b16 %v339
  %v1573 = vunpack.c.l.b16 %v340
  %v1574 = vunpack.c.h.b16 %v340
  %v1575 = vunpack.c.l.b16 %v341
  %v1576 = vunpack.c.h.b16 %v341
  %v1577 = vunpack.c.l.b16 %v342
  %v1578 = vunpack.c.h.b16 %v342
  %v1579 = vunpack.c.l.b16 %v343
  %v1580 = vunpack.c.h.b16 %v343
  %v1581 = vunpack.c.l.b16 %v344
  %v1582 = vunpack.c.h.b16 %v344
  %v1583 = vunpack.c.l.b16 %v345
  %v1584 = vunpack.c.h.b16 %v345
  %v1585 = vunpack.c.l.b16 %v346
  %v1586 = vunpack.c.h.b16 %v346
  %v1587 = vunpack.c.l.b16 %v347
  %v1588 = vunpack.c.h.b16 %v347
  %v1589 = vunpack.c.l.b16 %v348
  %v1590 = vunpack.c.h.b16 %v348
  %v1591 = vunpack.c.l.b16 %v349
  %v1592 = vunpack.c.h.b16 %v349
  %v1593 = vunpack.c.l.b16 %v350
  %v1594 = vunpack.c.h.b16 %v350
  %v1595 = vunpack.c.l.b16 %v351
  %v1596 = vunpack.c.h.b16 %v351
  %v1597 = vunpack.c.l.b16 %v352
  %v1598 = vunpack.c.h.b16 %v352
  %v1599 = vunpack.c.l.b16 %v353
  %v1600 = vunpack.c.h.b16 %v353
  %v1601 = vunpack.c.l.b16 %v354
  %v1602 = vunpack.c.h.b16 %v354
  %v1603 = vunpack.c.l.b16 %v355
  %v1604 = vunpack.c.h.b16 %v355
  %v1605 = vunpack.c.l.b16 %v356
  %v1606 = vunpack.c.h.b16 %v356
  %v1607 = vunpack.c.l.b16 %v357
  %v1608 = vunpack.c.h.b16 %v357
  %v1609 = vunpack.c.l.b16 %v358
  %v1610 = vunpack.c.h.b16 %v358
  %v1611 = vunpack.c.l.b16 %v359
  %v1612 = vunpack.c.h.b16 %v359
  %v1613 = vunpack.c.l.b16 %v360
  %v1614 = vunpack.c.h.b16 %v360
  %v1615 = vunpack.c.l.b16 %v361
  %v1616 = vunpack.c.h.b16 %v361
  %v1617 = vunpack.c.l.b16 %v362
  %v1618 = vunpack.c.h.b16 %v362
  %v1619 = vunpack.c.l.b16 %v363
  %v1620 = vunpack.c.h.b16 %v363
  %v1621 = vunpack.c.l.b16 %v364
  %v1622 = vunpack.c.h.b16 %v364
  %v1623 = vunpack.c.l.b16 %v365
  %v1624 = vunpack.c.h.b16 %v365
  %v1625 = vunpack.c.l.b16 %v366
  %v1626 = vunpack.c.h.b16 %v366
  %v1627 = vunpack.c.l.b16 %v367
  %v1628 = vunpack.c.h.b16 %v367
  %v1629 = vunpack.c.l.b16 %v368
  %v1630 = vunpack.c.h.b16 %v368
  %v1631 = vunpack.c.l.b16 %v369
  %v1632 = vunpack.c.h.b16 %v369
  %v1633 = vunpack.c.l.b16 %v370
  %v1634 = vunpack.c.h.b16 %v370
  %v1635 = vunpack.c.l.b16 %v371
  %v1636 = vunpack.c.h.b16 %v371
  %v1637 = vunpack.c.l.b16 %v372
  %v1638 = vunpack.c.h.b16 %v372
  %v1639 = vunpack.c.l.b16 %v373
  %v1640 = vunpack.c.h.b16 %v373
  %v1641 = vunpack.c.l.b16 %v374
  %v1642 = vunpack.c.h.b16 %v374
  %v1643 = vunpack.c.l.b16 %v375
  %v1644 = vunpack.c.h.b16 %v375
  %v1645 = vunpack.c.l.b16 %v376
  %v1646 = vunpack.c.h.b16 %v376
  %v1647 = vunpack.c.l.b16 %v377
  %v1648 = vunpack.c.h.b16 %v377
  %v1649 = vunpack.c.l.b16 %v378
  %v1650 = vunpack.c.h.b16 %v378
  %v1651 = vunpack.c.l.b16 %v379
  %v1652 = vunpack.c.h.b16 %v379
  %v1653 = vunpack.c.l.b16 %v380
  %v1654 = vunpack.c.h.b16 %v380
  %v1655 = vunpack.c.l.b16 %v381
  %v1656 = vunpack.c.h.b16 %v381
  %v1657 = vunpack.c.l.b16 %v382
  %v1658 = vunpack.c.h.b16 %v382
  %v1659 = vunpack.c.l.b16 %v383
  %v1660 = vunpack.c.h.b16 %v383
  %v1661 = vunpack.c.l.b16 %v384
  %v1662 = vunpack.c.h.b16 %v384
  %v1663 = vunpack.c.l.b16 %v385
  %v1664 = vunpack.c.h.b16 %v385
  %v1665 = vunpack.c.l.b16 %v386
  %v1666 = vunpack.c.h.b16 %v386
  %v1667 = vunpack.c.l.b16 %v387
  %v1668 = vunpack.c.h.b16 %v387
  %v1669 = vunpack.c.l.b16 %v388
  %v1670 = vunpack.c.h.b16 %v388
  %v1671 = vunpack.c.l.b16 %v389
  %v1672 = vunpack.c.h.b16 %v389
  %v1673 = vunpack.c.l.b16 %v390
  %v1674 = vunpack.c.h.b16 %v390
  %v1675 = vunpack.c.l.b16 %v391
  %v1676 = vunpack.c.h.b16 %v391
  %v1677 = vunpack.c.l.b16 %v392
  %v1678 = vunpack.c.h.b16 %v392
  %v1679 = vunpack.c.l.b16 %v393
  %v1680 = vunpack.c.h.b16 %v393
  %v1681 = vunpack.c.l.b16 %v394
  %v1682 = vunpack.c.h.b16 %v394
  %v1683 = vunpack.c.l.b16 %v395
  %v1684 = vunpack.c.h.b16 %v395
  %v1685 = vunpack.c.l.b16 %v396
  %v1686 = vunpack.c.h.b16 %v396
  %v1687 = vunpack.c.l.b16 %v397
  %v1688 = vunpack.c.h.b16 %v397
  %v1689 = vunpack.c.l.b16 %v398
  %v1690 = vunpack.c.h.b16 %v398
  %v1691 = vunpack.c.l.b16 %v399
  %v1692 = vunpack.c.h.b16 %v399
  %v1693 = vunpack.c.l.b16 %v400
  %v1694 = vunpack.c.h.b16 %v400
  %v1695 = vunpack.c.l.b16 %v401
  %v1696 = vunpack.c.h.b16 %v401
  %v1697 = vunpack.c.l.b16 %v402
  %v1698 = vunpack.c.h.b16 %v402
  %v1699 = vunpack.c.l.b16 %v403
  %v1700 = vunpack.c.h.b16 %v403
  %v1701 = vunpack.c.l.b16 %v404
  %v1702 = vunpack.c.h.b16 %v404
  %v1703 = vunpack.c.l.b16 %v405
  %v1704 = vunpack.c.h.b16 %v405
  %v1705 = vunpack.c.l.b16 %v406
  %v1706 = vunpack.c.h.b16 %v406
  %v1707 = vunpack.c.l.b16 %v407
  %v1708 = vunpack.c.h.b16 %v407
  %v1709 = vunpack.c.l.b16 %v408
  %v1710 = vunpack.c.h.b16 %v408
  %v1711 = vunpack.c.l.b16 %v409
  %v1712 = vunpack.c.h.b16 %v409
  %v1713 = vunpack.c.l.b16 %v410
  %v1714 = vunpack.c.h.b16 %v410
  %v1715 = vunpack.c.l.b16 %v411
  %v1716 = vunpack.c.h.b16 %v411
  %v1717 = vunpack.c.l.b16 %v412
  %v1718 = vunpack.c.h.b16 %v412
  %v1719 = vunpack.c.l.b16 %v413
  %v1720 = vunpack.c.h.b16 %v413
  %v1721 = vunpack.c.l.b16 %v414
  %v1722 = vunpack.c.h.b16 %v414
  %v1723 = vunpack.c.l.b16 %v415
  %v1724 = vunpack.c.h.b16 %v415
  %v1725 = vunpack.c.l.b16 %v416
  %v1726 = vunpack.c.h.b16 %v416
  %v1727 = vunpack.c.l.b16 %v417
  %v1728 = vunpack.c.h.b16 %v417
  %v1729 = vunpack.c.l.b16 %v418
  %v1730 = vunpack.c.h.b16 %v418
  %v1731 = vunpack.c.l.b16 %v419
  %v1732 = vunpack.c.h.b16 %v419
  %v1733 = vunpack.c.l.b16 %v420
  %v1734 = vunpack.c.h.b16 %v420
  %v1735 = vunpack.c.l.b16 %v421
  %v1736 = vunpack.c.h.b16 %v421
  %v1737 = vunpack.c.l.b16 %v422
  %v1738 = vunpack.c.h.b16 %v422
  %v1739 = vunpack.c.l.b16 %v423
  %v1740 = vunpack.c.h.b16 %v423
  %v1741 = vunpack.c.l.b16 %v424
  %v1742 = vunpack.c.h.b16 %v424
  %v1743 = vunpack.c.l.b16 %v425
  %v1744 = vunpack.c.h.b16 %v425
  %v1745 = vunpack.c.l.b16 %v426
  %v1746 = vunpack.c.h.b16 %v426
  %v1747 = vunpack.c.l.b16 %v427
  %v1748 = vunpack.c.h.b16 %v427
  %v1749 = vunpack.c.l.b16 %v428
  %v1750 = vunpack.c.h.b16 %v428
  %v1751 = vunpack.c.l.b16 %v429
  %v1752 = vunpack.c.h.b16 %v429
  %v1753 = vunpack.c.l.b16 %v430
  %v1754 = vunpack.c.h.b16 %v430
  %v1755 = vpack.c.b16 %v959, %v955
  %v1756 = vpack.c.b16 %v960, %v956
  %v1757 = vpack.c.b16 %v961, %v957
  %v1758 = vpack.c.b16 %v962, %v958
  %v1759 = vpack.c.b16 %v967, %v963
  %v1760 = vpack.c.b16 %v968, %v964
  %v1761 = vpack.c.b16 %v969, %v965
  %v1762 = vpack.c.b16 %v970, %v966
  %v1763 = vpack.c.b16 %v975, %v971
  %v1764 = vpack.c.b16 %v976, %v972
  %v1765 = vpack.c.b16 %v977, %v973
  %v1766 = vpack.c.b16 %v978, %v974
  %v1767 = vpack.c.b16 %v983, %v979
  %v1768 = vpack.c.b16 %v984, %v980
  %v1769 = vpack.c.b16 %v985, %v981
  %v1770 = vpack.c.b16 %v986, %v982
  %v1771 = vpack.c.b16 %v991, %v987
  %v1772 = vpack.c.b16 %v992, %v988
  %v1773 = vpack.c.b16 %v993, %v989
  %v1774 = vpack.c.b16 %v994, %v990
  %v1775 = vpack.c.b16 %v999, %v995
  %v1776 = vpack.c.b16 %v1000, %v996
  %v1777 = vpack.c.b16 %v1001, %v997
  %v1778 = vpack.c.b16 %v1002, %v998
  %v1779 = vpack.c.b16 %v1007, %v1003
  %v1780 = vpack.c.b16 %v1008, %v1004
  %v1781 = vpack.c.b16 %v1009, %v1005
  %v1782 = vpack.c.b16 %v1010, %v1006
  %v1783 = vpack.c.b16 %v1015, %v1011
  %v1784 = vpack.c.b16 %v1016, %v1012
  %v1785 = vpack.c.b16 %v1017, %v1013
  %v1786 = vpack.c.b16 %v1018, %v1014
  %v1787 = vpack.c.b16 %v1023, %v1019
  %v1788 = vpack.c.b16 %v1024, %v1020
  %v1789 = vpack.c.b16 %v1025, %v1021
  %v1790 = vpack.c.b16 %v1026, %v1022
  %v1791 = vpack.c.b16 %v1031, %v1027
  %v1792 = vpack.c.b16 %v1032, %v1028
  %v1793 = vpack.c.b16 %v1033, %v1029
  %v1794 = vpack.c.b16 %v1034, %v1030
  %v1795 = vpack.c.b16 %v1039, %v1035
  %v1796 = vpack.c.b16 %v1040, %v1036
  %v1797 = vpack.c.b16 %v1041, %v1037
  %v1798 = vpack.c.b16 %v1042, %v1038
  %v1799 = vpack.c.b16 %v1047, %v1043
  %v1800 = vpack.c.b16 %v1048, %v1044
  %v1801 = vpack.c.b16 %v1049, %v1045
  %v1802 = vpack.c.b16 %v1050, %v1046
  %v1803 = vpack.c.b16 %v1055, %v1051
  %v1804 = vpack.c.b16 %v1056, %v1052
  %v1805 = vpack.c.b16 %v1057, %v1053
  %v1806 = vpack.c.b16 %v1058, %v1054
  %v1807 = vpack.c.b16 %v1063, %v1059
  %v1808 = vpack.c.b16 %v1064, %v1060
  %v1809 = vpack.c.b16 %v1065, %v1061
  %v1810 = vpack.c.b16 %v1066, %v1062
  %v1811 = vpack.c.b16 %v1071, %v1067
  %v1812 = vpack.c.b16 %v1072, %v1068
  %v1813 = vpack.c.b16 %v1073, %v1069
  %v1814 = vpack.c.b16 %v1074, %v1070
  %v1815 = vpack.c.b16 %v1079, %v1075
  %v1816 = vpack.c.b16 %v1080, %v1076
  %v1817 = vpack.c.b16 %v1081, %v1077
  %v1818 = vpack.c.b16 %v1082, %v1078
  %v1819 = vpack.c.b16 %v1087, %v1083
  %v1820 = vpack.c.b16 %v1088, %v1084
  %v1821 = vpack.c.b16 %v1089, %v1085
  %v1822 = vpack.c.b16 %v1090, %v1086
  %v1823 = vpack.c.b16 %v1095, %v1091
  %v1824 = vpack.c.b16 %v1096, %v1092
  %v1825 = vpack.c.b16 %v1097, %v1093
  %v1826 = vpack.c.b16 %v1098, %v1094
  %v1827 = vpack.c.b16 %v1103, %v1099
  %v1828 = vpack.c.b16 %v1104, %v1100
  %v1829 = vpack.c.b16 %v1105, %v1101
  %v1830 = vpack.c.b16 %v1106, %v1102
  %v1831 = vpack.c.b16 %v1111, %v1107
  %v1832 = vpack.c.b16 %v1112, %v1108
  %v1833 = vpack.c.b16 %v1113, %v1109
  %v1834 = vpack.c.b16 %v1114, %v1110
  %v1835 = vpack.c.b16 %v1119, %v1115
  %v1836 = vpack.c.b16 %v1120, %v1116
  %v1837 = vpack.c.b16 %v1121, %v1117
  %v1838 = vpack.c.b16 %v1122, %v1118
  %v1839 = vpack.c.b16 %v1127, %v1123
  %v1840 = vpack.c.b16 %v1128, %v1124
  %v1841 = vpack.c.b16 %v1129, %v1125
  %v1842 = vpack.c.b16 %v1130, %v1126
  %v1843 = vpack.c.b16 %v1135, %v1131
  %v1844 = vpack.c.b16 %v1136, %v1132
  %v1845 = vpack.c.b16 %v1137, %v1133
  %v1846 = vpack.c.b16 %v1138, %v1134
  %v1847 = vpack.c.b16 %v1143, %v1139
  %v1848 = vpack.c.b16 %v1144, %v1140
  %v1849 = vpack.c.b16 %v1145, %v1141
  %v1850 = vpack.c.b16 %v1146, %v1142
  %v1851 = vpack.c.b16 %v1151, %v1147
  %v1852 = vpack.c.b16 %v1152, %v1148
  %v1853 = vpack.c.b16 %v1153, %v1149
  %v1854 = vpack.c.b16 %v1154, %v1150
  %v1855 = vpack.c.b16 %v1159, %v1155
  %v1856 = vpack.c.b16 %v1160, %v1156
  %v1857 = vpack.c.b16 %v1161, %v1157
  %v1858 = vpack.c.b16 %v1162, %v1158
  %v1859 = vpack.c.b16 %v1167, %v1163
  %v1860 = vpack.c.b16 %v1168, %v1164
  %v1861 = vpack.c.b16 %v1169, %v1165
  %v1862 = vpack.c.b16 %v1170, %v1166
  %v1863 = vpack.c.b16 %v1175, %v1171
  %v1864 = vpack.c.b16 %v1176, %v1172
  %v1865 = vpack.c.b16 %v1177, %v1173
  %v1866 = vpack.c.b16 %v1178, %v1174
  %v1867 = vpack.c.b16 %v1183, %v1179
  %v1868 = vpack.c.b16 %v1184, %v1180
  %v1869 = vpack.c.b16 %v1185, %v1181
  %v1870 = vpack.c.b16 %v1186, %v1182
  %v1871 = vpack.c.b16 %v1191, %v1187
  %v1872 = vpack.c.b16 %v1192, %v1188
  %v1873 = vpack.c.b16 %v1193, %v1189
  %v1874 = vpack.c.b16 %v1194, %v1190
  %v1875 = vpack.c.b16 %v1199, %v1195
  %v1876 = vpack.c.b16 %v1200, %v1196
  %v1877 = vpack.c.b16 %v1201, %v1197
  %v1878 = vpack.c.b16 %v1202, %v1198
  %v1879 = vpack.c.b16 %v1207, %v1203
  %v1880 = vpack.c.b16 %v1208, %v1204
  %v1881 = vpack.c.b16 %v1209, %v1205
  %v1882 = vpack.c.b16 %v1210, %v1206
  %v1883 = vpack.c.b16 %v1215, %v1211
  %v1884 = vpack.c.b16 %v1216, %v1212
  %v1885 = vpack.c.b16 %v1217, %v1213
  %v1886 = vpack.c.b16 %v1218, %v1214
  %v1887 = vpack.c.b16 %v1223, %v1219
  %v1888 = vpack.c.b16 %v1224, %v1220
  %v1889 = vpack.c.b16 %v1225, %v1221
  %v1890 = vpack.c.b16 %v1226, %v1222
  %v1891 = vpack.c.b16 %v1231, %v1227
  %v1892 = vpack.c.b16 %v1232, %v1228
  %v1893 = vpack.c.b16 %v1233, %v1229
  %v1894 = vpack.c.b16 %v1234, %v1230
  %v1895 = vpack.c.b16 %v1239, %v1235
  %v1896 = vpack.c.b16 %v1240, %v1236
  %v1897 = vpack.c.b16 %v1241, %v1237
  %v1898 = vpack.c.b16 %v1242, %v1238
  %v1899 = vpack.c.b16 %v1247, %v1243
  %v1900 = vpack.c.b16 %v1248, %v1244
  %v1901 = vpack.c.b16 %v1249, %v1245
  %v1902 = vpack.c.b16 %v1250, %v1246
  %v1903 = vpack.c.b16 %v1255, %v1251
  %v1904 = vpack.c.b16 %v1256, %v1252
  %v1905 = vpack.c.b16 %v1257, %v1253
  %v1906 = vpack.c.b16 %v1258, %v1254
  %v1907 = vpack.c.b16 %v1263, %v1259
  %v1908 = vpack.c.b16 %v1264, %v1260
  %v1909 = vpack.c.b16 %v1265, %v1261
  %v1910 = vpack.c.b16 %v1266, %v1262
  %v1911 = vpack.c.b16 %v1271, %v1267
  %v1912 = vpack.c.b16 %v1272, %v1268
  %v1913 = vpack.c.b16 %v1273, %v1269
  %v1914 = vpack.c.b16 %v1274, %v1270
  %v1915 = vpack.c.b16 %v1279, %v1275
  %v1916 = vpack.c.b16 %v1280, %v1276
  %v1917 = vpack.c.b16 %v1281, %v1277
  %v1918 = vpack.c.b16 %v1282, %v1278
  %v1919 = vpack.c.b16 %v1287, %v1283
  %v1920 = vpack.c.b16 %v1288, %v1284
  %v1921 = vpack.c.b16 %v1289, %v1285
  %v1922 = vpack.c.b16 %v1290, %v1286
  %v1923 = vpack.c.b16 %v1295, %v1291
  %v1924 = vpack.c.b16 %v1296, %v1292
  %v1925 = vpack.c.b16 %v1297, %v1293
  %v1926 = vpack.c.b16 %v1298, %v1294
  %v1927 = vpack.c.b16 %v1303, %v1299
  %v1928 = vpack.c.b16 %v1304, %v1300
  %v1929 = vpack.c.b16 %v1305, %v1301
  %v1930 = vpack.c.b16 %v1306, %v1302
  %v1931 = vpack.c.b16 %v1311, %v1307
  %v1932 = vpack.c.b16 %v1312, %v1308
  %v1933 = vpack.c.b16 %v1313, %v1309
  %v1934 = vpack.c.b16 %v1314, %v1310
  %v1935 = vpack.c.b16 %v1319, %v1315
  %v1936 = vpack.c.b16 %v1320, %v1316
  %v1937 = vpack.c.b16 %v1321, %v1317
  %v1938 = vpack.c.b16 %v1322, %v1318
  %v1939 = vpack.c.b16 %v1327, %v1323
  %v1940 = vpack.c.b16 %v1328, %v1324
  %v1941 = vpack.c.b16 %v1329, %v1325
  %v1942 = vpack.c.b16 %v1330, %v1326
  %v1943 = vpack.c.b16 %v1335, %v1331
  %v1944 = vpack.c.b16 %v1336, %v1332
  %v1945 = vpack.c.b16 %v1337, %v1333
  %v1946 = vpack.c.b16 %v1338, %v1334
  %v1947 = vpack.c.b16 %v1343, %v1339
  %v1948 = vpack.c.b16 %v1344, %v1340
  %v1949 = vpack.c.b16 %v1345, %v1341
  %v1950 = vpack.c.b16 %v1346, %v1342
  %v1951 = vpack.c.b16 %v1351, %v1347
  %v1952 = vpack.c.b16 %v1352, %v1348
  %v1953 = vpack.c.b16 %v1353, %v1349
  %v1954 = vpack.c.b16 %v1354, %v1350
  %v1955 = vpack.c.b16 %v1359, %v1355
  %v1956 = vpack.c.b16 %v1360, %v1356
  %v1957 = vpack.c.b16 %v1361, %v1357
  %v1958 = vpack.c.b16 %v1362, %v1358
  %v1959 = vpack.c.b16 %v1367, %v1363
  %v1960 = vpack.c.b16 %v1368, %v1364
  %v1961 = vpack.c.b16 %v1369, %v1365
  %v1962 = vpack.c.b16 %v1370, %v1366
  %v1963 = vpack.c.b16 %v1375, %v1371
  %v1964 = vpack.c.b16 %v1376, %v1372
  %v1965 = vpack.c.b16 %v1377, %v1373
  %v1966 = vpack.c.b16 %v1378, %v1374
  %v1967 = vpack.c.b16 %v1383, %v1379
  %v1968 = vpack.c.b16 %v1384, %v1380
  %v1969 = vpack.c.b16 %v1385, %v1381
  %v1970 = vpack.c.b16 %v1386, %v1382
  %v1971 = vpack.c.b16 %v1391, %v1387
  %v1972 = vpack.c.b16 %v1392, %v1388
  %v1973 = vpack.c.b16 %v1393, %v1389
  %v1974 = vpack.c.b16 %v1394, %v1390
  %v1975 = vpack.c.b16 %v1399, %v1395
  %v1976 = vpack.c.b16 %v1400, %v1396
  %v1977 = vpack.c.b16 %v1401, %v1397
  %v1978 = vpack.c.b16 %v1402, %v1398
  %v1979 = vpack.c.b16 %v1407, %v1403
  %v1980 = vpack.c.b16 %v1408, %v1404
  %v1981 = vpack.c.b16 %v1409, %v1405
  %v1982 = vpack.c.b16 %v1410, %v1406
  %v1983 = vpack.c.b16 %v1415, %v1411
  %v1984 = vpack.c.b16 %v1416, %v1412
  %v1985 = vpack.c.b16 %v1417, %v1413
  %v1986 = vpack.c.b16 %v1418, %v1414
  %v1987 = vpack.c.b16 %v1423, %v1419
  %v1988 = vpack.c.b16 %v1424, %v1420
  %v1989 = vpack.c.b16 %v1425, %v1421
  %v1990 = vpack.c.b16 %v1426, %v1422
  %v1991 = vpack.c.b16 %v1431, %v1427
  %v1992 = vpack.c.b16 %v1432, %v1428
  %v1993 = vpack.c.b16 %v1433, %v1429
  %v1994 = vpack.c.b16 %v1434, %v1430
  %v1995 = vpack.c.b16 %v1439, %v1435
  %v1996 = vpack.c.b16 %v1440, %v1436
  %v1997 = vpack.c.b16 %v1441, %v1437
  %v1998 = vpack.c.b16 %v1442, %v1438
  %v1999 = vpack.c.b16 %v1447, %v1443
  %v2000 = vpack.c.b16 %v1448, %v1444
  %v2001 = vpack.c.b16 %v1449, %v1445
  %v2002 = vpack.c.b16 %v1450, %v1446
  %v2003 = vpack.c.b16 %v1455, %v1451
  %v2004 = vpack.c.b16 %v1456, %v1452
  %v2005 = vpack.c.b16 %v1457, %v1453
  %v2006 = vpack.c.b16 %v1458, %v1454
  %v2007 = vpack.c.b16 %v1463, %v1459
  %v2008 = vpack.c.b16 %v1464, %v1460
  %v2009 = vpack.c.b16 %v1465, %v1461
  %v2010 = vpack.c.b16 %v1466, %v1462
  %v2011 = vpack.c.b16 %v1471, %v1467
  %v2012 = vpack.c.b16 %v1472, %v1468
  %v2013 = vpack.c.b16 %v1473, %v1469
  %v2014 = vpack.c.b16 %v1474, %v1470
  %v2015 = vpack.c.b16 %v1479, %v1475
  %v2016 = vpack.c.b16 %v1480, %v1476
  %v2017 = vpack.c.b16 %v1481, %v1477
  %v2018 = vpack.c.b16 %v1482, %v1478
  %v2019 = vpack.c.b16 %v1487, %v1483
  %v2020 = vpack.c.b16 %v1488, %v1484
  %v2021 = vpack.c.b16 %v1489, %v1485
  %v2022 = vpack.c.b16 %v1490, %v1486
  %v2023 = vpack.c.b16 %v1495, %v1491
  %v2024 = vpack.c.b16 %v1496, %v1492
  %v2025 = vpack.c.b16 %v1497, %v1493
  %v2026 = vpack.c.b16 %v1498, %v1494
  %v2027 = vpack.c.b16 %v1503, %v1499
  %v2028 = vpack.c.b16 %v1504, %v1500
  %v2029 = vpack.c.b16 %v1505, %v1501
  %v2030 = vpack.c.b16 %v1506, %v1502
  %v2031 = vpack.c.b16 %v1511, %v1507
  %v2032 = vpack.c.b16 %v1512, %v1508
  %v2033 = vpack.c.b16 %v1513, %v1509
  %v2034 = vpack.c.b16 %v1514, %v1510
  %v2035 = vpack.c.b16 %v1519, %v1515
  %v2036 = vpack.c.b16 %v1520, %v1516
  %v2037 = vpack.c.b16 %v1521, %v1517
  %v2038 = vpack.c.b16 %v1522, %v1518
  %v2039 = vpack.c.b16 %v1527, %v1523
  %v2040 = vpack.c.b16 %v1528, %v1524
  %v2041 = vpack.c.b16 %v1529, %v1525
  %v2042 = vpack.c.b16 %v1530, %v1526
  %v2043 = vpack.c.b16 %v1535, %v1531
  %v2044 = vpack.c.b16 %v1536, %v1532
  %v2045 = vpack.c.b16 %v1537, %v1533
  %v2046 = vpack.c.b16 %v1538, %v1534
  %v2047 = vpack.c.b16 %v1543, %v1539
  %v2048 = vpack.c.b16 %v1544, %v1540
  %v2049 = vpack.c.b16 %v1545, %v1541
  %v2050 = vpack.c.b16 %v1546, %v1542
  %v2051 = vpack.c.b16 %v1551, %v1547
  %v2052 = vpack.c.b16 %v1552, %v1548
  %v2053 = vpack.c.b16 %v1553, %v1549
  %v2054 = vpack.c.b16 %v1554, %v1550
  %v2055 = vpack.c.b16 %v1559, %v1555
  %v2056 = vpack.c.b16 %v1560, %v1556
  %v2057 = vpack.c.b16 %v1561, %v1557
  %v2058 = vpack.c.b16 %v1562, %v1558
  %v2059 = vpack.c.b16 %v1567, %v1563
  %v2060 = vpack.c.b16 %v1568, %v1564
  %v2061 = vpack.c.b16 %v1569, %v1565
  %v2062 = vpack.c.b16 %v1570, %v1566
  %v2063 = vpack.c.b16 %v1575, %v1571
  %v2064 = vpack.c.b16 %v1576, %v1572
  %v2065 = vpack.c.b16 %v1577, %v1573
  %v2066 = vpack.c.b16 %v1578, %v1574
  %v2067 = vpack.c.b16 %v1583, %v1579
  %v2068 = vpack.c.b16 %v1584, %v1580
  %v2069 = vpack.c.b16 %v1585, %v1581
  %v2070 = vpack.c.b16 %v1586, %v1582
  %v2071 = vpack.c.b16 %v1591, %v1587
  %v2072 = vpack.c.b16 %v1592, %v1588
  %v2073 = vpack.c.b16 %v1593, %v1589
  %v2074 = vpack.c.b16 %v1594, %v1590
  %v2075 = vpack.c.b16 %v1599, %v1595
  %v2076 = vpack.c.b16 %v1600, %v1596
  %v2077 = vpack.c.b16 %v1601, %v1597
  %v2078 = vpack.c.b16 %v1602, %v1598
  %v2079 = vpack.c.b16 %v1607, %v1603
  %v2080 = vpack.c.b16 %v1608, %v1604
  %v2081 = vpack.c.b16 %v1609, %v1605
  %v2082 = vpack.c.b16 %v1610, %v1606
  %v2083 = vpack.c.b16 %v1615, %v1611
  %v2084 = vpack.c.b16 %v1616, %v1612
  %v2085 = vpack.c.b16 %v1617, %v1613
  %v2086 = vpack.c.b16 %v1618, %v1614
  %v2087 = vpack.c.b16 %v1623, %v1619
  %v2088 = vpack.c.b16 %v1624, %v1620
  %v2089 = vpack.c.b16 %v1625, %v1621
  %v2090 = vpack.c.b16 %v1626, %v1622
  %v2091 = vpack.c.b16 %v1631, %v1627
  %v2092 = vpack.c.b16 %v1632, %v1628
  %v2093 = vpack.c.b16 %v1633, %v1629
  %v2094 = vpack.c.b16 %v1634, %v1630
  %v2095 = vpack.c.b16 %v1639, %v1635
  %v2096 = vpack.c.b16 %v1640, %v1636
  %v2097 = vpack.c.b16 %v1641, %v1637
  %v2098 = vpack.c.b16 %v1642, %v1638
  %v2099 = vpack.c.b16 %v1647, %v1643
  %v2100 = vpack.c.b16 %v1648, %v1644
  %v2101 = vpack.c.b16 %v1649, %v1645
  %v2102 = vpack.c.b16 %v1650, %v1646
  %v2103 = vpack.c.b16 %v1655, %v1651
  %v2104 = vpack.c.b16 %v1656, %v1652
  %v2105 = vpack.c.b16 %v1657, %v1653
  %v2106 = vpack.c.b16 %v1658, %v1654
  %v2107 = vpack.c.b16 %v1663, %v1659
  %v2108 = vpack.c.b16 %v1664, %v1660
  %v2109 = vpack.c.b16 %v1665, %v1661
  %v2110 = vpack.c.b16 %v1666, %v1662
  %v2111 = vpack.c.b16 %v1671, %v1667
  %v2112 = vpack.c.b16 %v1672, %v1668
  %v2113 = vpack.c.b16 %v1673, %v1669
  %v2114 = vpack.c.b16 %v1674, %v1670
  %v2115 = vpack.c.b16 %v1679, %v1675
  %v2116 = vpack.c.b16 %v1680, %v1676
  %v2117 = vpack.c.b16 %v1681, %v1677
  %v2118 = vpack.c.b16 %v1682, %v1678
  %v2119 = vpack.c.b16 %v1687, %v1683
  %v2120 = vpack.c.b16 %v1688, %v1684
  %v2121 = vpack.c.b16 %v1689, %v1685
  %v2122 = vpack.c.b16 %v1690, %v1686
  %v2123 = vpack.c.b16 %v1695, %v1691
  %v2124 = vpack.c.b16 %v1696, %v1692
  %v2125 = vpack.c.b16 %v1697, %v1693
  %v2126 = vpack.c.b16 %v1698, %v1694
  %v2127 = vpack.c.b16 %v1703, %v1699
  %v2128 = vpack.c.b16 %v1704, %v1700
  %v2129 = vpack.c.b16 %v1705, %v1701
  %v2130 = vpack.c.b16 %v1706, %v1702
  %v2131 = vpack.c.b16 %v1711, %v1707
  %v2132 = vpack.c.b16 %v1712, %v1708
  %v2133 = vpack.c.b16 %v1713, %v1709
  %v2134 = vpack.c.b16 %v1714, %v1710
  %v2135 = vpack.c.b16 %v1719, %v1715
  %v2136 = vpack.c.b16 %v1720, %v1716
  %v2137 = vpack.c.b16 %v1721, %v1717
  %v2138 = vpack.c.b16 %v1722, %v1718
  %v2139 = vpack.c.b16 %v1727, %v1723
  %v2140 = vpack.c.b16 %v1728, %v1724
  %v2141 = vpack.c.b16 %v1729, %v1725
  %v2142 = vpack.c.b16 %v1730, %v1726
  %v2143 = vpack.c.b16 %v1735, %v1731
  %v2144 = vpack.c.b16 %v1736, %v1732
  %v2145 = vpack.c.b16 %v1737, %v1733
  %v2146 = vpack.c.b16 %v1738, %v1734
  %v2147 = vpack.c.b16 %v1743, %v1739
  %v2148 = vpack.c.b16 %v1744, %v1740
  %v2149 = vpack.c.b16 %v1745, %v1741
  %v2150 = vpack.c.b16 %v1746, %v1742
  %v2151 = vpack.c.b16 %v1751, %v1747
  %v2152 = vpack.c.b16 %v1752, %v1748
  %v2153 = vpack.c.b16 %v1753, %v1749
  %v2154 = vpack.c.b16 %v1754, %v1750
  %vm2555 = vcmask 523264
  %v2557 = vsel %vm2555, %v533, 0
  %2559 = vmatprep.subr.bf16.mxu0 %v1784
  %2560 = vmatpush1.bf16.msra.mxu0 %v1783
  %2561 = vmatprep.subr.bf16.mxu0 %v1780
  %2562 = vmatpush1.bf16.msra.mxu0 %v1779
  %2563 = vmatprep.subr.bf16.mxu0 %v1776
  %2564 = vmatpush1.bf16.msra.mxu0 %v1775
  %2565 = vmatprep.subr.bf16.mxu0 %v1772
  %2566 = vmatpush1.bf16.msra.mxu0 %v1771
  %2567 = vmatprep.subr.bf16.mxu0 %v1768
  %2568 = vmatpush1.bf16.msra.mxu0 %v1767
  %2569 = vmatprep.subr.bf16.mxu0 %v1764
  %2570 = vmatpush1.bf16.msra.mxu0 %v1763
  %2571 = vmatprep.subr.bf16.mxu0 %v1760
  %2572 = vmatpush1.bf16.msra.mxu0 %v1759
  %2573 = vmatprep.subr.bf16.mxu0 %v1756
  %2574 = vmatpush1.bf16.msra.mxu0 %v1755
  %2575 = vmatprep.subr.bf16.mxu0 %v1816
  %2576 = vmatpush2.bf16.msra.mxu0 %v1815
  %2577 = vmatprep.subr.bf16.mxu0 %v1812
  %2578 = vmatpush2.bf16.msra.mxu0 %v1811
  %2579 = vmatprep.subr.bf16.mxu0 %v1808
  %2580 = vmatpush2.bf16.msra.mxu0 %v1807
  %2581 = vmatprep.subr.bf16.mxu0 %v1804
  %2582 = vmatpush2.bf16.msra.mxu0 %v1803
  %2583 = vmatprep.subr.bf16.mxu0 %v1800
  %2584 = vmatpush2.bf16.msra.mxu0 %v1799
  %2585 = vmatprep.subr.bf16.mxu0 %v1796
  %2586 = vmatpush2.bf16.msra.mxu0 %v1795
  %2587 = vmatprep.subr.bf16.mxu0 %v1792
  %2588 = vmatpush2.bf16.msra.mxu0 %v1791
  %2589 = vmatprep.subr.bf16.mxu0 %v1788
  %2590 = vmatpush2.bf16.msra.mxu0 %v1787
  %2591 = vmatprep.mubr.bf16.mxu0 %v492
  %2592 = vmatmul.mubr.bf16.gmra.mxu0 %v478
  %v2593 = vpop.f32.mrf.mxu0
  %v2594 = vadd.f32 %v436, %v2593
  %v2595 = vpop.f32.mrf.mxu0
  %v2596 = vadd.f32 %v440, %v2595
  %v2597 = vpop.f32.mrf.mxu0
  %v2598 = vpop.f32.mrf.mxu0
  %2599 = vdwg.mxu0
  %2600 = vmatprep.subr.bf16.mxu0 %v1848
  %2601 = vmatpush1.bf16.msra.mxu0 %v1847
  %2602 = vmatprep.subr.bf16.mxu0 %v1844
  %2603 = vmatpush1.bf16.msra.mxu0 %v1843
  %2604 = vmatprep.subr.bf16.mxu0 %v1840
  %2605 = vmatpush1.bf16.msra.mxu0 %v1839
  %2606 = vmatprep.subr.bf16.mxu0 %v1836
  %2607 = vmatpush1.bf16.msra.mxu0 %v1835
  %2608 = vmatprep.subr.bf16.mxu0 %v1832
  %2609 = vmatpush1.bf16.msra.mxu0 %v1831
  %2610 = vmatprep.subr.bf16.mxu0 %v1828
  %2611 = vmatpush1.bf16.msra.mxu0 %v1827
  %2612 = vmatprep.subr.bf16.mxu0 %v1824
  %2613 = vmatpush1.bf16.msra.mxu0 %v1823
  %2614 = vmatprep.subr.bf16.mxu0 %v1820
  %2615 = vmatpush1.bf16.msra.mxu0 %v1819
  %2616 = vmatprep.subr.bf16.mxu0 %v1880
  %2617 = vmatpush2.bf16.msra.mxu0 %v1879
  %2618 = vmatprep.subr.bf16.mxu0 %v1876
  %2619 = vmatpush2.bf16.msra.mxu0 %v1875
  %2620 = vmatprep.subr.bf16.mxu0 %v1872
  %2621 = vmatpush2.bf16.msra.mxu0 %v1871
  %2622 = vmatprep.subr.bf16.mxu0 %v1868
  %2623 = vmatpush2.bf16.msra.mxu0 %v1867
  %2624 = vmatprep.subr.bf16.mxu0 %v1864
  %2625 = vmatpush2.bf16.msra.mxu0 %v1863
  %2626 = vmatprep.subr.bf16.mxu0 %v1860
  %2627 = vmatpush2.bf16.msra.mxu0 %v1859
  %2628 = vmatprep.subr.bf16.mxu0 %v1856
  %2629 = vmatpush2.bf16.msra.mxu0 %v1855
  %2630 = vmatprep.subr.bf16.mxu0 %v1852
  %2631 = vmatpush2.bf16.msra.mxu0 %v1851
  %2632 = vmatprep.mubr.bf16.mxu0 %v502
  %2633 = vmatmul.mubr.bf16.gmra.mxu0 %v500
  %v2634 = vpop.f32.mrf.mxu0
  %v2635 = vadd.f32 %v2594, %v2634
  %v2636 = vpop.f32.mrf.mxu0
  %v2637 = vadd.f32 %v2596, %v2636
  %v2638 = vpop.f32.mrf.mxu0
  %v2639 = vpop.f32.mrf.mxu0
  %2640 = vdwg.mxu0
  %2641 = vmatprep.subr.bf16.mxu0 %v1912
  %2642 = vmatpush1.bf16.msra.mxu0 %v1911
  %2643 = vmatprep.subr.bf16.mxu0 %v1908
  %2644 = vmatpush1.bf16.msra.mxu0 %v1907
  %2645 = vmatprep.subr.bf16.mxu0 %v1904
  %2646 = vmatpush1.bf16.msra.mxu0 %v1903
  %2647 = vmatprep.subr.bf16.mxu0 %v1900
  %2648 = vmatpush1.bf16.msra.mxu0 %v1899
  %2649 = vmatprep.subr.bf16.mxu0 %v1896
  %2650 = vmatpush1.bf16.msra.mxu0 %v1895
  %2651 = vmatprep.subr.bf16.mxu0 %v1892
  %2652 = vmatpush1.bf16.msra.mxu0 %v1891
  %2653 = vmatprep.subr.bf16.mxu0 %v1888
  %2654 = vmatpush1.bf16.msra.mxu0 %v1887
  %2655 = vmatprep.subr.bf16.mxu0 %v1884
  %2656 = vmatpush1.bf16.msra.mxu0 %v1883
  %2657 = vmatprep.subr.bf16.mxu0 %v1944
  %2658 = vmatpush2.bf16.msra.mxu0 %v1943
  %2659 = vmatprep.subr.bf16.mxu0 %v1940
  %2660 = vmatpush2.bf16.msra.mxu0 %v1939
  %2661 = vmatprep.subr.bf16.mxu0 %v1936
  %2662 = vmatpush2.bf16.msra.mxu0 %v1935
  %2663 = vmatprep.subr.bf16.mxu0 %v1932
  %2664 = vmatpush2.bf16.msra.mxu0 %v1931
  %2665 = vmatprep.subr.bf16.mxu0 %v1928
  %2666 = vmatpush2.bf16.msra.mxu0 %v1927
  %2667 = vmatprep.subr.bf16.mxu0 %v1924
  %2668 = vmatpush2.bf16.msra.mxu0 %v1923
  %2669 = vmatprep.subr.bf16.mxu0 %v1920
  %2670 = vmatpush2.bf16.msra.mxu0 %v1919
  %2671 = vmatprep.subr.bf16.mxu0 %v1916
  %2672 = vmatpush2.bf16.msra.mxu0 %v1915
  %2673 = vmatprep.mubr.bf16.mxu0 %v499
  %2674 = vmatmul.mubr.bf16.gmra.mxu0 %v485
  %v2675 = vpop.f32.mrf.mxu0
  %v2676 = vadd.f32 %v2635, %v2675
  %v2677 = vpop.f32.mrf.mxu0
  %v2678 = vadd.f32 %v2637, %v2677
  %v2679 = vpop.f32.mrf.mxu0
  %v2680 = vpop.f32.mrf.mxu0
  %2681 = vdwg.mxu0
  %2682 = vmatprep.subr.bf16.mxu0 %v1976
  %2683 = vmatpush1.bf16.msra.mxu0 %v1975
  %2684 = vmatprep.subr.bf16.mxu0 %v1972
  %2685 = vmatpush1.bf16.msra.mxu0 %v1971
  %2686 = vmatprep.subr.bf16.mxu0 %v1968
  %2687 = vmatpush1.bf16.msra.mxu0 %v1967
  %2688 = vmatprep.subr.bf16.mxu0 %v1964
  %2689 = vmatpush1.bf16.msra.mxu0 %v1963
  %2690 = vmatprep.subr.bf16.mxu0 %v1960
  %2691 = vmatpush1.bf16.msra.mxu0 %v1959
  %2692 = vmatprep.subr.bf16.mxu0 %v1956
  %2693 = vmatpush1.bf16.msra.mxu0 %v1955
  %2694 = vmatprep.subr.bf16.mxu0 %v1952
  %2695 = vmatpush1.bf16.msra.mxu0 %v1951
  %2696 = vmatprep.subr.bf16.mxu0 %v1948
  %2697 = vmatpush1.bf16.msra.mxu0 %v1947
  %2698 = vmatprep.subr.bf16.mxu0 %v2008
  %2699 = vmatpush2.bf16.msra.mxu0 %v2007
  %2700 = vmatprep.subr.bf16.mxu0 %v2004
  %2701 = vmatpush2.bf16.msra.mxu0 %v2003
  %2702 = vmatprep.subr.bf16.mxu0 %v2000
  %2703 = vmatpush2.bf16.msra.mxu0 %v1999
  %2704 = vmatprep.subr.bf16.mxu0 %v1996
  %2705 = vmatpush2.bf16.msra.mxu0 %v1995
  %2706 = vmatprep.subr.bf16.mxu0 %v1992
  %2707 = vmatpush2.bf16.msra.mxu0 %v1991
  %2708 = vmatprep.subr.bf16.mxu0 %v1988
  %2709 = vmatpush2.bf16.msra.mxu0 %v1987
  %2710 = vmatprep.subr.bf16.mxu0 %v1984
  %2711 = vmatpush2.bf16.msra.mxu0 %v1983
  %2712 = vmatprep.subr.bf16.mxu0 %v1980
  %2713 = vmatpush2.bf16.msra.mxu0 %v1979
  %2714 = vmatprep.mubr.bf16.mxu0 %v503
  %2715 = vmatmul.mubr.bf16.gmra.mxu0 %v501
  %v2716 = vpop.f32.mrf.mxu0
  %v2717 = vadd.f32 %v2676, %v2716
  %v2718 = vpop.f32.mrf.mxu0
  %v2719 = vadd.f32 %v2678, %v2718
  %v2720 = vpop.f32.mrf.mxu0
  %v2721 = vpop.f32.mrf.mxu0
  %2722 = vdwg.mxu0
  %2723 = vmatprep.subr.bf16.mxu0 %v2040
  %2724 = vmatpush1.bf16.msra.mxu0 %v2039
  %2725 = vmatprep.subr.bf16.mxu0 %v2036
  %2726 = vmatpush1.bf16.msra.mxu0 %v2035
  %2727 = vmatprep.subr.bf16.mxu0 %v2032
  %2728 = vmatpush1.bf16.msra.mxu0 %v2031
  %2729 = vmatprep.subr.bf16.mxu0 %v2028
  %2730 = vmatpush1.bf16.msra.mxu0 %v2027
  %2731 = vmatprep.subr.bf16.mxu0 %v2024
  %2732 = vmatpush1.bf16.msra.mxu0 %v2023
  %2733 = vmatprep.subr.bf16.mxu0 %v2020
  %2734 = vmatpush1.bf16.msra.mxu0 %v2019
  %2735 = vmatprep.subr.bf16.mxu0 %v2016
  %2736 = vmatpush1.bf16.msra.mxu0 %v2015
  %2737 = vmatprep.subr.bf16.mxu0 %v2012
  %2738 = vmatpush1.bf16.msra.mxu0 %v2011
  %2739 = vmatprep.subr.bf16.mxu0 %v2072
  %2740 = vmatpush2.bf16.msra.mxu0 %v2071
  %2741 = vmatprep.subr.bf16.mxu0 %v2068
  %2742 = vmatpush2.bf16.msra.mxu0 %v2067
  %2743 = vmatprep.subr.bf16.mxu0 %v2064
  %2744 = vmatpush2.bf16.msra.mxu0 %v2063
  %2745 = vmatprep.subr.bf16.mxu0 %v2060
  %2746 = vmatpush2.bf16.msra.mxu0 %v2059
  %2747 = vmatprep.subr.bf16.mxu0 %v2056
  %2748 = vmatpush2.bf16.msra.mxu0 %v2055
  %2749 = vmatprep.subr.bf16.mxu0 %v2052
  %2750 = vmatpush2.bf16.msra.mxu0 %v2051
  %2751 = vmatprep.subr.bf16.mxu0 %v2048
  %2752 = vmatpush2.bf16.msra.mxu0 %v2047
  %2753 = vmatprep.subr.bf16.mxu0 %v2044
  %2754 = vmatpush2.bf16.msra.mxu0 %v2043
  %2755 = vmatprep.mubr.bf16.mxu0 %v540
  %2756 = vmatmul.mubr.bf16.gmra.mxu0 %v526
  %v2757 = vpop.f32.mrf.mxu0
  %v2758 = vadd.f32 %v2717, %v2757
  %v2759 = vpop.f32.mrf.mxu0
  %v2760 = vadd.f32 %v2719, %v2759
  %v2761 = vpop.f32.mrf.mxu0
  %v2762 = vpop.f32.mrf.mxu0
  %2763 = vdwg.mxu0
  %2764 = vmatprep.subr.bf16.mxu0 %v2104
  %2765 = vmatpush1.bf16.msra.mxu0 %v2103
  %2766 = vmatprep.subr.bf16.mxu0 %v2100
  %2767 = vmatpush1.bf16.msra.mxu0 %v2099
  %2768 = vmatprep.subr.bf16.mxu0 %v2096
  %2769 = vmatpush1.bf16.msra.mxu0 %v2095
  %2770 = vmatprep.subr.bf16.mxu0 %v2092
  %2771 = vmatpush1.bf16.msra.mxu0 %v2091
  %2772 = vmatprep.subr.bf16.mxu0 %v2088
  %2773 = vmatpush1.bf16.msra.mxu0 %v2087
  %2774 = vmatprep.subr.bf16.mxu0 %v2084
  %2775 = vmatpush1.bf16.msra.mxu0 %v2083
  %2776 = vmatprep.subr.bf16.mxu0 %v2080
  %2777 = vmatpush1.bf16.msra.mxu0 %v2079
  %2778 = vmatprep.subr.bf16.mxu0 %v2076
  %2779 = vmatpush1.bf16.msra.mxu0 %v2075
  %2780 = vmatprep.subr.bf16.mxu0 %v2136
  %2781 = vmatpush2.bf16.msra.mxu0 %v2135
  %2782 = vmatprep.subr.bf16.mxu0 %v2132
  %2783 = vmatpush2.bf16.msra.mxu0 %v2131
  %2784 = vmatprep.subr.bf16.mxu0 %v2128
  %2785 = vmatpush2.bf16.msra.mxu0 %v2127
  %2786 = vmatprep.subr.bf16.mxu0 %v2124
  %2787 = vmatpush2.bf16.msra.mxu0 %v2123
  %2788 = vmatprep.subr.bf16.mxu0 %v2120
  %2789 = vmatpush2.bf16.msra.mxu0 %v2119
  %2790 = vmatprep.subr.bf16.mxu0 %v2116
  %2791 = vmatpush2.bf16.msra.mxu0 %v2115
  %2792 = vmatprep.subr.bf16.mxu0 %v2112
  %2793 = vmatpush2.bf16.msra.mxu0 %v2111
  %2794 = vmatprep.subr.bf16.mxu0 %v2108
  %2795 = vmatpush2.bf16.msra.mxu0 %v2107
  %2796 = vmatprep.mubr.bf16.mxu0 %v542
  %2797 = vmatmul.mubr.bf16.gmra.mxu0 %v541
  %v2798 = vpop.f32.mrf.mxu0
  %v2799 = vadd.f32 %v2758, %v2798
  %v2800 = vpop.f32.mrf.mxu0
  %v2801 = vadd.f32 %v2760, %v2800
  %v2802 = vpop.f32.mrf.mxu0
  %v2803 = vpop.f32.mrf.mxu0
  %2804 = vdwg.mxu0
  %2805 = vmatprep.subr.bf16.mxu0 0
  %2806 = vmatpush1.bf16.msra.mxu0 0
  %2807 = vmatprep.subr.bf16.mxu0 0
  %2808 = vmatpush1.bf16.msra.mxu0 0
  %2809 = vmatprep.subr.bf16.mxu0 0
  %2810 = vmatpush1.bf16.msra.mxu0 0
  %2811 = vmatprep.subr.bf16.mxu0 0
  %2812 = vmatpush1.bf16.msra.mxu0 0
  %2813 = vmatprep.subr.bf16.mxu0 %v2152
  %2814 = vmatpush1.bf16.msra.mxu0 %v2151
  %2815 = vmatprep.subr.bf16.mxu0 %v2148
  %2816 = vmatpush1.bf16.msra.mxu0 %v2147
  %2817 = vmatprep.subr.bf16.mxu0 %v2144
  %2818 = vmatpush1.bf16.msra.mxu0 %v2143
  %2819 = vmatprep.subr.bf16.mxu0 %v2140
  %2820 = vmatpush1.bf16.msra.mxu0 %v2139
  %2821 = vmatprep.subr.bf16.mxu0 0
  %2822 = vmatpush2.bf16.msra.mxu0 0
  %2823 = vmatprep.subr.bf16.mxu0 0
  %2824 = vmatpush2.bf16.msra.mxu0 0
  %2825 = vmatprep.subr.bf16.mxu0 0
  %2826 = vmatpush2.bf16.msra.mxu0 0
  %2827 = vmatprep.subr.bf16.mxu0 0
  %2828 = vmatpush2.bf16.msra.mxu0 0
  %2829 = vmatprep.subr.bf16.mxu0 0
  %2830 = vmatpush2.bf16.msra.mxu0 0
  %2831 = vmatprep.subr.bf16.mxu0 0
  %2832 = vmatpush2.bf16.msra.mxu0 0
  %2833 = vmatprep.subr.bf16.mxu0 0
  %2834 = vmatpush2.bf16.msra.mxu0 0
  %2835 = vmatprep.subr.bf16.mxu0 0
  %2836 = vmatpush2.bf16.msra.mxu0 0
  %2837 = vmatprep.mubr.bf16.mxu0 0
  %2838 = vmatmul.mubr.bf16.gmra.mxu0 %v2557
  %v2839 = vpop.f32.mrf.mxu0
  %v2840 = vadd.f32 %v2799, %v2839
  %v2841 = vpop.f32.mrf.mxu0
  %v2842 = vadd.f32 %v2801, %v2841
  %v2843 = vpop.f32.mrf.mxu0
  %v2844 = vpop.f32.mrf.mxu0
  %2845 = vdwg.mxu0
  %2846 = vmatprep.subr.bf16.mxu0 %v1786
  %2847 = vmatpush1.bf16.msra.mxu0 %v1785
  %2848 = vmatprep.subr.bf16.mxu0 %v1782
  %2849 = vmatpush1.bf16.msra.mxu0 %v1781
  %2850 = vmatprep.subr.bf16.mxu0 %v1778
  %2851 = vmatpush1.bf16.msra.mxu0 %v1777
  %2852 = vmatprep.subr.bf16.mxu0 %v1774
  %2853 = vmatpush1.bf16.msra.mxu0 %v1773
  %2854 = vmatprep.subr.bf16.mxu0 %v1770
  %2855 = vmatpush1.bf16.msra.mxu0 %v1769
  %2856 = vmatprep.subr.bf16.mxu0 %v1766
  %2857 = vmatpush1.bf16.msra.mxu0 %v1765
  %2858 = vmatprep.subr.bf16.mxu0 %v1762
  %2859 = vmatpush1.bf16.msra.mxu0 %v1761
  %2860 = vmatprep.subr.bf16.mxu0 %v1758
  %2861 = vmatpush1.bf16.msra.mxu0 %v1757
  %2862 = vmatprep.subr.bf16.mxu0 %v1818
  %2863 = vmatpush2.bf16.msra.mxu0 %v1817
  %2864 = vmatprep.subr.bf16.mxu0 %v1814
  %2865 = vmatpush2.bf16.msra.mxu0 %v1813
  %2866 = vmatprep.subr.bf16.mxu0 %v1810
  %2867 = vmatpush2.bf16.msra.mxu0 %v1809
  %2868 = vmatprep.subr.bf16.mxu0 %v1806
  %2869 = vmatpush2.bf16.msra.mxu0 %v1805
  %2870 = vmatprep.subr.bf16.mxu0 %v1802
  %2871 = vmatpush2.bf16.msra.mxu0 %v1801
  %2872 = vmatprep.subr.bf16.mxu0 %v1798
  %2873 = vmatpush2.bf16.msra.mxu0 %v1797
  %2874 = vmatprep.subr.bf16.mxu0 %v1794
  %2875 = vmatpush2.bf16.msra.mxu0 %v1793
  %2876 = vmatprep.subr.bf16.mxu0 %v1790
  %2877 = vmatpush2.bf16.msra.mxu0 %v1789
  %2878 = vmatprep.mubr.bf16.mxu0 %v492
  %2879 = vmatmul.mubr.bf16.gmra.mxu0 %v478
  %v2880 = vpop.f32.mrf.mxu0
  %v2881 = vadd.f32 %v444, %v2880
  %v2882 = vpop.f32.mrf.mxu0
  %v2883 = vadd.f32 %v448, %v2882
  %v2884 = vpop.f32.mrf.mxu0
  %v2885 = vpop.f32.mrf.mxu0
  %2886 = vdwg.mxu0
  %2887 = vmatprep.subr.bf16.mxu0 %v1850
  %2888 = vmatpush1.bf16.msra.mxu0 %v1849
  %2889 = vmatprep.subr.bf16.mxu0 %v1846
  %2890 = vmatpush1.bf16.msra.mxu0 %v1845
  %2891 = vmatprep.subr.bf16.mxu0 %v1842
  %2892 = vmatpush1.bf16.msra.mxu0 %v1841
  %2893 = vmatprep.subr.bf16.mxu0 %v1838
  %2894 = vmatpush1.bf16.msra.mxu0 %v1837
  %2895 = vmatprep.subr.bf16.mxu0 %v1834
  %2896 = vmatpush1.bf16.msra.mxu0 %v1833
  %2897 = vmatprep.subr.bf16.mxu0 %v1830
  %2898 = vmatpush1.bf16.msra.mxu0 %v1829
  %2899 = vmatprep.subr.bf16.mxu0 %v1826
  %2900 = vmatpush1.bf16.msra.mxu0 %v1825
  %2901 = vmatprep.subr.bf16.mxu0 %v1822
  %2902 = vmatpush1.bf16.msra.mxu0 %v1821
  %2903 = vmatprep.subr.bf16.mxu0 %v1882
  %2904 = vmatpush2.bf16.msra.mxu0 %v1881
  %2905 = vmatprep.subr.bf16.mxu0 %v1878
  %2906 = vmatpush2.bf16.msra.mxu0 %v1877
  %2907 = vmatprep.subr.bf16.mxu0 %v1874
  %2908 = vmatpush2.bf16.msra.mxu0 %v1873
  %2909 = vmatprep.subr.bf16.mxu0 %v1870
  %2910 = vmatpush2.bf16.msra.mxu0 %v1869
  %2911 = vmatprep.subr.bf16.mxu0 %v1866
  %2912 = vmatpush2.bf16.msra.mxu0 %v1865
  %2913 = vmatprep.subr.bf16.mxu0 %v1862
  %2914 = vmatpush2.bf16.msra.mxu0 %v1861
  %2915 = vmatprep.subr.bf16.mxu0 %v1858
  %2916 = vmatpush2.bf16.msra.mxu0 %v1857
  %2917 = vmatprep.subr.bf16.mxu0 %v1854
  %2918 = vmatpush2.bf16.msra.mxu0 %v1853
  %2919 = vmatprep.mubr.bf16.mxu0 %v502
  %2920 = vmatmul.mubr.bf16.gmra.mxu0 %v500
  %v2921 = vpop.f32.mrf.mxu0
  %v2922 = vadd.f32 %v2881, %v2921
  %v2923 = vpop.f32.mrf.mxu0
  %v2924 = vadd.f32 %v2883, %v2923
  %v2925 = vpop.f32.mrf.mxu0
  %v2926 = vpop.f32.mrf.mxu0
  %2927 = vdwg.mxu0
  %2928 = vmatprep.subr.bf16.mxu0 %v1914
  %2929 = vmatpush1.bf16.msra.mxu0 %v1913
  %2930 = vmatprep.subr.bf16.mxu0 %v1910
  %2931 = vmatpush1.bf16.msra.mxu0 %v1909
  %2932 = vmatprep.subr.bf16.mxu0 %v1906
  %2933 = vmatpush1.bf16.msra.mxu0 %v1905
  %2934 = vmatprep.subr.bf16.mxu0 %v1902
  %2935 = vmatpush1.bf16.msra.mxu0 %v1901
  %2936 = vmatprep.subr.bf16.mxu0 %v1898
  %2937 = vmatpush1.bf16.msra.mxu0 %v1897
  %2938 = vmatprep.subr.bf16.mxu0 %v1894
  %2939 = vmatpush1.bf16.msra.mxu0 %v1893
  %2940 = vmatprep.subr.bf16.mxu0 %v1890
  %2941 = vmatpush1.bf16.msra.mxu0 %v1889
  %2942 = vmatprep.subr.bf16.mxu0 %v1886
  %2943 = vmatpush1.bf16.msra.mxu0 %v1885
  %2944 = vmatprep.subr.bf16.mxu0 %v1946
  %2945 = vmatpush2.bf16.msra.mxu0 %v1945
  %2946 = vmatprep.subr.bf16.mxu0 %v1942
  %2947 = vmatpush2.bf16.msra.mxu0 %v1941
  %2948 = vmatprep.subr.bf16.mxu0 %v1938
  %2949 = vmatpush2.bf16.msra.mxu0 %v1937
  %2950 = vmatprep.subr.bf16.mxu0 %v1934
  %2951 = vmatpush2.bf16.msra.mxu0 %v1933
  %2952 = vmatprep.subr.bf16.mxu0 %v1930
  %2953 = vmatpush2.bf16.msra.mxu0 %v1929
  %2954 = vmatprep.subr.bf16.mxu0 %v1926
  %2955 = vmatpush2.bf16.msra.mxu0 %v1925
  %2956 = vmatprep.subr.bf16.mxu0 %v1922
  %2957 = vmatpush2.bf16.msra.mxu0 %v1921
  %2958 = vmatprep.subr.bf16.mxu0 %v1918
  %2959 = vmatpush2.bf16.msra.mxu0 %v1917
  %2960 = vmatprep.mubr.bf16.mxu0 %v499
  %2961 = vmatmul.mubr.bf16.gmra.mxu0 %v485
  %v2962 = vpop.f32.mrf.mxu0
  %v2963 = vadd.f32 %v2922, %v2962
  %v2964 = vpop.f32.mrf.mxu0
  %v2965 = vadd.f32 %v2924, %v2964
  %v2966 = vpop.f32.mrf.mxu0
  %v2967 = vpop.f32.mrf.mxu0
  %2968 = vdwg.mxu0
  %2969 = vmatprep.subr.bf16.mxu0 %v1978
  %2970 = vmatpush1.bf16.msra.mxu0 %v1977
  %2971 = vmatprep.subr.bf16.mxu0 %v1974
  %2972 = vmatpush1.bf16.msra.mxu0 %v1973
  %2973 = vmatprep.subr.bf16.mxu0 %v1970
  %2974 = vmatpush1.bf16.msra.mxu0 %v1969
  %2975 = vmatprep.subr.bf16.mxu0 %v1966
  %2976 = vmatpush1.bf16.msra.mxu0 %v1965
  %2977 = vmatprep.subr.bf16.mxu0 %v1962
  %2978 = vmatpush1.bf16.msra.mxu0 %v1961
  %2979 = vmatprep.subr.bf16.mxu0 %v1958
  %2980 = vmatpush1.bf16.msra.mxu0 %v1957
  %2981 = vmatprep.subr.bf16.mxu0 %v1954
  %2982 = vmatpush1.bf16.msra.mxu0 %v1953
  %2983 = vmatprep.subr.bf16.mxu0 %v1950
  %2984 = vmatpush1.bf16.msra.mxu0 %v1949
  %2985 = vmatprep.subr.bf16.mxu0 %v2010
  %2986 = vmatpush2.bf16.msra.mxu0 %v2009
  %2987 = vmatprep.subr.bf16.mxu0 %v2006
  %2988 = vmatpush2.bf16.msra.mxu0 %v2005
  %2989 = vmatprep.subr.bf16.mxu0 %v2002
  %2990 = vmatpush2.bf16.msra.mxu0 %v2001
  %2991 = vmatprep.subr.bf16.mxu0 %v1998
  %2992 = vmatpush2.bf16.msra.mxu0 %v1997
  %2993 = vmatprep.subr.bf16.mxu0 %v1994
  %2994 = vmatpush2.bf16.msra.mxu0 %v1993
  %2995 = vmatprep.subr.bf16.mxu0 %v1990
  %2996 = vmatpush2.bf16.msra.mxu0 %v1989
  %2997 = vmatprep.subr.bf16.mxu0 %v1986
  %2998 = vmatpush2.bf16.msra.mxu0 %v1985
  %2999 = vmatprep.subr.bf16.mxu0 %v1982
  %3000 = vmatpush2.bf16.msra.mxu0 %v1981
  %3001 = vmatprep.mubr.bf16.mxu0 %v503
  %3002 = vmatmul.mubr.bf16.gmra.mxu0 %v501
  %v3003 = vpop.f32.mrf.mxu0
  %v3004 = vadd.f32 %v2963, %v3003
  %v3005 = vpop.f32.mrf.mxu0
  %v3006 = vadd.f32 %v2965, %v3005
  %v3007 = vpop.f32.mrf.mxu0
  %v3008 = vpop.f32.mrf.mxu0
  %3009 = vdwg.mxu0
  %3010 = vmatprep.subr.bf16.mxu0 %v2042
  %3011 = vmatpush1.bf16.msra.mxu0 %v2041
  %3012 = vmatprep.subr.bf16.mxu0 %v2038
  %3013 = vmatpush1.bf16.msra.mxu0 %v2037
  %3014 = vmatprep.subr.bf16.mxu0 %v2034
  %3015 = vmatpush1.bf16.msra.mxu0 %v2033
  %3016 = vmatprep.subr.bf16.mxu0 %v2030
  %3017 = vmatpush1.bf16.msra.mxu0 %v2029
  %3018 = vmatprep.subr.bf16.mxu0 %v2026
  %3019 = vmatpush1.bf16.msra.mxu0 %v2025
  %3020 = vmatprep.subr.bf16.mxu0 %v2022
  %3021 = vmatpush1.bf16.msra.mxu0 %v2021
  %3022 = vmatprep.subr.bf16.mxu0 %v2018
  %3023 = vmatpush1.bf16.msra.mxu0 %v2017
  %3024 = vmatprep.subr.bf16.mxu0 %v2014
  %3025 = vmatpush1.bf16.msra.mxu0 %v2013
  %3026 = vmatprep.subr.bf16.mxu0 %v2074
  %3027 = vmatpush2.bf16.msra.mxu0 %v2073
  %3028 = vmatprep.subr.bf16.mxu0 %v2070
  %3029 = vmatpush2.bf16.msra.mxu0 %v2069
  %3030 = vmatprep.subr.bf16.mxu0 %v2066
  %3031 = vmatpush2.bf16.msra.mxu0 %v2065
  %3032 = vmatprep.subr.bf16.mxu0 %v2062
  %3033 = vmatpush2.bf16.msra.mxu0 %v2061
  %3034 = vmatprep.subr.bf16.mxu0 %v2058
  %3035 = vmatpush2.bf16.msra.mxu0 %v2057
  %3036 = vmatprep.subr.bf16.mxu0 %v2054
  %3037 = vmatpush2.bf16.msra.mxu0 %v2053
  %3038 = vmatprep.subr.bf16.mxu0 %v2050
  %3039 = vmatpush2.bf16.msra.mxu0 %v2049
  %3040 = vmatprep.subr.bf16.mxu0 %v2046
  %3041 = vmatpush2.bf16.msra.mxu0 %v2045
  %3042 = vmatprep.mubr.bf16.mxu0 %v540
  %3043 = vmatmul.mubr.bf16.gmra.mxu0 %v526
  %v3044 = vpop.f32.mrf.mxu0
  %v3045 = vadd.f32 %v3004, %v3044
  %v3046 = vpop.f32.mrf.mxu0
  %v3047 = vadd.f32 %v3006, %v3046
  %v3048 = vpop.f32.mrf.mxu0
  %v3049 = vpop.f32.mrf.mxu0
  %3050 = vdwg.mxu0
  %3051 = vmatprep.subr.bf16.mxu0 %v2106
  %3052 = vmatpush1.bf16.msra.mxu0 %v2105
  %3053 = vmatprep.subr.bf16.mxu0 %v2102
  %3054 = vmatpush1.bf16.msra.mxu0 %v2101
  %3055 = vmatprep.subr.bf16.mxu0 %v2098
  %3056 = vmatpush1.bf16.msra.mxu0 %v2097
  %3057 = vmatprep.subr.bf16.mxu0 %v2094
  %3058 = vmatpush1.bf16.msra.mxu0 %v2093
  %3059 = vmatprep.subr.bf16.mxu0 %v2090
  %3060 = vmatpush1.bf16.msra.mxu0 %v2089
  %3061 = vmatprep.subr.bf16.mxu0 %v2086
  %3062 = vmatpush1.bf16.msra.mxu0 %v2085
  %3063 = vmatprep.subr.bf16.mxu0 %v2082
  %3064 = vmatpush1.bf16.msra.mxu0 %v2081
  %3065 = vmatprep.subr.bf16.mxu0 %v2078
  %3066 = vmatpush1.bf16.msra.mxu0 %v2077
  %3067 = vmatprep.subr.bf16.mxu0 %v2138
  %3068 = vmatpush2.bf16.msra.mxu0 %v2137
  %3069 = vmatprep.subr.bf16.mxu0 %v2134
  %3070 = vmatpush2.bf16.msra.mxu0 %v2133
  %3071 = vmatprep.subr.bf16.mxu0 %v2130
  %3072 = vmatpush2.bf16.msra.mxu0 %v2129
  %3073 = vmatprep.subr.bf16.mxu0 %v2126
  %3074 = vmatpush2.bf16.msra.mxu0 %v2125
  %3075 = vmatprep.subr.bf16.mxu0 %v2122
  %3076 = vmatpush2.bf16.msra.mxu0 %v2121
  %3077 = vmatprep.subr.bf16.mxu0 %v2118
  %3078 = vmatpush2.bf16.msra.mxu0 %v2117
  %3079 = vmatprep.subr.bf16.mxu0 %v2114
  %3080 = vmatpush2.bf16.msra.mxu0 %v2113
  %3081 = vmatprep.subr.bf16.mxu0 %v2110
  %3082 = vmatpush2.bf16.msra.mxu0 %v2109
  %3083 = vmatprep.mubr.bf16.mxu0 %v542
  %3084 = vmatmul.mubr.bf16.gmra.mxu0 %v541
  %v3085 = vpop.f32.mrf.mxu0
  %v3086 = vadd.f32 %v3045, %v3085
  %v3087 = vpop.f32.mrf.mxu0
  %v3088 = vadd.f32 %v3047, %v3087
  %v3089 = vpop.f32.mrf.mxu0
  %v3090 = vpop.f32.mrf.mxu0
  %3091 = vdwg.mxu0
  %3092 = vmatprep.subr.bf16.mxu0 0
  %3093 = vmatpush1.bf16.msra.mxu0 0
  %3094 = vmatprep.subr.bf16.mxu0 0
  %3095 = vmatpush1.bf16.msra.mxu0 0
  %3096 = vmatprep.subr.bf16.mxu0 0
  %3097 = vmatpush1.bf16.msra.mxu0 0
  %3098 = vmatprep.subr.bf16.mxu0 0
  %3099 = vmatpush1.bf16.msra.mxu0 0
  %3100 = vmatprep.subr.bf16.mxu0 %v2154
  %3101 = vmatpush1.bf16.msra.mxu0 %v2153
  %3102 = vmatprep.subr.bf16.mxu0 %v2150
  %3103 = vmatpush1.bf16.msra.mxu0 %v2149
  %3104 = vmatprep.subr.bf16.mxu0 %v2146
  %3105 = vmatpush1.bf16.msra.mxu0 %v2145
  %3106 = vmatprep.subr.bf16.mxu0 %v2142
  %3107 = vmatpush1.bf16.msra.mxu0 %v2141
  %3108 = vmatprep.subr.bf16.mxu0 0
  %3109 = vmatpush2.bf16.msra.mxu0 0
  %3110 = vmatprep.subr.bf16.mxu0 0
  %3111 = vmatpush2.bf16.msra.mxu0 0
  %3112 = vmatprep.subr.bf16.mxu0 0
  %3113 = vmatpush2.bf16.msra.mxu0 0
  %3114 = vmatprep.subr.bf16.mxu0 0
  %3115 = vmatpush2.bf16.msra.mxu0 0
  %3116 = vmatprep.subr.bf16.mxu0 0
  %3117 = vmatpush2.bf16.msra.mxu0 0
  %3118 = vmatprep.subr.bf16.mxu0 0
  %3119 = vmatpush2.bf16.msra.mxu0 0
  %3120 = vmatprep.subr.bf16.mxu0 0
  %3121 = vmatpush2.bf16.msra.mxu0 0
  %3122 = vmatprep.subr.bf16.mxu0 0
  %3123 = vmatpush2.bf16.msra.mxu0 0
  %3124 = vmatprep.mubr.bf16.mxu0 0
  %3125 = vmatmul.mubr.bf16.gmra.mxu0 %v2557
  %v3126 = vpop.f32.mrf.mxu0
  %v3127 = vadd.f32 %v3086, %v3126
  %v3128 = vpop.f32.mrf.mxu0
  %v3129 = vadd.f32 %v3088, %v3128
  %v3130 = vpop.f32.mrf.mxu0
  %v3131 = vpop.f32.mrf.mxu0
  %3132 = vdwg.mxu0
  %v3133 = vmax.f32 %v2840, 0.0
  %v3134 = vmax.f32 %v2842, 0.0
  %v3135 = vmax.f32 %v3127, 0.0
  %v3136 = vmax.f32 %v3129, 0.0
  %v3137 = vpack.c.bf16 %v3133, %v3133
  %v3138 = vpack.c.bf16 %v3134, %v3134
  %v3139 = vpack.c.bf16 %v3135, %v3135
  %v3140 = vpack.c.bf16 %v3136, %v3136
  %v3141 = vld [vmem:[%s3] sm:$0xff]
  %v3142 = vld [vmem:[%s3 + $0x8] sm:$0xff]
  %v3143 = vld [vmem:[%s3 + $0x10] sm:$0xff]
  %v3144 = vld [vmem:[%s3 + $0x18] sm:$0xff]
  %v3145 = vld [vmem:[%s3 + $0x20] sm:$0xff]
  %v3146 = vld [vmem:[%s3 + $0x28] sm:$0xff]
  %v3147 = vld [vmem:[%s3 + $0x30] sm:$0xff]
  %v3148 = vld [vmem:[%s3 + $0x38] sm:$0xff]
  %v3149 = vld [vmem:[%s3 + $0x40] sm:$0xff]
  %v3150 = vld [vmem:[%s3 + $0x48] sm:$0xff]
  %v3151 = vld [vmem:[%s3 + $0x50] sm:$0xff]
  %v3152 = vld [vmem:[%s3 + $0x58] sm:$0xff]
  %v3153 = vld [vmem:[%s3 + $0x60] sm:$0xff]
  %v3154 = vld [vmem:[%s3 + $0x68] sm:$0xff]
  %v3155 = vld [vmem:[%s3 + $0x70] sm:$0xff]
  %v3156 = vld [vmem:[%s3 + $0x78] sm:$0xff]
  %v3157 = vld [vmem:[%s3 + $0x80] sm:$0xff]
  %v3158 = vld [vmem:[%s3 + $0x88] sm:$0xff]
  %v3159 = vld [vmem:[%s3 + $0x90] sm:$0xff]
  %v3160 = vld [vmem:[%s3 + $0x98] sm:$0xff]
  %v3161 = vld [vmem:[%s3 + $0xa0] sm:$0xff]
  %v3162 = vld [vmem:[%s3 + $0xa8] sm:$0xff]
  %v3163 = vld [vmem:[%s3 + $0xb0] sm:$0xff]
  %v3164 = vld [vmem:[%s3 + $0xb8] sm:$0xff]
  %v3165 = vld [vmem:[%s3 + $0xc0] sm:$0xff]
  %v3166 = vld [vmem:[%s3 + $0xc8] sm:$0xff]
  %v3167 = vld [vmem:[%s3 + $0xd0] sm:$0xff]
  %v3168 = vld [vmem:[%s3 + $0xd8] sm:$0xff]
  %v3169 = vld [vmem:[%s3 + $0xe0] sm:$0xff]
  %v3170 = vld [vmem:[%s3 + $0xe8] sm:$0xff]
  %v3171 = vld [vmem:[%s3 + $0xf0] sm:$0xff]
  %v3172 = vld [vmem:[%s3 + $0xf8] sm:$0xff]
  %v3173 = vld [vmem:[%s3 + $0x100] sm:$0xff]
  %v3174 = vld [vmem:[%s3 + $0x108] sm:$0xff]
  %v3175 = vld [vmem:[%s3 + $0x110] sm:$0xff]
  %v3176 = vld [vmem:[%s3 + $0x118] sm:$0xff]
  %v3177 = vld [vmem:[%s3 + $0x120] sm:$0xff]
  %v3178 = vld [vmem:[%s3 + $0x128] sm:$0xff]
  %v3179 = vld [vmem:[%s3 + $0x130] sm:$0xff]
  %v3180 = vld [vmem:[%s3 + $0x138] sm:$0xff]
  %v3181 = vld [vmem:[%s3 + $0x140] sm:$0xff]
  %v3182 = vld [vmem:[%s3 + $0x148] sm:$0xff]
  %v3183 = vld [vmem:[%s3 + $0x150] sm:$0xff]
  %v3184 = vld [vmem:[%s3 + $0x158] sm:$0xff]
  %v3185 = vld [vmem:[%s3 + $0x160] sm:$0xff]
  %v3186 = vld [vmem:[%s3 + $0x168] sm:$0xff]
  %v3187 = vld [vmem:[%s3 + $0x170] sm:$0xff]
  %v3188 = vld [vmem:[%s3 + $0x178] sm:$0xff]
  %v3189 = vld [vmem:[%s3 + $0x180] sm:$0xff]
  %v3190 = vld [vmem:[%s3 + $0x188] sm:$0xff]
  %v3191 = vld [vmem:[%s3 + $0x190] sm:$0xff]
  %v3192 = vld [vmem:[%s3 + $0x198] sm:$0xff]
  %v3193 = vld [vmem:[%s3 + $0x1a0] sm:$0xff]
  %v3194 = vld [vmem:[%s3 + $0x1a8] sm:$0xff]
  %v3195 = vld [vmem:[%s3 + $0x1b0] sm:$0xff]
  %v3196 = vld [vmem:[%s3 + $0x1b8] sm:$0xff]
  %v3197 = vld [vmem:[%s3 + $0x1c0] sm:$0xff]
  %v3198 = vld [vmem:[%s3 + $0x1c8] sm:$0xff]
  %v3199 = vld [vmem:[%s3 + $0x1d0] sm:$0xff]
  %v3200 = vld [vmem:[%s3 + $0x1d8] sm:$0xff]
  %v3201 = vld [vmem:[%s3 + $0x1e0] sm:$0xff]
  %v3202 = vld [vmem:[%s3 + $0x1e8] sm:$0xff]
  %v3203 = vld [vmem:[%s3 + $0x1f0] sm:$0xff]
  %v3204 = vld [vmem:[%s3 + $0x1f8] sm:$0xff]
  %v3205 = vld [vmem:[%s4] sm:$0x3]
  %v3207 = vlaneseq
  %v3208 = vshrl.u32 %v3207, 7
  %v3209 = vsub.s32 0, %v3208
  %v3210 = vrot.slane %v3205, %v3209
  %v3211 = vlaneseq
  %v3212 = vshrl.u32 %v3211, 7
  %v3213 = vsub.s32 1, %v3212
  %v3214 = vrot.slane %v3205, %v3213
  %v3281 = vunpack.c.l.b16 %v3141
  %v3282 = vunpack.c.h.b16 %v3141
  %v3283 = vunpack.c.l.b16 %v3142
  %v3284 = vunpack.c.h.b16 %v3142
  %v3285 = vunpack.c.l.b16 %v3143
  %v3286 = vunpack.c.h.b16 %v3143
  %v3287 = vunpack.c.l.b16 %v3144
  %v3288 = vunpack.c.h.b16 %v3144
  %v3289 = vunpack.c.l.b16 %v3145
  %v3290 = vunpack.c.h.b16 %v3145
  %v3291 = vunpack.c.l.b16 %v3146
  %v3292 = vunpack.c.h.b16 %v3146
  %v3293 = vunpack.c.l.b16 %v3147
  %v3294 = vunpack.c.h.b16 %v3147
  %v3295 = vunpack.c.l.b16 %v3148
  %v3296 = vunpack.c.h.b16 %v3148
  %v3297 = vunpack.c.l.b16 %v3149
  %v3298 = vunpack.c.h.b16 %v3149
  %v3299 = vunpack.c.l.b16 %v3150
  %v3300 = vunpack.c.h.b16 %v3150
  %v3301 = vunpack.c.l.b16 %v3151
  %v3302 = vunpack.c.h.b16 %v3151
  %v3303 = vunpack.c.l.b16 %v3152
  %v3304 = vunpack.c.h.b16 %v3152
  %v3305 = vunpack.c.l.b16 %v3153
  %v3306 = vunpack.c.h.b16 %v3153
  %v3307 = vunpack.c.l.b16 %v3154
  %v3308 = vunpack.c.h.b16 %v3154
  %v3309 = vunpack.c.l.b16 %v3155
  %v3310 = vunpack.c.h.b16 %v3155
  %v3311 = vunpack.c.l.b16 %v3156
  %v3312 = vunpack.c.h.b16 %v3156
  %v3313 = vunpack.c.l.b16 %v3157
  %v3314 = vunpack.c.h.b16 %v3157
  %v3315 = vunpack.c.l.b16 %v3158
  %v3316 = vunpack.c.h.b16 %v3158
  %v3317 = vunpack.c.l.b16 %v3159
  %v3318 = vunpack.c.h.b16 %v3159
  %v3319 = vunpack.c.l.b16 %v3160
  %v3320 = vunpack.c.h.b16 %v3160
  %v3321 = vunpack.c.l.b16 %v3161
  %v3322 = vunpack.c.h.b16 %v3161
  %v3323 = vunpack.c.l.b16 %v3162
  %v3324 = vunpack.c.h.b16 %v3162
  %v3325 = vunpack.c.l.b16 %v3163
  %v3326 = vunpack.c.h.b16 %v3163
  %v3327 = vunpack.c.l.b16 %v3164
  %v3328 = vunpack.c.h.b16 %v3164
  %v3329 = vunpack.c.l.b16 %v3165
  %v3330 = vunpack.c.h.b16 %v3165
  %v3331 = vunpack.c.l.b16 %v3166
  %v3332 = vunpack.c.h.b16 %v3166
  %v3333 = vunpack.c.l.b16 %v3167
  %v3334 = vunpack.c.h.b16 %v3167
  %v3335 = vunpack.c.l.b16 %v3168
  %v3336 = vunpack.c.h.b16 %v3168
  %v3337 = vunpack.c.l.b16 %v3169
  %v3338 = vunpack.c.h.b16 %v3169
  %v3339 = vunpack.c.l.b16 %v3170
  %v3340 = vunpack.c.h.b16 %v3170
  %v3341 = vunpack.c.l.b16 %v3171
  %v3342 = vunpack.c.h.b16 %v3171
  %v3343 = vunpack.c.l.b16 %v3172
  %v3344 = vunpack.c.h.b16 %v3172
  %v3345 = vunpack.c.l.b16 %v3173
  %v3346 = vunpack.c.h.b16 %v3173
  %v3347 = vunpack.c.l.b16 %v3174
  %v3348 = vunpack.c.h.b16 %v3174
  %v3349 = vunpack.c.l.b16 %v3175
  %v3350 = vunpack.c.h.b16 %v3175
  %v3351 = vunpack.c.l.b16 %v3176
  %v3352 = vunpack.c.h.b16 %v3176
  %v3353 = vunpack.c.l.b16 %v3177
  %v3354 = vunpack.c.h.b16 %v3177
  %v3355 = vunpack.c.l.b16 %v3178
  %v3356 = vunpack.c.h.b16 %v3178
  %v3357 = vunpack.c.l.b16 %v3179
  %v3358 = vunpack.c.h.b16 %v3179
  %v3359 = vunpack.c.l.b16 %v3180
  %v3360 = vunpack.c.h.b16 %v3180
  %v3361 = vunpack.c.l.b16 %v3181
  %v3362 = vunpack.c.h.b16 %v3181
  %v3363 = vunpack.c.l.b16 %v3182
  %v3364 = vunpack.c.h.b16 %v3182
  %v3365 = vunpack.c.l.b16 %v3183
  %v3366 = vunpack.c.h.b16 %v3183
  %v3367 = vunpack.c.l.b16 %v3184
  %v3368 = vunpack.c.h.b16 %v3184
  %v3369 = vunpack.c.l.b16 %v3185
  %v3370 = vunpack.c.h.b16 %v3185
  %v3371 = vunpack.c.l.b16 %v3186
  %v3372 = vunpack.c.h.b16 %v3186
  %v3373 = vunpack.c.l.b16 %v3187
  %v3374 = vunpack.c.h.b16 %v3187
  %v3375 = vunpack.c.l.b16 %v3188
  %v3376 = vunpack.c.h.b16 %v3188
  %v3377 = vunpack.c.l.b16 %v3189
  %v3378 = vunpack.c.h.b16 %v3189
  %v3379 = vunpack.c.l.b16 %v3190
  %v3380 = vunpack.c.h.b16 %v3190
  %v3381 = vunpack.c.l.b16 %v3191
  %v3382 = vunpack.c.h.b16 %v3191
  %v3383 = vunpack.c.l.b16 %v3192
  %v3384 = vunpack.c.h.b16 %v3192
  %v3385 = vunpack.c.l.b16 %v3193
  %v3386 = vunpack.c.h.b16 %v3193
  %v3387 = vunpack.c.l.b16 %v3194
  %v3388 = vunpack.c.h.b16 %v3194
  %v3389 = vunpack.c.l.b16 %v3195
  %v3390 = vunpack.c.h.b16 %v3195
  %v3391 = vunpack.c.l.b16 %v3196
  %v3392 = vunpack.c.h.b16 %v3196
  %v3393 = vunpack.c.l.b16 %v3197
  %v3394 = vunpack.c.h.b16 %v3197
  %v3395 = vunpack.c.l.b16 %v3198
  %v3396 = vunpack.c.h.b16 %v3198
  %v3397 = vunpack.c.l.b16 %v3199
  %v3398 = vunpack.c.h.b16 %v3199
  %v3399 = vunpack.c.l.b16 %v3200
  %v3400 = vunpack.c.h.b16 %v3200
  %v3401 = vunpack.c.l.b16 %v3201
  %v3402 = vunpack.c.h.b16 %v3201
  %v3403 = vunpack.c.l.b16 %v3202
  %v3404 = vunpack.c.h.b16 %v3202
  %v3405 = vunpack.c.l.b16 %v3203
  %v3406 = vunpack.c.h.b16 %v3203
  %v3407 = vunpack.c.l.b16 %v3204
  %v3408 = vunpack.c.h.b16 %v3204
  %v3409 = vpack.c.b16 %v3283, %v3281
  %v3410 = vpack.c.b16 %v3284, %v3282
  %v3411 = vpack.c.b16 %v3287, %v3285
  %v3412 = vpack.c.b16 %v3288, %v3286
  %v3413 = vpack.c.b16 %v3291, %v3289
  %v3414 = vpack.c.b16 %v3292, %v3290
  %v3415 = vpack.c.b16 %v3295, %v3293
  %v3416 = vpack.c.b16 %v3296, %v3294
  %v3417 = vpack.c.b16 %v3299, %v3297
  %v3418 = vpack.c.b16 %v3300, %v3298
  %v3419 = vpack.c.b16 %v3303, %v3301
  %v3420 = vpack.c.b16 %v3304, %v3302
  %v3421 = vpack.c.b16 %v3307, %v3305
  %v3422 = vpack.c.b16 %v3308, %v3306
  %v3423 = vpack.c.b16 %v3311, %v3309
  %v3424 = vpack.c.b16 %v3312, %v3310
  %v3425 = vpack.c.b16 %v3315, %v3313
  %v3426 = vpack.c.b16 %v3316, %v3314
  %v3427 = vpack.c.b16 %v3319, %v3317
  %v3428 = vpack.c.b16 %v3320, %v3318
  %v3429 = vpack.c.b16 %v3323, %v3321
  %v3430 = vpack.c.b16 %v3324, %v3322
  %v3431 = vpack.c.b16 %v3327, %v3325
  %v3432 = vpack.c.b16 %v3328, %v3326
  %v3433 = vpack.c.b16 %v3331, %v3329
  %v3434 = vpack.c.b16 %v3332, %v3330
  %v3435 = vpack.c.b16 %v3335, %v3333
  %v3436 = vpack.c.b16 %v3336, %v3334
  %v3437 = vpack.c.b16 %v3339, %v3337
  %v3438 = vpack.c.b16 %v3340, %v3338
  %v3439 = vpack.c.b16 %v3343, %v3341
  %v3440 = vpack.c.b16 %v3344, %v3342
  %v3441 = vpack.c.b16 %v3347, %v3345
  %v3442 = vpack.c.b16 %v3348, %v3346
  %v3443 = vpack.c.b16 %v3351, %v3349
  %v3444 = vpack.c.b16 %v3352, %v3350
  %v3445 = vpack.c.b16 %v3355, %v3353
  %v3446 = vpack.c.b16 %v3356, %v3354
  %v3447 = vpack.c.b16 %v3359, %v3357
  %v3448 = vpack.c.b16 %v3360, %v3358
  %v3449 = vpack.c.b16 %v3363, %v3361
  %v3450 = vpack.c.b16 %v3364, %v3362
  %v3451 = vpack.c.b16 %v3367, %v3365
  %v3452 = vpack.c.b16 %v3368, %v3366
  %v3453 = vpack.c.b16 %v3371, %v3369
  %v3454 = vpack.c.b16 %v3372, %v3370
  %v3455 = vpack.c.b16 %v3375, %v3373
  %v3456 = vpack.c.b16 %v3376, %v3374
  %v3457 = vpack.c.b16 %v3379, %v3377
  %v3458 = vpack.c.b16 %v3380, %v3378
  %v3459 = vpack.c.b16 %v3383, %v3381
  %v3460 = vpack.c.b16 %v3384, %v3382
  %v3461 = vpack.c.b16 %v3387, %v3385
  %v3462 = vpack.c.b16 %v3388, %v3386
  %v3463 = vpack.c.b16 %v3391, %v3389
  %v3464 = vpack.c.b16 %v3392, %v3390
  %v3465 = vpack.c.b16 %v3395, %v3393
  %v3466 = vpack.c.b16 %v3396, %v3394
  %v3467 = vpack.c.b16 %v3399, %v3397
  %v3468 = vpack.c.b16 %v3400, %v3398
  %v3469 = vpack.c.b16 %v3403, %v3401
  %v3470 = vpack.c.b16 %v3404, %v3402
  %v3471 = vpack.c.b16 %v3407, %v3405
  %v3472 = vpack.c.b16 %v3408, %v3406
  %3537 = vmatprep.subr.bf16.mxu0 %v3424
  %3538 = vmatpush1.bf16.msra.mxu0 %v3423
  %3539 = vmatprep.subr.bf16.mxu0 %v3422
  %3540 = vmatpush1.bf16.msra.mxu0 %v3421
  %3541 = vmatprep.subr.bf16.mxu0 %v3420
  %3542 = vmatpush1.bf16.msra.mxu0 %v3419
  %3543 = vmatprep.subr.bf16.mxu0 %v3418
  %3544 = vmatpush1.bf16.msra.mxu0 %v3417
  %3545 = vmatprep.subr.bf16.mxu0 %v3416
  %3546 = vmatpush1.bf16.msra.mxu0 %v3415
  %3547 = vmatprep.subr.bf16.mxu0 %v3414
  %3548 = vmatpush1.bf16.msra.mxu0 %v3413
  %3549 = vmatprep.subr.bf16.mxu0 %v3412
  %3550 = vmatpush1.bf16.msra.mxu0 %v3411
  %3551 = vmatprep.subr.bf16.mxu0 %v3410
  %3552 = vmatpush1.bf16.msra.mxu0 %v3409
  %3553 = vmatprep.subr.bf16.mxu0 %v3440
  %3554 = vmatpush2.bf16.msra.mxu0 %v3439
  %3555 = vmatprep.subr.bf16.mxu0 %v3438
  %3556 = vmatpush2.bf16.msra.mxu0 %v3437
  %3557 = vmatprep.subr.bf16.mxu0 %v3436
  %3558 = vmatpush2.bf16.msra.mxu0 %v3435
  %3559 = vmatprep.subr.bf16.mxu0 %v3434
  %3560 = vmatpush2.bf16.msra.mxu0 %v3433
  %3561 = vmatprep.subr.bf16.mxu0 %v3432
  %3562 = vmatpush2.bf16.msra.mxu0 %v3431
  %3563 = vmatprep.subr.bf16.mxu0 %v3430
  %3564 = vmatpush2.bf16.msra.mxu0 %v3429
  %3565 = vmatprep.subr.bf16.mxu0 %v3428
  %3566 = vmatpush2.bf16.msra.mxu0 %v3427
  %3567 = vmatprep.subr.bf16.mxu0 %v3426
  %3568 = vmatpush2.bf16.msra.mxu0 %v3425
  %3569 = vmatprep.mubr.bf16.mxu0 %v3138
  %3570 = vmatmul.mubr.bf16.gmra.mxu0 %v3137
  %v3571 = vpop.f32.mrf.mxu0
  %v3572 = vadd.f32 %v3210, %v3571
  %v3573 = vpop.f32.mrf.mxu0
  %v3574 = vadd.f32 %v3214, %v3573
  %v3575 = vpop.f32.mrf.mxu0
  %v3576 = vpop.f32.mrf.mxu0
  %3577 = vdwg.mxu0
  %3578 = vmatprep.subr.bf16.mxu0 %v3456
  %3579 = vmatpush1.bf16.msra.mxu0 %v3455
  %3580 = vmatprep.subr.bf16.mxu0 %v3454
  %3581 = vmatpush1.bf16.msra.mxu0 %v3453
  %3582 = vmatprep.subr.bf16.mxu0 %v3452
  %3583 = vmatpush1.bf16.msra.mxu0 %v3451
  %3584 = vmatprep.subr.bf16.mxu0 %v3450
  %3585 = vmatpush1.bf16.msra.mxu0 %v3449
  %3586 = vmatprep.subr.bf16.mxu0 %v3448
  %3587 = vmatpush1.bf16.msra.mxu0 %v3447
  %3588 = vmatprep.subr.bf16.mxu0 %v3446
  %3589 = vmatpush1.bf16.msra.mxu0 %v3445
  %3590 = vmatprep.subr.bf16.mxu0 %v3444
  %3591 = vmatpush1.bf16.msra.mxu0 %v3443
  %3592 = vmatprep.subr.bf16.mxu0 %v3442
  %3593 = vmatpush1.bf16.msra.mxu0 %v3441
  %3594 = vmatprep.subr.bf16.mxu0 %v3472
  %3595 = vmatpush2.bf16.msra.mxu0 %v3471
  %3596 = vmatprep.subr.bf16.mxu0 %v3470
  %3597 = vmatpush2.bf16.msra.mxu0 %v3469
  %3598 = vmatprep.subr.bf16.mxu0 %v3468
  %3599 = vmatpush2.bf16.msra.mxu0 %v3467
  %3600 = vmatprep.subr.bf16.mxu0 %v3466
  %3601 = vmatpush2.bf16.msra.mxu0 %v3465
  %3602 = vmatprep.subr.bf16.mxu0 %v3464
  %3603 = vmatpush2.bf16.msra.mxu0 %v3463
  %3604 = vmatprep.subr.bf16.mxu0 %v3462
  %3605 = vmatpush2.bf16.msra.mxu0 %v3461
  %3606 = vmatprep.subr.bf16.mxu0 %v3460
  %3607 = vmatpush2.bf16.msra.mxu0 %v3459
  %3608 = vmatprep.subr.bf16.mxu0 %v3458
  %3609 = vmatpush2.bf16.msra.mxu0 %v3457
  %3610 = vmatprep.mubr.bf16.mxu0 %v3140
  %3611 = vmatmul.mubr.bf16.gmra.mxu0 %v3139
  %v3612 = vpop.f32.mrf.mxu0
  %v3613 = vadd.f32 %v3572, %v3612
  %v3614 = vpop.f32.mrf.mxu0
  %v3615 = vadd.f32 %v3574, %v3614
  %v3616 = vpop.f32.mrf.mxu0
  %v3617 = vpop.f32.mrf.mxu0
  %3618 = vdwg.mxu0
  %v3619 = vmax.f32 %v3613, 0.0
  %v3620 = vmax.f32 %v3615, 0.0
  %v3621 = vld [vmem:[%s5] sm:$0x3]
  %v3623 = vlaneseq
  %v3624 = vshrl.u32 %v3623, 7
  %v3625 = vsub.s32 0, %v3624
  %v3626 = vrot.slane %v3621, %v3625
  %v3627 = vlaneseq
  %v3628 = vshrl.u32 %v3627, 7
  %v3629 = vsub.s32 1, %v3628
  %v3630 = vrot.slane %v3621, %v3629
  %v3633 = vmul.f32 %v3619, %v3626
  %v3634 = vmul.f32 %v3620, %v3630
  %vm3635 = vcmask 1041408
  %v3636 = vsel %vm3635, %v3633, 0.0
  %v3637 = vsel %vm3635, %v3634, 0.0
  %v3638 = vadd.f32 %v3636, %v3637
  %3639 = vadd.xlane.f32.xlu0 %v3638
  %v3640 = vpop.xlane.xlu0 %3639
  %v3641 = vld [vmem:[#allocation2] sm:$0x1]
  %v3643 = vlaneseq
  %v3644 = vshrl.u32 %v3643, 7
  %v3645 = vsub.s32 0, %v3644
  %v3646 = vrot.slane %v3641, %v3645
  %v3648 = vadd.f32 %v3640, %v3646
  %vm3649 = vcmask 1024
  %3650 = vst.msk [vmem:[%s7] sm:$0x3] %vm3649, %v3648
  // Predicated region
  $region30: #{coinrun_critic_forward.7} parent=0 // pred_check
    _
  $region31: #{coinrun_critic_forward.7} parent=0 // pred_check_branch
    %3652 = sbr.rel (0) target = $region33
  $region32: #{coinrun_critic_forward.7} parent=0 // pred_region
    _
  $region33: #{coinrun_critic_forward.7} parent=0 // pred_fallthru
    _
  // Predicated region
  $region34: #{coinrun_critic_forward.7} parent=0 // pred_check
    _
  $region35: #{coinrun_critic_forward.7} parent=0 // pred_check_branch
    %3654 = sbr.rel (0) target = $region37
  $region36: #{coinrun_critic_forward.7} parent=0 // pred_region
    _
  $region37: #{coinrun_critic_forward.7} parent=0 // pred_fallthru
    _

</llo_original>
